<compile_context>
chip_gen: v5e
topology: v5e:2x2
jax: 0.10.0
libtpu: 0.0.40
codegen_flags: <defaults>
</compile_context>

<pallas_src>
import jax
import jax.numpy as jnp
from jax import lax
from jax.experimental import pallas as pl
from jax.experimental.pallas import tpu as pltpu


def _round_up(x, m):
    return ((x + m - 1) // m) * m


# ---------------- Pallas kernels ----------------

def _make_conv_stats_kernel(tap_offsets, tm, th, c_pad, compute_dtype, fold_taps):
    """Fused shifted-GEMM convolution + masked per-tile BatchNorm statistics.

    The zero-padded input is flattened to rows (N*Hp*Wp, C_in); for tap (kh, kw) the
    input row feeding full-grid output row `o` is `o + kh*Wp + kw`, a constant shift,
    so each grid step only needs its own TM rows plus TH halo rows (no im2col).
    """
    n_taps = len(tap_offsets)

    def kernel(x_lo_ref, x_hi_ref, w_ref, mask_ref, conv_ref, stats_ref, win_ref):
        # Assemble the sliding window (tile + halo) once in an f32 VMEM scratch so the
        # unaligned per-tap row slices below are plain (sublane-shifted) vector loads.
        win_ref[0:tm, :] = x_lo_ref[...].astype(jnp.float32)
        win_ref[tm:tm + th, :] = x_hi_ref[...].astype(jnp.float32)

        if fold_taps:
            # C_in lane-aligned: concatenate the K*K shifted slices along lanes and do
            # ONE MXU dot with contraction depth K*K*C_in — accumulation stays inside
            # the MXU result buffer instead of K*K-1 full-tile f32 VPU adds.
            a = jnp.concatenate(
                [win_ref[d:d + tm, :].astype(compute_dtype) for d in tap_offsets],
                axis=-1)                                          # (tm, K*K*C_in)
            acc = jnp.dot(a, w_ref[...], preferred_element_type=jnp.float32)
        else:
            # Small / unaligned C_in: per-tap dots (static K*K unroll).
            acc = None
            for t in range(n_taps):
                d = tap_offsets[t]                  # constant row shift kh*Wp + kw
                a = win_ref[d:d + tm, :].astype(compute_dtype)
                p = jnp.dot(a, w_ref[t], preferred_element_type=jnp.float32)
                acc = p if acc is None else acc + p

        # Conv intermediate goes to HBM in the (narrow) store dtype; BN statistics are
        # taken from the still-on-chip f32 accumulator so their precision is unchanged.
        conv_ref[...] = acc.astype(conv_ref.dtype)

        # mask is 1.0 only for rows that are real (strided) conv output pixels, so
        # cross-image / padded halo garbage never reaches the statistics.
        m = mask_ref[...]                                   # (tm, 1) f32
        am = acc * m
        s = jnp.sum(am, axis=0)                             # (c_pad,)
        ss = jnp.sum(acc * am, axis=0)                      # (c_pad,)
        stats_ref[...] = jnp.stack([s, ss], axis=0).reshape(1, 2, c_pad)

    return kernel


def _make_bn_act_kernel(c_out, use_silu):
    """BatchNorm affine + (optional) SiLU; writes only the real C_out channels."""

    def kernel(x_ref, scale_ref, shift_ref, o_ref):
        x = x_ref[...].astype(jnp.float32)                  # (tm, c_pad)
        y = x * scale_ref[...] + shift_ref[...]
        if use_silu:
            y = y * jax.nn.sigmoid(y)                       # SiLU (exp goes to the EUP)
        o_ref[...] = y[:, :c_out].astype(o_ref.dtype)       # drop dead padded lanes

    return kernel


# ---------------- wrapper ----------------

def xpl_image_conv(x, weight, gamma, beta, *, kernel_size, padding=None, stride=None,
                   eps=1e-3, activation="silu", groups=1,
                   compute_dtype=jnp.bfloat16, store_dtype=jnp.bfloat16, tile_m=1024):
    """x: (N, C_in, H, W) f32; weight: (C_out, C_in, K, K); gamma/beta: (C_out,).

    compute_dtype: MXU operand dtype (bf16 halves input DMA bytes; f32 accumulation).
    store_dtype:   dtype of the conv intermediate handed from pass 1 to pass 2.
    """
    assert groups == 1  # TODO(synk): grouped convolution not implemented (module default is 1)
    N, C_in, H, W = x.shape
    C_out = weight.shape[0]
    K = kernel_size
    # Mirrors the torch module exactly: any falsy `padding` falls back to "same".
    padding = padding if padding else [K // 2] * 4
    left, right, top, bottom = padding
    stride = 1 if stride is None else stride

    # --- XLA glue: zero-pad, NCHW -> NHWC, flatten (n, h, w) to rows ---
    xp = jnp.pad(x.astype(jnp.float32),
                 ((0, 0), (0, 0), (top, bottom), (left, right)))
    Hp, Wp = xp.shape[2], xp.shape[3]
    Ho = (Hp - K) // stride + 1
    Wo = (Wp - K) // stride + 1

    R = N * Hp * Wp                              # full-grid output rows
    halo = (K - 1) * Wp + (K - 1)                # max tap shift
    TM = _round_up(max(tile_m, 8), 8)
    halo8 = _round_up(max(halo, 8), 8)
    if halo8 >= TM:
        TM = _round_up(halo8, TM)                # very wide image / big K: grow tile
        TH = TM
    else:
        # Shrink the halo block to the smallest power-of-two divisor of TM (multiple
        # of 8) that still covers the halo, so x_hi stops re-DMAing a full tile.
        TH = TM
        while TH % 2 == 0 and (TH // 2) % 8 == 0 and (TH // 2) >= halo8:
            TH //= 2
    ratio = TM // TH                             # TH | TM -> halo blocks stay aligned
    R_pad = _round_up(R, TM)
    n_tiles = R_pad // TM
    C_pad = _round_up(C_out, 128)                # lane-dense conv-intermediate channels

    xf = xp.transpose(0, 2, 3, 1).reshape(R, C_in)
    # pad extra rows of zeros so the last tile's halo block stays in-bounds
    xf = jnp.pad(xf, ((0, R_pad + TM - R), (0, 0))).astype(compute_dtype)

    # weights: (C_out, C_in, K, K) -> (K*K taps, C_in, C_pad)
    w_taps = weight.astype(jnp.float32).transpose(2, 3, 1, 0).reshape(K * K, C_in, C_out)
    w_taps = jnp.pad(w_taps, ((0, 0), (0, 0), (0, C_pad - C_out))).astype(compute_dtype)
    tap_offsets = tuple(kh * Wp + kw for kh in range(K) for kw in range(K))

    # Fold all K*K taps into one MXU contraction only when the in-kernel lane concat
    # is tile-aligned; otherwise keep the proven per-tap dot loop.
    fold_taps = (C_in % 128 == 0)
    if fold_taps:
        w_arg = w_taps.reshape(K * K * C_in, C_pad)
        w_spec = pl.BlockSpec((K * K * C_in, C_pad), lambda i: (0, 0))
    else:
        w_arg = w_taps
        w_spec = pl.BlockSpec((K * K, C_in, C_pad), lambda i: (0, 0, 0))

    # validity mask over full-grid rows: true conv output pixels only (handles stride)
    rid = jnp.arange(R_pad)
    hh = (rid // Wp) % Hp
    ww = rid % Wp
    valid = (rid < R) & (hh <= Hp - K) & (hh % stride == 0) \
            & (ww <= Wp - K) & (ww % stride == 0)
    mask = valid.astype(jnp.float32).reshape(R_pad, 1)

    grid = (n_tiles,)
    esize = jnp.dtype(compute_dtype).itemsize
    ssize = jnp.dtype(store_dtype).itemsize

    # ---- pass 1: fused conv (shifted GEMM) + per-tile masked BN statistics ----
    cost1 = pl.CostEstimate(
        flops=2 * R_pad * C_pad * K * K * C_in + 4 * R_pad * C_pad,
        transcendentals=0,
        bytes_accessed=(n_tiles * (TM + TH) * C_in * esize        # input tiles + halos
                        + R_pad * 4                               # mask
                        + K * K * C_in * C_pad * esize            # weights (resident)
                        + R_pad * C_pad * ssize                   # conv intermediate
                        + n_tiles * 2 * C_pad * 4))               # per-tile stats
    conv_full, stats = pl.pallas_call(
        _make_conv_stats_kernel(tap_offsets, TM, TH, C_pad, compute_dtype, fold_taps),
        out_shape=(jax.ShapeDtypeStruct((R_pad, C_pad), store_dtype),
                   jax.ShapeDtypeStruct((n_tiles, 2, C_pad), jnp.float32)),
        grid=grid,
        in_specs=[pl.BlockSpec((TM, C_in), lambda i: (i, 0)),                 # tile
                  pl.BlockSpec((TH, C_in), lambda i: (i * ratio + ratio, 0)), # halo
                  w_spec,
                  pl.BlockSpec((TM, 1), lambda i: (i, 0))],
        out_specs=(pl.BlockSpec((TM, C_pad), lambda i: (i, 0)),
                   pl.BlockSpec((1, 2, C_pad), lambda i: (i, 0, 0))),
        scratch_shapes=[pltpu.VMEM((TM + TH, C_in), jnp.float32)],
        compiler_params=pltpu.CompilerParams(dimension_semantics=("parallel",)),
        cost_estimate=cost1,
    )(xf, xf, w_arg, mask)

    # ---- tiny XLA epilogue: reduce per-tile sums, build BN scale/shift ----
    sums = jnp.sum(stats, axis=0)                       # (2, C_pad)
    count = jnp.float32(N * Ho * Wo)
    mean = sums[0] / count
    var = jnp.maximum(sums[1] / count - mean * mean, 0.0)   # biased var, clamped >= 0
    inv_std = lax.rsqrt(var + eps)
    g = jnp.pad(gamma.astype(jnp.float32), (0, C_pad - C_out))
    b = jnp.pad(beta.astype(jnp.float32), (0, C_pad - C_out))
    scale = (g * inv_std)[None, :]
    shift = (b - mean * g * inv_std)[None, :]

    # ---- pass 2: fused BN affine + activation, stores only the real C_out lanes ----
    use_silu = activation.lower() == "silu"
    cost2 = pl.CostEstimate(
        flops=4 * R_pad * C_pad,
        transcendentals=R_pad * C_pad if use_silu else 0,
        bytes_accessed=R_pad * C_pad * ssize + R_pad * C_out * 4 + 2 * C_pad * 4)
    y_rows = pl.pallas_call(
        _make_bn_act_kernel(C_out, use_silu),
        out_shape=jax.ShapeDtypeStruct((R_pad, C_out), jnp.float32),
        grid=grid,
        in_specs=[pl.BlockSpec((TM, C_pad), lambda i: (i, 0)),
                  pl.BlockSpec((1, C_pad), lambda i: (0, 0)),
                  pl.BlockSpec((1, C_pad), lambda i: (0, 0))],
        out_specs=pl.BlockSpec((TM, C_out), lambda i: (i, 0)),
        compiler_params=pltpu.CompilerParams(dimension_semantics=("parallel",)),
        cost_estimate=cost2,
    )(conv_full, scale, shift)

    # slice valid (strided) output positions, return NCHW
    y = y_rows[:R].reshape(N, Hp, Wp, C_out)
    y = y[:, 0:Hp - K + 1:stride, 0:Wp - K + 1:stride, :]
    return jnp.transpose(y, (0, 3, 1, 2))


# ---------------- pure-JAX reference (for verification) ----------------

def _reference(x, weight, gamma, beta, K, padding, stride, eps, activation):
    left, right, top, bottom = padding
    xp = jnp.pad(x, ((0, 0), (0, 0), (top, bottom), (left, right)))
    conv = lax.conv_general_dilated(
        xp, weight, (stride, stride), "VALID",
        dimension_numbers=("NCHW", "OIHW", "NCHW"))
    mean = conv.mean(axis=(0, 2, 3), keepdims=True)
    var = conv.var(axis=(0, 2, 3), keepdims=True)
    yn = (conv - mean) / jnp.sqrt(var + eps)
    yn = yn * gamma[None, :, None, None] + beta[None, :, None, None]
    return yn * jax.nn.sigmoid(yn) if activation == "silu" else yn


if __name__ == "__main__":
    # small shapes: batch=2, in_channels=4, spatial=16x16, out_channels=8, k=3
    N, C_in, H, W = 2, 4, 16, 16
    C_out, K = 8, 3
    padding = [1, 1, 1, 1]
    stride = 1

    key = jax.random.PRNGKey(0)
    kx, kw, kg, kb = jax.random.split(key, 4)
    x = jax.random.normal(kx, (N, C_in, H, W), dtype=jnp.float32)
    weight = 0.1 * jax.random.normal(kw, (C_out, C_in, K, K), dtype=jnp.float32)
    gamma = 1.0 + 0.1 * jax.random.normal(kg, (C_out,), dtype=jnp.float32)
    beta = 0.05 * jax.random.normal(kb, (C_out,), dtype=jnp.float32)

    ref = _reference(x, weight, gamma, beta, K, padding, stride, 1e-3, "silu")

    # f32 operand/intermediate path: validates the algorithm tightly.
    out_f32 = xpl_image_conv(x, weight, gamma, beta, kernel_size=K, padding=padding,
                             stride=stride, eps=1e-3, activation="silu",
                             compute_dtype=jnp.float32, store_dtype=jnp.float32)
    out_f32 = jax.block_until_ready(out_f32)
    assert out_f32.shape == ref.shape, (out_f32.shape, ref.shape)
    assert jnp.allclose(out_f32, ref, rtol=1e-3, atol=1e-3), "f32 path mismatch"

    # default path: bf16 MXU operands + bf16 conv intermediate (looser tolerance).
    out_bf16 = xpl_image_conv(x, weight, gamma, beta, kernel_size=K, padding=padding,
                              stride=stride, eps=1e-3, activation="silu")
    out_bf16 = jax.block_until_ready(out_bf16)
    assert out_bf16.shape == ref.shape, (out_bf16.shape, ref.shape)
    assert jnp.allclose(out_bf16, ref, rtol=5e-2, atol=5e-2), "bf16 path mismatch"

    print("KERNEL_OK")
</pallas_src>

<mosaic_0001>
module attributes {stable_mosaic.version = 11 : i64} {
  func.func @kernel(%arg0: i32, %arg1: memref<1024x4xf32, #tpu.memory_space<vmem>>, %arg2: memref<64x4xf32, #tpu.memory_space<vmem>>, %arg3: memref<9x4x128xf32, #tpu.memory_space<vmem>>, %arg4: memref<1024x1xf32, #tpu.memory_space<vmem>>, %arg5: memref<1024x128xf32, #tpu.memory_space<vmem>>, %arg6: memref<1x2x128xf32, #tpu.memory_space<vmem>>, %arg7: memref<1088x4xf32, #tpu.memory_space<vmem>>) attributes {dimension_semantics = [#tpu.dimension_semantics<parallel>], iteration_bounds = array<i64: 1>, scalar_prefetch = 0 : i64, scratch_operands = 1 : i64, tpu.core_type = #tpu.core_type<tc>, window_params = [{transform_indices = @transform_0, window_bounds = array<i64: 1024, 4>}, {transform_indices = @transform_1, window_bounds = array<i64: 64, 4>}, {pipeline_mode = #tpu.pipeline_mode<synchronous>, transform_indices = @transform_2, window_bounds = array<i64: 9, 4, 128>}, {transform_indices = @transform_3, window_bounds = array<i64: 1024, 1>}, {transform_indices = @transform_4, window_bounds = array<i64: 1024, 128>}, {transform_indices = @transform_5, window_bounds = array<i64: 1, 2, 128>}]} {
    %c0 = arith.constant 0 : index
    %c0_0 = arith.constant 0 : index
    %0 = vector.load %arg1[%c0, %c0_0] : memref<1024x4xf32, #tpu.memory_space<vmem>>, vector<1024x4xf32>
    %c0_1 = arith.constant 0 : index
    %c0_2 = arith.constant 0 : index
    %1 = vector.load %arg7[%c0_1, %c0_2] : memref<1088x4xf32, #tpu.memory_space<vmem>>, vector<1024x4xf32>
    tpu.vector_store %arg7[%c0_1, %c0_2], %0 {strides = array<i32>} : memref<1088x4xf32, #tpu.memory_space<vmem>>, vector<1024x4xf32>,
    %c0_3 = arith.constant 0 : index
    %c0_4 = arith.constant 0 : index
    %2 = vector.load %arg2[%c0_3, %c0_4] : memref<64x4xf32, #tpu.memory_space<vmem>>, vector<64x4xf32>
    %c1024 = arith.constant 1024 : index
    %c0_5 = arith.constant 0 : index
    %3 = vector.load %arg7[%c1024, %c0_5] : memref<1088x4xf32, #tpu.memory_space<vmem>>, vector<64x4xf32>
    tpu.vector_store %arg7[%c1024, %c0_5], %2 {strides = array<i32>} : memref<1088x4xf32, #tpu.memory_space<vmem>>, vector<64x4xf32>,
    %c0_6 = arith.constant 0 : index
    %c0_7 = arith.constant 0 : index
    %4 = vector.load %arg7[%c0_6, %c0_7] : memref<1088x4xf32, #tpu.memory_space<vmem>>, vector<1024x4xf32>
    %c0_8 = arith.constant 0 : index
    %c0_9 = arith.constant 0 : index
    %c0_10 = arith.constant 0 : index
    %5 = vector.load %arg3[%c0_8, %c0_9, %c0_10] : memref<9x4x128xf32, #tpu.memory_space<vmem>>, vector<1x4x128xf32>
    %6 = vector.shape_cast %5 : vector<1x4x128xf32> to vector<4x128xf32>
    %cst = arith.constant dense<0.000000e+00> : vector<1024x128xf32>
    %7 = tpu.matmul %4, %6, %cst {dimension_numbers = #tpu.dot_dimension_numbers<[1], [0], [0], [1], [0, 0, 1, 1], [], []>} : vector<1024x4xf32>, vector<4x128xf32>, vector<1024x128xf32> -> vector<1024x128xf32>
    %c1 = arith.constant 1 : index
    %c0_11 = arith.constant 0 : index
    %8 = vector.load %arg7[%c1, %c0_11] : memref<1088x4xf32, #tpu.memory_space<vmem>>, vector<1024x4xf32>
    %c1_12 = arith.constant 1 : index
    %c0_13 = arith.constant 0 : index
    %c0_14 = arith.constant 0 : index
    %9 = vector.load %arg3[%c1_12, %c0_13, %c0_14] : memref<9x4x128xf32, #tpu.memory_space<vmem>>, vector<1x4x128xf32>
    %10 = vector.shape_cast %9 : vector<1x4x128xf32> to vector<4x128xf32>
    %cst_15 = arith.constant dense<0.000000e+00> : vector<1024x128xf32>
    %11 = tpu.matmul %8, %10, %cst_15 {dimension_numbers = #tpu.dot_dimension_numbers<[1], [0], [0], [1], [0, 0, 1, 1], [], []>} : vector<1024x4xf32>, vector<4x128xf32>, vector<1024x128xf32> -> vector<1024x128xf32>
    %12 = arith.addf %7, %11 : vector<1024x128xf32>
    %c2 = arith.constant 2 : index
    %c0_16 = arith.constant 0 : index
    %13 = vector.load %arg7[%c2, %c0_16] : memref<1088x4xf32, #tpu.memory_space<vmem>>, vector<1024x4xf32>
    %c2_17 = arith.constant 2 : index
    %c0_18 = arith.constant 0 : index
    %c0_19 = arith.constant 0 : index
    %14 = vector.load %arg3[%c2_17, %c0_18, %c0_19] : memref<9x4x128xf32, #tpu.memory_space<vmem>>, vector<1x4x128xf32>
    %15 = vector.shape_cast %14 : vector<1x4x128xf32> to vector<4x128xf32>
    %cst_20 = arith.constant dense<0.000000e+00> : vector<1024x128xf32>
    %16 = tpu.matmul %13, %15, %cst_20 {dimension_numbers = #tpu.dot_dimension_numbers<[1], [0], [0], [1], [0, 0, 1, 1], [], []>} : vector<1024x4xf32>, vector<4x128xf32>, vector<1024x128xf32> -> vector<1024x128xf32>
    %17 = arith.addf %12, %16 : vector<1024x128xf32>
    %c18 = arith.constant 18 : index
    %c0_21 = arith.constant 0 : index
    %18 = vector.load %arg7[%c18, %c0_21] : memref<1088x4xf32, #tpu.memory_space<vmem>>, vector<1024x4xf32>
    %c3 = arith.constant 3 : index
    %c0_22 = arith.constant 0 : index
    %c0_23 = arith.constant 0 : index
    %19 = vector.load %arg3[%c3, %c0_22, %c0_23] : memref<9x4x128xf32, #tpu.memory_space<vmem>>, vector<1x4x128xf32>
    %20 = vector.shape_cast %19 : vector<1x4x128xf32> to vector<4x128xf32>
    %cst_24 = arith.constant dense<0.000000e+00> : vector<1024x128xf32>
    %21 = tpu.matmul %18, %20, %cst_24 {dimension_numbers = #tpu.dot_dimension_numbers<[1], [0], [0], [1], [0, 0, 1, 1], [], []>} : vector<1024x4xf32>, vector<4x128xf32>, vector<1024x128xf32> -> vector<1024x128xf32>
    %22 = arith.addf %17, %21 : vector<1024x128xf32>
    %c19 = arith.constant 19 : index
    %c0_25 = arith.constant 0 : index
    %23 = vector.load %arg7[%c19, %c0_25] : memref<1088x4xf32, #tpu.memory_space<vmem>>, vector<1024x4xf32>
    %c4 = arith.constant 4 : index
    %c0_26 = arith.constant 0 : index
    %c0_27 = arith.constant 0 : index
    %24 = vector.load %arg3[%c4, %c0_26, %c0_27] : memref<9x4x128xf32, #tpu.memory_space<vmem>>, vector<1x4x128xf32>
    %25 = vector.shape_cast %24 : vector<1x4x128xf32> to vector<4x128xf32>
    %cst_28 = arith.constant dense<0.000000e+00> : vector<1024x128xf32>
    %26 = tpu.matmul %23, %25, %cst_28 {dimension_numbers = #tpu.dot_dimension_numbers<[1], [0], [0], [1], [0, 0, 1, 1], [], []>} : vector<1024x4xf32>, vector<4x128xf32>, vector<1024x128xf32> -> vector<1024x128xf32>
    %27 = arith.addf %22, %26 : vector<1024x128xf32>
    %c20 = arith.constant 20 : index
    %c0_29 = arith.constant 0 : index
    %28 = vector.load %arg7[%c20, %c0_29] : memref<1088x4xf32, #tpu.memory_space<vmem>>, vector<1024x4xf32>
    %c5 = arith.constant 5 : index
    %c0_30 = arith.constant 0 : index
    %c0_31 = arith.constant 0 : index
    %29 = vector.load %arg3[%c5, %c0_30, %c0_31] : memref<9x4x128xf32, #tpu.memory_space<vmem>>, vector<1x4x128xf32>
    %30 = vector.shape_cast %29 : vector<1x4x128xf32> to vector<4x128xf32>
    %cst_32 = arith.constant dense<0.000000e+00> : vector<1024x128xf32>
    %31 = tpu.matmul %28, %30, %cst_32 {dimension_numbers = #tpu.dot_dimension_numbers<[1], [0], [0], [1], [0, 0, 1, 1], [], []>} : vector<1024x4xf32>, vector<4x128xf32>, vector<1024x128xf32> -> vector<1024x128xf32>
    %32 = arith.addf %27, %31 : vector<1024x128xf32>
    %c36 = arith.constant 36 : index
    %c0_33 = arith.constant 0 : index
    %33 = vector.load %arg7[%c36, %c0_33] : memref<1088x4xf32, #tpu.memory_space<vmem>>, vector<1024x4xf32>
    %c6 = arith.constant 6 : index
    %c0_34 = arith.constant 0 : index
    %c0_35 = arith.constant 0 : index
    %34 = vector.load %arg3[%c6, %c0_34, %c0_35] : memref<9x4x128xf32, #tpu.memory_space<vmem>>, vector<1x4x128xf32>
    %35 = vector.shape_cast %34 : vector<1x4x128xf32> to vector<4x128xf32>
    %cst_36 = arith.constant dense<0.000000e+00> : vector<1024x128xf32>
    %36 = tpu.matmul %33, %35, %cst_36 {dimension_numbers = #tpu.dot_dimension_numbers<[1], [0], [0], [1], [0, 0, 1, 1], [], []>} : vector<1024x4xf32>, vector<4x128xf32>, vector<1024x128xf32> -> vector<1024x128xf32>
    %37 = arith.addf %32, %36 : vector<1024x128xf32>
    %c37 = arith.constant 37 : index
    %c0_37 = arith.constant 0 : index
    %38 = vector.load %arg7[%c37, %c0_37] : memref<1088x4xf32, #tpu.memory_space<vmem>>, vector<1024x4xf32>
    %c7 = arith.constant 7 : index
    %c0_38 = arith.constant 0 : index
    %c0_39 = arith.constant 0 : index
    %39 = vector.load %arg3[%c7, %c0_38, %c0_39] : memref<9x4x128xf32, #tpu.memory_space<vmem>>, vector<1x4x128xf32>
    %40 = vector.shape_cast %39 : vector<1x4x128xf32> to vector<4x128xf32>
    %cst_40 = arith.constant dense<0.000000e+00> : vector<1024x128xf32>
    %41 = tpu.matmul %38, %40, %cst_40 {dimension_numbers = #tpu.dot_dimension_numbers<[1], [0], [0], [1], [0, 0, 1, 1], [], []>} : vector<1024x4xf32>, vector<4x128xf32>, vector<1024x128xf32> -> vector<1024x128xf32>
    %42 = arith.addf %37, %41 : vector<1024x128xf32>
    %c38 = arith.constant 38 : index
    %c0_41 = arith.constant 0 : index
    %43 = vector.load %arg7[%c38, %c0_41] : memref<1088x4xf32, #tpu.memory_space<vmem>>, vector<1024x4xf32>
    %c8 = arith.constant 8 : index
    %c0_42 = arith.constant 0 : index
    %c0_43 = arith.constant 0 : index
    %44 = vector.load %arg3[%c8, %c0_42, %c0_43] : memref<9x4x128xf32, #tpu.memory_space<vmem>>, vector<1x4x128xf32>
    %45 = vector.shape_cast %44 : vector<1x4x128xf32> to vector<4x128xf32>
    %cst_44 = arith.constant dense<0.000000e+00> : vector<1024x128xf32>
    %46 = tpu.matmul %43, %45, %cst_44 {dimension_numbers = #tpu.dot_dimension_numbers<[1], [0], [0], [1], [0, 0, 1, 1], [], []>} : vector<1024x4xf32>, vector<4x128xf32>, vector<1024x128xf32> -> vector<1024x128xf32>
    %47 = arith.addf %42, %46 : vector<1024x128xf32>
    %c0_45 = arith.constant 0 : index
    %c0_46 = arith.constant 0 : index
    %48 = vector.load %arg5[%c0_45, %c0_46] : memref<1024x128xf32, #tpu.memory_space<vmem>>, vector<1024x128xf32>
    tpu.vector_store %arg5[%c0_45, %c0_46], %47 {strides = array<i32>} : memref<1024x128xf32, #tpu.memory_space<vmem>>, vector<1024x128xf32>,
    %c0_47 = arith.constant 0 : index
    %c0_48 = arith.constant 0 : index
    %49 = vector.load %arg4[%c0_47, %c0_48] : memref<1024x1xf32, #tpu.memory_space<vmem>>, vector<1024x1xf32>
    %50 = vector.broadcast %49 : vector<1024x1xf32> to vector<1024x128xf32>
    %51 = arith.mulf %47, %50 : vector<1024x128xf32>
    %cst_49 = arith.constant dense<0.000000e+00> : vector<128xf32>
    %52 = vector.multi_reduction <add>, %51, %cst_49 [0] : vector<1024x128xf32> to vector<128xf32>
    %53 = arith.mulf %47, %51 : vector<1024x128xf32>
    %cst_50 = arith.constant dense<0.000000e+00> : vector<128xf32>
    %54 = vector.multi_reduction <add>, %53, %cst_50 [0] : vector<1024x128xf32> to vector<128xf32>
    %55 = vector.shape_cast %52 : vector<128xf32> to vector<1x128xf32>
    %56 = vector.shape_cast %54 : vector<128xf32> to vector<1x128xf32>
    %57 = tpu.concatenate %55, %56 in 0 : vector<1x128xf32>, vector<1x128xf32> -> vector<2x128xf32>
    %58 = vector.shape_cast %57 : vector<2x128xf32> to vector<1x2x128xf32>
    %c0_51 = arith.constant 0 : index
    %c0_52 = arith.constant 0 : index
    %c0_53 = arith.constant 0 : index
    %59 = vector.load %arg6[%c0_51, %c0_52, %c0_53] : memref<1x2x128xf32, #tpu.memory_space<vmem>>, vector<1x2x128xf32>
    tpu.vector_store %arg6[%c0_51, %c0_52, %c0_53], %58 {strides = array<i32>} : memref<1x2x128xf32, #tpu.memory_space<vmem>>, vector<1x2x128xf32>,
    return
  }
  func.func @transform_0(%arg0: i32) -> (i32, i32) {
    %c0_i32 = arith.constant 0 : i32
    %c0_i32_0 = arith.constant 0 : i32
    return %arg0, %c0_i32 : i32, i32
  }
  func.func @transform_1(%arg0: i32) -> (i32, i32) {
    %c16_i32 = arith.constant 16 : i32
    %0 = arith.muli %arg0, %c16_i32 : i32
    %c16_i32_0 = arith.constant 16 : i32
    %1 = arith.addi %0, %c16_i32_0 : i32
    %c0_i32 = arith.constant 0 : i32
    %c0_i32_1 = arith.constant 0 : i32
    return %1, %c0_i32 : i32, i32
  }
  func.func @transform_2(%arg0: i32) -> (i32, i32, i32) {
    %c0_i32 = arith.constant 0 : i32
    %c0_i32_0 = arith.constant 0 : i32
    %c0_i32_1 = arith.constant 0 : i32
    %c0_i32_2 = arith.constant 0 : i32
    return %c0_i32, %c0_i32_0, %c0_i32_1 : i32, i32, i32
  }
  func.func @transform_3(%arg0: i32) -> (i32, i32) {
    %c0_i32 = arith.constant 0 : i32
    %c0_i32_0 = arith.constant 0 : i32
    return %arg0, %c0_i32 : i32, i32
  }
  func.func @transform_4(%arg0: i32) -> (i32, i32) {
    %c0_i32 = arith.constant 0 : i32
    %c0_i32_0 = arith.constant 0 : i32
    return %arg0, %c0_i32 : i32, i32
  }
  func.func @transform_5(%arg0: i32) -> (i32, i32, i32) {
    %c0_i32 = arith.constant 0 : i32
    %c0_i32_0 = arith.constant 0 : i32
    %c0_i32_1 = arith.constant 0 : i32
    return %arg0, %c0_i32, %c0_i32_0 : i32, i32, i32
  }
}

</mosaic_0001>

<llo_original>
// kernel: tpu_custom_call.1
$region0: #{tpu_custom_call.1}
  #allocation0 [shape = 'u32[]', space=smem, size = 0x4, offset = 0x4, fixed_abs, tag = 'smem constant byte address 0x4 - core index']
  #allocation1 [shape = 'u32[72,128]{1,0:T(1,128)}', space=vmem, size = 0x9000, scoped, tag = 'internal scratch']
  #allocation2 [shape = 'f32[1088,4]{1,0:T(8,128)}', space=vmem, size = 0x88000, scoped, tag = 'scratch operand']
  %s0 = inlined_call_operand.vmem [shape: f32[2048,4], index: 0, kind: input, shape index: {}]
  %s1 = inlined_call_operand.vmem [shape: f32[2048,4], index: 1, kind: input, shape index: {}]
  %s2 = inlined_call_operand.vmem [shape: f32[9,4,128], index: 2, kind: input, shape index: {}]
  %s3 = inlined_call_operand.vmem [shape: f32[1024,1], index: 3, kind: input, shape index: {}]
  %s4 = inlined_call_operand.hbm [shape: f32[1024,128], index: 4, kind: output, shape index: {0}]
  %s5 = inlined_call_operand.hbm [shape: f32[1,2,128], index: 5, kind: output, shape index: {1}]
  %6 = xla_tuple %s4, %s5
  %s7 = sld [smem:[#allocation0]]
  $region34: #{tpu_custom_call.1} parent=0
    _
  %s9 = ssub.s32 1, %s7
  %s10 = scalar_select 0, %s9, %s7
  $region1: #{tpu_custom_call.1} parent=0
    #allocation3 [shape = 'u8[524288]{0}', space=vmem, size = 0x80000, scoped, tag = 'output window, operand 0, single buffered']
    #allocation4 [shape = 's32[1]{0}', space=sflag, size = 0x4, scoped, tag = 'scoped memory for tpu_custom_call.1']
    #allocation5 [shape = 'u8[1024]{0}', space=vmem, size = 0x400, scoped, tag = 'output window, operand 1, single buffered']
    #allocation6 [shape = 's32[1]{0}', space=sflag, size = 0x4, scoped, tag = 'scoped memory for tpu_custom_call.1']
    %11 = vsyncpa [#allocation4], 0
    %12 = vsyncpa [#allocation6], 0
    // Predicated region
    $region2: #{tpu_custom_call.1} parent=1 // pred_check
      _
    $region3: #{tpu_custom_call.1} parent=1 // pred_check_branch
      %14 = sbr.rel (0) target = $region5
    $region4: #{tpu_custom_call.1} parent=1 // pred_region
      _
    $region5: #{tpu_custom_call.1} parent=1 // pred_fallthru
      _
    // Predicated region
    $region6: #{tpu_custom_call.1} parent=1 // pred_check
      _
    $region7: #{tpu_custom_call.1} parent=1 // pred_check_branch
      %16 = sbr.rel (0) target = $region9
    $region8: #{tpu_custom_call.1} parent=1 // pred_region
      %s17 = smul.u32 0, 16
      %s18 = sadd.s32 %s17, 16
      %s19 = smul.u32 8, %s18
      %p20 = scmp.lt.s32.totalorder %s19, 255
      %s21 = scalar_select %p20, %s19, 255
      %s22 = smul.addr %s21, 8
      %s23 = scalar_lea.vmem %s1, %s22
      %s24 = smul.u32 0, 16
      %s25 = sadd.s32 %s24, 16
      %s26 = smul.u32 8, %s25
    $region9: #{tpu_custom_call.1} parent=1 // pred_fallthru
      _
    // Predicated region
    $region10: #{tpu_custom_call.1} parent=1 // pred_check
      _
    $region11: #{tpu_custom_call.1} parent=1 // pred_check_branch
      %28 = sbr.rel (0) target = $region13
    $region12: #{tpu_custom_call.1} parent=1 // pred_region
      _
    $region13: #{tpu_custom_call.1} parent=1 // pred_fallthru
      _
    // Predicated region
    $region14: #{tpu_custom_call.1} parent=1 // pred_check
      _
    $region15: #{tpu_custom_call.1} parent=1 // pred_check_branch
      %30 = sbr.rel (0) target = $region17
    $region16: #{tpu_custom_call.1} parent=1 // pred_region
      _
    $region17: #{tpu_custom_call.1} parent=1 // pred_fallthru
      _
    %s31 = smul.u32 0, 16
    %s32 = sadd.s32 %s31, 16
    %s33 = smul.u32 8, %s32
    %p34 = scmp.lt.s32.totalorder %s33, 255
    %s35 = scalar_select %p34, %s33, 255
    %s36 = smul.addr %s35, 8
    %s37 = scalar_lea.vmem %s1, %s36
    %s38 = smul.u32 0, 16
    %s39 = sadd.s32 %s38, 16
    %s40 = smul.u32 8, %s39
    %p41 = scmp.lt.s32.totalorder %s40, 255
    %s42 = scalar_select %p41, %s40, 255
    %s43 = smul.addr %s42, 8
    %s44 = scalar_lea.vmem %s1, %s43
    %s45 = smul.u32 0, 16
    %s46 = sadd.s32 %s45, 16
    %s47 = smul.u32 8, %s46
    %v48 = vld [vmem:[%s0] sm:$0xff]
    %v49 = vld [vmem:[%s0 + $0x8] sm:$0xff]
    %v50 = vld [vmem:[%s0 + $0x10] sm:$0xff]
    %v51 = vld [vmem:[%s0 + $0x18] sm:$0xff]
    %v52 = vld [vmem:[%s0 + $0x20] sm:$0xff]
    %v53 = vld [vmem:[%s0 + $0x28] sm:$0xff]
    %v54 = vld [vmem:[%s0 + $0x30] sm:$0xff]
    %v55 = vld [vmem:[%s0 + $0x38] sm:$0xff]
    %v56 = vld [vmem:[%s0 + $0x40] sm:$0xff]
    %v57 = vld [vmem:[%s0 + $0x48] sm:$0xff]
    %v58 = vld [vmem:[%s0 + $0x50] sm:$0xff]
    %v59 = vld [vmem:[%s0 + $0x58] sm:$0xff]
    %v60 = vld [vmem:[%s0 + $0x60] sm:$0xff]
    %v61 = vld [vmem:[%s0 + $0x68] sm:$0xff]
    %v62 = vld [vmem:[%s0 + $0x70] sm:$0xff]
    %v63 = vld [vmem:[%s0 + $0x78] sm:$0xff]
    %v64 = vld [vmem:[%s0 + $0x80] sm:$0xff]
    %v65 = vld [vmem:[%s0 + $0x88] sm:$0xff]
    %v66 = vld [vmem:[%s0 + $0x90] sm:$0xff]
    %v67 = vld [vmem:[%s0 + $0x98] sm:$0xff]
    %v68 = vld [vmem:[%s0 + $0xa0] sm:$0xff]
    %v69 = vld [vmem:[%s0 + $0xa8] sm:$0xff]
    %v70 = vld [vmem:[%s0 + $0xb0] sm:$0xff]
    %v71 = vld [vmem:[%s0 + $0xb8] sm:$0xff]
    %v72 = vld [vmem:[%s0 + $0xc0] sm:$0xff]
    %v73 = vld [vmem:[%s0 + $0xc8] sm:$0xff]
    %v74 = vld [vmem:[%s0 + $0xd0] sm:$0xff]
    %v75 = vld [vmem:[%s0 + $0xd8] sm:$0xff]
    %v76 = vld [vmem:[%s0 + $0xe0] sm:$0xff]
    %v77 = vld [vmem:[%s0 + $0xe8] sm:$0xff]
    %v78 = vld [vmem:[%s0 + $0xf0] sm:$0xff]
    %v79 = vld [vmem:[%s0 + $0xf8] sm:$0xff]
    %v80 = vld [vmem:[%s0 + $0x100] sm:$0xff]
    %v81 = vld [vmem:[%s0 + $0x108] sm:$0xff]
    %v82 = vld [vmem:[%s0 + $0x110] sm:$0xff]
    %v83 = vld [vmem:[%s0 + $0x118] sm:$0xff]
    %v84 = vld [vmem:[%s0 + $0x120] sm:$0xff]
    %v85 = vld [vmem:[%s0 + $0x128] sm:$0xff]
    %v86 = vld [vmem:[%s0 + $0x130] sm:$0xff]
    %v87 = vld [vmem:[%s0 + $0x138] sm:$0xff]
    %v88 = vld [vmem:[%s0 + $0x140] sm:$0xff]
    %v89 = vld [vmem:[%s0 + $0x148] sm:$0xff]
    %v90 = vld [vmem:[%s0 + $0x150] sm:$0xff]
    %v91 = vld [vmem:[%s0 + $0x158] sm:$0xff]
    %v92 = vld [vmem:[%s0 + $0x160] sm:$0xff]
    %v93 = vld [vmem:[%s0 + $0x168] sm:$0xff]
    %v94 = vld [vmem:[%s0 + $0x170] sm:$0xff]
    %v95 = vld [vmem:[%s0 + $0x178] sm:$0xff]
    %v96 = vld [vmem:[%s0 + $0x180] sm:$0xff]
    %v97 = vld [vmem:[%s0 + $0x188] sm:$0xff]
    %v98 = vld [vmem:[%s0 + $0x190] sm:$0xff]
    %v99 = vld [vmem:[%s0 + $0x198] sm:$0xff]
    %v100 = vld [vmem:[%s0 + $0x1a0] sm:$0xff]
    %v101 = vld [vmem:[%s0 + $0x1a8] sm:$0xff]
    %v102 = vld [vmem:[%s0 + $0x1b0] sm:$0xff]
    %v103 = vld [vmem:[%s0 + $0x1b8] sm:$0xff]
    %v104 = vld [vmem:[%s0 + $0x1c0] sm:$0xff]
    %v105 = vld [vmem:[%s0 + $0x1c8] sm:$0xff]
    %v106 = vld [vmem:[%s0 + $0x1d0] sm:$0xff]
    %v107 = vld [vmem:[%s0 + $0x1d8] sm:$0xff]
    %v108 = vld [vmem:[%s0 + $0x1e0] sm:$0xff]
    %v109 = vld [vmem:[%s0 + $0x1e8] sm:$0xff]
    %v110 = vld [vmem:[%s0 + $0x1f0] sm:$0xff]
    %v111 = vld [vmem:[%s0 + $0x1f8] sm:$0xff]
    %v112 = vld [vmem:[%s0 + $0x200] sm:$0xff]
    %v113 = vld [vmem:[%s0 + $0x208] sm:$0xff]
    %v114 = vld [vmem:[%s0 + $0x210] sm:$0xff]
    %v115 = vld [vmem:[%s0 + $0x218] sm:$0xff]
    %v116 = vld [vmem:[%s0 + $0x220] sm:$0xff]
    %v117 = vld [vmem:[%s0 + $0x228] sm:$0xff]
    %v118 = vld [vmem:[%s0 + $0x230] sm:$0xff]
    %v119 = vld [vmem:[%s0 + $0x238] sm:$0xff]
    %v120 = vld [vmem:[%s0 + $0x240] sm:$0xff]
    %v121 = vld [vmem:[%s0 + $0x248] sm:$0xff]
    %v122 = vld [vmem:[%s0 + $0x250] sm:$0xff]
    %v123 = vld [vmem:[%s0 + $0x258] sm:$0xff]
    %v124 = vld [vmem:[%s0 + $0x260] sm:$0xff]
    %v125 = vld [vmem:[%s0 + $0x268] sm:$0xff]
    %v126 = vld [vmem:[%s0 + $0x270] sm:$0xff]
    %v127 = vld [vmem:[%s0 + $0x278] sm:$0xff]
    %v128 = vld [vmem:[%s0 + $0x280] sm:$0xff]
    %v129 = vld [vmem:[%s0 + $0x288] sm:$0xff]
    %v130 = vld [vmem:[%s0 + $0x290] sm:$0xff]
    %v131 = vld [vmem:[%s0 + $0x298] sm:$0xff]
    %v132 = vld [vmem:[%s0 + $0x2a0] sm:$0xff]
    %v133 = vld [vmem:[%s0 + $0x2a8] sm:$0xff]
    %v134 = vld [vmem:[%s0 + $0x2b0] sm:$0xff]
    %v135 = vld [vmem:[%s0 + $0x2b8] sm:$0xff]
    %v136 = vld [vmem:[%s0 + $0x2c0] sm:$0xff]
    %v137 = vld [vmem:[%s0 + $0x2c8] sm:$0xff]
    %v138 = vld [vmem:[%s0 + $0x2d0] sm:$0xff]
    %v139 = vld [vmem:[%s0 + $0x2d8] sm:$0xff]
    %v140 = vld [vmem:[%s0 + $0x2e0] sm:$0xff]
    %v141 = vld [vmem:[%s0 + $0x2e8] sm:$0xff]
    %v142 = vld [vmem:[%s0 + $0x2f0] sm:$0xff]
    %v143 = vld [vmem:[%s0 + $0x2f8] sm:$0xff]
    %v144 = vld [vmem:[%s0 + $0x300] sm:$0xff]
    %v145 = vld [vmem:[%s0 + $0x308] sm:$0xff]
    %v146 = vld [vmem:[%s0 + $0x310] sm:$0xff]
    %v147 = vld [vmem:[%s0 + $0x318] sm:$0xff]
    %v148 = vld [vmem:[%s0 + $0x320] sm:$0xff]
    %v149 = vld [vmem:[%s0 + $0x328] sm:$0xff]
    %v150 = vld [vmem:[%s0 + $0x330] sm:$0xff]
    %v151 = vld [vmem:[%s0 + $0x338] sm:$0xff]
    %v152 = vld [vmem:[%s0 + $0x340] sm:$0xff]
    %v153 = vld [vmem:[%s0 + $0x348] sm:$0xff]
    %v154 = vld [vmem:[%s0 + $0x350] sm:$0xff]
    %v155 = vld [vmem:[%s0 + $0x358] sm:$0xff]
    %v156 = vld [vmem:[%s0 + $0x360] sm:$0xff]
    %v157 = vld [vmem:[%s0 + $0x368] sm:$0xff]
    %v158 = vld [vmem:[%s0 + $0x370] sm:$0xff]
    %v159 = vld [vmem:[%s0 + $0x378] sm:$0xff]
    %v160 = vld [vmem:[%s0 + $0x380] sm:$0xff]
    %v161 = vld [vmem:[%s0 + $0x388] sm:$0xff]
    %v162 = vld [vmem:[%s0 + $0x390] sm:$0xff]
    %v163 = vld [vmem:[%s0 + $0x398] sm:$0xff]
    %v164 = vld [vmem:[%s0 + $0x3a0] sm:$0xff]
    %v165 = vld [vmem:[%s0 + $0x3a8] sm:$0xff]
    %v166 = vld [vmem:[%s0 + $0x3b0] sm:$0xff]
    %v167 = vld [vmem:[%s0 + $0x3b8] sm:$0xff]
    %v168 = vld [vmem:[%s0 + $0x3c0] sm:$0xff]
    %v169 = vld [vmem:[%s0 + $0x3c8] sm:$0xff]
    %v170 = vld [vmem:[%s0 + $0x3d0] sm:$0xff]
    %v171 = vld [vmem:[%s0 + $0x3d8] sm:$0xff]
    %v172 = vld [vmem:[%s0 + $0x3e0] sm:$0xff]
    %v173 = vld [vmem:[%s0 + $0x3e8] sm:$0xff]
    %v174 = vld [vmem:[%s0 + $0x3f0] sm:$0xff]
    %v175 = vld [vmem:[%s0 + $0x3f8] sm:$0xff]
    %vm176 = vcmask 31744
    %177 = vst.msk [vmem:[#allocation2] sm:$0xff] %vm176, %v48
    %178 = vst.msk [vmem:[#allocation2 + $0x8] sm:$0xff] %vm176, %v49
    %179 = vst.msk [vmem:[#allocation2 + $0x10] sm:$0xff] %vm176, %v50
    %180 = vst.msk [vmem:[#allocation2 + $0x18] sm:$0xff] %vm176, %v51
    %181 = vst.msk [vmem:[#allocation2 + $0x20] sm:$0xff] %vm176, %v52
    %182 = vst.msk [vmem:[#allocation2 + $0x28] sm:$0xff] %vm176, %v53
    %183 = vst.msk [vmem:[#allocation2 + $0x30] sm:$0xff] %vm176, %v54
    %184 = vst.msk [vmem:[#allocation2 + $0x38] sm:$0xff] %vm176, %v55
    %185 = vst.msk [vmem:[#allocation2 + $0x40] sm:$0xff] %vm176, %v56
    %186 = vst.msk [vmem:[#allocation2 + $0x48] sm:$0xff] %vm176, %v57
    %187 = vst.msk [vmem:[#allocation2 + $0x50] sm:$0xff] %vm176, %v58
    %188 = vst.msk [vmem:[#allocation2 + $0x58] sm:$0xff] %vm176, %v59
    %189 = vst.msk [vmem:[#allocation2 + $0x60] sm:$0xff] %vm176, %v60
    %190 = vst.msk [vmem:[#allocation2 + $0x68] sm:$0xff] %vm176, %v61
    %191 = vst.msk [vmem:[#allocation2 + $0x70] sm:$0xff] %vm176, %v62
    %192 = vst.msk [vmem:[#allocation2 + $0x78] sm:$0xff] %vm176, %v63
    %193 = vst.msk [vmem:[#allocation2 + $0x80] sm:$0xff] %vm176, %v64
    %194 = vst.msk [vmem:[#allocation2 + $0x88] sm:$0xff] %vm176, %v65
    %195 = vst.msk [vmem:[#allocation2 + $0x90] sm:$0xff] %vm176, %v66
    %196 = vst.msk [vmem:[#allocation2 + $0x98] sm:$0xff] %vm176, %v67
    %197 = vst.msk [vmem:[#allocation2 + $0xa0] sm:$0xff] %vm176, %v68
    %198 = vst.msk [vmem:[#allocation2 + $0xa8] sm:$0xff] %vm176, %v69
    %199 = vst.msk [vmem:[#allocation2 + $0xb0] sm:$0xff] %vm176, %v70
    %200 = vst.msk [vmem:[#allocation2 + $0xb8] sm:$0xff] %vm176, %v71
    %201 = vst.msk [vmem:[#allocation2 + $0xc0] sm:$0xff] %vm176, %v72
    %202 = vst.msk [vmem:[#allocation2 + $0xc8] sm:$0xff] %vm176, %v73
    %203 = vst.msk [vmem:[#allocation2 + $0xd0] sm:$0xff] %vm176, %v74
    %204 = vst.msk [vmem:[#allocation2 + $0xd8] sm:$0xff] %vm176, %v75
    %205 = vst.msk [vmem:[#allocation2 + $0xe0] sm:$0xff] %vm176, %v76
    %206 = vst.msk [vmem:[#allocation2 + $0xe8] sm:$0xff] %vm176, %v77
    %207 = vst.msk [vmem:[#allocation2 + $0xf0] sm:$0xff] %vm176, %v78
    %208 = vst.msk [vmem:[#allocation2 + $0xf8] sm:$0xff] %vm176, %v79
    %209 = vst.msk [vmem:[#allocation2 + $0x100] sm:$0xff] %vm176, %v80
    %210 = vst.msk [vmem:[#allocation2 + $0x108] sm:$0xff] %vm176, %v81
    %211 = vst.msk [vmem:[#allocation2 + $0x110] sm:$0xff] %vm176, %v82
    %212 = vst.msk [vmem:[#allocation2 + $0x118] sm:$0xff] %vm176, %v83
    %213 = vst.msk [vmem:[#allocation2 + $0x120] sm:$0xff] %vm176, %v84
    %214 = vst.msk [vmem:[#allocation2 + $0x128] sm:$0xff] %vm176, %v85
    %215 = vst.msk [vmem:[#allocation2 + $0x130] sm:$0xff] %vm176, %v86
    %216 = vst.msk [vmem:[#allocation2 + $0x138] sm:$0xff] %vm176, %v87
    %217 = vst.msk [vmem:[#allocation2 + $0x140] sm:$0xff] %vm176, %v88
    %218 = vst.msk [vmem:[#allocation2 + $0x148] sm:$0xff] %vm176, %v89
    %219 = vst.msk [vmem:[#allocation2 + $0x150] sm:$0xff] %vm176, %v90
    %220 = vst.msk [vmem:[#allocation2 + $0x158] sm:$0xff] %vm176, %v91
    %221 = vst.msk [vmem:[#allocation2 + $0x160] sm:$0xff] %vm176, %v92
    %222 = vst.msk [vmem:[#allocation2 + $0x168] sm:$0xff] %vm176, %v93
    %223 = vst.msk [vmem:[#allocation2 + $0x170] sm:$0xff] %vm176, %v94
    %224 = vst.msk [vmem:[#allocation2 + $0x178] sm:$0xff] %vm176, %v95
    %225 = vst.msk [vmem:[#allocation2 + $0x180] sm:$0xff] %vm176, %v96
    %226 = vst.msk [vmem:[#allocation2 + $0x188] sm:$0xff] %vm176, %v97
    %227 = vst.msk [vmem:[#allocation2 + $0x190] sm:$0xff] %vm176, %v98
    %228 = vst.msk [vmem:[#allocation2 + $0x198] sm:$0xff] %vm176, %v99
    %229 = vst.msk [vmem:[#allocation2 + $0x1a0] sm:$0xff] %vm176, %v100
    %230 = vst.msk [vmem:[#allocation2 + $0x1a8] sm:$0xff] %vm176, %v101
    %231 = vst.msk [vmem:[#allocation2 + $0x1b0] sm:$0xff] %vm176, %v102
    %232 = vst.msk [vmem:[#allocation2 + $0x1b8] sm:$0xff] %vm176, %v103
    %233 = vst.msk [vmem:[#allocation2 + $0x1c0] sm:$0xff] %vm176, %v104
    %234 = vst.msk [vmem:[#allocation2 + $0x1c8] sm:$0xff] %vm176, %v105
    %235 = vst.msk [vmem:[#allocation2 + $0x1d0] sm:$0xff] %vm176, %v106
    %236 = vst.msk [vmem:[#allocation2 + $0x1d8] sm:$0xff] %vm176, %v107
    %237 = vst.msk [vmem:[#allocation2 + $0x1e0] sm:$0xff] %vm176, %v108
    %238 = vst.msk [vmem:[#allocation2 + $0x1e8] sm:$0xff] %vm176, %v109
    %239 = vst.msk [vmem:[#allocation2 + $0x1f0] sm:$0xff] %vm176, %v110
    %240 = vst.msk [vmem:[#allocation2 + $0x1f8] sm:$0xff] %vm176, %v111
    %241 = vst.msk [vmem:[#allocation2 + $0x200] sm:$0xff] %vm176, %v112
    %242 = vst.msk [vmem:[#allocation2 + $0x208] sm:$0xff] %vm176, %v113
    %243 = vst.msk [vmem:[#allocation2 + $0x210] sm:$0xff] %vm176, %v114
    %244 = vst.msk [vmem:[#allocation2 + $0x218] sm:$0xff] %vm176, %v115
    %245 = vst.msk [vmem:[#allocation2 + $0x220] sm:$0xff] %vm176, %v116
    %246 = vst.msk [vmem:[#allocation2 + $0x228] sm:$0xff] %vm176, %v117
    %247 = vst.msk [vmem:[#allocation2 + $0x230] sm:$0xff] %vm176, %v118
    %248 = vst.msk [vmem:[#allocation2 + $0x238] sm:$0xff] %vm176, %v119
    %249 = vst.msk [vmem:[#allocation2 + $0x240] sm:$0xff] %vm176, %v120
    %250 = vst.msk [vmem:[#allocation2 + $0x248] sm:$0xff] %vm176, %v121
    %251 = vst.msk [vmem:[#allocation2 + $0x250] sm:$0xff] %vm176, %v122
    %252 = vst.msk [vmem:[#allocation2 + $0x258] sm:$0xff] %vm176, %v123
    %253 = vst.msk [vmem:[#allocation2 + $0x260] sm:$0xff] %vm176, %v124
    %254 = vst.msk [vmem:[#allocation2 + $0x268] sm:$0xff] %vm176, %v125
    %255 = vst.msk [vmem:[#allocation2 + $0x270] sm:$0xff] %vm176, %v126
    %256 = vst.msk [vmem:[#allocation2 + $0x278] sm:$0xff] %vm176, %v127
    %257 = vst.msk [vmem:[#allocation2 + $0x280] sm:$0xff] %vm176, %v128
    %258 = vst.msk [vmem:[#allocation2 + $0x288] sm:$0xff] %vm176, %v129
    %259 = vst.msk [vmem:[#allocation2 + $0x290] sm:$0xff] %vm176, %v130
    %260 = vst.msk [vmem:[#allocation2 + $0x298] sm:$0xff] %vm176, %v131
    %261 = vst.msk [vmem:[#allocation2 + $0x2a0] sm:$0xff] %vm176, %v132
    %262 = vst.msk [vmem:[#allocation2 + $0x2a8] sm:$0xff] %vm176, %v133
    %263 = vst.msk [vmem:[#allocation2 + $0x2b0] sm:$0xff] %vm176, %v134
    %264 = vst.msk [vmem:[#allocation2 + $0x2b8] sm:$0xff] %vm176, %v135
    %265 = vst.msk [vmem:[#allocation2 + $0x2c0] sm:$0xff] %vm176, %v136
    %266 = vst.msk [vmem:[#allocation2 + $0x2c8] sm:$0xff] %vm176, %v137
    %267 = vst.msk [vmem:[#allocation2 + $0x2d0] sm:$0xff] %vm176, %v138
    %268 = vst.msk [vmem:[#allocation2 + $0x2d8] sm:$0xff] %vm176, %v139
    %269 = vst.msk [vmem:[#allocation2 + $0x2e0] sm:$0xff] %vm176, %v140
    %270 = vst.msk [vmem:[#allocation2 + $0x2e8] sm:$0xff] %vm176, %v141
    %271 = vst.msk [vmem:[#allocation2 + $0x2f0] sm:$0xff] %vm176, %v142
    %272 = vst.msk [vmem:[#allocation2 + $0x2f8] sm:$0xff] %vm176, %v143
    %273 = vst.msk [vmem:[#allocation2 + $0x300] sm:$0xff] %vm176, %v144
    %274 = vst.msk [vmem:[#allocation2 + $0x308] sm:$0xff] %vm176, %v145
    %275 = vst.msk [vmem:[#allocation2 + $0x310] sm:$0xff] %vm176, %v146
    %276 = vst.msk [vmem:[#allocation2 + $0x318] sm:$0xff] %vm176, %v147
    %277 = vst.msk [vmem:[#allocation2 + $0x320] sm:$0xff] %vm176, %v148
    %278 = vst.msk [vmem:[#allocation2 + $0x328] sm:$0xff] %vm176, %v149
    %279 = vst.msk [vmem:[#allocation2 + $0x330] sm:$0xff] %vm176, %v150
    %280 = vst.msk [vmem:[#allocation2 + $0x338] sm:$0xff] %vm176, %v151
    %281 = vst.msk [vmem:[#allocation2 + $0x340] sm:$0xff] %vm176, %v152
    %282 = vst.msk [vmem:[#allocation2 + $0x348] sm:$0xff] %vm176, %v153
    %283 = vst.msk [vmem:[#allocation2 + $0x350] sm:$0xff] %vm176, %v154
    %284 = vst.msk [vmem:[#allocation2 + $0x358] sm:$0xff] %vm176, %v155
    %285 = vst.msk [vmem:[#allocation2 + $0x360] sm:$0xff] %vm176, %v156
    %286 = vst.msk [vmem:[#allocation2 + $0x368] sm:$0xff] %vm176, %v157
    %287 = vst.msk [vmem:[#allocation2 + $0x370] sm:$0xff] %vm176, %v158
    %288 = vst.msk [vmem:[#allocation2 + $0x378] sm:$0xff] %vm176, %v159
    %289 = vst.msk [vmem:[#allocation2 + $0x380] sm:$0xff] %vm176, %v160
    %290 = vst.msk [vmem:[#allocation2 + $0x388] sm:$0xff] %vm176, %v161
    %291 = vst.msk [vmem:[#allocation2 + $0x390] sm:$0xff] %vm176, %v162
    %292 = vst.msk [vmem:[#allocation2 + $0x398] sm:$0xff] %vm176, %v163
    %293 = vst.msk [vmem:[#allocation2 + $0x3a0] sm:$0xff] %vm176, %v164
    %294 = vst.msk [vmem:[#allocation2 + $0x3a8] sm:$0xff] %vm176, %v165
    %295 = vst.msk [vmem:[#allocation2 + $0x3b0] sm:$0xff] %vm176, %v166
    %296 = vst.msk [vmem:[#allocation2 + $0x3b8] sm:$0xff] %vm176, %v167
    %297 = vst.msk [vmem:[#allocation2 + $0x3c0] sm:$0xff] %vm176, %v168
    %298 = vst.msk [vmem:[#allocation2 + $0x3c8] sm:$0xff] %vm176, %v169
    %299 = vst.msk [vmem:[#allocation2 + $0x3d0] sm:$0xff] %vm176, %v170
    %300 = vst.msk [vmem:[#allocation2 + $0x3d8] sm:$0xff] %vm176, %v171
    %301 = vst.msk [vmem:[#allocation2 + $0x3e0] sm:$0xff] %vm176, %v172
    %302 = vst.msk [vmem:[#allocation2 + $0x3e8] sm:$0xff] %vm176, %v173
    %303 = vst.msk [vmem:[#allocation2 + $0x3f0] sm:$0xff] %vm176, %v174
    %304 = vst.msk [vmem:[#allocation2 + $0x3f8] sm:$0xff] %vm176, %v175
    %v305 = vld [vmem:[%s44] sm:$0xff]
    %v306 = vld [vmem:[%s44 + $0x8] sm:$0xff]
    %v307 = vld [vmem:[%s44 + $0x10] sm:$0xff]
    %v308 = vld [vmem:[%s44 + $0x18] sm:$0xff]
    %v309 = vld [vmem:[%s44 + $0x20] sm:$0xff]
    %v310 = vld [vmem:[%s44 + $0x28] sm:$0xff]
    %v311 = vld [vmem:[%s44 + $0x30] sm:$0xff]
    %v312 = vld [vmem:[%s44 + $0x38] sm:$0xff]
    %313 = vst.msk [vmem:[#allocation2 + $0x400] sm:$0xff] %vm176, %v305
    %314 = vst.msk [vmem:[#allocation2 + $0x408] sm:$0xff] %vm176, %v306
    %315 = vst.msk [vmem:[#allocation2 + $0x410] sm:$0xff] %vm176, %v307
    %316 = vst.msk [vmem:[#allocation2 + $0x418] sm:$0xff] %vm176, %v308
    %317 = vst.msk [vmem:[#allocation2 + $0x420] sm:$0xff] %vm176, %v309
    %318 = vst.msk [vmem:[#allocation2 + $0x428] sm:$0xff] %vm176, %v310
    %319 = vst.msk [vmem:[#allocation2 + $0x430] sm:$0xff] %vm176, %v311
    %320 = vst.msk [vmem:[#allocation2 + $0x438] sm:$0xff] %vm176, %v312
    %v321 = vld [vmem:[#allocation2] sm:$0xff]
    %v322 = vld [vmem:[#allocation2 + $0x8] sm:$0xff]
    %v323 = vld [vmem:[#allocation2 + $0x10] sm:$0xff]
    %v324 = vld [vmem:[#allocation2 + $0x18] sm:$0xff]
    %v325 = vld [vmem:[#allocation2 + $0x20] sm:$0xff]
    %v326 = vld [vmem:[#allocation2 + $0x28] sm:$0xff]
    %v327 = vld [vmem:[#allocation2 + $0x30] sm:$0xff]
    %v328 = vld [vmem:[#allocation2 + $0x38] sm:$0xff]
    %v329 = vld [vmem:[#allocation2 + $0x40] sm:$0xff]
    %v330 = vld [vmem:[#allocation2 + $0x48] sm:$0xff]
    %v331 = vld [vmem:[#allocation2 + $0x50] sm:$0xff]
    %v332 = vld [vmem:[#allocation2 + $0x58] sm:$0xff]
    %v333 = vld [vmem:[#allocation2 + $0x60] sm:$0xff]
    %v334 = vld [vmem:[#allocation2 + $0x68] sm:$0xff]
    %v335 = vld [vmem:[#allocation2 + $0x70] sm:$0xff]
    %v336 = vld [vmem:[#allocation2 + $0x78] sm:$0xff]
    %v337 = vld [vmem:[#allocation2 + $0x80] sm:$0xff]
    %v338 = vld [vmem:[#allocation2 + $0x88] sm:$0xff]
    %v339 = vld [vmem:[#allocation2 + $0x90] sm:$0xff]
    %v340 = vld [vmem:[#allocation2 + $0x98] sm:$0xff]
    %v341 = vld [vmem:[#allocation2 + $0xa0] sm:$0xff]
    %v342 = vld [vmem:[#allocation2 + $0xa8] sm:$0xff]
    %v343 = vld [vmem:[#allocation2 + $0xb0] sm:$0xff]
    %v344 = vld [vmem:[#allocation2 + $0xb8] sm:$0xff]
    %v345 = vld [vmem:[#allocation2 + $0xc0] sm:$0xff]
    %v346 = vld [vmem:[#allocation2 + $0xc8] sm:$0xff]
    %v347 = vld [vmem:[#allocation2 + $0xd0] sm:$0xff]
    %v348 = vld [vmem:[#allocation2 + $0xd8] sm:$0xff]
    %v349 = vld [vmem:[#allocation2 + $0xe0] sm:$0xff]
    %v350 = vld [vmem:[#allocation2 + $0xe8] sm:$0xff]
    %v351 = vld [vmem:[#allocation2 + $0xf0] sm:$0xff]
    %v352 = vld [vmem:[#allocation2 + $0xf8] sm:$0xff]
    %v353 = vld [vmem:[#allocation2 + $0x100] sm:$0xff]
    %v354 = vld [vmem:[#allocation2 + $0x108] sm:$0xff]
    %v355 = vld [vmem:[#allocation2 + $0x110] sm:$0xff]
    %v356 = vld [vmem:[#allocation2 + $0x118] sm:$0xff]
    %v357 = vld [vmem:[#allocation2 + $0x120] sm:$0xff]
    %v358 = vld [vmem:[#allocation2 + $0x128] sm:$0xff]
    %v359 = vld [vmem:[#allocation2 + $0x130] sm:$0xff]
    %v360 = vld [vmem:[#allocation2 + $0x138] sm:$0xff]
    %v361 = vld [vmem:[#allocation2 + $0x140] sm:$0xff]
    %v362 = vld [vmem:[#allocation2 + $0x148] sm:$0xff]
    %v363 = vld [vmem:[#allocation2 + $0x150] sm:$0xff]
    %v364 = vld [vmem:[#allocation2 + $0x158] sm:$0xff]
    %v365 = vld [vmem:[#allocation2 + $0x160] sm:$0xff]
    %v366 = vld [vmem:[#allocation2 + $0x168] sm:$0xff]
    %v367 = vld [vmem:[#allocation2 + $0x170] sm:$0xff]
    %v368 = vld [vmem:[#allocation2 + $0x178] sm:$0xff]
    %v369 = vld [vmem:[#allocation2 + $0x180] sm:$0xff]
    %v370 = vld [vmem:[#allocation2 + $0x188] sm:$0xff]
    %v371 = vld [vmem:[#allocation2 + $0x190] sm:$0xff]
    %v372 = vld [vmem:[#allocation2 + $0x198] sm:$0xff]
    %v373 = vld [vmem:[#allocation2 + $0x1a0] sm:$0xff]
    %v374 = vld [vmem:[#allocation2 + $0x1a8] sm:$0xff]
    %v375 = vld [vmem:[#allocation2 + $0x1b0] sm:$0xff]
    %v376 = vld [vmem:[#allocation2 + $0x1b8] sm:$0xff]
    %v377 = vld [vmem:[#allocation2 + $0x1c0] sm:$0xff]
    %v378 = vld [vmem:[#allocation2 + $0x1c8] sm:$0xff]
    %v379 = vld [vmem:[#allocation2 + $0x1d0] sm:$0xff]
    %v380 = vld [vmem:[#allocation2 + $0x1d8] sm:$0xff]
    %v381 = vld [vmem:[#allocation2 + $0x1e0] sm:$0xff]
    %v382 = vld [vmem:[#allocation2 + $0x1e8] sm:$0xff]
    %v383 = vld [vmem:[#allocation2 + $0x1f0] sm:$0xff]
    %v384 = vld [vmem:[#allocation2 + $0x1f8] sm:$0xff]
    %v385 = vld [vmem:[#allocation2 + $0x200] sm:$0xff]
    %v386 = vld [vmem:[#allocation2 + $0x208] sm:$0xff]
    %v387 = vld [vmem:[#allocation2 + $0x210] sm:$0xff]
    %v388 = vld [vmem:[#allocation2 + $0x218] sm:$0xff]
    %v389 = vld [vmem:[#allocation2 + $0x220] sm:$0xff]
    %v390 = vld [vmem:[#allocation2 + $0x228] sm:$0xff]
    %v391 = vld [vmem:[#allocation2 + $0x230] sm:$0xff]
    %v392 = vld [vmem:[#allocation2 + $0x238] sm:$0xff]
    %v393 = vld [vmem:[#allocation2 + $0x240] sm:$0xff]
    %v394 = vld [vmem:[#allocation2 + $0x248] sm:$0xff]
    %v395 = vld [vmem:[#allocation2 + $0x250] sm:$0xff]
    %v396 = vld [vmem:[#allocation2 + $0x258] sm:$0xff]
    %v397 = vld [vmem:[#allocation2 + $0x260] sm:$0xff]
    %v398 = vld [vmem:[#allocation2 + $0x268] sm:$0xff]
    %v399 = vld [vmem:[#allocation2 + $0x270] sm:$0xff]
    %v400 = vld [vmem:[#allocation2 + $0x278] sm:$0xff]
    %v401 = vld [vmem:[#allocation2 + $0x280] sm:$0xff]
    %v402 = vld [vmem:[#allocation2 + $0x288] sm:$0xff]
    %v403 = vld [vmem:[#allocation2 + $0x290] sm:$0xff]
    %v404 = vld [vmem:[#allocation2 + $0x298] sm:$0xff]
    %v405 = vld [vmem:[#allocation2 + $0x2a0] sm:$0xff]
    %v406 = vld [vmem:[#allocation2 + $0x2a8] sm:$0xff]
    %v407 = vld [vmem:[#allocation2 + $0x2b0] sm:$0xff]
    %v408 = vld [vmem:[#allocation2 + $0x2b8] sm:$0xff]
    %v409 = vld [vmem:[#allocation2 + $0x2c0] sm:$0xff]
    %v410 = vld [vmem:[#allocation2 + $0x2c8] sm:$0xff]
    %v411 = vld [vmem:[#allocation2 + $0x2d0] sm:$0xff]
    %v412 = vld [vmem:[#allocation2 + $0x2d8] sm:$0xff]
    %v413 = vld [vmem:[#allocation2 + $0x2e0] sm:$0xff]
    %v414 = vld [vmem:[#allocation2 + $0x2e8] sm:$0xff]
    %v415 = vld [vmem:[#allocation2 + $0x2f0] sm:$0xff]
    %v416 = vld [vmem:[#allocation2 + $0x2f8] sm:$0xff]
    %v417 = vld [vmem:[#allocation2 + $0x300] sm:$0xff]
    %v418 = vld [vmem:[#allocation2 + $0x308] sm:$0xff]
    %v419 = vld [vmem:[#allocation2 + $0x310] sm:$0xff]
    %v420 = vld [vmem:[#allocation2 + $0x318] sm:$0xff]
    %v421 = vld [vmem:[#allocation2 + $0x320] sm:$0xff]
    %v422 = vld [vmem:[#allocation2 + $0x328] sm:$0xff]
    %v423 = vld [vmem:[#allocation2 + $0x330] sm:$0xff]
    %v424 = vld [vmem:[#allocation2 + $0x338] sm:$0xff]
    %v425 = vld [vmem:[#allocation2 + $0x340] sm:$0xff]
    %v426 = vld [vmem:[#allocation2 + $0x348] sm:$0xff]
    %v427 = vld [vmem:[#allocation2 + $0x350] sm:$0xff]
    %v428 = vld [vmem:[#allocation2 + $0x358] sm:$0xff]
    %v429 = vld [vmem:[#allocation2 + $0x360] sm:$0xff]
    %v430 = vld [vmem:[#allocation2 + $0x368] sm:$0xff]
    %v431 = vld [vmem:[#allocation2 + $0x370] sm:$0xff]
    %v432 = vld [vmem:[#allocation2 + $0x378] sm:$0xff]
    %v433 = vld [vmem:[#allocation2 + $0x380] sm:$0xff]
    %v434 = vld [vmem:[#allocation2 + $0x388] sm:$0xff]
    %v435 = vld [vmem:[#allocation2 + $0x390] sm:$0xff]
    %v436 = vld [vmem:[#allocation2 + $0x398] sm:$0xff]
    %v437 = vld [vmem:[#allocation2 + $0x3a0] sm:$0xff]
    %v438 = vld [vmem:[#allocation2 + $0x3a8] sm:$0xff]
    %v439 = vld [vmem:[#allocation2 + $0x3b0] sm:$0xff]
    %v440 = vld [vmem:[#allocation2 + $0x3b8] sm:$0xff]
    %v441 = vld [vmem:[#allocation2 + $0x3c0] sm:$0xff]
    %v442 = vld [vmem:[#allocation2 + $0x3c8] sm:$0xff]
    %v443 = vld [vmem:[#allocation2 + $0x3d0] sm:$0xff]
    %v444 = vld [vmem:[#allocation2 + $0x3d8] sm:$0xff]
    %v445 = vld [vmem:[#allocation2 + $0x3e0] sm:$0xff]
    %v446 = vld [vmem:[#allocation2 + $0x3e8] sm:$0xff]
    %v447 = vld [vmem:[#allocation2 + $0x3f0] sm:$0xff]
    %v448 = vld [vmem:[#allocation2 + $0x3f8] sm:$0xff]
    %v449 = vld [vmem:[%s2] sm:$0xf]
    %v450 = vld [vmem:[#allocation2 + $0x1] sm:$0xff]
    %v451 = vld [vmem:[#allocation2 + $0x9] sm:$0xff]
    %v452 = vld [vmem:[#allocation2 + $0x11] sm:$0xff]
    %v453 = vld [vmem:[#allocation2 + $0x19] sm:$0xff]
    %v454 = vld [vmem:[#allocation2 + $0x21] sm:$0xff]
    %v455 = vld [vmem:[#allocation2 + $0x29] sm:$0xff]
    %v456 = vld [vmem:[#allocation2 + $0x31] sm:$0xff]
    %v457 = vld [vmem:[#allocation2 + $0x39] sm:$0xff]
    %v458 = vld [vmem:[#allocation2 + $0x41] sm:$0xff]
    %v459 = vld [vmem:[#allocation2 + $0x49] sm:$0xff]
    %v460 = vld [vmem:[#allocation2 + $0x51] sm:$0xff]
    %v461 = vld [vmem:[#allocation2 + $0x59] sm:$0xff]
    %v462 = vld [vmem:[#allocation2 + $0x61] sm:$0xff]
    %v463 = vld [vmem:[#allocation2 + $0x69] sm:$0xff]
    %v464 = vld [vmem:[#allocation2 + $0x71] sm:$0xff]
    %v465 = vld [vmem:[#allocation2 + $0x79] sm:$0xff]
    %v466 = vld [vmem:[#allocation2 + $0x81] sm:$0xff]
    %v467 = vld [vmem:[#allocation2 + $0x89] sm:$0xff]
    %v468 = vld [vmem:[#allocation2 + $0x91] sm:$0xff]
    %v469 = vld [vmem:[#allocation2 + $0x99] sm:$0xff]
    %v470 = vld [vmem:[#allocation2 + $0xa1] sm:$0xff]
    %v471 = vld [vmem:[#allocation2 + $0xa9] sm:$0xff]
    %v472 = vld [vmem:[#allocation2 + $0xb1] sm:$0xff]
    %v473 = vld [vmem:[#allocation2 + $0xb9] sm:$0xff]
    %v474 = vld [vmem:[#allocation2 + $0xc1] sm:$0xff]
    %v475 = vld [vmem:[#allocation2 + $0xc9] sm:$0xff]
    %v476 = vld [vmem:[#allocation2 + $0xd1] sm:$0xff]
    %v477 = vld [vmem:[#allocation2 + $0xd9] sm:$0xff]
    %v478 = vld [vmem:[#allocation2 + $0xe1] sm:$0xff]
    %v479 = vld [vmem:[#allocation2 + $0xe9] sm:$0xff]
    %v480 = vld [vmem:[#allocation2 + $0xf1] sm:$0xff]
    %v481 = vld [vmem:[#allocation2 + $0xf9] sm:$0xff]
    %v482 = vld [vmem:[#allocation2 + $0x101] sm:$0xff]
    %v483 = vld [vmem:[#allocation2 + $0x109] sm:$0xff]
    %v484 = vld [vmem:[#allocation2 + $0x111] sm:$0xff]
    %v485 = vld [vmem:[#allocation2 + $0x119] sm:$0xff]
    %v486 = vld [vmem:[#allocation2 + $0x121] sm:$0xff]
    %v487 = vld [vmem:[#allocation2 + $0x129] sm:$0xff]
    %v488 = vld [vmem:[#allocation2 + $0x131] sm:$0xff]
    %v489 = vld [vmem:[#allocation2 + $0x139] sm:$0xff]
    %v490 = vld [vmem:[#allocation2 + $0x141] sm:$0xff]
    %v491 = vld [vmem:[#allocation2 + $0x149] sm:$0xff]
    %v492 = vld [vmem:[#allocation2 + $0x151] sm:$0xff]
    %v493 = vld [vmem:[#allocation2 + $0x159] sm:$0xff]
    %v494 = vld [vmem:[#allocation2 + $0x161] sm:$0xff]
    %v495 = vld [vmem:[#allocation2 + $0x169] sm:$0xff]
    %v496 = vld [vmem:[#allocation2 + $0x171] sm:$0xff]
    %v497 = vld [vmem:[#allocation2 + $0x179] sm:$0xff]
    %v498 = vld [vmem:[#allocation2 + $0x181] sm:$0xff]
    %v499 = vld [vmem:[#allocation2 + $0x189] sm:$0xff]
    %v500 = vld [vmem:[#allocation2 + $0x191] sm:$0xff]
    %v501 = vld [vmem:[#allocation2 + $0x199] sm:$0xff]
    %v502 = vld [vmem:[#allocation2 + $0x1a1] sm:$0xff]
    %v503 = vld [vmem:[#allocation2 + $0x1a9] sm:$0xff]
    %v504 = vld [vmem:[#allocation2 + $0x1b1] sm:$0xff]
    %v505 = vld [vmem:[#allocation2 + $0x1b9] sm:$0xff]
    %v506 = vld [vmem:[#allocation2 + $0x1c1] sm:$0xff]
    %v507 = vld [vmem:[#allocation2 + $0x1c9] sm:$0xff]
    %v508 = vld [vmem:[#allocation2 + $0x1d1] sm:$0xff]
    %v509 = vld [vmem:[#allocation2 + $0x1d9] sm:$0xff]
    %v510 = vld [vmem:[#allocation2 + $0x1e1] sm:$0xff]
    %v511 = vld [vmem:[#allocation2 + $0x1e9] sm:$0xff]
    %v512 = vld [vmem:[#allocation2 + $0x1f1] sm:$0xff]
    %v513 = vld [vmem:[#allocation2 + $0x1f9] sm:$0xff]
    %v514 = vld [vmem:[#allocation2 + $0x201] sm:$0xff]
    %v515 = vld [vmem:[#allocation2 + $0x209] sm:$0xff]
    %v516 = vld [vmem:[#allocation2 + $0x211] sm:$0xff]
    %v517 = vld [vmem:[#allocation2 + $0x219] sm:$0xff]
    %v518 = vld [vmem:[#allocation2 + $0x221] sm:$0xff]
    %v519 = vld [vmem:[#allocation2 + $0x229] sm:$0xff]
    %v520 = vld [vmem:[#allocation2 + $0x231] sm:$0xff]
    %v521 = vld [vmem:[#allocation2 + $0x239] sm:$0xff]
    %v522 = vld [vmem:[#allocation2 + $0x241] sm:$0xff]
    %v523 = vld [vmem:[#allocation2 + $0x249] sm:$0xff]
    %v524 = vld [vmem:[#allocation2 + $0x251] sm:$0xff]
    %v525 = vld [vmem:[#allocation2 + $0x259] sm:$0xff]
    %v526 = vld [vmem:[#allocation2 + $0x261] sm:$0xff]
    %v527 = vld [vmem:[#allocation2 + $0x269] sm:$0xff]
    %v528 = vld [vmem:[#allocation2 + $0x271] sm:$0xff]
    %v529 = vld [vmem:[#allocation2 + $0x279] sm:$0xff]
    %v530 = vld [vmem:[#allocation2 + $0x281] sm:$0xff]
    %v531 = vld [vmem:[#allocation2 + $0x289] sm:$0xff]
    %v532 = vld [vmem:[#allocation2 + $0x291] sm:$0xff]
    %v533 = vld [vmem:[#allocation2 + $0x299] sm:$0xff]
    %v534 = vld [vmem:[#allocation2 + $0x2a1] sm:$0xff]
    %v535 = vld [vmem:[#allocation2 + $0x2a9] sm:$0xff]
    %v536 = vld [vmem:[#allocation2 + $0x2b1] sm:$0xff]
    %v537 = vld [vmem:[#allocation2 + $0x2b9] sm:$0xff]
    %v538 = vld [vmem:[#allocation2 + $0x2c1] sm:$0xff]
    %v539 = vld [vmem:[#allocation2 + $0x2c9] sm:$0xff]
    %v540 = vld [vmem:[#allocation2 + $0x2d1] sm:$0xff]
    %v541 = vld [vmem:[#allocation2 + $0x2d9] sm:$0xff]
    %v542 = vld [vmem:[#allocation2 + $0x2e1] sm:$0xff]
    %v543 = vld [vmem:[#allocation2 + $0x2e9] sm:$0xff]
    %v544 = vld [vmem:[#allocation2 + $0x2f1] sm:$0xff]
    %v545 = vld [vmem:[#allocation2 + $0x2f9] sm:$0xff]
    %v546 = vld [vmem:[#allocation2 + $0x301] sm:$0xff]
    %v547 = vld [vmem:[#allocation2 + $0x309] sm:$0xff]
    %v548 = vld [vmem:[#allocation2 + $0x311] sm:$0xff]
    %v549 = vld [vmem:[#allocation2 + $0x319] sm:$0xff]
    %v550 = vld [vmem:[#allocation2 + $0x321] sm:$0xff]
    %v551 = vld [vmem:[#allocation2 + $0x329] sm:$0xff]
    %v552 = vld [vmem:[#allocation2 + $0x331] sm:$0xff]
    %v553 = vld [vmem:[#allocation2 + $0x339] sm:$0xff]
    %v554 = vld [vmem:[#allocation2 + $0x341] sm:$0xff]
    %v555 = vld [vmem:[#allocation2 + $0x349] sm:$0xff]
    %v556 = vld [vmem:[#allocation2 + $0x351] sm:$0xff]
    %v557 = vld [vmem:[#allocation2 + $0x359] sm:$0xff]
    %v558 = vld [vmem:[#allocation2 + $0x361] sm:$0xff]
    %v559 = vld [vmem:[#allocation2 + $0x369] sm:$0xff]
    %v560 = vld [vmem:[#allocation2 + $0x371] sm:$0xff]
    %v561 = vld [vmem:[#allocation2 + $0x379] sm:$0xff]
    %v562 = vld [vmem:[#allocation2 + $0x381] sm:$0xff]
    %v563 = vld [vmem:[#allocation2 + $0x389] sm:$0xff]
    %v564 = vld [vmem:[#allocation2 + $0x391] sm:$0xff]
    %v565 = vld [vmem:[#allocation2 + $0x399] sm:$0xff]
    %v566 = vld [vmem:[#allocation2 + $0x3a1] sm:$0xff]
    %v567 = vld [vmem:[#allocation2 + $0x3a9] sm:$0xff]
    %v568 = vld [vmem:[#allocation2 + $0x3b1] sm:$0xff]
    %v569 = vld [vmem:[#allocation2 + $0x3b9] sm:$0xff]
    %v570 = vld [vmem:[#allocation2 + $0x3c1] sm:$0xff]
    %v571 = vld [vmem:[#allocation2 + $0x3c9] sm:$0xff]
    %v572 = vld [vmem:[#allocation2 + $0x3d1] sm:$0xff]
    %v573 = vld [vmem:[#allocation2 + $0x3d9] sm:$0xff]
    %v574 = vld [vmem:[#allocation2 + $0x3e1] sm:$0xff]
    %v575 = vld [vmem:[#allocation2 + $0x3e9] sm:$0xff]
    %v576 = vld [vmem:[#allocation2 + $0x3f1] sm:$0xff]
    %v577 = vld [vmem:[#allocation2 + $0x3f9] sm:$0xff]
    %s578 = scalar_lea.vmem %s2, 4
    %v579 = vld [vmem:[%s578] sm:$0xf]
    %v581 = vsel %vm176, %v450, 0
    %v584 = vsel %vm176, %v451, 0
    %v587 = vsel %vm176, %v452, 0
    %v590 = vsel %vm176, %v453, 0
    %v593 = vsel %vm176, %v454, 0
    %v596 = vsel %vm176, %v455, 0
    %v599 = vsel %vm176, %v456, 0
    %v602 = vsel %vm176, %v457, 0
    %v605 = vsel %vm176, %v458, 0
    %v608 = vsel %vm176, %v459, 0
    %v611 = vsel %vm176, %v460, 0
    %v614 = vsel %vm176, %v461, 0
    %v617 = vsel %vm176, %v462, 0
    %v620 = vsel %vm176, %v463, 0
    %v623 = vsel %vm176, %v464, 0
    %v626 = vsel %vm176, %v465, 0
    %v629 = vsel %vm176, %v466, 0
    %v632 = vsel %vm176, %v467, 0
    %v635 = vsel %vm176, %v468, 0
    %v638 = vsel %vm176, %v469, 0
    %v641 = vsel %vm176, %v470, 0
    %v644 = vsel %vm176, %v471, 0
    %v647 = vsel %vm176, %v472, 0
    %v650 = vsel %vm176, %v473, 0
    %v653 = vsel %vm176, %v474, 0
    %v656 = vsel %vm176, %v475, 0
    %v659 = vsel %vm176, %v476, 0
    %v662 = vsel %vm176, %v477, 0
    %v665 = vsel %vm176, %v478, 0
    %v668 = vsel %vm176, %v479, 0
    %v671 = vsel %vm176, %v480, 0
    %v674 = vsel %vm176, %v481, 0
    %v677 = vsel %vm176, %v482, 0
    %v680 = vsel %vm176, %v483, 0
    %v683 = vsel %vm176, %v484, 0
    %v686 = vsel %vm176, %v485, 0
    %v689 = vsel %vm176, %v486, 0
    %v692 = vsel %vm176, %v487, 0
    %v695 = vsel %vm176, %v488, 0
    %v698 = vsel %vm176, %v489, 0
    %v701 = vsel %vm176, %v490, 0
    %v704 = vsel %vm176, %v491, 0
    %v707 = vsel %vm176, %v492, 0
    %v710 = vsel %vm176, %v493, 0
    %v713 = vsel %vm176, %v494, 0
    %v716 = vsel %vm176, %v495, 0
    %v719 = vsel %vm176, %v496, 0
    %v722 = vsel %vm176, %v497, 0
    %v725 = vsel %vm176, %v498, 0
    %v728 = vsel %vm176, %v499, 0
    %v731 = vsel %vm176, %v500, 0
    %v734 = vsel %vm176, %v501, 0
    %v737 = vsel %vm176, %v502, 0
    %v740 = vsel %vm176, %v503, 0
    %v743 = vsel %vm176, %v504, 0
    %v746 = vsel %vm176, %v505, 0
    %v749 = vsel %vm176, %v506, 0
    %v752 = vsel %vm176, %v507, 0
    %v755 = vsel %vm176, %v508, 0
    %v758 = vsel %vm176, %v509, 0
    %v761 = vsel %vm176, %v510, 0
    %v764 = vsel %vm176, %v511, 0
    %v767 = vsel %vm176, %v512, 0
    %v770 = vsel %vm176, %v513, 0
    %v773 = vsel %vm176, %v514, 0
    %v776 = vsel %vm176, %v515, 0
    %v779 = vsel %vm176, %v516, 0
    %v782 = vsel %vm176, %v517, 0
    %v785 = vsel %vm176, %v518, 0
    %v788 = vsel %vm176, %v519, 0
    %v791 = vsel %vm176, %v520, 0
    %v794 = vsel %vm176, %v521, 0
    %v797 = vsel %vm176, %v522, 0
    %v800 = vsel %vm176, %v523, 0
    %v803 = vsel %vm176, %v524, 0
    %v806 = vsel %vm176, %v525, 0
    %v809 = vsel %vm176, %v526, 0
    %v812 = vsel %vm176, %v527, 0
    %v815 = vsel %vm176, %v528, 0
    %v818 = vsel %vm176, %v529, 0
    %v821 = vsel %vm176, %v530, 0
    %v824 = vsel %vm176, %v531, 0
    %v827 = vsel %vm176, %v532, 0
    %v830 = vsel %vm176, %v533, 0
    %v833 = vsel %vm176, %v534, 0
    %v836 = vsel %vm176, %v535, 0
    %v839 = vsel %vm176, %v536, 0
    %v842 = vsel %vm176, %v537, 0
    %v845 = vsel %vm176, %v538, 0
    %v848 = vsel %vm176, %v539, 0
    %v851 = vsel %vm176, %v540, 0
    %v854 = vsel %vm176, %v541, 0
    %v857 = vsel %vm176, %v542, 0
    %v860 = vsel %vm176, %v543, 0
    %v863 = vsel %vm176, %v544, 0
    %v866 = vsel %vm176, %v545, 0
    %v869 = vsel %vm176, %v546, 0
    %v872 = vsel %vm176, %v547, 0
    %v875 = vsel %vm176, %v548, 0
    %v878 = vsel %vm176, %v549, 0
    %v881 = vsel %vm176, %v550, 0
    %v884 = vsel %vm176, %v551, 0
    %v887 = vsel %vm176, %v552, 0
    %v890 = vsel %vm176, %v553, 0
    %v893 = vsel %vm176, %v554, 0
    %v896 = vsel %vm176, %v555, 0
    %v899 = vsel %vm176, %v556, 0
    %v902 = vsel %vm176, %v557, 0
    %v905 = vsel %vm176, %v558, 0
    %v908 = vsel %vm176, %v559, 0
    %v911 = vsel %vm176, %v560, 0
    %v914 = vsel %vm176, %v561, 0
    %v917 = vsel %vm176, %v562, 0
    %v920 = vsel %vm176, %v563, 0
    %v923 = vsel %vm176, %v564, 0
    %v926 = vsel %vm176, %v565, 0
    %v929 = vsel %vm176, %v566, 0
    %v932 = vsel %vm176, %v567, 0
    %v935 = vsel %vm176, %v568, 0
    %v938 = vsel %vm176, %v569, 0
    %v941 = vsel %vm176, %v570, 0
    %v944 = vsel %vm176, %v571, 0
    %v947 = vsel %vm176, %v572, 0
    %v950 = vsel %vm176, %v573, 0
    %v953 = vsel %vm176, %v574, 0
    %v956 = vsel %vm176, %v575, 0
    %v959 = vsel %vm176, %v576, 0
    %v962 = vsel %vm176, %v577, 0
    %vm964 = vcmask 1043456
    %v966 = vsel %vm964, %v579, 0
    %968 = vmatpush.msra.mxu0 0.0
    %969 = vmatpush.msra.mxu0 0.0
    %970 = vmatpush.msra.mxu0 0.0
    %971 = vmatpush.msra.mxu0 0.0
    %972 = vmatpush.msra.mxu0 0.0
    %973 = vmatpush.msra.mxu0 0.0
    %974 = vmatpush.msra.mxu0 0.0
    %975 = vmatpush.msra.mxu0 0.0
    %976 = vmatpush.msra.mxu0 0.0
    %977 = vmatpush.msra.mxu0 0.0
    %978 = vmatpush.msra.mxu0 0.0
    %979 = vmatpush.msra.mxu0 0.0
    %980 = vmatpush.msra.mxu0 0.0
    %981 = vmatpush.msra.mxu0 0.0
    %982 = vmatpush.msra.mxu0 0.0
    %983 = vmatpush.msra.mxu0 %v966
    %984 = vmatmul.f32.gmra.mxu0 %v581
    %v985 = vpop.f32.mrf.mxu0
    %v986 = vadd.f32 0.0, %v985
    %987 = vmatmul.f32.gmra.mxu0 %v584
    %v988 = vpop.f32.mrf.mxu0
    %v989 = vadd.f32 0.0, %v988
    %990 = vmatmul.f32.gmra.mxu0 %v587
    %v991 = vpop.f32.mrf.mxu0
    %v992 = vadd.f32 0.0, %v991
    %993 = vmatmul.f32.gmra.mxu0 %v590
    %v994 = vpop.f32.mrf.mxu0
    %v995 = vadd.f32 0.0, %v994
    %996 = vmatmul.f32.gmra.mxu0 %v593
    %v997 = vpop.f32.mrf.mxu0
    %v998 = vadd.f32 0.0, %v997
    %999 = vmatmul.f32.gmra.mxu0 %v596
    %v1000 = vpop.f32.mrf.mxu0
    %v1001 = vadd.f32 0.0, %v1000
    %1002 = vmatmul.f32.gmra.mxu0 %v599
    %v1003 = vpop.f32.mrf.mxu0
    %v1004 = vadd.f32 0.0, %v1003
    %1005 = vmatmul.f32.gmra.mxu0 %v602
    %v1006 = vpop.f32.mrf.mxu0
    %v1007 = vadd.f32 0.0, %v1006
    %1008 = vmatmul.f32.gmra.mxu0 %v605
    %v1009 = vpop.f32.mrf.mxu0
    %v1010 = vadd.f32 0.0, %v1009
    %1011 = vmatmul.f32.gmra.mxu0 %v608
    %v1012 = vpop.f32.mrf.mxu0
    %v1013 = vadd.f32 0.0, %v1012
    %1014 = vmatmul.f32.gmra.mxu0 %v611
    %v1015 = vpop.f32.mrf.mxu0
    %v1016 = vadd.f32 0.0, %v1015
    %1017 = vmatmul.f32.gmra.mxu0 %v614
    %v1018 = vpop.f32.mrf.mxu0
    %v1019 = vadd.f32 0.0, %v1018
    %1020 = vmatmul.f32.gmra.mxu0 %v617
    %v1021 = vpop.f32.mrf.mxu0
    %v1022 = vadd.f32 0.0, %v1021
    %1023 = vmatmul.f32.gmra.mxu0 %v620
    %v1024 = vpop.f32.mrf.mxu0
    %v1025 = vadd.f32 0.0, %v1024
    %1026 = vmatmul.f32.gmra.mxu0 %v623
    %v1027 = vpop.f32.mrf.mxu0
    %v1028 = vadd.f32 0.0, %v1027
    %1029 = vmatmul.f32.gmra.mxu0 %v626
    %v1030 = vpop.f32.mrf.mxu0
    %v1031 = vadd.f32 0.0, %v1030
    %1032 = vmatmul.f32.gmra.mxu0 %v629
    %v1033 = vpop.f32.mrf.mxu0
    %v1034 = vadd.f32 0.0, %v1033
    %1035 = vmatmul.f32.gmra.mxu0 %v632
    %v1036 = vpop.f32.mrf.mxu0
    %v1037 = vadd.f32 0.0, %v1036
    %1038 = vmatmul.f32.gmra.mxu0 %v635
    %v1039 = vpop.f32.mrf.mxu0
    %v1040 = vadd.f32 0.0, %v1039
    %1041 = vmatmul.f32.gmra.mxu0 %v638
    %v1042 = vpop.f32.mrf.mxu0
    %v1043 = vadd.f32 0.0, %v1042
    %1044 = vmatmul.f32.gmra.mxu0 %v641
    %v1045 = vpop.f32.mrf.mxu0
    %v1046 = vadd.f32 0.0, %v1045
    %1047 = vmatmul.f32.gmra.mxu0 %v644
    %v1048 = vpop.f32.mrf.mxu0
    %v1049 = vadd.f32 0.0, %v1048
    %1050 = vmatmul.f32.gmra.mxu0 %v647
    %v1051 = vpop.f32.mrf.mxu0
    %v1052 = vadd.f32 0.0, %v1051
    %1053 = vmatmul.f32.gmra.mxu0 %v650
    %v1054 = vpop.f32.mrf.mxu0
    %v1055 = vadd.f32 0.0, %v1054
    %1056 = vmatmul.f32.gmra.mxu0 %v653
    %v1057 = vpop.f32.mrf.mxu0
    %v1058 = vadd.f32 0.0, %v1057
    %1059 = vmatmul.f32.gmra.mxu0 %v656
    %v1060 = vpop.f32.mrf.mxu0
    %v1061 = vadd.f32 0.0, %v1060
    %1062 = vmatmul.f32.gmra.mxu0 %v659
    %v1063 = vpop.f32.mrf.mxu0
    %v1064 = vadd.f32 0.0, %v1063
    %1065 = vmatmul.f32.gmra.mxu0 %v662
    %v1066 = vpop.f32.mrf.mxu0
    %v1067 = vadd.f32 0.0, %v1066
    %1068 = vmatmul.f32.gmra.mxu0 %v665
    %v1069 = vpop.f32.mrf.mxu0
    %v1070 = vadd.f32 0.0, %v1069
    %1071 = vmatmul.f32.gmra.mxu0 %v668
    %v1072 = vpop.f32.mrf.mxu0
    %v1073 = vadd.f32 0.0, %v1072
    %1074 = vmatmul.f32.gmra.mxu0 %v671
    %v1075 = vpop.f32.mrf.mxu0
    %v1076 = vadd.f32 0.0, %v1075
    %1077 = vmatmul.f32.gmra.mxu0 %v674
    %v1078 = vpop.f32.mrf.mxu0
    %v1079 = vadd.f32 0.0, %v1078
    %1080 = vmatmul.f32.gmra.mxu0 %v677
    %v1081 = vpop.f32.mrf.mxu0
    %v1082 = vadd.f32 0.0, %v1081
    %1083 = vmatmul.f32.gmra.mxu0 %v680
    %v1084 = vpop.f32.mrf.mxu0
    %v1085 = vadd.f32 0.0, %v1084
    %1086 = vmatmul.f32.gmra.mxu0 %v683
    %v1087 = vpop.f32.mrf.mxu0
    %v1088 = vadd.f32 0.0, %v1087
    %1089 = vmatmul.f32.gmra.mxu0 %v686
    %v1090 = vpop.f32.mrf.mxu0
    %v1091 = vadd.f32 0.0, %v1090
    %1092 = vmatmul.f32.gmra.mxu0 %v689
    %v1093 = vpop.f32.mrf.mxu0
    %v1094 = vadd.f32 0.0, %v1093
    %1095 = vmatmul.f32.gmra.mxu0 %v692
    %v1096 = vpop.f32.mrf.mxu0
    %v1097 = vadd.f32 0.0, %v1096
    %1098 = vmatmul.f32.gmra.mxu0 %v695
    %v1099 = vpop.f32.mrf.mxu0
    %v1100 = vadd.f32 0.0, %v1099
    %1101 = vmatmul.f32.gmra.mxu0 %v698
    %v1102 = vpop.f32.mrf.mxu0
    %v1103 = vadd.f32 0.0, %v1102
    %1104 = vmatmul.f32.gmra.mxu0 %v701
    %v1105 = vpop.f32.mrf.mxu0
    %v1106 = vadd.f32 0.0, %v1105
    %1107 = vmatmul.f32.gmra.mxu0 %v704
    %v1108 = vpop.f32.mrf.mxu0
    %v1109 = vadd.f32 0.0, %v1108
    %1110 = vmatmul.f32.gmra.mxu0 %v707
    %v1111 = vpop.f32.mrf.mxu0
    %v1112 = vadd.f32 0.0, %v1111
    %1113 = vmatmul.f32.gmra.mxu0 %v710
    %v1114 = vpop.f32.mrf.mxu0
    %v1115 = vadd.f32 0.0, %v1114
    %1116 = vmatmul.f32.gmra.mxu0 %v713
    %v1117 = vpop.f32.mrf.mxu0
    %v1118 = vadd.f32 0.0, %v1117
    %1119 = vmatmul.f32.gmra.mxu0 %v716
    %v1120 = vpop.f32.mrf.mxu0
    %v1121 = vadd.f32 0.0, %v1120
    %1122 = vmatmul.f32.gmra.mxu0 %v719
    %v1123 = vpop.f32.mrf.mxu0
    %v1124 = vadd.f32 0.0, %v1123
    %1125 = vmatmul.f32.gmra.mxu0 %v722
    %v1126 = vpop.f32.mrf.mxu0
    %v1127 = vadd.f32 0.0, %v1126
    %1128 = vmatmul.f32.gmra.mxu0 %v725
    %v1129 = vpop.f32.mrf.mxu0
    %v1130 = vadd.f32 0.0, %v1129
    %1131 = vmatmul.f32.gmra.mxu0 %v728
    %v1132 = vpop.f32.mrf.mxu0
    %v1133 = vadd.f32 0.0, %v1132
    %1134 = vmatmul.f32.gmra.mxu0 %v731
    %v1135 = vpop.f32.mrf.mxu0
    %v1136 = vadd.f32 0.0, %v1135
    %1137 = vmatmul.f32.gmra.mxu0 %v734
    %v1138 = vpop.f32.mrf.mxu0
    %v1139 = vadd.f32 0.0, %v1138
    %1140 = vmatmul.f32.gmra.mxu0 %v737
    %v1141 = vpop.f32.mrf.mxu0
    %v1142 = vadd.f32 0.0, %v1141
    %1143 = vmatmul.f32.gmra.mxu0 %v740
    %v1144 = vpop.f32.mrf.mxu0
    %v1145 = vadd.f32 0.0, %v1144
    %1146 = vmatmul.f32.gmra.mxu0 %v743
    %v1147 = vpop.f32.mrf.mxu0
    %v1148 = vadd.f32 0.0, %v1147
    %1149 = vmatmul.f32.gmra.mxu0 %v746
    %v1150 = vpop.f32.mrf.mxu0
    %v1151 = vadd.f32 0.0, %v1150
    %1152 = vmatmul.f32.gmra.mxu0 %v749
    %v1153 = vpop.f32.mrf.mxu0
    %v1154 = vadd.f32 0.0, %v1153
    %1155 = vmatmul.f32.gmra.mxu0 %v752
    %v1156 = vpop.f32.mrf.mxu0
    %v1157 = vadd.f32 0.0, %v1156
    %1158 = vmatmul.f32.gmra.mxu0 %v755
    %v1159 = vpop.f32.mrf.mxu0
    %v1160 = vadd.f32 0.0, %v1159
    %1161 = vmatmul.f32.gmra.mxu0 %v758
    %v1162 = vpop.f32.mrf.mxu0
    %v1163 = vadd.f32 0.0, %v1162
    %1164 = vmatmul.f32.gmra.mxu0 %v761
    %v1165 = vpop.f32.mrf.mxu0
    %v1166 = vadd.f32 0.0, %v1165
    %1167 = vmatmul.f32.gmra.mxu0 %v764
    %v1168 = vpop.f32.mrf.mxu0
    %v1169 = vadd.f32 0.0, %v1168
    %1170 = vmatmul.f32.gmra.mxu0 %v767
    %v1171 = vpop.f32.mrf.mxu0
    %v1172 = vadd.f32 0.0, %v1171
    %1173 = vmatmul.f32.gmra.mxu0 %v770
    %v1174 = vpop.f32.mrf.mxu0
    %v1175 = vadd.f32 0.0, %v1174
    %1176 = vmatmul.f32.gmra.mxu0 %v773
    %v1177 = vpop.f32.mrf.mxu0
    %v1178 = vadd.f32 0.0, %v1177
    %1179 = vmatmul.f32.gmra.mxu0 %v776
    %v1180 = vpop.f32.mrf.mxu0
    %v1181 = vadd.f32 0.0, %v1180
    %1182 = vmatmul.f32.gmra.mxu0 %v779
    %v1183 = vpop.f32.mrf.mxu0
    %v1184 = vadd.f32 0.0, %v1183
    %1185 = vmatmul.f32.gmra.mxu0 %v782
    %v1186 = vpop.f32.mrf.mxu0
    %v1187 = vadd.f32 0.0, %v1186
    %1188 = vmatmul.f32.gmra.mxu0 %v785
    %v1189 = vpop.f32.mrf.mxu0
    %v1190 = vadd.f32 0.0, %v1189
    %1191 = vmatmul.f32.gmra.mxu0 %v788
    %v1192 = vpop.f32.mrf.mxu0
    %v1193 = vadd.f32 0.0, %v1192
    %1194 = vmatmul.f32.gmra.mxu0 %v791
    %v1195 = vpop.f32.mrf.mxu0
    %v1196 = vadd.f32 0.0, %v1195
    %1197 = vmatmul.f32.gmra.mxu0 %v794
    %v1198 = vpop.f32.mrf.mxu0
    %v1199 = vadd.f32 0.0, %v1198
    %1200 = vmatmul.f32.gmra.mxu0 %v797
    %v1201 = vpop.f32.mrf.mxu0
    %v1202 = vadd.f32 0.0, %v1201
    %1203 = vmatmul.f32.gmra.mxu0 %v800
    %v1204 = vpop.f32.mrf.mxu0
    %v1205 = vadd.f32 0.0, %v1204
    %1206 = vmatmul.f32.gmra.mxu0 %v803
    %v1207 = vpop.f32.mrf.mxu0
    %v1208 = vadd.f32 0.0, %v1207
    %1209 = vmatmul.f32.gmra.mxu0 %v806
    %v1210 = vpop.f32.mrf.mxu0
    %v1211 = vadd.f32 0.0, %v1210
    %1212 = vmatmul.f32.gmra.mxu0 %v809
    %v1213 = vpop.f32.mrf.mxu0
    %v1214 = vadd.f32 0.0, %v1213
    %1215 = vmatmul.f32.gmra.mxu0 %v812
    %v1216 = vpop.f32.mrf.mxu0
    %v1217 = vadd.f32 0.0, %v1216
    %1218 = vmatmul.f32.gmra.mxu0 %v815
    %v1219 = vpop.f32.mrf.mxu0
    %v1220 = vadd.f32 0.0, %v1219
    %1221 = vmatmul.f32.gmra.mxu0 %v818
    %v1222 = vpop.f32.mrf.mxu0
    %v1223 = vadd.f32 0.0, %v1222
    %1224 = vmatmul.f32.gmra.mxu0 %v821
    %v1225 = vpop.f32.mrf.mxu0
    %v1226 = vadd.f32 0.0, %v1225
    %1227 = vmatmul.f32.gmra.mxu0 %v824
    %v1228 = vpop.f32.mrf.mxu0
    %v1229 = vadd.f32 0.0, %v1228
    %1230 = vmatmul.f32.gmra.mxu0 %v827
    %v1231 = vpop.f32.mrf.mxu0
    %v1232 = vadd.f32 0.0, %v1231
    %1233 = vmatmul.f32.gmra.mxu0 %v830
    %v1234 = vpop.f32.mrf.mxu0
    %v1235 = vadd.f32 0.0, %v1234
    %1236 = vmatmul.f32.gmra.mxu0 %v833
    %v1237 = vpop.f32.mrf.mxu0
    %v1238 = vadd.f32 0.0, %v1237
    %1239 = vmatmul.f32.gmra.mxu0 %v836
    %v1240 = vpop.f32.mrf.mxu0
    %v1241 = vadd.f32 0.0, %v1240
    %1242 = vmatmul.f32.gmra.mxu0 %v839
    %v1243 = vpop.f32.mrf.mxu0
    %v1244 = vadd.f32 0.0, %v1243
    %1245 = vmatmul.f32.gmra.mxu0 %v842
    %v1246 = vpop.f32.mrf.mxu0
    %v1247 = vadd.f32 0.0, %v1246
    %1248 = vmatmul.f32.gmra.mxu0 %v845
    %v1249 = vpop.f32.mrf.mxu0
    %v1250 = vadd.f32 0.0, %v1249
    %1251 = vmatmul.f32.gmra.mxu0 %v848
    %v1252 = vpop.f32.mrf.mxu0
    %v1253 = vadd.f32 0.0, %v1252
    %1254 = vmatmul.f32.gmra.mxu0 %v851
    %v1255 = vpop.f32.mrf.mxu0
    %v1256 = vadd.f32 0.0, %v1255
    %1257 = vmatmul.f32.gmra.mxu0 %v854
    %v1258 = vpop.f32.mrf.mxu0
    %v1259 = vadd.f32 0.0, %v1258
    %1260 = vmatmul.f32.gmra.mxu0 %v857
    %v1261 = vpop.f32.mrf.mxu0
    %v1262 = vadd.f32 0.0, %v1261
    %1263 = vmatmul.f32.gmra.mxu0 %v860
    %v1264 = vpop.f32.mrf.mxu0
    %v1265 = vadd.f32 0.0, %v1264
    %1266 = vmatmul.f32.gmra.mxu0 %v863
    %v1267 = vpop.f32.mrf.mxu0
    %v1268 = vadd.f32 0.0, %v1267
    %1269 = vmatmul.f32.gmra.mxu0 %v866
    %v1270 = vpop.f32.mrf.mxu0
    %v1271 = vadd.f32 0.0, %v1270
    %1272 = vmatmul.f32.gmra.mxu0 %v869
    %v1273 = vpop.f32.mrf.mxu0
    %v1274 = vadd.f32 0.0, %v1273
    %1275 = vmatmul.f32.gmra.mxu0 %v872
    %v1276 = vpop.f32.mrf.mxu0
    %v1277 = vadd.f32 0.0, %v1276
    %1278 = vmatmul.f32.gmra.mxu0 %v875
    %v1279 = vpop.f32.mrf.mxu0
    %v1280 = vadd.f32 0.0, %v1279
    %1281 = vmatmul.f32.gmra.mxu0 %v878
    %v1282 = vpop.f32.mrf.mxu0
    %v1283 = vadd.f32 0.0, %v1282
    %1284 = vmatmul.f32.gmra.mxu0 %v881
    %v1285 = vpop.f32.mrf.mxu0
    %v1286 = vadd.f32 0.0, %v1285
    %1287 = vmatmul.f32.gmra.mxu0 %v884
    %v1288 = vpop.f32.mrf.mxu0
    %v1289 = vadd.f32 0.0, %v1288
    %1290 = vmatmul.f32.gmra.mxu0 %v887
    %v1291 = vpop.f32.mrf.mxu0
    %v1292 = vadd.f32 0.0, %v1291
    %1293 = vmatmul.f32.gmra.mxu0 %v890
    %v1294 = vpop.f32.mrf.mxu0
    %v1295 = vadd.f32 0.0, %v1294
    %1296 = vmatmul.f32.gmra.mxu0 %v893
    %v1297 = vpop.f32.mrf.mxu0
    %v1298 = vadd.f32 0.0, %v1297
    %1299 = vmatmul.f32.gmra.mxu0 %v896
    %v1300 = vpop.f32.mrf.mxu0
    %v1301 = vadd.f32 0.0, %v1300
    %1302 = vmatmul.f32.gmra.mxu0 %v899
    %v1303 = vpop.f32.mrf.mxu0
    %v1304 = vadd.f32 0.0, %v1303
    %1305 = vmatmul.f32.gmra.mxu0 %v902
    %v1306 = vpop.f32.mrf.mxu0
    %v1307 = vadd.f32 0.0, %v1306
    %1308 = vmatmul.f32.gmra.mxu0 %v905
    %v1309 = vpop.f32.mrf.mxu0
    %v1310 = vadd.f32 0.0, %v1309
    %1311 = vmatmul.f32.gmra.mxu0 %v908
    %v1312 = vpop.f32.mrf.mxu0
    %v1313 = vadd.f32 0.0, %v1312
    %1314 = vmatmul.f32.gmra.mxu0 %v911
    %v1315 = vpop.f32.mrf.mxu0
    %v1316 = vadd.f32 0.0, %v1315
    %1317 = vmatmul.f32.gmra.mxu0 %v914
    %v1318 = vpop.f32.mrf.mxu0
    %v1319 = vadd.f32 0.0, %v1318
    %1320 = vmatmul.f32.gmra.mxu0 %v917
    %v1321 = vpop.f32.mrf.mxu0
    %v1322 = vadd.f32 0.0, %v1321
    %1323 = vmatmul.f32.gmra.mxu0 %v920
    %v1324 = vpop.f32.mrf.mxu0
    %v1325 = vadd.f32 0.0, %v1324
    %1326 = vmatmul.f32.gmra.mxu0 %v923
    %v1327 = vpop.f32.mrf.mxu0
    %v1328 = vadd.f32 0.0, %v1327
    %1329 = vmatmul.f32.gmra.mxu0 %v926
    %v1330 = vpop.f32.mrf.mxu0
    %v1331 = vadd.f32 0.0, %v1330
    %1332 = vmatmul.f32.gmra.mxu0 %v929
    %v1333 = vpop.f32.mrf.mxu0
    %v1334 = vadd.f32 0.0, %v1333
    %1335 = vmatmul.f32.gmra.mxu0 %v932
    %v1336 = vpop.f32.mrf.mxu0
    %v1337 = vadd.f32 0.0, %v1336
    %1338 = vmatmul.f32.gmra.mxu0 %v935
    %v1339 = vpop.f32.mrf.mxu0
    %v1340 = vadd.f32 0.0, %v1339
    %1341 = vmatmul.f32.gmra.mxu0 %v938
    %v1342 = vpop.f32.mrf.mxu0
    %v1343 = vadd.f32 0.0, %v1342
    %1344 = vmatmul.f32.gmra.mxu0 %v941
    %v1345 = vpop.f32.mrf.mxu0
    %v1346 = vadd.f32 0.0, %v1345
    %1347 = vmatmul.f32.gmra.mxu0 %v944
    %v1348 = vpop.f32.mrf.mxu0
    %v1349 = vadd.f32 0.0, %v1348
    %1350 = vmatmul.f32.gmra.mxu0 %v947
    %v1351 = vpop.f32.mrf.mxu0
    %v1352 = vadd.f32 0.0, %v1351
    %1353 = vmatmul.f32.gmra.mxu0 %v950
    %v1354 = vpop.f32.mrf.mxu0
    %v1355 = vadd.f32 0.0, %v1354
    %1356 = vmatmul.f32.gmra.mxu0 %v953
    %v1357 = vpop.f32.mrf.mxu0
    %v1358 = vadd.f32 0.0, %v1357
    %1359 = vmatmul.f32.gmra.mxu0 %v956
    %v1360 = vpop.f32.mrf.mxu0
    %v1361 = vadd.f32 0.0, %v1360
    %1362 = vmatmul.f32.gmra.mxu0 %v959
    %v1363 = vpop.f32.mrf.mxu0
    %v1364 = vadd.f32 0.0, %v1363
    %1365 = vmatmul.f32.gmra.mxu0 %v962
    %v1366 = vpop.f32.mrf.mxu0
    %v1367 = vadd.f32 0.0, %v1366
    %1368 = vdwg.mxu0
    %v1370 = vsel %vm176, %v321, 0
    %v1373 = vsel %vm176, %v322, 0
    %v1376 = vsel %vm176, %v323, 0
    %v1379 = vsel %vm176, %v324, 0
    %v1382 = vsel %vm176, %v325, 0
    %v1385 = vsel %vm176, %v326, 0
    %v1388 = vsel %vm176, %v327, 0
    %v1391 = vsel %vm176, %v328, 0
    %v1394 = vsel %vm176, %v329, 0
    %v1397 = vsel %vm176, %v330, 0
    %v1400 = vsel %vm176, %v331, 0
    %v1403 = vsel %vm176, %v332, 0
    %v1406 = vsel %vm176, %v333, 0
    %v1409 = vsel %vm176, %v334, 0
    %v1412 = vsel %vm176, %v335, 0
    %v1415 = vsel %vm176, %v336, 0
    %v1418 = vsel %vm176, %v337, 0
    %v1421 = vsel %vm176, %v338, 0
    %v1424 = vsel %vm176, %v339, 0
    %v1427 = vsel %vm176, %v340, 0
    %v1430 = vsel %vm176, %v341, 0
    %v1433 = vsel %vm176, %v342, 0
    %v1436 = vsel %vm176, %v343, 0
    %v1439 = vsel %vm176, %v344, 0
    %v1442 = vsel %vm176, %v345, 0
    %v1445 = vsel %vm176, %v346, 0
    %v1448 = vsel %vm176, %v347, 0
    %v1451 = vsel %vm176, %v348, 0
    %v1454 = vsel %vm176, %v349, 0
    %v1457 = vsel %vm176, %v350, 0
    %v1460 = vsel %vm176, %v351, 0
    %v1463 = vsel %vm176, %v352, 0
    %v1466 = vsel %vm176, %v353, 0
    %v1469 = vsel %vm176, %v354, 0
    %v1472 = vsel %vm176, %v355, 0
    %v1475 = vsel %vm176, %v356, 0
    %v1478 = vsel %vm176, %v357, 0
    %v1481 = vsel %vm176, %v358, 0
    %v1484 = vsel %vm176, %v359, 0
    %v1487 = vsel %vm176, %v360, 0
    %v1490 = vsel %vm176, %v361, 0
    %v1493 = vsel %vm176, %v362, 0
    %v1496 = vsel %vm176, %v363, 0
    %v1499 = vsel %vm176, %v364, 0
    %v1502 = vsel %vm176, %v365, 0
    %v1505 = vsel %vm176, %v366, 0
    %v1508 = vsel %vm176, %v367, 0
    %v1511 = vsel %vm176, %v368, 0
    %v1514 = vsel %vm176, %v369, 0
    %v1517 = vsel %vm176, %v370, 0
    %v1520 = vsel %vm176, %v371, 0
    %v1523 = vsel %vm176, %v372, 0
    %v1526 = vsel %vm176, %v373, 0
    %v1529 = vsel %vm176, %v374, 0
    %v1532 = vsel %vm176, %v375, 0
    %v1535 = vsel %vm176, %v376, 0
    %v1538 = vsel %vm176, %v377, 0
    %v1541 = vsel %vm176, %v378, 0
    %v1544 = vsel %vm176, %v379, 0
    %v1547 = vsel %vm176, %v380, 0
    %v1550 = vsel %vm176, %v381, 0
    %v1553 = vsel %vm176, %v382, 0
    %v1556 = vsel %vm176, %v383, 0
    %v1559 = vsel %vm176, %v384, 0
    %v1562 = vsel %vm176, %v385, 0
    %v1565 = vsel %vm176, %v386, 0
    %v1568 = vsel %vm176, %v387, 0
    %v1571 = vsel %vm176, %v388, 0
    %v1574 = vsel %vm176, %v389, 0
    %v1577 = vsel %vm176, %v390, 0
    %v1580 = vsel %vm176, %v391, 0
    %v1583 = vsel %vm176, %v392, 0
    %v1586 = vsel %vm176, %v393, 0
    %v1589 = vsel %vm176, %v394, 0
    %v1592 = vsel %vm176, %v395, 0
    %v1595 = vsel %vm176, %v396, 0
    %v1598 = vsel %vm176, %v397, 0
    %v1601 = vsel %vm176, %v398, 0
    %v1604 = vsel %vm176, %v399, 0
    %v1607 = vsel %vm176, %v400, 0
    %v1610 = vsel %vm176, %v401, 0
    %v1613 = vsel %vm176, %v402, 0
    %v1616 = vsel %vm176, %v403, 0
    %v1619 = vsel %vm176, %v404, 0
    %v1622 = vsel %vm176, %v405, 0
    %v1625 = vsel %vm176, %v406, 0
    %v1628 = vsel %vm176, %v407, 0
    %v1631 = vsel %vm176, %v408, 0
    %v1634 = vsel %vm176, %v409, 0
    %v1637 = vsel %vm176, %v410, 0
    %v1640 = vsel %vm176, %v411, 0
    %v1643 = vsel %vm176, %v412, 0
    %v1646 = vsel %vm176, %v413, 0
    %v1649 = vsel %vm176, %v414, 0
    %v1652 = vsel %vm176, %v415, 0
    %v1655 = vsel %vm176, %v416, 0
    %v1658 = vsel %vm176, %v417, 0
    %v1661 = vsel %vm176, %v418, 0
    %v1664 = vsel %vm176, %v419, 0
    %v1667 = vsel %vm176, %v420, 0
    %v1670 = vsel %vm176, %v421, 0
    %v1673 = vsel %vm176, %v422, 0
    %v1676 = vsel %vm176, %v423, 0
    %v1679 = vsel %vm176, %v424, 0
    %v1682 = vsel %vm176, %v425, 0
    %v1685 = vsel %vm176, %v426, 0
    %v1688 = vsel %vm176, %v427, 0
    %v1691 = vsel %vm176, %v428, 0
    %v1694 = vsel %vm176, %v429, 0
    %v1697 = vsel %vm176, %v430, 0
    %v1700 = vsel %vm176, %v431, 0
    %v1703 = vsel %vm176, %v432, 0
    %v1706 = vsel %vm176, %v433, 0
    %v1709 = vsel %vm176, %v434, 0
    %v1712 = vsel %vm176, %v435, 0
    %v1715 = vsel %vm176, %v436, 0
    %v1718 = vsel %vm176, %v437, 0
    %v1721 = vsel %vm176, %v438, 0
    %v1724 = vsel %vm176, %v439, 0
    %v1727 = vsel %vm176, %v440, 0
    %v1730 = vsel %vm176, %v441, 0
    %v1733 = vsel %vm176, %v442, 0
    %v1736 = vsel %vm176, %v443, 0
    %v1739 = vsel %vm176, %v444, 0
    %v1742 = vsel %vm176, %v445, 0
    %v1745 = vsel %vm176, %v446, 0
    %v1748 = vsel %vm176, %v447, 0
    %v1751 = vsel %vm176, %v448, 0
    %v1754 = vsel %vm964, %v449, 0
    %1756 = vmatpush.msra.mxu0 0.0
    %1757 = vmatpush.msra.mxu0 0.0
    %1758 = vmatpush.msra.mxu0 0.0
    %1759 = vmatpush.msra.mxu0 0.0
    %1760 = vmatpush.msra.mxu0 0.0
    %1761 = vmatpush.msra.mxu0 0.0
    %1762 = vmatpush.msra.mxu0 0.0
    %1763 = vmatpush.msra.mxu0 0.0
    %1764 = vmatpush.msra.mxu0 0.0
    %1765 = vmatpush.msra.mxu0 0.0
    %1766 = vmatpush.msra.mxu0 0.0
    %1767 = vmatpush.msra.mxu0 0.0
    %1768 = vmatpush.msra.mxu0 0.0
    %1769 = vmatpush.msra.mxu0 0.0
    %1770 = vmatpush.msra.mxu0 0.0
    %1771 = vmatpush.msra.mxu0 %v1754
    %1772 = vmatmul.f32.gmra.mxu0 %v1370
    %v1773 = vpop.f32.mrf.mxu0
    %v1774 = vadd.f32 %v986, %v1773
    %1775 = vmatmul.f32.gmra.mxu0 %v1373
    %v1776 = vpop.f32.mrf.mxu0
    %v1777 = vadd.f32 %v989, %v1776
    %1778 = vmatmul.f32.gmra.mxu0 %v1376
    %v1779 = vpop.f32.mrf.mxu0
    %v1780 = vadd.f32 %v992, %v1779
    %1781 = vmatmul.f32.gmra.mxu0 %v1379
    %v1782 = vpop.f32.mrf.mxu0
    %v1783 = vadd.f32 %v995, %v1782
    %1784 = vmatmul.f32.gmra.mxu0 %v1382
    %v1785 = vpop.f32.mrf.mxu0
    %v1786 = vadd.f32 %v998, %v1785
    %1787 = vmatmul.f32.gmra.mxu0 %v1385
    %v1788 = vpop.f32.mrf.mxu0
    %v1789 = vadd.f32 %v1001, %v1788
    %1790 = vmatmul.f32.gmra.mxu0 %v1388
    %v1791 = vpop.f32.mrf.mxu0
    %v1792 = vadd.f32 %v1004, %v1791
    %1793 = vmatmul.f32.gmra.mxu0 %v1391
    %v1794 = vpop.f32.mrf.mxu0
    %v1795 = vadd.f32 %v1007, %v1794
    %1796 = vmatmul.f32.gmra.mxu0 %v1394
    %v1797 = vpop.f32.mrf.mxu0
    %v1798 = vadd.f32 %v1010, %v1797
    %1799 = vmatmul.f32.gmra.mxu0 %v1397
    %v1800 = vpop.f32.mrf.mxu0
    %v1801 = vadd.f32 %v1013, %v1800
    %1802 = vmatmul.f32.gmra.mxu0 %v1400
    %v1803 = vpop.f32.mrf.mxu0
    %v1804 = vadd.f32 %v1016, %v1803
    %1805 = vmatmul.f32.gmra.mxu0 %v1403
    %v1806 = vpop.f32.mrf.mxu0
    %v1807 = vadd.f32 %v1019, %v1806
    %1808 = vmatmul.f32.gmra.mxu0 %v1406
    %v1809 = vpop.f32.mrf.mxu0
    %v1810 = vadd.f32 %v1022, %v1809
    %1811 = vmatmul.f32.gmra.mxu0 %v1409
    %v1812 = vpop.f32.mrf.mxu0
    %v1813 = vadd.f32 %v1025, %v1812
    %1814 = vmatmul.f32.gmra.mxu0 %v1412
    %v1815 = vpop.f32.mrf.mxu0
    %v1816 = vadd.f32 %v1028, %v1815
    %1817 = vmatmul.f32.gmra.mxu0 %v1415
    %v1818 = vpop.f32.mrf.mxu0
    %v1819 = vadd.f32 %v1031, %v1818
    %1820 = vmatmul.f32.gmra.mxu0 %v1418
    %v1821 = vpop.f32.mrf.mxu0
    %v1822 = vadd.f32 %v1034, %v1821
    %1823 = vmatmul.f32.gmra.mxu0 %v1421
    %v1824 = vpop.f32.mrf.mxu0
    %v1825 = vadd.f32 %v1037, %v1824
    %1826 = vmatmul.f32.gmra.mxu0 %v1424
    %v1827 = vpop.f32.mrf.mxu0
    %v1828 = vadd.f32 %v1040, %v1827
    %1829 = vmatmul.f32.gmra.mxu0 %v1427
    %v1830 = vpop.f32.mrf.mxu0
    %v1831 = vadd.f32 %v1043, %v1830
    %1832 = vmatmul.f32.gmra.mxu0 %v1430
    %v1833 = vpop.f32.mrf.mxu0
    %v1834 = vadd.f32 %v1046, %v1833
    %1835 = vmatmul.f32.gmra.mxu0 %v1433
    %v1836 = vpop.f32.mrf.mxu0
    %v1837 = vadd.f32 %v1049, %v1836
    %1838 = vmatmul.f32.gmra.mxu0 %v1436
    %v1839 = vpop.f32.mrf.mxu0
    %v1840 = vadd.f32 %v1052, %v1839
    %1841 = vmatmul.f32.gmra.mxu0 %v1439
    %v1842 = vpop.f32.mrf.mxu0
    %v1843 = vadd.f32 %v1055, %v1842
    %1844 = vmatmul.f32.gmra.mxu0 %v1442
    %v1845 = vpop.f32.mrf.mxu0
    %v1846 = vadd.f32 %v1058, %v1845
    %1847 = vmatmul.f32.gmra.mxu0 %v1445
    %v1848 = vpop.f32.mrf.mxu0
    %v1849 = vadd.f32 %v1061, %v1848
    %1850 = vmatmul.f32.gmra.mxu0 %v1448
    %v1851 = vpop.f32.mrf.mxu0
    %v1852 = vadd.f32 %v1064, %v1851
    %1853 = vmatmul.f32.gmra.mxu0 %v1451
    %v1854 = vpop.f32.mrf.mxu0
    %v1855 = vadd.f32 %v1067, %v1854
    %1856 = vmatmul.f32.gmra.mxu0 %v1454
    %v1857 = vpop.f32.mrf.mxu0
    %v1858 = vadd.f32 %v1070, %v1857
    %1859 = vmatmul.f32.gmra.mxu0 %v1457
    %v1860 = vpop.f32.mrf.mxu0
    %v1861 = vadd.f32 %v1073, %v1860
    %1862 = vmatmul.f32.gmra.mxu0 %v1460
    %v1863 = vpop.f32.mrf.mxu0
    %v1864 = vadd.f32 %v1076, %v1863
    %1865 = vmatmul.f32.gmra.mxu0 %v1463
    %v1866 = vpop.f32.mrf.mxu0
    %v1867 = vadd.f32 %v1079, %v1866
    %1868 = vmatmul.f32.gmra.mxu0 %v1466
    %v1869 = vpop.f32.mrf.mxu0
    %v1870 = vadd.f32 %v1082, %v1869
    %1871 = vmatmul.f32.gmra.mxu0 %v1469
    %v1872 = vpop.f32.mrf.mxu0
    %v1873 = vadd.f32 %v1085, %v1872
    %1874 = vmatmul.f32.gmra.mxu0 %v1472
    %v1875 = vpop.f32.mrf.mxu0
    %v1876 = vadd.f32 %v1088, %v1875
    %1877 = vmatmul.f32.gmra.mxu0 %v1475
    %v1878 = vpop.f32.mrf.mxu0
    %v1879 = vadd.f32 %v1091, %v1878
    %1880 = vmatmul.f32.gmra.mxu0 %v1478
    %v1881 = vpop.f32.mrf.mxu0
    %v1882 = vadd.f32 %v1094, %v1881
    %1883 = vmatmul.f32.gmra.mxu0 %v1481
    %v1884 = vpop.f32.mrf.mxu0
    %v1885 = vadd.f32 %v1097, %v1884
    %1886 = vmatmul.f32.gmra.mxu0 %v1484
    %v1887 = vpop.f32.mrf.mxu0
    %v1888 = vadd.f32 %v1100, %v1887
    %1889 = vmatmul.f32.gmra.mxu0 %v1487
    %v1890 = vpop.f32.mrf.mxu0
    %v1891 = vadd.f32 %v1103, %v1890
    %1892 = vmatmul.f32.gmra.mxu0 %v1490
    %v1893 = vpop.f32.mrf.mxu0
    %v1894 = vadd.f32 %v1106, %v1893
    %1895 = vmatmul.f32.gmra.mxu0 %v1493
    %v1896 = vpop.f32.mrf.mxu0
    %v1897 = vadd.f32 %v1109, %v1896
    %1898 = vmatmul.f32.gmra.mxu0 %v1496
    %v1899 = vpop.f32.mrf.mxu0
    %v1900 = vadd.f32 %v1112, %v1899
    %1901 = vmatmul.f32.gmra.mxu0 %v1499
    %v1902 = vpop.f32.mrf.mxu0
    %v1903 = vadd.f32 %v1115, %v1902
    %1904 = vmatmul.f32.gmra.mxu0 %v1502
    %v1905 = vpop.f32.mrf.mxu0
    %v1906 = vadd.f32 %v1118, %v1905
    %1907 = vmatmul.f32.gmra.mxu0 %v1505
    %v1908 = vpop.f32.mrf.mxu0
    %v1909 = vadd.f32 %v1121, %v1908
    %1910 = vmatmul.f32.gmra.mxu0 %v1508
    %v1911 = vpop.f32.mrf.mxu0
    %v1912 = vadd.f32 %v1124, %v1911
    %1913 = vmatmul.f32.gmra.mxu0 %v1511
    %v1914 = vpop.f32.mrf.mxu0
    %v1915 = vadd.f32 %v1127, %v1914
    %1916 = vmatmul.f32.gmra.mxu0 %v1514
    %v1917 = vpop.f32.mrf.mxu0
    %v1918 = vadd.f32 %v1130, %v1917
    %1919 = vmatmul.f32.gmra.mxu0 %v1517
    %v1920 = vpop.f32.mrf.mxu0
    %v1921 = vadd.f32 %v1133, %v1920
    %1922 = vmatmul.f32.gmra.mxu0 %v1520
    %v1923 = vpop.f32.mrf.mxu0
    %v1924 = vadd.f32 %v1136, %v1923
    %1925 = vmatmul.f32.gmra.mxu0 %v1523
    %v1926 = vpop.f32.mrf.mxu0
    %v1927 = vadd.f32 %v1139, %v1926
    %1928 = vmatmul.f32.gmra.mxu0 %v1526
    %v1929 = vpop.f32.mrf.mxu0
    %v1930 = vadd.f32 %v1142, %v1929
    %1931 = vmatmul.f32.gmra.mxu0 %v1529
    %v1932 = vpop.f32.mrf.mxu0
    %v1933 = vadd.f32 %v1145, %v1932
    %1934 = vmatmul.f32.gmra.mxu0 %v1532
    %v1935 = vpop.f32.mrf.mxu0
    %v1936 = vadd.f32 %v1148, %v1935
    %1937 = vmatmul.f32.gmra.mxu0 %v1535
    %v1938 = vpop.f32.mrf.mxu0
    %v1939 = vadd.f32 %v1151, %v1938
    %1940 = vmatmul.f32.gmra.mxu0 %v1538
    %v1941 = vpop.f32.mrf.mxu0
    %v1942 = vadd.f32 %v1154, %v1941
    %1943 = vmatmul.f32.gmra.mxu0 %v1541
    %v1944 = vpop.f32.mrf.mxu0
    %v1945 = vadd.f32 %v1157, %v1944
    %1946 = vmatmul.f32.gmra.mxu0 %v1544
    %v1947 = vpop.f32.mrf.mxu0
    %v1948 = vadd.f32 %v1160, %v1947
    %1949 = vmatmul.f32.gmra.mxu0 %v1547
    %v1950 = vpop.f32.mrf.mxu0
    %v1951 = vadd.f32 %v1163, %v1950
    %1952 = vmatmul.f32.gmra.mxu0 %v1550
    %v1953 = vpop.f32.mrf.mxu0
    %v1954 = vadd.f32 %v1166, %v1953
    %1955 = vmatmul.f32.gmra.mxu0 %v1553
    %v1956 = vpop.f32.mrf.mxu0
    %v1957 = vadd.f32 %v1169, %v1956
    %1958 = vmatmul.f32.gmra.mxu0 %v1556
    %v1959 = vpop.f32.mrf.mxu0
    %v1960 = vadd.f32 %v1172, %v1959
    %1961 = vmatmul.f32.gmra.mxu0 %v1559
    %v1962 = vpop.f32.mrf.mxu0
    %v1963 = vadd.f32 %v1175, %v1962
    %1964 = vmatmul.f32.gmra.mxu0 %v1562
    %v1965 = vpop.f32.mrf.mxu0
    %v1966 = vadd.f32 %v1178, %v1965
    %1967 = vmatmul.f32.gmra.mxu0 %v1565
    %v1968 = vpop.f32.mrf.mxu0
    %v1969 = vadd.f32 %v1181, %v1968
    %1970 = vmatmul.f32.gmra.mxu0 %v1568
    %v1971 = vpop.f32.mrf.mxu0
    %v1972 = vadd.f32 %v1184, %v1971
    %1973 = vmatmul.f32.gmra.mxu0 %v1571
    %v1974 = vpop.f32.mrf.mxu0
    %v1975 = vadd.f32 %v1187, %v1974
    %1976 = vmatmul.f32.gmra.mxu0 %v1574
    %v1977 = vpop.f32.mrf.mxu0
    %v1978 = vadd.f32 %v1190, %v1977
    %1979 = vmatmul.f32.gmra.mxu0 %v1577
    %v1980 = vpop.f32.mrf.mxu0
    %v1981 = vadd.f32 %v1193, %v1980
    %1982 = vmatmul.f32.gmra.mxu0 %v1580
    %v1983 = vpop.f32.mrf.mxu0
    %v1984 = vadd.f32 %v1196, %v1983
    %1985 = vmatmul.f32.gmra.mxu0 %v1583
    %v1986 = vpop.f32.mrf.mxu0
    %v1987 = vadd.f32 %v1199, %v1986
    %1988 = vmatmul.f32.gmra.mxu0 %v1586
    %v1989 = vpop.f32.mrf.mxu0
    %v1990 = vadd.f32 %v1202, %v1989
    %1991 = vmatmul.f32.gmra.mxu0 %v1589
    %v1992 = vpop.f32.mrf.mxu0
    %v1993 = vadd.f32 %v1205, %v1992
    %1994 = vmatmul.f32.gmra.mxu0 %v1592
    %v1995 = vpop.f32.mrf.mxu0
    %v1996 = vadd.f32 %v1208, %v1995
    %1997 = vmatmul.f32.gmra.mxu0 %v1595
    %v1998 = vpop.f32.mrf.mxu0
    %v1999 = vadd.f32 %v1211, %v1998
    %2000 = vmatmul.f32.gmra.mxu0 %v1598
    %v2001 = vpop.f32.mrf.mxu0
    %v2002 = vadd.f32 %v1214, %v2001
    %2003 = vmatmul.f32.gmra.mxu0 %v1601
    %v2004 = vpop.f32.mrf.mxu0
    %v2005 = vadd.f32 %v1217, %v2004
    %2006 = vmatmul.f32.gmra.mxu0 %v1604
    %v2007 = vpop.f32.mrf.mxu0
    %v2008 = vadd.f32 %v1220, %v2007
    %2009 = vmatmul.f32.gmra.mxu0 %v1607
    %v2010 = vpop.f32.mrf.mxu0
    %v2011 = vadd.f32 %v1223, %v2010
    %2012 = vmatmul.f32.gmra.mxu0 %v1610
    %v2013 = vpop.f32.mrf.mxu0
    %v2014 = vadd.f32 %v1226, %v2013
    %2015 = vmatmul.f32.gmra.mxu0 %v1613
    %v2016 = vpop.f32.mrf.mxu0
    %v2017 = vadd.f32 %v1229, %v2016
    %2018 = vmatmul.f32.gmra.mxu0 %v1616
    %v2019 = vpop.f32.mrf.mxu0
    %v2020 = vadd.f32 %v1232, %v2019
    %2021 = vmatmul.f32.gmra.mxu0 %v1619
    %v2022 = vpop.f32.mrf.mxu0
    %v2023 = vadd.f32 %v1235, %v2022
    %2024 = vmatmul.f32.gmra.mxu0 %v1622
    %v2025 = vpop.f32.mrf.mxu0
    %v2026 = vadd.f32 %v1238, %v2025
    %2027 = vmatmul.f32.gmra.mxu0 %v1625
    %v2028 = vpop.f32.mrf.mxu0
    %v2029 = vadd.f32 %v1241, %v2028
    %2030 = vmatmul.f32.gmra.mxu0 %v1628
    %v2031 = vpop.f32.mrf.mxu0
    %v2032 = vadd.f32 %v1244, %v2031
    %2033 = vmatmul.f32.gmra.mxu0 %v1631
    %v2034 = vpop.f32.mrf.mxu0
    %v2035 = vadd.f32 %v1247, %v2034
    %2036 = vmatmul.f32.gmra.mxu0 %v1634
    %v2037 = vpop.f32.mrf.mxu0
    %v2038 = vadd.f32 %v1250, %v2037
    %2039 = vmatmul.f32.gmra.mxu0 %v1637
    %v2040 = vpop.f32.mrf.mxu0
    %v2041 = vadd.f32 %v1253, %v2040
    %2042 = vmatmul.f32.gmra.mxu0 %v1640
    %v2043 = vpop.f32.mrf.mxu0
    %v2044 = vadd.f32 %v1256, %v2043
    %2045 = vmatmul.f32.gmra.mxu0 %v1643
    %v2046 = vpop.f32.mrf.mxu0
    %v2047 = vadd.f32 %v1259, %v2046
    %2048 = vmatmul.f32.gmra.mxu0 %v1646
    %v2049 = vpop.f32.mrf.mxu0
    %v2050 = vadd.f32 %v1262, %v2049
    %2051 = vmatmul.f32.gmra.mxu0 %v1649
    %v2052 = vpop.f32.mrf.mxu0
    %v2053 = vadd.f32 %v1265, %v2052
    %2054 = vmatmul.f32.gmra.mxu0 %v1652
    %v2055 = vpop.f32.mrf.mxu0
    %v2056 = vadd.f32 %v1268, %v2055
    %2057 = vmatmul.f32.gmra.mxu0 %v1655
    %v2058 = vpop.f32.mrf.mxu0
    %v2059 = vadd.f32 %v1271, %v2058
    %2060 = vmatmul.f32.gmra.mxu0 %v1658
    %v2061 = vpop.f32.mrf.mxu0
    %v2062 = vadd.f32 %v1274, %v2061
    %2063 = vmatmul.f32.gmra.mxu0 %v1661
    %v2064 = vpop.f32.mrf.mxu0
    %v2065 = vadd.f32 %v1277, %v2064
    %2066 = vmatmul.f32.gmra.mxu0 %v1664
    %v2067 = vpop.f32.mrf.mxu0
    %v2068 = vadd.f32 %v1280, %v2067
    %2069 = vmatmul.f32.gmra.mxu0 %v1667
    %v2070 = vpop.f32.mrf.mxu0
    %v2071 = vadd.f32 %v1283, %v2070
    %2072 = vmatmul.f32.gmra.mxu0 %v1670
    %v2073 = vpop.f32.mrf.mxu0
    %v2074 = vadd.f32 %v1286, %v2073
    %2075 = vmatmul.f32.gmra.mxu0 %v1673
    %v2076 = vpop.f32.mrf.mxu0
    %v2077 = vadd.f32 %v1289, %v2076
    %2078 = vmatmul.f32.gmra.mxu0 %v1676
    %v2079 = vpop.f32.mrf.mxu0
    %v2080 = vadd.f32 %v1292, %v2079
    %2081 = vmatmul.f32.gmra.mxu0 %v1679
    %v2082 = vpop.f32.mrf.mxu0
    %v2083 = vadd.f32 %v1295, %v2082
    %2084 = vmatmul.f32.gmra.mxu0 %v1682
    %v2085 = vpop.f32.mrf.mxu0
    %v2086 = vadd.f32 %v1298, %v2085
    %2087 = vmatmul.f32.gmra.mxu0 %v1685
    %v2088 = vpop.f32.mrf.mxu0
    %v2089 = vadd.f32 %v1301, %v2088
    %2090 = vmatmul.f32.gmra.mxu0 %v1688
    %v2091 = vpop.f32.mrf.mxu0
    %v2092 = vadd.f32 %v1304, %v2091
    %2093 = vmatmul.f32.gmra.mxu0 %v1691
    %v2094 = vpop.f32.mrf.mxu0
    %v2095 = vadd.f32 %v1307, %v2094
    %2096 = vmatmul.f32.gmra.mxu0 %v1694
    %v2097 = vpop.f32.mrf.mxu0
    %v2098 = vadd.f32 %v1310, %v2097
    %2099 = vmatmul.f32.gmra.mxu0 %v1697
    %v2100 = vpop.f32.mrf.mxu0
    %v2101 = vadd.f32 %v1313, %v2100
    %2102 = vmatmul.f32.gmra.mxu0 %v1700
    %v2103 = vpop.f32.mrf.mxu0
    %v2104 = vadd.f32 %v1316, %v2103
    %2105 = vmatmul.f32.gmra.mxu0 %v1703
    %v2106 = vpop.f32.mrf.mxu0
    %v2107 = vadd.f32 %v1319, %v2106
    %2108 = vmatmul.f32.gmra.mxu0 %v1706
    %v2109 = vpop.f32.mrf.mxu0
    %v2110 = vadd.f32 %v1322, %v2109
    %2111 = vmatmul.f32.gmra.mxu0 %v1709
    %v2112 = vpop.f32.mrf.mxu0
    %v2113 = vadd.f32 %v1325, %v2112
    %2114 = vmatmul.f32.gmra.mxu0 %v1712
    %v2115 = vpop.f32.mrf.mxu0
    %v2116 = vadd.f32 %v1328, %v2115
    %2117 = vmatmul.f32.gmra.mxu0 %v1715
    %v2118 = vpop.f32.mrf.mxu0
    %v2119 = vadd.f32 %v1331, %v2118
    %2120 = vmatmul.f32.gmra.mxu0 %v1718
    %v2121 = vpop.f32.mrf.mxu0
    %v2122 = vadd.f32 %v1334, %v2121
    %2123 = vmatmul.f32.gmra.mxu0 %v1721
    %v2124 = vpop.f32.mrf.mxu0
    %v2125 = vadd.f32 %v1337, %v2124
    %2126 = vmatmul.f32.gmra.mxu0 %v1724
    %v2127 = vpop.f32.mrf.mxu0
    %v2128 = vadd.f32 %v1340, %v2127
    %2129 = vmatmul.f32.gmra.mxu0 %v1727
    %v2130 = vpop.f32.mrf.mxu0
    %v2131 = vadd.f32 %v1343, %v2130
    %2132 = vmatmul.f32.gmra.mxu0 %v1730
    %v2133 = vpop.f32.mrf.mxu0
    %v2134 = vadd.f32 %v1346, %v2133
    %2135 = vmatmul.f32.gmra.mxu0 %v1733
    %v2136 = vpop.f32.mrf.mxu0
    %v2137 = vadd.f32 %v1349, %v2136
    %2138 = vmatmul.f32.gmra.mxu0 %v1736
    %v2139 = vpop.f32.mrf.mxu0
    %v2140 = vadd.f32 %v1352, %v2139
    %2141 = vmatmul.f32.gmra.mxu0 %v1739
    %v2142 = vpop.f32.mrf.mxu0
    %v2143 = vadd.f32 %v1355, %v2142
    %2144 = vmatmul.f32.gmra.mxu0 %v1742
    %v2145 = vpop.f32.mrf.mxu0
    %v2146 = vadd.f32 %v1358, %v2145
    %2147 = vmatmul.f32.gmra.mxu0 %v1745
    %v2148 = vpop.f32.mrf.mxu0
    %v2149 = vadd.f32 %v1361, %v2148
    %2150 = vmatmul.f32.gmra.mxu0 %v1748
    %v2151 = vpop.f32.mrf.mxu0
    %v2152 = vadd.f32 %v1364, %v2151
    %2153 = vmatmul.f32.gmra.mxu0 %v1751
    %v2154 = vpop.f32.mrf.mxu0
    %v2155 = vadd.f32 %v1367, %v2154
    %2156 = vdwg.mxu0
    %v2157 = vld [vmem:[#allocation2 + $0x2] sm:$0xff]
    %v2158 = vld [vmem:[#allocation2 + $0xa] sm:$0xff]
    %v2159 = vld [vmem:[#allocation2 + $0x12] sm:$0xff]
    %v2160 = vld [vmem:[#allocation2 + $0x1a] sm:$0xff]
    %v2161 = vld [vmem:[#allocation2 + $0x22] sm:$0xff]
    %v2162 = vld [vmem:[#allocation2 + $0x2a] sm:$0xff]
    %v2163 = vld [vmem:[#allocation2 + $0x32] sm:$0xff]
    %v2164 = vld [vmem:[#allocation2 + $0x3a] sm:$0xff]
    %v2165 = vld [vmem:[#allocation2 + $0x42] sm:$0xff]
    %v2166 = vld [vmem:[#allocation2 + $0x4a] sm:$0xff]
    %v2167 = vld [vmem:[#allocation2 + $0x52] sm:$0xff]
    %v2168 = vld [vmem:[#allocation2 + $0x5a] sm:$0xff]
    %v2169 = vld [vmem:[#allocation2 + $0x62] sm:$0xff]
    %v2170 = vld [vmem:[#allocation2 + $0x6a] sm:$0xff]
    %v2171 = vld [vmem:[#allocation2 + $0x72] sm:$0xff]
    %v2172 = vld [vmem:[#allocation2 + $0x7a] sm:$0xff]
    %v2173 = vld [vmem:[#allocation2 + $0x82] sm:$0xff]
    %v2174 = vld [vmem:[#allocation2 + $0x8a] sm:$0xff]
    %v2175 = vld [vmem:[#allocation2 + $0x92] sm:$0xff]
    %v2176 = vld [vmem:[#allocation2 + $0x9a] sm:$0xff]
    %v2177 = vld [vmem:[#allocation2 + $0xa2] sm:$0xff]
    %v2178 = vld [vmem:[#allocation2 + $0xaa] sm:$0xff]
    %v2179 = vld [vmem:[#allocation2 + $0xb2] sm:$0xff]
    %v2180 = vld [vmem:[#allocation2 + $0xba] sm:$0xff]
    %v2181 = vld [vmem:[#allocation2 + $0xc2] sm:$0xff]
    %v2182 = vld [vmem:[#allocation2 + $0xca] sm:$0xff]
    %v2183 = vld [vmem:[#allocation2 + $0xd2] sm:$0xff]
    %v2184 = vld [vmem:[#allocation2 + $0xda] sm:$0xff]
    %v2185 = vld [vmem:[#allocation2 + $0xe2] sm:$0xff]
    %v2186 = vld [vmem:[#allocation2 + $0xea] sm:$0xff]
    %v2187 = vld [vmem:[#allocation2 + $0xf2] sm:$0xff]
    %v2188 = vld [vmem:[#allocation2 + $0xfa] sm:$0xff]
    %v2189 = vld [vmem:[#allocation2 + $0x102] sm:$0xff]
    %v2190 = vld [vmem:[#allocation2 + $0x10a] sm:$0xff]
    %v2191 = vld [vmem:[#allocation2 + $0x112] sm:$0xff]
    %v2192 = vld [vmem:[#allocation2 + $0x11a] sm:$0xff]
    %v2193 = vld [vmem:[#allocation2 + $0x122] sm:$0xff]
    %v2194 = vld [vmem:[#allocation2 + $0x12a] sm:$0xff]
    %v2195 = vld [vmem:[#allocation2 + $0x132] sm:$0xff]
    %v2196 = vld [vmem:[#allocation2 + $0x13a] sm:$0xff]
    %v2197 = vld [vmem:[#allocation2 + $0x142] sm:$0xff]
    %v2198 = vld [vmem:[#allocation2 + $0x14a] sm:$0xff]
    %v2199 = vld [vmem:[#allocation2 + $0x152] sm:$0xff]
    %v2200 = vld [vmem:[#allocation2 + $0x15a] sm:$0xff]
    %v2201 = vld [vmem:[#allocation2 + $0x162] sm:$0xff]
    %v2202 = vld [vmem:[#allocation2 + $0x16a] sm:$0xff]
    %v2203 = vld [vmem:[#allocation2 + $0x172] sm:$0xff]
    %v2204 = vld [vmem:[#allocation2 + $0x17a] sm:$0xff]
    %v2205 = vld [vmem:[#allocation2 + $0x182] sm:$0xff]
    %v2206 = vld [vmem:[#allocation2 + $0x18a] sm:$0xff]
    %v2207 = vld [vmem:[#allocation2 + $0x192] sm:$0xff]
    %v2208 = vld [vmem:[#allocation2 + $0x19a] sm:$0xff]
    %v2209 = vld [vmem:[#allocation2 + $0x1a2] sm:$0xff]
    %v2210 = vld [vmem:[#allocation2 + $0x1aa] sm:$0xff]
    %v2211 = vld [vmem:[#allocation2 + $0x1b2] sm:$0xff]
    %v2212 = vld [vmem:[#allocation2 + $0x1ba] sm:$0xff]
    %v2213 = vld [vmem:[#allocation2 + $0x1c2] sm:$0xff]
    %v2214 = vld [vmem:[#allocation2 + $0x1ca] sm:$0xff]
    %v2215 = vld [vmem:[#allocation2 + $0x1d2] sm:$0xff]
    %v2216 = vld [vmem:[#allocation2 + $0x1da] sm:$0xff]
    %v2217 = vld [vmem:[#allocation2 + $0x1e2] sm:$0xff]
    %v2218 = vld [vmem:[#allocation2 + $0x1ea] sm:$0xff]
    %v2219 = vld [vmem:[#allocation2 + $0x1f2] sm:$0xff]
    %v2220 = vld [vmem:[#allocation2 + $0x1fa] sm:$0xff]
    %v2221 = vld [vmem:[#allocation2 + $0x202] sm:$0xff]
    %v2222 = vld [vmem:[#allocation2 + $0x20a] sm:$0xff]
    %v2223 = vld [vmem:[#allocation2 + $0x212] sm:$0xff]
    %v2224 = vld [vmem:[#allocation2 + $0x21a] sm:$0xff]
    %v2225 = vld [vmem:[#allocation2 + $0x222] sm:$0xff]
    %v2226 = vld [vmem:[#allocation2 + $0x22a] sm:$0xff]
    %v2227 = vld [vmem:[#allocation2 + $0x232] sm:$0xff]
    %v2228 = vld [vmem:[#allocation2 + $0x23a] sm:$0xff]
    %v2229 = vld [vmem:[#allocation2 + $0x242] sm:$0xff]
    %v2230 = vld [vmem:[#allocation2 + $0x24a] sm:$0xff]
    %v2231 = vld [vmem:[#allocation2 + $0x252] sm:$0xff]
    %v2232 = vld [vmem:[#allocation2 + $0x25a] sm:$0xff]
    %v2233 = vld [vmem:[#allocation2 + $0x262] sm:$0xff]
    %v2234 = vld [vmem:[#allocation2 + $0x26a] sm:$0xff]
    %v2235 = vld [vmem:[#allocation2 + $0x272] sm:$0xff]
    %v2236 = vld [vmem:[#allocation2 + $0x27a] sm:$0xff]
    %v2237 = vld [vmem:[#allocation2 + $0x282] sm:$0xff]
    %v2238 = vld [vmem:[#allocation2 + $0x28a] sm:$0xff]
    %v2239 = vld [vmem:[#allocation2 + $0x292] sm:$0xff]
    %v2240 = vld [vmem:[#allocation2 + $0x29a] sm:$0xff]
    %v2241 = vld [vmem:[#allocation2 + $0x2a2] sm:$0xff]
    %v2242 = vld [vmem:[#allocation2 + $0x2aa] sm:$0xff]
    %v2243 = vld [vmem:[#allocation2 + $0x2b2] sm:$0xff]
    %v2244 = vld [vmem:[#allocation2 + $0x2ba] sm:$0xff]
    %v2245 = vld [vmem:[#allocation2 + $0x2c2] sm:$0xff]
    %v2246 = vld [vmem:[#allocation2 + $0x2ca] sm:$0xff]
    %v2247 = vld [vmem:[#allocation2 + $0x2d2] sm:$0xff]
    %v2248 = vld [vmem:[#allocation2 + $0x2da] sm:$0xff]
    %v2249 = vld [vmem:[#allocation2 + $0x2e2] sm:$0xff]
    %v2250 = vld [vmem:[#allocation2 + $0x2ea] sm:$0xff]
    %v2251 = vld [vmem:[#allocation2 + $0x2f2] sm:$0xff]
    %v2252 = vld [vmem:[#allocation2 + $0x2fa] sm:$0xff]
    %v2253 = vld [vmem:[#allocation2 + $0x302] sm:$0xff]
    %v2254 = vld [vmem:[#allocation2 + $0x30a] sm:$0xff]
    %v2255 = vld [vmem:[#allocation2 + $0x312] sm:$0xff]
    %v2256 = vld [vmem:[#allocation2 + $0x31a] sm:$0xff]
    %v2257 = vld [vmem:[#allocation2 + $0x322] sm:$0xff]
    %v2258 = vld [vmem:[#allocation2 + $0x32a] sm:$0xff]
    %v2259 = vld [vmem:[#allocation2 + $0x332] sm:$0xff]
    %v2260 = vld [vmem:[#allocation2 + $0x33a] sm:$0xff]
    %v2261 = vld [vmem:[#allocation2 + $0x342] sm:$0xff]
    %v2262 = vld [vmem:[#allocation2 + $0x34a] sm:$0xff]
    %v2263 = vld [vmem:[#allocation2 + $0x352] sm:$0xff]
    %v2264 = vld [vmem:[#allocation2 + $0x35a] sm:$0xff]
    %v2265 = vld [vmem:[#allocation2 + $0x362] sm:$0xff]
    %v2266 = vld [vmem:[#allocation2 + $0x36a] sm:$0xff]
    %v2267 = vld [vmem:[#allocation2 + $0x372] sm:$0xff]
    %v2268 = vld [vmem:[#allocation2 + $0x37a] sm:$0xff]
    %v2269 = vld [vmem:[#allocation2 + $0x382] sm:$0xff]
    %v2270 = vld [vmem:[#allocation2 + $0x38a] sm:$0xff]
    %v2271 = vld [vmem:[#allocation2 + $0x392] sm:$0xff]
    %v2272 = vld [vmem:[#allocation2 + $0x39a] sm:$0xff]
    %v2273 = vld [vmem:[#allocation2 + $0x3a2] sm:$0xff]
    %v2274 = vld [vmem:[#allocation2 + $0x3aa] sm:$0xff]
    %v2275 = vld [vmem:[#allocation2 + $0x3b2] sm:$0xff]
    %v2276 = vld [vmem:[#allocation2 + $0x3ba] sm:$0xff]
    %v2277 = vld [vmem:[#allocation2 + $0x3c2] sm:$0xff]
    %v2278 = vld [vmem:[#allocation2 + $0x3ca] sm:$0xff]
    %v2279 = vld [vmem:[#allocation2 + $0x3d2] sm:$0xff]
    %v2280 = vld [vmem:[#allocation2 + $0x3da] sm:$0xff]
    %v2281 = vld [vmem:[#allocation2 + $0x3e2] sm:$0xff]
    %v2282 = vld [vmem:[#allocation2 + $0x3ea] sm:$0xff]
    %v2283 = vld [vmem:[#allocation2 + $0x3f2] sm:$0xff]
    %v2284 = vld [vmem:[#allocation2 + $0x3fa] sm:$0xff]
    %s2285 = scalar_lea.vmem %s2, 8
    %v2286 = vld [vmem:[%s2285] sm:$0xf]
    %v2288 = vsel %vm176, %v2157, 0
    %v2291 = vsel %vm176, %v2158, 0
    %v2294 = vsel %vm176, %v2159, 0
    %v2297 = vsel %vm176, %v2160, 0
    %v2300 = vsel %vm176, %v2161, 0
    %v2303 = vsel %vm176, %v2162, 0
    %v2306 = vsel %vm176, %v2163, 0
    %v2309 = vsel %vm176, %v2164, 0
    %v2312 = vsel %vm176, %v2165, 0
    %v2315 = vsel %vm176, %v2166, 0
    %v2318 = vsel %vm176, %v2167, 0
    %v2321 = vsel %vm176, %v2168, 0
    %v2324 = vsel %vm176, %v2169, 0
    %v2327 = vsel %vm176, %v2170, 0
    %v2330 = vsel %vm176, %v2171, 0
    %v2333 = vsel %vm176, %v2172, 0
    %v2336 = vsel %vm176, %v2173, 0
    %v2339 = vsel %vm176, %v2174, 0
    %v2342 = vsel %vm176, %v2175, 0
    %v2345 = vsel %vm176, %v2176, 0
    %v2348 = vsel %vm176, %v2177, 0
    %v2351 = vsel %vm176, %v2178, 0
    %v2354 = vsel %vm176, %v2179, 0
    %v2357 = vsel %vm176, %v2180, 0
    %v2360 = vsel %vm176, %v2181, 0
    %v2363 = vsel %vm176, %v2182, 0
    %v2366 = vsel %vm176, %v2183, 0
    %v2369 = vsel %vm176, %v2184, 0
    %v2372 = vsel %vm176, %v2185, 0
    %v2375 = vsel %vm176, %v2186, 0
    %v2378 = vsel %vm176, %v2187, 0
    %v2381 = vsel %vm176, %v2188, 0
    %v2384 = vsel %vm176, %v2189, 0
    %v2387 = vsel %vm176, %v2190, 0
    %v2390 = vsel %vm176, %v2191, 0
    %v2393 = vsel %vm176, %v2192, 0
    %v2396 = vsel %vm176, %v2193, 0
    %v2399 = vsel %vm176, %v2194, 0
    %v2402 = vsel %vm176, %v2195, 0
    %v2405 = vsel %vm176, %v2196, 0
    %v2408 = vsel %vm176, %v2197, 0
    %v2411 = vsel %vm176, %v2198, 0
    %v2414 = vsel %vm176, %v2199, 0
    %v2417 = vsel %vm176, %v2200, 0
    %v2420 = vsel %vm176, %v2201, 0
    %v2423 = vsel %vm176, %v2202, 0
    %v2426 = vsel %vm176, %v2203, 0
    %v2429 = vsel %vm176, %v2204, 0
    %v2432 = vsel %vm176, %v2205, 0
    %v2435 = vsel %vm176, %v2206, 0
    %v2438 = vsel %vm176, %v2207, 0
    %v2441 = vsel %vm176, %v2208, 0
    %v2444 = vsel %vm176, %v2209, 0
    %v2447 = vsel %vm176, %v2210, 0
    %v2450 = vsel %vm176, %v2211, 0
    %v2453 = vsel %vm176, %v2212, 0
    %v2456 = vsel %vm176, %v2213, 0
    %v2459 = vsel %vm176, %v2214, 0
    %v2462 = vsel %vm176, %v2215, 0
    %v2465 = vsel %vm176, %v2216, 0
    %v2468 = vsel %vm176, %v2217, 0
    %v2471 = vsel %vm176, %v2218, 0
    %v2474 = vsel %vm176, %v2219, 0
    %v2477 = vsel %vm176, %v2220, 0
    %v2480 = vsel %vm176, %v2221, 0
    %v2483 = vsel %vm176, %v2222, 0
    %v2486 = vsel %vm176, %v2223, 0
    %v2489 = vsel %vm176, %v2224, 0
    %v2492 = vsel %vm176, %v2225, 0
    %v2495 = vsel %vm176, %v2226, 0
    %v2498 = vsel %vm176, %v2227, 0
    %v2501 = vsel %vm176, %v2228, 0
    %v2504 = vsel %vm176, %v2229, 0
    %v2507 = vsel %vm176, %v2230, 0
    %v2510 = vsel %vm176, %v2231, 0
    %v2513 = vsel %vm176, %v2232, 0
    %v2516 = vsel %vm176, %v2233, 0
    %v2519 = vsel %vm176, %v2234, 0
    %v2522 = vsel %vm176, %v2235, 0
    %v2525 = vsel %vm176, %v2236, 0
    %v2528 = vsel %vm176, %v2237, 0
    %v2531 = vsel %vm176, %v2238, 0
    %v2534 = vsel %vm176, %v2239, 0
    %v2537 = vsel %vm176, %v2240, 0
    %v2540 = vsel %vm176, %v2241, 0
    %v2543 = vsel %vm176, %v2242, 0
    %v2546 = vsel %vm176, %v2243, 0
    %v2549 = vsel %vm176, %v2244, 0
    %v2552 = vsel %vm176, %v2245, 0
    %v2555 = vsel %vm176, %v2246, 0
    %v2558 = vsel %vm176, %v2247, 0
    %v2561 = vsel %vm176, %v2248, 0
    %v2564 = vsel %vm176, %v2249, 0
    %v2567 = vsel %vm176, %v2250, 0
    %v2570 = vsel %vm176, %v2251, 0
    %v2573 = vsel %vm176, %v2252, 0
    %v2576 = vsel %vm176, %v2253, 0
    %v2579 = vsel %vm176, %v2254, 0
    %v2582 = vsel %vm176, %v2255, 0
    %v2585 = vsel %vm176, %v2256, 0
    %v2588 = vsel %vm176, %v2257, 0
    %v2591 = vsel %vm176, %v2258, 0
    %v2594 = vsel %vm176, %v2259, 0
    %v2597 = vsel %vm176, %v2260, 0
    %v2600 = vsel %vm176, %v2261, 0
    %v2603 = vsel %vm176, %v2262, 0
    %v2606 = vsel %vm176, %v2263, 0
    %v2609 = vsel %vm176, %v2264, 0
    %v2612 = vsel %vm176, %v2265, 0
    %v2615 = vsel %vm176, %v2266, 0
    %v2618 = vsel %vm176, %v2267, 0
    %v2621 = vsel %vm176, %v2268, 0
    %v2624 = vsel %vm176, %v2269, 0
    %v2627 = vsel %vm176, %v2270, 0
    %v2630 = vsel %vm176, %v2271, 0
    %v2633 = vsel %vm176, %v2272, 0
    %v2636 = vsel %vm176, %v2273, 0
    %v2639 = vsel %vm176, %v2274, 0
    %v2642 = vsel %vm176, %v2275, 0
    %v2645 = vsel %vm176, %v2276, 0
    %v2648 = vsel %vm176, %v2277, 0
    %v2651 = vsel %vm176, %v2278, 0
    %v2654 = vsel %vm176, %v2279, 0
    %v2657 = vsel %vm176, %v2280, 0
    %v2660 = vsel %vm176, %v2281, 0
    %v2663 = vsel %vm176, %v2282, 0
    %v2666 = vsel %vm176, %v2283, 0
    %v2669 = vsel %vm176, %v2284, 0
    %v2672 = vsel %vm964, %v2286, 0
    %2674 = vmatpush.msra.mxu0 0.0
    %2675 = vmatpush.msra.mxu0 0.0
    %2676 = vmatpush.msra.mxu0 0.0
    %2677 = vmatpush.msra.mxu0 0.0
    %2678 = vmatpush.msra.mxu0 0.0
    %2679 = vmatpush.msra.mxu0 0.0
    %2680 = vmatpush.msra.mxu0 0.0
    %2681 = vmatpush.msra.mxu0 0.0
    %2682 = vmatpush.msra.mxu0 0.0
    %2683 = vmatpush.msra.mxu0 0.0
    %2684 = vmatpush.msra.mxu0 0.0
    %2685 = vmatpush.msra.mxu0 0.0
    %2686 = vmatpush.msra.mxu0 0.0
    %2687 = vmatpush.msra.mxu0 0.0
    %2688 = vmatpush.msra.mxu0 0.0
    %2689 = vmatpush.msra.mxu0 %v2672
    %2690 = vmatmul.f32.gmra.mxu0 %v2288
    %v2691 = vpop.f32.mrf.mxu0
    %v2692 = vadd.f32 0.0, %v2691
    %2693 = vmatmul.f32.gmra.mxu0 %v2291
    %v2694 = vpop.f32.mrf.mxu0
    %v2695 = vadd.f32 0.0, %v2694
    %2696 = vmatmul.f32.gmra.mxu0 %v2294
    %v2697 = vpop.f32.mrf.mxu0
    %v2698 = vadd.f32 0.0, %v2697
    %2699 = vmatmul.f32.gmra.mxu0 %v2297
    %v2700 = vpop.f32.mrf.mxu0
    %v2701 = vadd.f32 0.0, %v2700
    %2702 = vmatmul.f32.gmra.mxu0 %v2300
    %v2703 = vpop.f32.mrf.mxu0
    %v2704 = vadd.f32 0.0, %v2703
    %2705 = vmatmul.f32.gmra.mxu0 %v2303
    %v2706 = vpop.f32.mrf.mxu0
    %v2707 = vadd.f32 0.0, %v2706
    %2708 = vmatmul.f32.gmra.mxu0 %v2306
    %v2709 = vpop.f32.mrf.mxu0
    %v2710 = vadd.f32 0.0, %v2709
    %2711 = vmatmul.f32.gmra.mxu0 %v2309
    %v2712 = vpop.f32.mrf.mxu0
    %v2713 = vadd.f32 0.0, %v2712
    %2714 = vmatmul.f32.gmra.mxu0 %v2312
    %v2715 = vpop.f32.mrf.mxu0
    %v2716 = vadd.f32 0.0, %v2715
    %2717 = vmatmul.f32.gmra.mxu0 %v2315
    %v2718 = vpop.f32.mrf.mxu0
    %v2719 = vadd.f32 0.0, %v2718
    %2720 = vmatmul.f32.gmra.mxu0 %v2318
    %v2721 = vpop.f32.mrf.mxu0
    %v2722 = vadd.f32 0.0, %v2721
    %2723 = vmatmul.f32.gmra.mxu0 %v2321
    %v2724 = vpop.f32.mrf.mxu0
    %v2725 = vadd.f32 0.0, %v2724
    %2726 = vmatmul.f32.gmra.mxu0 %v2324
    %v2727 = vpop.f32.mrf.mxu0
    %v2728 = vadd.f32 0.0, %v2727
    %2729 = vmatmul.f32.gmra.mxu0 %v2327
    %v2730 = vpop.f32.mrf.mxu0
    %v2731 = vadd.f32 0.0, %v2730
    %2732 = vmatmul.f32.gmra.mxu0 %v2330
    %v2733 = vpop.f32.mrf.mxu0
    %v2734 = vadd.f32 0.0, %v2733
    %2735 = vmatmul.f32.gmra.mxu0 %v2333
    %v2736 = vpop.f32.mrf.mxu0
    %v2737 = vadd.f32 0.0, %v2736
    %2738 = vmatmul.f32.gmra.mxu0 %v2336
    %v2739 = vpop.f32.mrf.mxu0
    %v2740 = vadd.f32 0.0, %v2739
    %2741 = vmatmul.f32.gmra.mxu0 %v2339
    %v2742 = vpop.f32.mrf.mxu0
    %v2743 = vadd.f32 0.0, %v2742
    %2744 = vmatmul.f32.gmra.mxu0 %v2342
    %v2745 = vpop.f32.mrf.mxu0
    %v2746 = vadd.f32 0.0, %v2745
    %2747 = vmatmul.f32.gmra.mxu0 %v2345
    %v2748 = vpop.f32.mrf.mxu0
    %v2749 = vadd.f32 0.0, %v2748
    %2750 = vmatmul.f32.gmra.mxu0 %v2348
    %v2751 = vpop.f32.mrf.mxu0
    %v2752 = vadd.f32 0.0, %v2751
    %2753 = vmatmul.f32.gmra.mxu0 %v2351
    %v2754 = vpop.f32.mrf.mxu0
    %v2755 = vadd.f32 0.0, %v2754
    %2756 = vmatmul.f32.gmra.mxu0 %v2354
    %v2757 = vpop.f32.mrf.mxu0
    %v2758 = vadd.f32 0.0, %v2757
    %2759 = vmatmul.f32.gmra.mxu0 %v2357
    %v2760 = vpop.f32.mrf.mxu0
    %v2761 = vadd.f32 0.0, %v2760
    %2762 = vmatmul.f32.gmra.mxu0 %v2360
    %v2763 = vpop.f32.mrf.mxu0
    %v2764 = vadd.f32 0.0, %v2763
    %2765 = vmatmul.f32.gmra.mxu0 %v2363
    %v2766 = vpop.f32.mrf.mxu0
    %v2767 = vadd.f32 0.0, %v2766
    %2768 = vmatmul.f32.gmra.mxu0 %v2366
    %v2769 = vpop.f32.mrf.mxu0
    %v2770 = vadd.f32 0.0, %v2769
    %2771 = vmatmul.f32.gmra.mxu0 %v2369
    %v2772 = vpop.f32.mrf.mxu0
    %v2773 = vadd.f32 0.0, %v2772
    %2774 = vmatmul.f32.gmra.mxu0 %v2372
    %v2775 = vpop.f32.mrf.mxu0
    %v2776 = vadd.f32 0.0, %v2775
    %2777 = vmatmul.f32.gmra.mxu0 %v2375
    %v2778 = vpop.f32.mrf.mxu0
    %v2779 = vadd.f32 0.0, %v2778
    %2780 = vmatmul.f32.gmra.mxu0 %v2378
    %v2781 = vpop.f32.mrf.mxu0
    %v2782 = vadd.f32 0.0, %v2781
    %2783 = vmatmul.f32.gmra.mxu0 %v2381
    %v2784 = vpop.f32.mrf.mxu0
    %v2785 = vadd.f32 0.0, %v2784
    %2786 = vmatmul.f32.gmra.mxu0 %v2384
    %v2787 = vpop.f32.mrf.mxu0
    %v2788 = vadd.f32 0.0, %v2787
    %2789 = vmatmul.f32.gmra.mxu0 %v2387
    %v2790 = vpop.f32.mrf.mxu0
    %v2791 = vadd.f32 0.0, %v2790
    %2792 = vmatmul.f32.gmra.mxu0 %v2390
    %v2793 = vpop.f32.mrf.mxu0
    %v2794 = vadd.f32 0.0, %v2793
    %2795 = vmatmul.f32.gmra.mxu0 %v2393
    %v2796 = vpop.f32.mrf.mxu0
    %v2797 = vadd.f32 0.0, %v2796
    %2798 = vmatmul.f32.gmra.mxu0 %v2396
    %v2799 = vpop.f32.mrf.mxu0
    %v2800 = vadd.f32 0.0, %v2799
    %2801 = vmatmul.f32.gmra.mxu0 %v2399
    %v2802 = vpop.f32.mrf.mxu0
    %v2803 = vadd.f32 0.0, %v2802
    %2804 = vmatmul.f32.gmra.mxu0 %v2402
    %v2805 = vpop.f32.mrf.mxu0
    %v2806 = vadd.f32 0.0, %v2805
    %2807 = vmatmul.f32.gmra.mxu0 %v2405
    %v2808 = vpop.f32.mrf.mxu0
    %v2809 = vadd.f32 0.0, %v2808
    %2810 = vmatmul.f32.gmra.mxu0 %v2408
    %v2811 = vpop.f32.mrf.mxu0
    %v2812 = vadd.f32 0.0, %v2811
    %2813 = vmatmul.f32.gmra.mxu0 %v2411
    %v2814 = vpop.f32.mrf.mxu0
    %v2815 = vadd.f32 0.0, %v2814
    %2816 = vmatmul.f32.gmra.mxu0 %v2414
    %v2817 = vpop.f32.mrf.mxu0
    %v2818 = vadd.f32 0.0, %v2817
    %2819 = vmatmul.f32.gmra.mxu0 %v2417
    %v2820 = vpop.f32.mrf.mxu0
    %v2821 = vadd.f32 0.0, %v2820
    %2822 = vmatmul.f32.gmra.mxu0 %v2420
    %v2823 = vpop.f32.mrf.mxu0
    %v2824 = vadd.f32 0.0, %v2823
    %2825 = vmatmul.f32.gmra.mxu0 %v2423
    %v2826 = vpop.f32.mrf.mxu0
    %v2827 = vadd.f32 0.0, %v2826
    %2828 = vmatmul.f32.gmra.mxu0 %v2426
    %v2829 = vpop.f32.mrf.mxu0
    %v2830 = vadd.f32 0.0, %v2829
    %2831 = vmatmul.f32.gmra.mxu0 %v2429
    %v2832 = vpop.f32.mrf.mxu0
    %v2833 = vadd.f32 0.0, %v2832
    %2834 = vmatmul.f32.gmra.mxu0 %v2432
    %v2835 = vpop.f32.mrf.mxu0
    %v2836 = vadd.f32 0.0, %v2835
    %2837 = vmatmul.f32.gmra.mxu0 %v2435
    %v2838 = vpop.f32.mrf.mxu0
    %v2839 = vadd.f32 0.0, %v2838
    %2840 = vmatmul.f32.gmra.mxu0 %v2438
    %v2841 = vpop.f32.mrf.mxu0
    %v2842 = vadd.f32 0.0, %v2841
    %2843 = vmatmul.f32.gmra.mxu0 %v2441
    %v2844 = vpop.f32.mrf.mxu0
    %v2845 = vadd.f32 0.0, %v2844
    %2846 = vmatmul.f32.gmra.mxu0 %v2444
    %v2847 = vpop.f32.mrf.mxu0
    %v2848 = vadd.f32 0.0, %v2847
    %2849 = vmatmul.f32.gmra.mxu0 %v2447
    %v2850 = vpop.f32.mrf.mxu0
    %v2851 = vadd.f32 0.0, %v2850
    %2852 = vmatmul.f32.gmra.mxu0 %v2450
    %v2853 = vpop.f32.mrf.mxu0
    %v2854 = vadd.f32 0.0, %v2853
    %2855 = vmatmul.f32.gmra.mxu0 %v2453
    %v2856 = vpop.f32.mrf.mxu0
    %v2857 = vadd.f32 0.0, %v2856
    %2858 = vmatmul.f32.gmra.mxu0 %v2456
    %v2859 = vpop.f32.mrf.mxu0
    %v2860 = vadd.f32 0.0, %v2859
    %2861 = vmatmul.f32.gmra.mxu0 %v2459
    %v2862 = vpop.f32.mrf.mxu0
    %v2863 = vadd.f32 0.0, %v2862
    %2864 = vmatmul.f32.gmra.mxu0 %v2462
    %v2865 = vpop.f32.mrf.mxu0
    %v2866 = vadd.f32 0.0, %v2865
    %2867 = vmatmul.f32.gmra.mxu0 %v2465
    %v2868 = vpop.f32.mrf.mxu0
    %v2869 = vadd.f32 0.0, %v2868
    %2870 = vmatmul.f32.gmra.mxu0 %v2468
    %v2871 = vpop.f32.mrf.mxu0
    %v2872 = vadd.f32 0.0, %v2871
    %2873 = vmatmul.f32.gmra.mxu0 %v2471
    %v2874 = vpop.f32.mrf.mxu0
    %v2875 = vadd.f32 0.0, %v2874
    %2876 = vmatmul.f32.gmra.mxu0 %v2474
    %v2877 = vpop.f32.mrf.mxu0
    %v2878 = vadd.f32 0.0, %v2877
    %2879 = vmatmul.f32.gmra.mxu0 %v2477
    %v2880 = vpop.f32.mrf.mxu0
    %v2881 = vadd.f32 0.0, %v2880
    %2882 = vmatmul.f32.gmra.mxu0 %v2480
    %v2883 = vpop.f32.mrf.mxu0
    %v2884 = vadd.f32 0.0, %v2883
    %2885 = vmatmul.f32.gmra.mxu0 %v2483
    %v2886 = vpop.f32.mrf.mxu0
    %v2887 = vadd.f32 0.0, %v2886
    %2888 = vmatmul.f32.gmra.mxu0 %v2486
    %v2889 = vpop.f32.mrf.mxu0
    %v2890 = vadd.f32 0.0, %v2889
    %2891 = vmatmul.f32.gmra.mxu0 %v2489
    %v2892 = vpop.f32.mrf.mxu0
    %v2893 = vadd.f32 0.0, %v2892
    %2894 = vmatmul.f32.gmra.mxu0 %v2492
    %v2895 = vpop.f32.mrf.mxu0
    %v2896 = vadd.f32 0.0, %v2895
    %2897 = vmatmul.f32.gmra.mxu0 %v2495
    %v2898 = vpop.f32.mrf.mxu0
    %v2899 = vadd.f32 0.0, %v2898
    %2900 = vmatmul.f32.gmra.mxu0 %v2498
    %v2901 = vpop.f32.mrf.mxu0
    %v2902 = vadd.f32 0.0, %v2901
    %2903 = vmatmul.f32.gmra.mxu0 %v2501
    %v2904 = vpop.f32.mrf.mxu0
    %v2905 = vadd.f32 0.0, %v2904
    %2906 = vmatmul.f32.gmra.mxu0 %v2504
    %v2907 = vpop.f32.mrf.mxu0
    %v2908 = vadd.f32 0.0, %v2907
    %2909 = vmatmul.f32.gmra.mxu0 %v2507
    %v2910 = vpop.f32.mrf.mxu0
    %v2911 = vadd.f32 0.0, %v2910
    %2912 = vmatmul.f32.gmra.mxu0 %v2510
    %v2913 = vpop.f32.mrf.mxu0
    %v2914 = vadd.f32 0.0, %v2913
    %2915 = vmatmul.f32.gmra.mxu0 %v2513
    %v2916 = vpop.f32.mrf.mxu0
    %v2917 = vadd.f32 0.0, %v2916
    %2918 = vmatmul.f32.gmra.mxu0 %v2516
    %v2919 = vpop.f32.mrf.mxu0
    %v2920 = vadd.f32 0.0, %v2919
    %2921 = vmatmul.f32.gmra.mxu0 %v2519
    %v2922 = vpop.f32.mrf.mxu0
    %v2923 = vadd.f32 0.0, %v2922
    %2924 = vmatmul.f32.gmra.mxu0 %v2522
    %v2925 = vpop.f32.mrf.mxu0
    %v2926 = vadd.f32 0.0, %v2925
    %2927 = vmatmul.f32.gmra.mxu0 %v2525
    %v2928 = vpop.f32.mrf.mxu0
    %v2929 = vadd.f32 0.0, %v2928
    %2930 = vmatmul.f32.gmra.mxu0 %v2528
    %v2931 = vpop.f32.mrf.mxu0
    %v2932 = vadd.f32 0.0, %v2931
    %2933 = vmatmul.f32.gmra.mxu0 %v2531
    %v2934 = vpop.f32.mrf.mxu0
    %v2935 = vadd.f32 0.0, %v2934
    %2936 = vmatmul.f32.gmra.mxu0 %v2534
    %v2937 = vpop.f32.mrf.mxu0
    %v2938 = vadd.f32 0.0, %v2937
    %2939 = vmatmul.f32.gmra.mxu0 %v2537
    %v2940 = vpop.f32.mrf.mxu0
    %v2941 = vadd.f32 0.0, %v2940
    %2942 = vmatmul.f32.gmra.mxu0 %v2540
    %v2943 = vpop.f32.mrf.mxu0
    %v2944 = vadd.f32 0.0, %v2943
    %2945 = vmatmul.f32.gmra.mxu0 %v2543
    %v2946 = vpop.f32.mrf.mxu0
    %v2947 = vadd.f32 0.0, %v2946
    %2948 = vmatmul.f32.gmra.mxu0 %v2546
    %v2949 = vpop.f32.mrf.mxu0
    %v2950 = vadd.f32 0.0, %v2949
    %2951 = vmatmul.f32.gmra.mxu0 %v2549
    %v2952 = vpop.f32.mrf.mxu0
    %v2953 = vadd.f32 0.0, %v2952
    %2954 = vmatmul.f32.gmra.mxu0 %v2552
    %v2955 = vpop.f32.mrf.mxu0
    %v2956 = vadd.f32 0.0, %v2955
    %2957 = vmatmul.f32.gmra.mxu0 %v2555
    %v2958 = vpop.f32.mrf.mxu0
    %v2959 = vadd.f32 0.0, %v2958
    %2960 = vmatmul.f32.gmra.mxu0 %v2558
    %v2961 = vpop.f32.mrf.mxu0
    %v2962 = vadd.f32 0.0, %v2961
    %2963 = vmatmul.f32.gmra.mxu0 %v2561
    %v2964 = vpop.f32.mrf.mxu0
    %v2965 = vadd.f32 0.0, %v2964
    %2966 = vmatmul.f32.gmra.mxu0 %v2564
    %v2967 = vpop.f32.mrf.mxu0
    %v2968 = vadd.f32 0.0, %v2967
    %2969 = vmatmul.f32.gmra.mxu0 %v2567
    %v2970 = vpop.f32.mrf.mxu0
    %v2971 = vadd.f32 0.0, %v2970
    %2972 = vmatmul.f32.gmra.mxu0 %v2570
    %v2973 = vpop.f32.mrf.mxu0
    %v2974 = vadd.f32 0.0, %v2973
    %2975 = vmatmul.f32.gmra.mxu0 %v2573
    %v2976 = vpop.f32.mrf.mxu0
    %v2977 = vadd.f32 0.0, %v2976
    %2978 = vmatmul.f32.gmra.mxu0 %v2576
    %v2979 = vpop.f32.mrf.mxu0
    %v2980 = vadd.f32 0.0, %v2979
    %2981 = vmatmul.f32.gmra.mxu0 %v2579
    %v2982 = vpop.f32.mrf.mxu0
    %v2983 = vadd.f32 0.0, %v2982
    %2984 = vmatmul.f32.gmra.mxu0 %v2582
    %v2985 = vpop.f32.mrf.mxu0
    %v2986 = vadd.f32 0.0, %v2985
    %2987 = vmatmul.f32.gmra.mxu0 %v2585
    %v2988 = vpop.f32.mrf.mxu0
    %v2989 = vadd.f32 0.0, %v2988
    %2990 = vmatmul.f32.gmra.mxu0 %v2588
    %v2991 = vpop.f32.mrf.mxu0
    %v2992 = vadd.f32 0.0, %v2991
    %2993 = vmatmul.f32.gmra.mxu0 %v2591
    %v2994 = vpop.f32.mrf.mxu0
    %v2995 = vadd.f32 0.0, %v2994
    %2996 = vmatmul.f32.gmra.mxu0 %v2594
    %v2997 = vpop.f32.mrf.mxu0
    %v2998 = vadd.f32 0.0, %v2997
    %2999 = vmatmul.f32.gmra.mxu0 %v2597
    %v3000 = vpop.f32.mrf.mxu0
    %v3001 = vadd.f32 0.0, %v3000
    %3002 = vmatmul.f32.gmra.mxu0 %v2600
    %v3003 = vpop.f32.mrf.mxu0
    %v3004 = vadd.f32 0.0, %v3003
    %3005 = vmatmul.f32.gmra.mxu0 %v2603
    %v3006 = vpop.f32.mrf.mxu0
    %v3007 = vadd.f32 0.0, %v3006
    %3008 = vmatmul.f32.gmra.mxu0 %v2606
    %v3009 = vpop.f32.mrf.mxu0
    %v3010 = vadd.f32 0.0, %v3009
    %3011 = vmatmul.f32.gmra.mxu0 %v2609
    %v3012 = vpop.f32.mrf.mxu0
    %v3013 = vadd.f32 0.0, %v3012
    %3014 = vmatmul.f32.gmra.mxu0 %v2612
    %v3015 = vpop.f32.mrf.mxu0
    %v3016 = vadd.f32 0.0, %v3015
    %3017 = vmatmul.f32.gmra.mxu0 %v2615
    %v3018 = vpop.f32.mrf.mxu0
    %v3019 = vadd.f32 0.0, %v3018
    %3020 = vmatmul.f32.gmra.mxu0 %v2618
    %v3021 = vpop.f32.mrf.mxu0
    %v3022 = vadd.f32 0.0, %v3021
    %3023 = vmatmul.f32.gmra.mxu0 %v2621
    %v3024 = vpop.f32.mrf.mxu0
    %v3025 = vadd.f32 0.0, %v3024
    %3026 = vmatmul.f32.gmra.mxu0 %v2624
    %v3027 = vpop.f32.mrf.mxu0
    %v3028 = vadd.f32 0.0, %v3027
    %3029 = vmatmul.f32.gmra.mxu0 %v2627
    %v3030 = vpop.f32.mrf.mxu0
    %v3031 = vadd.f32 0.0, %v3030
    %3032 = vmatmul.f32.gmra.mxu0 %v2630
    %v3033 = vpop.f32.mrf.mxu0
    %v3034 = vadd.f32 0.0, %v3033
    %3035 = vmatmul.f32.gmra.mxu0 %v2633
    %v3036 = vpop.f32.mrf.mxu0
    %v3037 = vadd.f32 0.0, %v3036
    %3038 = vmatmul.f32.gmra.mxu0 %v2636
    %v3039 = vpop.f32.mrf.mxu0
    %v3040 = vadd.f32 0.0, %v3039
    %3041 = vmatmul.f32.gmra.mxu0 %v2639
    %v3042 = vpop.f32.mrf.mxu0
    %v3043 = vadd.f32 0.0, %v3042
    %3044 = vmatmul.f32.gmra.mxu0 %v2642
    %v3045 = vpop.f32.mrf.mxu0
    %v3046 = vadd.f32 0.0, %v3045
    %3047 = vmatmul.f32.gmra.mxu0 %v2645
    %v3048 = vpop.f32.mrf.mxu0
    %v3049 = vadd.f32 0.0, %v3048
    %3050 = vmatmul.f32.gmra.mxu0 %v2648
    %v3051 = vpop.f32.mrf.mxu0
    %v3052 = vadd.f32 0.0, %v3051
    %3053 = vmatmul.f32.gmra.mxu0 %v2651
    %v3054 = vpop.f32.mrf.mxu0
    %v3055 = vadd.f32 0.0, %v3054
    %3056 = vmatmul.f32.gmra.mxu0 %v2654
    %v3057 = vpop.f32.mrf.mxu0
    %v3058 = vadd.f32 0.0, %v3057
    %3059 = vmatmul.f32.gmra.mxu0 %v2657
    %v3060 = vpop.f32.mrf.mxu0
    %v3061 = vadd.f32 0.0, %v3060
    %3062 = vmatmul.f32.gmra.mxu0 %v2660
    %v3063 = vpop.f32.mrf.mxu0
    %v3064 = vadd.f32 0.0, %v3063
    %3065 = vmatmul.f32.gmra.mxu0 %v2663
    %v3066 = vpop.f32.mrf.mxu0
    %v3067 = vadd.f32 0.0, %v3066
    %3068 = vmatmul.f32.gmra.mxu0 %v2666
    %v3069 = vpop.f32.mrf.mxu0
    %v3070 = vadd.f32 0.0, %v3069
    %3071 = vmatmul.f32.gmra.mxu0 %v2669
    %v3072 = vpop.f32.mrf.mxu0
    %v3073 = vadd.f32 0.0, %v3072
    %3074 = vdwg.mxu0
    %v3075 = vadd.f32 %v1774, %v2692
    %v3076 = vadd.f32 %v1777, %v2695
    %v3077 = vadd.f32 %v1780, %v2698
    %v3078 = vadd.f32 %v1783, %v2701
    %v3079 = vadd.f32 %v1786, %v2704
    %v3080 = vadd.f32 %v1789, %v2707
    %v3081 = vadd.f32 %v1792, %v2710
    %v3082 = vadd.f32 %v1795, %v2713
    %v3083 = vadd.f32 %v1798, %v2716
    %v3084 = vadd.f32 %v1801, %v2719
    %v3085 = vadd.f32 %v1804, %v2722
    %v3086 = vadd.f32 %v1807, %v2725
    %v3087 = vadd.f32 %v1810, %v2728
    %v3088 = vadd.f32 %v1813, %v2731
    %v3089 = vadd.f32 %v1816, %v2734
    %v3090 = vadd.f32 %v1819, %v2737
    %v3091 = vadd.f32 %v1822, %v2740
    %v3092 = vadd.f32 %v1825, %v2743
    %v3093 = vadd.f32 %v1828, %v2746
    %v3094 = vadd.f32 %v1831, %v2749
    %v3095 = vadd.f32 %v1834, %v2752
    %v3096 = vadd.f32 %v1837, %v2755
    %v3097 = vadd.f32 %v1840, %v2758
    %v3098 = vadd.f32 %v1843, %v2761
    %v3099 = vadd.f32 %v1846, %v2764
    %v3100 = vadd.f32 %v1849, %v2767
    %v3101 = vadd.f32 %v1852, %v2770
    %v3102 = vadd.f32 %v1855, %v2773
    %v3103 = vadd.f32 %v1858, %v2776
    %v3104 = vadd.f32 %v1861, %v2779
    %v3105 = vadd.f32 %v1864, %v2782
    %v3106 = vadd.f32 %v1867, %v2785
    %v3107 = vadd.f32 %v1870, %v2788
    %v3108 = vadd.f32 %v1873, %v2791
    %v3109 = vadd.f32 %v1876, %v2794
    %v3110 = vadd.f32 %v1879, %v2797
    %v3111 = vadd.f32 %v1882, %v2800
    %v3112 = vadd.f32 %v1885, %v2803
    %v3113 = vadd.f32 %v1888, %v2806
    %v3114 = vadd.f32 %v1891, %v2809
    %v3115 = vadd.f32 %v1894, %v2812
    %v3116 = vadd.f32 %v1897, %v2815
    %v3117 = vadd.f32 %v1900, %v2818
    %v3118 = vadd.f32 %v1903, %v2821
    %v3119 = vadd.f32 %v1906, %v2824
    %v3120 = vadd.f32 %v1909, %v2827
    %v3121 = vadd.f32 %v1912, %v2830
    %v3122 = vadd.f32 %v1915, %v2833
    %v3123 = vadd.f32 %v1918, %v2836
    %v3124 = vadd.f32 %v1921, %v2839
    %v3125 = vadd.f32 %v1924, %v2842
    %v3126 = vadd.f32 %v1927, %v2845
    %v3127 = vadd.f32 %v1930, %v2848
    %v3128 = vadd.f32 %v1933, %v2851
    %v3129 = vadd.f32 %v1936, %v2854
    %v3130 = vadd.f32 %v1939, %v2857
    %v3131 = vadd.f32 %v1942, %v2860
    %v3132 = vadd.f32 %v1945, %v2863
    %v3133 = vadd.f32 %v1948, %v2866
    %v3134 = vadd.f32 %v1951, %v2869
    %v3135 = vadd.f32 %v1954, %v2872
    %v3136 = vadd.f32 %v1957, %v2875
    %v3137 = vadd.f32 %v1960, %v2878
    %v3138 = vadd.f32 %v1963, %v2881
    %v3139 = vadd.f32 %v1966, %v2884
    %v3140 = vadd.f32 %v1969, %v2887
    %v3141 = vadd.f32 %v1972, %v2890
    %v3142 = vadd.f32 %v1975, %v2893
    %v3143 = vadd.f32 %v1978, %v2896
    %v3144 = vadd.f32 %v1981, %v2899
    %v3145 = vadd.f32 %v1984, %v2902
    %v3146 = vadd.f32 %v1987, %v2905
    %v3147 = vadd.f32 %v1990, %v2908
    %v3148 = vadd.f32 %v1993, %v2911
    %v3149 = vadd.f32 %v1996, %v2914
    %v3150 = vadd.f32 %v1999, %v2917
    %v3151 = vadd.f32 %v2002, %v2920
    %v3152 = vadd.f32 %v2005, %v2923
    %v3153 = vadd.f32 %v2008, %v2926
    %v3154 = vadd.f32 %v2011, %v2929
    %v3155 = vadd.f32 %v2014, %v2932
    %v3156 = vadd.f32 %v2017, %v2935
    %v3157 = vadd.f32 %v2020, %v2938
    %v3158 = vadd.f32 %v2023, %v2941
    %v3159 = vadd.f32 %v2026, %v2944
    %v3160 = vadd.f32 %v2029, %v2947
    %v3161 = vadd.f32 %v2032, %v2950
    %v3162 = vadd.f32 %v2035, %v2953
    %v3163 = vadd.f32 %v2038, %v2956
    %v3164 = vadd.f32 %v2041, %v2959
    %v3165 = vadd.f32 %v2044, %v2962
    %v3166 = vadd.f32 %v2047, %v2965
    %v3167 = vadd.f32 %v2050, %v2968
    %v3168 = vadd.f32 %v2053, %v2971
    %v3169 = vadd.f32 %v2056, %v2974
    %v3170 = vadd.f32 %v2059, %v2977
    %v3171 = vadd.f32 %v2062, %v2980
    %v3172 = vadd.f32 %v2065, %v2983
    %v3173 = vadd.f32 %v2068, %v2986
    %v3174 = vadd.f32 %v2071, %v2989
    %v3175 = vadd.f32 %v2074, %v2992
    %v3176 = vadd.f32 %v2077, %v2995
    %v3177 = vadd.f32 %v2080, %v2998
    %v3178 = vadd.f32 %v2083, %v3001
    %v3179 = vadd.f32 %v2086, %v3004
    %v3180 = vadd.f32 %v2089, %v3007
    %v3181 = vadd.f32 %v2092, %v3010
    %v3182 = vadd.f32 %v2095, %v3013
    %v3183 = vadd.f32 %v2098, %v3016
    %v3184 = vadd.f32 %v2101, %v3019
    %v3185 = vadd.f32 %v2104, %v3022
    %v3186 = vadd.f32 %v2107, %v3025
    %v3187 = vadd.f32 %v2110, %v3028
    %v3188 = vadd.f32 %v2113, %v3031
    %v3189 = vadd.f32 %v2116, %v3034
    %v3190 = vadd.f32 %v2119, %v3037
    %v3191 = vadd.f32 %v2122, %v3040
    %v3192 = vadd.f32 %v2125, %v3043
    %v3193 = vadd.f32 %v2128, %v3046
    %v3194 = vadd.f32 %v2131, %v3049
    %v3195 = vadd.f32 %v2134, %v3052
    %v3196 = vadd.f32 %v2137, %v3055
    %v3197 = vadd.f32 %v2140, %v3058
    %v3198 = vadd.f32 %v2143, %v3061
    %v3199 = vadd.f32 %v2146, %v3064
    %v3200 = vadd.f32 %v2149, %v3067
    %v3201 = vadd.f32 %v2152, %v3070
    %v3202 = vadd.f32 %v2155, %v3073
    %v3203 = vld [vmem:[#allocation2 + $0x12] sm:$0xff]
    %v3204 = vld [vmem:[#allocation2 + $0x1a] sm:$0xff]
    %v3205 = vld [vmem:[#allocation2 + $0x22] sm:$0xff]
    %v3206 = vld [vmem:[#allocation2 + $0x2a] sm:$0xff]
    %v3207 = vld [vmem:[#allocation2 + $0x32] sm:$0xff]
    %v3208 = vld [vmem:[#allocation2 + $0x3a] sm:$0xff]
    %v3209 = vld [vmem:[#allocation2 + $0x42] sm:$0xff]
    %v3210 = vld [vmem:[#allocation2 + $0x4a] sm:$0xff]
    %v3211 = vld [vmem:[#allocation2 + $0x52] sm:$0xff]
    %v3212 = vld [vmem:[#allocation2 + $0x5a] sm:$0xff]
    %v3213 = vld [vmem:[#allocation2 + $0x62] sm:$0xff]
    %v3214 = vld [vmem:[#allocation2 + $0x6a] sm:$0xff]
    %v3215 = vld [vmem:[#allocation2 + $0x72] sm:$0xff]
    %v3216 = vld [vmem:[#allocation2 + $0x7a] sm:$0xff]
    %v3217 = vld [vmem:[#allocation2 + $0x82] sm:$0xff]
    %v3218 = vld [vmem:[#allocation2 + $0x8a] sm:$0xff]
    %v3219 = vld [vmem:[#allocation2 + $0x92] sm:$0xff]
    %v3220 = vld [vmem:[#allocation2 + $0x9a] sm:$0xff]
    %v3221 = vld [vmem:[#allocation2 + $0xa2] sm:$0xff]
    %v3222 = vld [vmem:[#allocation2 + $0xaa] sm:$0xff]
    %v3223 = vld [vmem:[#allocation2 + $0xb2] sm:$0xff]
    %v3224 = vld [vmem:[#allocation2 + $0xba] sm:$0xff]
    %v3225 = vld [vmem:[#allocation2 + $0xc2] sm:$0xff]
    %v3226 = vld [vmem:[#allocation2 + $0xca] sm:$0xff]
    %v3227 = vld [vmem:[#allocation2 + $0xd2] sm:$0xff]
    %v3228 = vld [vmem:[#allocation2 + $0xda] sm:$0xff]
    %v3229 = vld [vmem:[#allocation2 + $0xe2] sm:$0xff]
    %v3230 = vld [vmem:[#allocation2 + $0xea] sm:$0xff]
    %v3231 = vld [vmem:[#allocation2 + $0xf2] sm:$0xff]
    %v3232 = vld [vmem:[#allocation2 + $0xfa] sm:$0xff]
    %v3233 = vld [vmem:[#allocation2 + $0x102] sm:$0xff]
    %v3234 = vld [vmem:[#allocation2 + $0x10a] sm:$0xff]
    %v3235 = vld [vmem:[#allocation2 + $0x112] sm:$0xff]
    %v3236 = vld [vmem:[#allocation2 + $0x11a] sm:$0xff]
    %v3237 = vld [vmem:[#allocation2 + $0x122] sm:$0xff]
    %v3238 = vld [vmem:[#allocation2 + $0x12a] sm:$0xff]
    %v3239 = vld [vmem:[#allocation2 + $0x132] sm:$0xff]
    %v3240 = vld [vmem:[#allocation2 + $0x13a] sm:$0xff]
    %v3241 = vld [vmem:[#allocation2 + $0x142] sm:$0xff]
    %v3242 = vld [vmem:[#allocation2 + $0x14a] sm:$0xff]
    %v3243 = vld [vmem:[#allocation2 + $0x152] sm:$0xff]
    %v3244 = vld [vmem:[#allocation2 + $0x15a] sm:$0xff]
    %v3245 = vld [vmem:[#allocation2 + $0x162] sm:$0xff]
    %v3246 = vld [vmem:[#allocation2 + $0x16a] sm:$0xff]
    %v3247 = vld [vmem:[#allocation2 + $0x172] sm:$0xff]
    %v3248 = vld [vmem:[#allocation2 + $0x17a] sm:$0xff]
    %v3249 = vld [vmem:[#allocation2 + $0x182] sm:$0xff]
    %v3250 = vld [vmem:[#allocation2 + $0x18a] sm:$0xff]
    %v3251 = vld [vmem:[#allocation2 + $0x192] sm:$0xff]
    %v3252 = vld [vmem:[#allocation2 + $0x19a] sm:$0xff]
    %v3253 = vld [vmem:[#allocation2 + $0x1a2] sm:$0xff]
    %v3254 = vld [vmem:[#allocation2 + $0x1aa] sm:$0xff]
    %v3255 = vld [vmem:[#allocation2 + $0x1b2] sm:$0xff]
    %v3256 = vld [vmem:[#allocation2 + $0x1ba] sm:$0xff]
    %v3257 = vld [vmem:[#allocation2 + $0x1c2] sm:$0xff]
    %v3258 = vld [vmem:[#allocation2 + $0x1ca] sm:$0xff]
    %v3259 = vld [vmem:[#allocation2 + $0x1d2] sm:$0xff]
    %v3260 = vld [vmem:[#allocation2 + $0x1da] sm:$0xff]
    %v3261 = vld [vmem:[#allocation2 + $0x1e2] sm:$0xff]
    %v3262 = vld [vmem:[#allocation2 + $0x1ea] sm:$0xff]
    %v3263 = vld [vmem:[#allocation2 + $0x1f2] sm:$0xff]
    %v3264 = vld [vmem:[#allocation2 + $0x1fa] sm:$0xff]
    %v3265 = vld [vmem:[#allocation2 + $0x202] sm:$0xff]
    %v3266 = vld [vmem:[#allocation2 + $0x20a] sm:$0xff]
    %v3267 = vld [vmem:[#allocation2 + $0x212] sm:$0xff]
    %v3268 = vld [vmem:[#allocation2 + $0x21a] sm:$0xff]
    %v3269 = vld [vmem:[#allocation2 + $0x222] sm:$0xff]
    %v3270 = vld [vmem:[#allocation2 + $0x22a] sm:$0xff]
    %v3271 = vld [vmem:[#allocation2 + $0x232] sm:$0xff]
    %v3272 = vld [vmem:[#allocation2 + $0x23a] sm:$0xff]
    %v3273 = vld [vmem:[#allocation2 + $0x242] sm:$0xff]
    %v3274 = vld [vmem:[#allocation2 + $0x24a] sm:$0xff]
    %v3275 = vld [vmem:[#allocation2 + $0x252] sm:$0xff]
    %v3276 = vld [vmem:[#allocation2 + $0x25a] sm:$0xff]
    %v3277 = vld [vmem:[#allocation2 + $0x262] sm:$0xff]
    %v3278 = vld [vmem:[#allocation2 + $0x26a] sm:$0xff]
    %v3279 = vld [vmem:[#allocation2 + $0x272] sm:$0xff]
    %v3280 = vld [vmem:[#allocation2 + $0x27a] sm:$0xff]
    %v3281 = vld [vmem:[#allocation2 + $0x282] sm:$0xff]
    %v3282 = vld [vmem:[#allocation2 + $0x28a] sm:$0xff]
    %v3283 = vld [vmem:[#allocation2 + $0x292] sm:$0xff]
    %v3284 = vld [vmem:[#allocation2 + $0x29a] sm:$0xff]
    %v3285 = vld [vmem:[#allocation2 + $0x2a2] sm:$0xff]
    %v3286 = vld [vmem:[#allocation2 + $0x2aa] sm:$0xff]
    %v3287 = vld [vmem:[#allocation2 + $0x2b2] sm:$0xff]
    %v3288 = vld [vmem:[#allocation2 + $0x2ba] sm:$0xff]
    %v3289 = vld [vmem:[#allocation2 + $0x2c2] sm:$0xff]
    %v3290 = vld [vmem:[#allocation2 + $0x2ca] sm:$0xff]
    %v3291 = vld [vmem:[#allocation2 + $0x2d2] sm:$0xff]
    %v3292 = vld [vmem:[#allocation2 + $0x2da] sm:$0xff]
    %v3293 = vld [vmem:[#allocation2 + $0x2e2] sm:$0xff]
    %v3294 = vld [vmem:[#allocation2 + $0x2ea] sm:$0xff]
    %v3295 = vld [vmem:[#allocation2 + $0x2f2] sm:$0xff]
    %v3296 = vld [vmem:[#allocation2 + $0x2fa] sm:$0xff]
    %v3297 = vld [vmem:[#allocation2 + $0x302] sm:$0xff]
    %v3298 = vld [vmem:[#allocation2 + $0x30a] sm:$0xff]
    %v3299 = vld [vmem:[#allocation2 + $0x312] sm:$0xff]
    %v3300 = vld [vmem:[#allocation2 + $0x31a] sm:$0xff]
    %v3301 = vld [vmem:[#allocation2 + $0x322] sm:$0xff]
    %v3302 = vld [vmem:[#allocation2 + $0x32a] sm:$0xff]
    %v3303 = vld [vmem:[#allocation2 + $0x332] sm:$0xff]
    %v3304 = vld [vmem:[#allocation2 + $0x33a] sm:$0xff]
    %v3305 = vld [vmem:[#allocation2 + $0x342] sm:$0xff]
    %v3306 = vld [vmem:[#allocation2 + $0x34a] sm:$0xff]
    %v3307 = vld [vmem:[#allocation2 + $0x352] sm:$0xff]
    %v3308 = vld [vmem:[#allocation2 + $0x35a] sm:$0xff]
    %v3309 = vld [vmem:[#allocation2 + $0x362] sm:$0xff]
    %v3310 = vld [vmem:[#allocation2 + $0x36a] sm:$0xff]
    %v3311 = vld [vmem:[#allocation2 + $0x372] sm:$0xff]
    %v3312 = vld [vmem:[#allocation2 + $0x37a] sm:$0xff]
    %v3313 = vld [vmem:[#allocation2 + $0x382] sm:$0xff]
    %v3314 = vld [vmem:[#allocation2 + $0x38a] sm:$0xff]
    %v3315 = vld [vmem:[#allocation2 + $0x392] sm:$0xff]
    %v3316 = vld [vmem:[#allocation2 + $0x39a] sm:$0xff]
    %v3317 = vld [vmem:[#allocation2 + $0x3a2] sm:$0xff]
    %v3318 = vld [vmem:[#allocation2 + $0x3aa] sm:$0xff]
    %v3319 = vld [vmem:[#allocation2 + $0x3b2] sm:$0xff]
    %v3320 = vld [vmem:[#allocation2 + $0x3ba] sm:$0xff]
    %v3321 = vld [vmem:[#allocation2 + $0x3c2] sm:$0xff]
    %v3322 = vld [vmem:[#allocation2 + $0x3ca] sm:$0xff]
    %v3323 = vld [vmem:[#allocation2 + $0x3d2] sm:$0xff]
    %v3324 = vld [vmem:[#allocation2 + $0x3da] sm:$0xff]
    %v3325 = vld [vmem:[#allocation2 + $0x3e2] sm:$0xff]
    %v3326 = vld [vmem:[#allocation2 + $0x3ea] sm:$0xff]
    %v3327 = vld [vmem:[#allocation2 + $0x3f2] sm:$0xff]
    %v3328 = vld [vmem:[#allocation2 + $0x3fa] sm:$0xff]
    %v3329 = vld [vmem:[#allocation2 + $0x402] sm:$0xff]
    %v3330 = vld [vmem:[#allocation2 + $0x40a] sm:$0xff]
    %s3331 = scalar_lea.vmem %s2, 12
    %v3332 = vld [vmem:[%s3331] sm:$0xf]
    %v3334 = vsel %vm176, %v3203, 0
    %v3337 = vsel %vm176, %v3204, 0
    %v3340 = vsel %vm176, %v3205, 0
    %v3343 = vsel %vm176, %v3206, 0
    %v3346 = vsel %vm176, %v3207, 0
    %v3349 = vsel %vm176, %v3208, 0
    %v3352 = vsel %vm176, %v3209, 0
    %v3355 = vsel %vm176, %v3210, 0
    %v3358 = vsel %vm176, %v3211, 0
    %v3361 = vsel %vm176, %v3212, 0
    %v3364 = vsel %vm176, %v3213, 0
    %v3367 = vsel %vm176, %v3214, 0
    %v3370 = vsel %vm176, %v3215, 0
    %v3373 = vsel %vm176, %v3216, 0
    %v3376 = vsel %vm176, %v3217, 0
    %v3379 = vsel %vm176, %v3218, 0
    %v3382 = vsel %vm176, %v3219, 0
    %v3385 = vsel %vm176, %v3220, 0
    %v3388 = vsel %vm176, %v3221, 0
    %v3391 = vsel %vm176, %v3222, 0
    %v3394 = vsel %vm176, %v3223, 0
    %v3397 = vsel %vm176, %v3224, 0
    %v3400 = vsel %vm176, %v3225, 0
    %v3403 = vsel %vm176, %v3226, 0
    %v3406 = vsel %vm176, %v3227, 0
    %v3409 = vsel %vm176, %v3228, 0
    %v3412 = vsel %vm176, %v3229, 0
    %v3415 = vsel %vm176, %v3230, 0
    %v3418 = vsel %vm176, %v3231, 0
    %v3421 = vsel %vm176, %v3232, 0
    %v3424 = vsel %vm176, %v3233, 0
    %v3427 = vsel %vm176, %v3234, 0
    %v3430 = vsel %vm176, %v3235, 0
    %v3433 = vsel %vm176, %v3236, 0
    %v3436 = vsel %vm176, %v3237, 0
    %v3439 = vsel %vm176, %v3238, 0
    %v3442 = vsel %vm176, %v3239, 0
    %v3445 = vsel %vm176, %v3240, 0
    %v3448 = vsel %vm176, %v3241, 0
    %v3451 = vsel %vm176, %v3242, 0
    %v3454 = vsel %vm176, %v3243, 0
    %v3457 = vsel %vm176, %v3244, 0
    %v3460 = vsel %vm176, %v3245, 0
    %v3463 = vsel %vm176, %v3246, 0
    %v3466 = vsel %vm176, %v3247, 0
    %v3469 = vsel %vm176, %v3248, 0
    %v3472 = vsel %vm176, %v3249, 0
    %v3475 = vsel %vm176, %v3250, 0
    %v3478 = vsel %vm176, %v3251, 0
    %v3481 = vsel %vm176, %v3252, 0
    %v3484 = vsel %vm176, %v3253, 0
    %v3487 = vsel %vm176, %v3254, 0
    %v3490 = vsel %vm176, %v3255, 0
    %v3493 = vsel %vm176, %v3256, 0
    %v3496 = vsel %vm176, %v3257, 0
    %v3499 = vsel %vm176, %v3258, 0
    %v3502 = vsel %vm176, %v3259, 0
    %v3505 = vsel %vm176, %v3260, 0
    %v3508 = vsel %vm176, %v3261, 0
    %v3511 = vsel %vm176, %v3262, 0
    %v3514 = vsel %vm176, %v3263, 0
    %v3517 = vsel %vm176, %v3264, 0
    %v3520 = vsel %vm176, %v3265, 0
    %v3523 = vsel %vm176, %v3266, 0
    %v3526 = vsel %vm176, %v3267, 0
    %v3529 = vsel %vm176, %v3268, 0
    %v3532 = vsel %vm176, %v3269, 0
    %v3535 = vsel %vm176, %v3270, 0
    %v3538 = vsel %vm176, %v3271, 0
    %v3541 = vsel %vm176, %v3272, 0
    %v3544 = vsel %vm176, %v3273, 0
    %v3547 = vsel %vm176, %v3274, 0
    %v3550 = vsel %vm176, %v3275, 0
    %v3553 = vsel %vm176, %v3276, 0
    %v3556 = vsel %vm176, %v3277, 0
    %v3559 = vsel %vm176, %v3278, 0
    %v3562 = vsel %vm176, %v3279, 0
    %v3565 = vsel %vm176, %v3280, 0
    %v3568 = vsel %vm176, %v3281, 0
    %v3571 = vsel %vm176, %v3282, 0
    %v3574 = vsel %vm176, %v3283, 0
    %v3577 = vsel %vm176, %v3284, 0
    %v3580 = vsel %vm176, %v3285, 0
    %v3583 = vsel %vm176, %v3286, 0
    %v3586 = vsel %vm176, %v3287, 0
    %v3589 = vsel %vm176, %v3288, 0
    %v3592 = vsel %vm176, %v3289, 0
    %v3595 = vsel %vm176, %v3290, 0
    %v3598 = vsel %vm176, %v3291, 0
    %v3601 = vsel %vm176, %v3292, 0
    %v3604 = vsel %vm176, %v3293, 0
    %v3607 = vsel %vm176, %v3294, 0
    %v3610 = vsel %vm176, %v3295, 0
    %v3613 = vsel %vm176, %v3296, 0
    %v3616 = vsel %vm176, %v3297, 0
    %v3619 = vsel %vm176, %v3298, 0
    %v3622 = vsel %vm176, %v3299, 0
    %v3625 = vsel %vm176, %v3300, 0
    %v3628 = vsel %vm176, %v3301, 0
    %v3631 = vsel %vm176, %v3302, 0
    %v3634 = vsel %vm176, %v3303, 0
    %v3637 = vsel %vm176, %v3304, 0
    %v3640 = vsel %vm176, %v3305, 0
    %v3643 = vsel %vm176, %v3306, 0
    %v3646 = vsel %vm176, %v3307, 0
    %v3649 = vsel %vm176, %v3308, 0
    %v3652 = vsel %vm176, %v3309, 0
    %v3655 = vsel %vm176, %v3310, 0
    %v3658 = vsel %vm176, %v3311, 0
    %v3661 = vsel %vm176, %v3312, 0
    %v3664 = vsel %vm176, %v3313, 0
    %v3667 = vsel %vm176, %v3314, 0
    %v3670 = vsel %vm176, %v3315, 0
    %v3673 = vsel %vm176, %v3316, 0
    %v3676 = vsel %vm176, %v3317, 0
    %v3679 = vsel %vm176, %v3318, 0
    %v3682 = vsel %vm176, %v3319, 0
    %v3685 = vsel %vm176, %v3320, 0
    %v3688 = vsel %vm176, %v3321, 0
    %v3691 = vsel %vm176, %v3322, 0
    %v3694 = vsel %vm176, %v3323, 0
    %v3697 = vsel %vm176, %v3324, 0
    %v3700 = vsel %vm176, %v3325, 0
    %v3703 = vsel %vm176, %v3326, 0
    %v3706 = vsel %vm176, %v3327, 0
    %v3709 = vsel %vm176, %v3328, 0
    %v3712 = vsel %vm176, %v3329, 0
    %v3715 = vsel %vm176, %v3330, 0
    %v3718 = vsel %vm964, %v3332, 0
    %3720 = vmatpush.msra.mxu0 0.0
    %3721 = vmatpush.msra.mxu0 0.0
    %3722 = vmatpush.msra.mxu0 0.0
    %3723 = vmatpush.msra.mxu0 0.0
    %3724 = vmatpush.msra.mxu0 0.0
    %3725 = vmatpush.msra.mxu0 0.0
    %3726 = vmatpush.msra.mxu0 0.0
    %3727 = vmatpush.msra.mxu0 0.0
    %3728 = vmatpush.msra.mxu0 0.0
    %3729 = vmatpush.msra.mxu0 0.0
    %3730 = vmatpush.msra.mxu0 0.0
    %3731 = vmatpush.msra.mxu0 0.0
    %3732 = vmatpush.msra.mxu0 0.0
    %3733 = vmatpush.msra.mxu0 0.0
    %3734 = vmatpush.msra.mxu0 0.0
    %3735 = vmatpush.msra.mxu0 %v3718
    %3736 = vmatmul.f32.gmra.mxu0 %v3334
    %v3737 = vpop.f32.mrf.mxu0
    %v3738 = vadd.f32 0.0, %v3737
    %3739 = vmatmul.f32.gmra.mxu0 %v3337
    %v3740 = vpop.f32.mrf.mxu0
    %v3741 = vadd.f32 0.0, %v3740
    %3742 = vmatmul.f32.gmra.mxu0 %v3340
    %v3743 = vpop.f32.mrf.mxu0
    %v3744 = vadd.f32 0.0, %v3743
    %3745 = vmatmul.f32.gmra.mxu0 %v3343
    %v3746 = vpop.f32.mrf.mxu0
    %v3747 = vadd.f32 0.0, %v3746
    %3748 = vmatmul.f32.gmra.mxu0 %v3346
    %v3749 = vpop.f32.mrf.mxu0
    %v3750 = vadd.f32 0.0, %v3749
    %3751 = vmatmul.f32.gmra.mxu0 %v3349
    %v3752 = vpop.f32.mrf.mxu0
    %v3753 = vadd.f32 0.0, %v3752
    %3754 = vmatmul.f32.gmra.mxu0 %v3352
    %v3755 = vpop.f32.mrf.mxu0
    %v3756 = vadd.f32 0.0, %v3755
    %3757 = vmatmul.f32.gmra.mxu0 %v3355
    %v3758 = vpop.f32.mrf.mxu0
    %v3759 = vadd.f32 0.0, %v3758
    %3760 = vmatmul.f32.gmra.mxu0 %v3358
    %v3761 = vpop.f32.mrf.mxu0
    %v3762 = vadd.f32 0.0, %v3761
    %3763 = vmatmul.f32.gmra.mxu0 %v3361
    %v3764 = vpop.f32.mrf.mxu0
    %v3765 = vadd.f32 0.0, %v3764
    %3766 = vmatmul.f32.gmra.mxu0 %v3364
    %v3767 = vpop.f32.mrf.mxu0
    %v3768 = vadd.f32 0.0, %v3767
    %3769 = vmatmul.f32.gmra.mxu0 %v3367
    %v3770 = vpop.f32.mrf.mxu0
    %v3771 = vadd.f32 0.0, %v3770
    %3772 = vmatmul.f32.gmra.mxu0 %v3370
    %v3773 = vpop.f32.mrf.mxu0
    %v3774 = vadd.f32 0.0, %v3773
    %3775 = vmatmul.f32.gmra.mxu0 %v3373
    %v3776 = vpop.f32.mrf.mxu0
    %v3777 = vadd.f32 0.0, %v3776
    %3778 = vmatmul.f32.gmra.mxu0 %v3376
    %v3779 = vpop.f32.mrf.mxu0
    %v3780 = vadd.f32 0.0, %v3779
    %3781 = vmatmul.f32.gmra.mxu0 %v3379
    %v3782 = vpop.f32.mrf.mxu0
    %v3783 = vadd.f32 0.0, %v3782
    %3784 = vmatmul.f32.gmra.mxu0 %v3382
    %v3785 = vpop.f32.mrf.mxu0
    %v3786 = vadd.f32 0.0, %v3785
    %3787 = vmatmul.f32.gmra.mxu0 %v3385
    %v3788 = vpop.f32.mrf.mxu0
    %v3789 = vadd.f32 0.0, %v3788
    %3790 = vmatmul.f32.gmra.mxu0 %v3388
    %v3791 = vpop.f32.mrf.mxu0
    %v3792 = vadd.f32 0.0, %v3791
    %3793 = vmatmul.f32.gmra.mxu0 %v3391
    %v3794 = vpop.f32.mrf.mxu0
    %v3795 = vadd.f32 0.0, %v3794
    %3796 = vmatmul.f32.gmra.mxu0 %v3394
    %v3797 = vpop.f32.mrf.mxu0
    %v3798 = vadd.f32 0.0, %v3797
    %3799 = vmatmul.f32.gmra.mxu0 %v3397
    %v3800 = vpop.f32.mrf.mxu0
    %v3801 = vadd.f32 0.0, %v3800
    %3802 = vmatmul.f32.gmra.mxu0 %v3400
    %v3803 = vpop.f32.mrf.mxu0
    %v3804 = vadd.f32 0.0, %v3803
    %3805 = vmatmul.f32.gmra.mxu0 %v3403
    %v3806 = vpop.f32.mrf.mxu0
    %v3807 = vadd.f32 0.0, %v3806
    %3808 = vmatmul.f32.gmra.mxu0 %v3406
    %v3809 = vpop.f32.mrf.mxu0
    %v3810 = vadd.f32 0.0, %v3809
    %3811 = vmatmul.f32.gmra.mxu0 %v3409
    %v3812 = vpop.f32.mrf.mxu0
    %v3813 = vadd.f32 0.0, %v3812
    %3814 = vmatmul.f32.gmra.mxu0 %v3412
    %v3815 = vpop.f32.mrf.mxu0
    %v3816 = vadd.f32 0.0, %v3815
    %3817 = vmatmul.f32.gmra.mxu0 %v3415
    %v3818 = vpop.f32.mrf.mxu0
    %v3819 = vadd.f32 0.0, %v3818
    %3820 = vmatmul.f32.gmra.mxu0 %v3418
    %v3821 = vpop.f32.mrf.mxu0
    %v3822 = vadd.f32 0.0, %v3821
    %3823 = vmatmul.f32.gmra.mxu0 %v3421
    %v3824 = vpop.f32.mrf.mxu0
    %v3825 = vadd.f32 0.0, %v3824
    %3826 = vmatmul.f32.gmra.mxu0 %v3424
    %v3827 = vpop.f32.mrf.mxu0
    %v3828 = vadd.f32 0.0, %v3827
    %3829 = vmatmul.f32.gmra.mxu0 %v3427
    %v3830 = vpop.f32.mrf.mxu0
    %v3831 = vadd.f32 0.0, %v3830
    %3832 = vmatmul.f32.gmra.mxu0 %v3430
    %v3833 = vpop.f32.mrf.mxu0
    %v3834 = vadd.f32 0.0, %v3833
    %3835 = vmatmul.f32.gmra.mxu0 %v3433
    %v3836 = vpop.f32.mrf.mxu0
    %v3837 = vadd.f32 0.0, %v3836
    %3838 = vmatmul.f32.gmra.mxu0 %v3436
    %v3839 = vpop.f32.mrf.mxu0
    %v3840 = vadd.f32 0.0, %v3839
    %3841 = vmatmul.f32.gmra.mxu0 %v3439
    %v3842 = vpop.f32.mrf.mxu0
    %v3843 = vadd.f32 0.0, %v3842
    %3844 = vmatmul.f32.gmra.mxu0 %v3442
    %v3845 = vpop.f32.mrf.mxu0
    %v3846 = vadd.f32 0.0, %v3845
    %3847 = vmatmul.f32.gmra.mxu0 %v3445
    %v3848 = vpop.f32.mrf.mxu0
    %v3849 = vadd.f32 0.0, %v3848
    %3850 = vmatmul.f32.gmra.mxu0 %v3448
    %v3851 = vpop.f32.mrf.mxu0
    %v3852 = vadd.f32 0.0, %v3851
    %3853 = vmatmul.f32.gmra.mxu0 %v3451
    %v3854 = vpop.f32.mrf.mxu0
    %v3855 = vadd.f32 0.0, %v3854
    %3856 = vmatmul.f32.gmra.mxu0 %v3454
    %v3857 = vpop.f32.mrf.mxu0
    %v3858 = vadd.f32 0.0, %v3857
    %3859 = vmatmul.f32.gmra.mxu0 %v3457
    %v3860 = vpop.f32.mrf.mxu0
    %v3861 = vadd.f32 0.0, %v3860
    %3862 = vmatmul.f32.gmra.mxu0 %v3460
    %v3863 = vpop.f32.mrf.mxu0
    %v3864 = vadd.f32 0.0, %v3863
    %3865 = vmatmul.f32.gmra.mxu0 %v3463
    %v3866 = vpop.f32.mrf.mxu0
    %v3867 = vadd.f32 0.0, %v3866
    %3868 = vmatmul.f32.gmra.mxu0 %v3466
    %v3869 = vpop.f32.mrf.mxu0
    %v3870 = vadd.f32 0.0, %v3869
    %3871 = vmatmul.f32.gmra.mxu0 %v3469
    %v3872 = vpop.f32.mrf.mxu0
    %v3873 = vadd.f32 0.0, %v3872
    %3874 = vmatmul.f32.gmra.mxu0 %v3472
    %v3875 = vpop.f32.mrf.mxu0
    %v3876 = vadd.f32 0.0, %v3875
    %3877 = vmatmul.f32.gmra.mxu0 %v3475
    %v3878 = vpop.f32.mrf.mxu0
    %v3879 = vadd.f32 0.0, %v3878
    %3880 = vmatmul.f32.gmra.mxu0 %v3478
    %v3881 = vpop.f32.mrf.mxu0
    %v3882 = vadd.f32 0.0, %v3881
    %3883 = vmatmul.f32.gmra.mxu0 %v3481
    %v3884 = vpop.f32.mrf.mxu0
    %v3885 = vadd.f32 0.0, %v3884
    %3886 = vmatmul.f32.gmra.mxu0 %v3484
    %v3887 = vpop.f32.mrf.mxu0
    %v3888 = vadd.f32 0.0, %v3887
    %3889 = vmatmul.f32.gmra.mxu0 %v3487
    %v3890 = vpop.f32.mrf.mxu0
    %v3891 = vadd.f32 0.0, %v3890
    %3892 = vmatmul.f32.gmra.mxu0 %v3490
    %v3893 = vpop.f32.mrf.mxu0
    %v3894 = vadd.f32 0.0, %v3893
    %3895 = vmatmul.f32.gmra.mxu0 %v3493
    %v3896 = vpop.f32.mrf.mxu0
    %v3897 = vadd.f32 0.0, %v3896
    %3898 = vmatmul.f32.gmra.mxu0 %v3496
    %v3899 = vpop.f32.mrf.mxu0
    %v3900 = vadd.f32 0.0, %v3899
    %3901 = vmatmul.f32.gmra.mxu0 %v3499
    %v3902 = vpop.f32.mrf.mxu0
    %v3903 = vadd.f32 0.0, %v3902
    %3904 = vmatmul.f32.gmra.mxu0 %v3502
    %v3905 = vpop.f32.mrf.mxu0
    %v3906 = vadd.f32 0.0, %v3905
    %3907 = vmatmul.f32.gmra.mxu0 %v3505
    %v3908 = vpop.f32.mrf.mxu0
    %v3909 = vadd.f32 0.0, %v3908
    %3910 = vmatmul.f32.gmra.mxu0 %v3508
    %v3911 = vpop.f32.mrf.mxu0
    %v3912 = vadd.f32 0.0, %v3911
    %3913 = vmatmul.f32.gmra.mxu0 %v3511
    %v3914 = vpop.f32.mrf.mxu0
    %v3915 = vadd.f32 0.0, %v3914
    %3916 = vmatmul.f32.gmra.mxu0 %v3514
    %v3917 = vpop.f32.mrf.mxu0
    %v3918 = vadd.f32 0.0, %v3917
    %3919 = vmatmul.f32.gmra.mxu0 %v3517
    %v3920 = vpop.f32.mrf.mxu0
    %v3921 = vadd.f32 0.0, %v3920
    %3922 = vmatmul.f32.gmra.mxu0 %v3520
    %v3923 = vpop.f32.mrf.mxu0
    %v3924 = vadd.f32 0.0, %v3923
    %3925 = vmatmul.f32.gmra.mxu0 %v3523
    %v3926 = vpop.f32.mrf.mxu0
    %v3927 = vadd.f32 0.0, %v3926
    %3928 = vmatmul.f32.gmra.mxu0 %v3526
    %v3929 = vpop.f32.mrf.mxu0
    %v3930 = vadd.f32 0.0, %v3929
    %3931 = vmatmul.f32.gmra.mxu0 %v3529
    %v3932 = vpop.f32.mrf.mxu0
    %v3933 = vadd.f32 0.0, %v3932
    %3934 = vmatmul.f32.gmra.mxu0 %v3532
    %v3935 = vpop.f32.mrf.mxu0
    %v3936 = vadd.f32 0.0, %v3935
    %3937 = vmatmul.f32.gmra.mxu0 %v3535
    %v3938 = vpop.f32.mrf.mxu0
    %v3939 = vadd.f32 0.0, %v3938
    %3940 = vmatmul.f32.gmra.mxu0 %v3538
    %v3941 = vpop.f32.mrf.mxu0
    %v3942 = vadd.f32 0.0, %v3941
    %3943 = vmatmul.f32.gmra.mxu0 %v3541
    %v3944 = vpop.f32.mrf.mxu0
    %v3945 = vadd.f32 0.0, %v3944
    %3946 = vmatmul.f32.gmra.mxu0 %v3544
    %v3947 = vpop.f32.mrf.mxu0
    %v3948 = vadd.f32 0.0, %v3947
    %3949 = vmatmul.f32.gmra.mxu0 %v3547
    %v3950 = vpop.f32.mrf.mxu0
    %v3951 = vadd.f32 0.0, %v3950
    %3952 = vmatmul.f32.gmra.mxu0 %v3550
    %v3953 = vpop.f32.mrf.mxu0
    %v3954 = vadd.f32 0.0, %v3953
    %3955 = vmatmul.f32.gmra.mxu0 %v3553
    %v3956 = vpop.f32.mrf.mxu0
    %v3957 = vadd.f32 0.0, %v3956
    %3958 = vmatmul.f32.gmra.mxu0 %v3556
    %v3959 = vpop.f32.mrf.mxu0
    %v3960 = vadd.f32 0.0, %v3959
    %3961 = vmatmul.f32.gmra.mxu0 %v3559
    %v3962 = vpop.f32.mrf.mxu0
    %v3963 = vadd.f32 0.0, %v3962
    %3964 = vmatmul.f32.gmra.mxu0 %v3562
    %v3965 = vpop.f32.mrf.mxu0
    %v3966 = vadd.f32 0.0, %v3965
    %3967 = vmatmul.f32.gmra.mxu0 %v3565
    %v3968 = vpop.f32.mrf.mxu0
    %v3969 = vadd.f32 0.0, %v3968
    %3970 = vmatmul.f32.gmra.mxu0 %v3568
    %v3971 = vpop.f32.mrf.mxu0
    %v3972 = vadd.f32 0.0, %v3971
    %3973 = vmatmul.f32.gmra.mxu0 %v3571
    %v3974 = vpop.f32.mrf.mxu0
    %v3975 = vadd.f32 0.0, %v3974
    %3976 = vmatmul.f32.gmra.mxu0 %v3574
    %v3977 = vpop.f32.mrf.mxu0
    %v3978 = vadd.f32 0.0, %v3977
    %3979 = vmatmul.f32.gmra.mxu0 %v3577
    %v3980 = vpop.f32.mrf.mxu0
    %v3981 = vadd.f32 0.0, %v3980
    %3982 = vmatmul.f32.gmra.mxu0 %v3580
    %v3983 = vpop.f32.mrf.mxu0
    %v3984 = vadd.f32 0.0, %v3983
    %3985 = vmatmul.f32.gmra.mxu0 %v3583
    %v3986 = vpop.f32.mrf.mxu0
    %v3987 = vadd.f32 0.0, %v3986
    %3988 = vmatmul.f32.gmra.mxu0 %v3586
    %v3989 = vpop.f32.mrf.mxu0
    %v3990 = vadd.f32 0.0, %v3989
    %3991 = vmatmul.f32.gmra.mxu0 %v3589
    %v3992 = vpop.f32.mrf.mxu0
    %v3993 = vadd.f32 0.0, %v3992
    %3994 = vmatmul.f32.gmra.mxu0 %v3592
    %v3995 = vpop.f32.mrf.mxu0
    %v3996 = vadd.f32 0.0, %v3995
    %3997 = vmatmul.f32.gmra.mxu0 %v3595
    %v3998 = vpop.f32.mrf.mxu0
    %v3999 = vadd.f32 0.0, %v3998
    %4000 = vmatmul.f32.gmra.mxu0 %v3598
    %v4001 = vpop.f32.mrf.mxu0
    %v4002 = vadd.f32 0.0, %v4001
    %4003 = vmatmul.f32.gmra.mxu0 %v3601
    %v4004 = vpop.f32.mrf.mxu0
    %v4005 = vadd.f32 0.0, %v4004
    %4006 = vmatmul.f32.gmra.mxu0 %v3604
    %v4007 = vpop.f32.mrf.mxu0
    %v4008 = vadd.f32 0.0, %v4007
    %4009 = vmatmul.f32.gmra.mxu0 %v3607
    %v4010 = vpop.f32.mrf.mxu0
    %v4011 = vadd.f32 0.0, %v4010
    %4012 = vmatmul.f32.gmra.mxu0 %v3610
    %v4013 = vpop.f32.mrf.mxu0
    %v4014 = vadd.f32 0.0, %v4013
    %4015 = vmatmul.f32.gmra.mxu0 %v3613
    %v4016 = vpop.f32.mrf.mxu0
    %v4017 = vadd.f32 0.0, %v4016
    %4018 = vmatmul.f32.gmra.mxu0 %v3616
    %v4019 = vpop.f32.mrf.mxu0
    %v4020 = vadd.f32 0.0, %v4019
    %4021 = vmatmul.f32.gmra.mxu0 %v3619
    %v4022 = vpop.f32.mrf.mxu0
    %v4023 = vadd.f32 0.0, %v4022
    %4024 = vmatmul.f32.gmra.mxu0 %v3622
    %v4025 = vpop.f32.mrf.mxu0
    %v4026 = vadd.f32 0.0, %v4025
    %4027 = vmatmul.f32.gmra.mxu0 %v3625
    %v4028 = vpop.f32.mrf.mxu0
    %v4029 = vadd.f32 0.0, %v4028
    %4030 = vmatmul.f32.gmra.mxu0 %v3628
    %v4031 = vpop.f32.mrf.mxu0
    %v4032 = vadd.f32 0.0, %v4031
    %4033 = vmatmul.f32.gmra.mxu0 %v3631
    %v4034 = vpop.f32.mrf.mxu0
    %v4035 = vadd.f32 0.0, %v4034
    %4036 = vmatmul.f32.gmra.mxu0 %v3634
    %v4037 = vpop.f32.mrf.mxu0
    %v4038 = vadd.f32 0.0, %v4037
    %4039 = vmatmul.f32.gmra.mxu0 %v3637
    %v4040 = vpop.f32.mrf.mxu0
    %v4041 = vadd.f32 0.0, %v4040
    %4042 = vmatmul.f32.gmra.mxu0 %v3640
    %v4043 = vpop.f32.mrf.mxu0
    %v4044 = vadd.f32 0.0, %v4043
    %4045 = vmatmul.f32.gmra.mxu0 %v3643
    %v4046 = vpop.f32.mrf.mxu0
    %v4047 = vadd.f32 0.0, %v4046
    %4048 = vmatmul.f32.gmra.mxu0 %v3646
    %v4049 = vpop.f32.mrf.mxu0
    %v4050 = vadd.f32 0.0, %v4049
    %4051 = vmatmul.f32.gmra.mxu0 %v3649
    %v4052 = vpop.f32.mrf.mxu0
    %v4053 = vadd.f32 0.0, %v4052
    %4054 = vmatmul.f32.gmra.mxu0 %v3652
    %v4055 = vpop.f32.mrf.mxu0
    %v4056 = vadd.f32 0.0, %v4055
    %4057 = vmatmul.f32.gmra.mxu0 %v3655
    %v4058 = vpop.f32.mrf.mxu0
    %v4059 = vadd.f32 0.0, %v4058
    %4060 = vmatmul.f32.gmra.mxu0 %v3658
    %v4061 = vpop.f32.mrf.mxu0
    %v4062 = vadd.f32 0.0, %v4061
    %4063 = vmatmul.f32.gmra.mxu0 %v3661
    %v4064 = vpop.f32.mrf.mxu0
    %v4065 = vadd.f32 0.0, %v4064
    %4066 = vmatmul.f32.gmra.mxu0 %v3664
    %v4067 = vpop.f32.mrf.mxu0
    %v4068 = vadd.f32 0.0, %v4067
    %4069 = vmatmul.f32.gmra.mxu0 %v3667
    %v4070 = vpop.f32.mrf.mxu0
    %v4071 = vadd.f32 0.0, %v4070
    %4072 = vmatmul.f32.gmra.mxu0 %v3670
    %v4073 = vpop.f32.mrf.mxu0
    %v4074 = vadd.f32 0.0, %v4073
    %4075 = vmatmul.f32.gmra.mxu0 %v3673
    %v4076 = vpop.f32.mrf.mxu0
    %v4077 = vadd.f32 0.0, %v4076
    %4078 = vmatmul.f32.gmra.mxu0 %v3676
    %v4079 = vpop.f32.mrf.mxu0
    %v4080 = vadd.f32 0.0, %v4079
    %4081 = vmatmul.f32.gmra.mxu0 %v3679
    %v4082 = vpop.f32.mrf.mxu0
    %v4083 = vadd.f32 0.0, %v4082
    %4084 = vmatmul.f32.gmra.mxu0 %v3682
    %v4085 = vpop.f32.mrf.mxu0
    %v4086 = vadd.f32 0.0, %v4085
    %4087 = vmatmul.f32.gmra.mxu0 %v3685
    %v4088 = vpop.f32.mrf.mxu0
    %v4089 = vadd.f32 0.0, %v4088
    %4090 = vmatmul.f32.gmra.mxu0 %v3688
    %v4091 = vpop.f32.mrf.mxu0
    %v4092 = vadd.f32 0.0, %v4091
    %4093 = vmatmul.f32.gmra.mxu0 %v3691
    %v4094 = vpop.f32.mrf.mxu0
    %v4095 = vadd.f32 0.0, %v4094
    %4096 = vmatmul.f32.gmra.mxu0 %v3694
    %v4097 = vpop.f32.mrf.mxu0
    %v4098 = vadd.f32 0.0, %v4097
    %4099 = vmatmul.f32.gmra.mxu0 %v3697
    %v4100 = vpop.f32.mrf.mxu0
    %v4101 = vadd.f32 0.0, %v4100
    %4102 = vmatmul.f32.gmra.mxu0 %v3700
    %v4103 = vpop.f32.mrf.mxu0
    %v4104 = vadd.f32 0.0, %v4103
    %4105 = vmatmul.f32.gmra.mxu0 %v3703
    %v4106 = vpop.f32.mrf.mxu0
    %v4107 = vadd.f32 0.0, %v4106
    %4108 = vmatmul.f32.gmra.mxu0 %v3706
    %v4109 = vpop.f32.mrf.mxu0
    %v4110 = vadd.f32 0.0, %v4109
    %4111 = vmatmul.f32.gmra.mxu0 %v3709
    %v4112 = vpop.f32.mrf.mxu0
    %v4113 = vadd.f32 0.0, %v4112
    %4114 = vmatmul.f32.gmra.mxu0 %v3712
    %v4115 = vpop.f32.mrf.mxu0
    %v4116 = vadd.f32 0.0, %v4115
    %4117 = vmatmul.f32.gmra.mxu0 %v3715
    %v4118 = vpop.f32.mrf.mxu0
    %v4119 = vadd.f32 0.0, %v4118
    %4120 = vdwg.mxu0
    %v4121 = vadd.f32 %v3075, %v3738
    %v4122 = vadd.f32 %v3076, %v3741
    %v4123 = vadd.f32 %v3077, %v3744
    %v4124 = vadd.f32 %v3078, %v3747
    %v4125 = vadd.f32 %v3079, %v3750
    %v4126 = vadd.f32 %v3080, %v3753
    %v4127 = vadd.f32 %v3081, %v3756
    %v4128 = vadd.f32 %v3082, %v3759
    %v4129 = vadd.f32 %v3083, %v3762
    %v4130 = vadd.f32 %v3084, %v3765
    %v4131 = vadd.f32 %v3085, %v3768
    %v4132 = vadd.f32 %v3086, %v3771
    %v4133 = vadd.f32 %v3087, %v3774
    %v4134 = vadd.f32 %v3088, %v3777
    %v4135 = vadd.f32 %v3089, %v3780
    %v4136 = vadd.f32 %v3090, %v3783
    %v4137 = vadd.f32 %v3091, %v3786
    %v4138 = vadd.f32 %v3092, %v3789
    %v4139 = vadd.f32 %v3093, %v3792
    %v4140 = vadd.f32 %v3094, %v3795
    %v4141 = vadd.f32 %v3095, %v3798
    %v4142 = vadd.f32 %v3096, %v3801
    %v4143 = vadd.f32 %v3097, %v3804
    %v4144 = vadd.f32 %v3098, %v3807
    %v4145 = vadd.f32 %v3099, %v3810
    %v4146 = vadd.f32 %v3100, %v3813
    %v4147 = vadd.f32 %v3101, %v3816
    %v4148 = vadd.f32 %v3102, %v3819
    %v4149 = vadd.f32 %v3103, %v3822
    %v4150 = vadd.f32 %v3104, %v3825
    %v4151 = vadd.f32 %v3105, %v3828
    %v4152 = vadd.f32 %v3106, %v3831
    %v4153 = vadd.f32 %v3107, %v3834
    %v4154 = vadd.f32 %v3108, %v3837
    %v4155 = vadd.f32 %v3109, %v3840
    %v4156 = vadd.f32 %v3110, %v3843
    %v4157 = vadd.f32 %v3111, %v3846
    %v4158 = vadd.f32 %v3112, %v3849
    %v4159 = vadd.f32 %v3113, %v3852
    %v4160 = vadd.f32 %v3114, %v3855
    %v4161 = vadd.f32 %v3115, %v3858
    %v4162 = vadd.f32 %v3116, %v3861
    %v4163 = vadd.f32 %v3117, %v3864
    %v4164 = vadd.f32 %v3118, %v3867
    %v4165 = vadd.f32 %v3119, %v3870
    %v4166 = vadd.f32 %v3120, %v3873
    %v4167 = vadd.f32 %v3121, %v3876
    %v4168 = vadd.f32 %v3122, %v3879
    %v4169 = vadd.f32 %v3123, %v3882
    %v4170 = vadd.f32 %v3124, %v3885
    %v4171 = vadd.f32 %v3125, %v3888
    %v4172 = vadd.f32 %v3126, %v3891
    %v4173 = vadd.f32 %v3127, %v3894
    %v4174 = vadd.f32 %v3128, %v3897
    %v4175 = vadd.f32 %v3129, %v3900
    %v4176 = vadd.f32 %v3130, %v3903
    %v4177 = vadd.f32 %v3131, %v3906
    %v4178 = vadd.f32 %v3132, %v3909
    %v4179 = vadd.f32 %v3133, %v3912
    %v4180 = vadd.f32 %v3134, %v3915
    %v4181 = vadd.f32 %v3135, %v3918
    %v4182 = vadd.f32 %v3136, %v3921
    %v4183 = vadd.f32 %v3137, %v3924
    %v4184 = vadd.f32 %v3138, %v3927
    %v4185 = vadd.f32 %v3139, %v3930
    %v4186 = vadd.f32 %v3140, %v3933
    %v4187 = vadd.f32 %v3141, %v3936
    %v4188 = vadd.f32 %v3142, %v3939
    %v4189 = vadd.f32 %v3143, %v3942
    %v4190 = vadd.f32 %v3144, %v3945
    %v4191 = vadd.f32 %v3145, %v3948
    %v4192 = vadd.f32 %v3146, %v3951
    %v4193 = vadd.f32 %v3147, %v3954
    %v4194 = vadd.f32 %v3148, %v3957
    %v4195 = vadd.f32 %v3149, %v3960
    %v4196 = vadd.f32 %v3150, %v3963
    %v4197 = vadd.f32 %v3151, %v3966
    %v4198 = vadd.f32 %v3152, %v3969
    %v4199 = vadd.f32 %v3153, %v3972
    %v4200 = vadd.f32 %v3154, %v3975
    %v4201 = vadd.f32 %v3155, %v3978
    %v4202 = vadd.f32 %v3156, %v3981
    %v4203 = vadd.f32 %v3157, %v3984
    %v4204 = vadd.f32 %v3158, %v3987
    %v4205 = vadd.f32 %v3159, %v3990
    %v4206 = vadd.f32 %v3160, %v3993
    %v4207 = vadd.f32 %v3161, %v3996
    %v4208 = vadd.f32 %v3162, %v3999
    %v4209 = vadd.f32 %v3163, %v4002
    %v4210 = vadd.f32 %v3164, %v4005
    %v4211 = vadd.f32 %v3165, %v4008
    %v4212 = vadd.f32 %v3166, %v4011
    %v4213 = vadd.f32 %v3167, %v4014
    %v4214 = vadd.f32 %v3168, %v4017
    %v4215 = vadd.f32 %v3169, %v4020
    %v4216 = vadd.f32 %v3170, %v4023
    %v4217 = vadd.f32 %v3171, %v4026
    %v4218 = vadd.f32 %v3172, %v4029
    %v4219 = vadd.f32 %v3173, %v4032
    %v4220 = vadd.f32 %v3174, %v4035
    %v4221 = vadd.f32 %v3175, %v4038
    %v4222 = vadd.f32 %v3176, %v4041
    %v4223 = vadd.f32 %v3177, %v4044
    %v4224 = vadd.f32 %v3178, %v4047
    %v4225 = vadd.f32 %v3179, %v4050
    %v4226 = vadd.f32 %v3180, %v4053
    %v4227 = vadd.f32 %v3181, %v4056
    %v4228 = vadd.f32 %v3182, %v4059
    %v4229 = vadd.f32 %v3183, %v4062
    %v4230 = vadd.f32 %v3184, %v4065
    %v4231 = vadd.f32 %v3185, %v4068
    %v4232 = vadd.f32 %v3186, %v4071
    %v4233 = vadd.f32 %v3187, %v4074
    %v4234 = vadd.f32 %v3188, %v4077
    %v4235 = vadd.f32 %v3189, %v4080
    %v4236 = vadd.f32 %v3190, %v4083
    %v4237 = vadd.f32 %v3191, %v4086
    %v4238 = vadd.f32 %v3192, %v4089
    %v4239 = vadd.f32 %v3193, %v4092
    %v4240 = vadd.f32 %v3194, %v4095
    %v4241 = vadd.f32 %v3195, %v4098
    %v4242 = vadd.f32 %v3196, %v4101
    %v4243 = vadd.f32 %v3197, %v4104
    %v4244 = vadd.f32 %v3198, %v4107
    %v4245 = vadd.f32 %v3199, %v4110
    %v4246 = vadd.f32 %v3200, %v4113
    %v4247 = vadd.f32 %v3201, %v4116
    %v4248 = vadd.f32 %v3202, %v4119
    %v4249 = vld [vmem:[#allocation2 + $0x13] sm:$0xff]
    %v4250 = vld [vmem:[#allocation2 + $0x1b] sm:$0xff]
    %v4251 = vld [vmem:[#allocation2 + $0x23] sm:$0xff]
    %v4252 = vld [vmem:[#allocation2 + $0x2b] sm:$0xff]
    %v4253 = vld [vmem:[#allocation2 + $0x33] sm:$0xff]
    %v4254 = vld [vmem:[#allocation2 + $0x3b] sm:$0xff]
    %v4255 = vld [vmem:[#allocation2 + $0x43] sm:$0xff]
    %v4256 = vld [vmem:[#allocation2 + $0x4b] sm:$0xff]
    %v4257 = vld [vmem:[#allocation2 + $0x53] sm:$0xff]
    %v4258 = vld [vmem:[#allocation2 + $0x5b] sm:$0xff]
    %v4259 = vld [vmem:[#allocation2 + $0x63] sm:$0xff]
    %v4260 = vld [vmem:[#allocation2 + $0x6b] sm:$0xff]
    %v4261 = vld [vmem:[#allocation2 + $0x73] sm:$0xff]
    %v4262 = vld [vmem:[#allocation2 + $0x7b] sm:$0xff]
    %v4263 = vld [vmem:[#allocation2 + $0x83] sm:$0xff]
    %v4264 = vld [vmem:[#allocation2 + $0x8b] sm:$0xff]
    %v4265 = vld [vmem:[#allocation2 + $0x93] sm:$0xff]
    %v4266 = vld [vmem:[#allocation2 + $0x9b] sm:$0xff]
    %v4267 = vld [vmem:[#allocation2 + $0xa3] sm:$0xff]
    %v4268 = vld [vmem:[#allocation2 + $0xab] sm:$0xff]
    %v4269 = vld [vmem:[#allocation2 + $0xb3] sm:$0xff]
    %v4270 = vld [vmem:[#allocation2 + $0xbb] sm:$0xff]
    %v4271 = vld [vmem:[#allocation2 + $0xc3] sm:$0xff]
    %v4272 = vld [vmem:[#allocation2 + $0xcb] sm:$0xff]
    %v4273 = vld [vmem:[#allocation2 + $0xd3] sm:$0xff]
    %v4274 = vld [vmem:[#allocation2 + $0xdb] sm:$0xff]
    %v4275 = vld [vmem:[#allocation2 + $0xe3] sm:$0xff]
    %v4276 = vld [vmem:[#allocation2 + $0xeb] sm:$0xff]
    %v4277 = vld [vmem:[#allocation2 + $0xf3] sm:$0xff]
    %v4278 = vld [vmem:[#allocation2 + $0xfb] sm:$0xff]
    %v4279 = vld [vmem:[#allocation2 + $0x103] sm:$0xff]
    %v4280 = vld [vmem:[#allocation2 + $0x10b] sm:$0xff]
    %v4281 = vld [vmem:[#allocation2 + $0x113] sm:$0xff]
    %v4282 = vld [vmem:[#allocation2 + $0x11b] sm:$0xff]
    %v4283 = vld [vmem:[#allocation2 + $0x123] sm:$0xff]
    %v4284 = vld [vmem:[#allocation2 + $0x12b] sm:$0xff]
    %v4285 = vld [vmem:[#allocation2 + $0x133] sm:$0xff]
    %v4286 = vld [vmem:[#allocation2 + $0x13b] sm:$0xff]
    %v4287 = vld [vmem:[#allocation2 + $0x143] sm:$0xff]
    %v4288 = vld [vmem:[#allocation2 + $0x14b] sm:$0xff]
    %v4289 = vld [vmem:[#allocation2 + $0x153] sm:$0xff]
    %v4290 = vld [vmem:[#allocation2 + $0x15b] sm:$0xff]
    %v4291 = vld [vmem:[#allocation2 + $0x163] sm:$0xff]
    %v4292 = vld [vmem:[#allocation2 + $0x16b] sm:$0xff]
    %v4293 = vld [vmem:[#allocation2 + $0x173] sm:$0xff]
    %v4294 = vld [vmem:[#allocation2 + $0x17b] sm:$0xff]
    %v4295 = vld [vmem:[#allocation2 + $0x183] sm:$0xff]
    %v4296 = vld [vmem:[#allocation2 + $0x18b] sm:$0xff]
    %v4297 = vld [vmem:[#allocation2 + $0x193] sm:$0xff]
    %v4298 = vld [vmem:[#allocation2 + $0x19b] sm:$0xff]
    %v4299 = vld [vmem:[#allocation2 + $0x1a3] sm:$0xff]
    %v4300 = vld [vmem:[#allocation2 + $0x1ab] sm:$0xff]
    %v4301 = vld [vmem:[#allocation2 + $0x1b3] sm:$0xff]
    %v4302 = vld [vmem:[#allocation2 + $0x1bb] sm:$0xff]
    %v4303 = vld [vmem:[#allocation2 + $0x1c3] sm:$0xff]
    %v4304 = vld [vmem:[#allocation2 + $0x1cb] sm:$0xff]
    %v4305 = vld [vmem:[#allocation2 + $0x1d3] sm:$0xff]
    %v4306 = vld [vmem:[#allocation2 + $0x1db] sm:$0xff]
    %v4307 = vld [vmem:[#allocation2 + $0x1e3] sm:$0xff]
    %v4308 = vld [vmem:[#allocation2 + $0x1eb] sm:$0xff]
    %v4309 = vld [vmem:[#allocation2 + $0x1f3] sm:$0xff]
    %v4310 = vld [vmem:[#allocation2 + $0x1fb] sm:$0xff]
    %v4311 = vld [vmem:[#allocation2 + $0x203] sm:$0xff]
    %v4312 = vld [vmem:[#allocation2 + $0x20b] sm:$0xff]
    %v4313 = vld [vmem:[#allocation2 + $0x213] sm:$0xff]
    %v4314 = vld [vmem:[#allocation2 + $0x21b] sm:$0xff]
    %v4315 = vld [vmem:[#allocation2 + $0x223] sm:$0xff]
    %v4316 = vld [vmem:[#allocation2 + $0x22b] sm:$0xff]
    %v4317 = vld [vmem:[#allocation2 + $0x233] sm:$0xff]
    %v4318 = vld [vmem:[#allocation2 + $0x23b] sm:$0xff]
    %v4319 = vld [vmem:[#allocation2 + $0x243] sm:$0xff]
    %v4320 = vld [vmem:[#allocation2 + $0x24b] sm:$0xff]
    %v4321 = vld [vmem:[#allocation2 + $0x253] sm:$0xff]
    %v4322 = vld [vmem:[#allocation2 + $0x25b] sm:$0xff]
    %v4323 = vld [vmem:[#allocation2 + $0x263] sm:$0xff]
    %v4324 = vld [vmem:[#allocation2 + $0x26b] sm:$0xff]
    %v4325 = vld [vmem:[#allocation2 + $0x273] sm:$0xff]
    %v4326 = vld [vmem:[#allocation2 + $0x27b] sm:$0xff]
    %v4327 = vld [vmem:[#allocation2 + $0x283] sm:$0xff]
    %v4328 = vld [vmem:[#allocation2 + $0x28b] sm:$0xff]
    %v4329 = vld [vmem:[#allocation2 + $0x293] sm:$0xff]
    %v4330 = vld [vmem:[#allocation2 + $0x29b] sm:$0xff]
    %v4331 = vld [vmem:[#allocation2 + $0x2a3] sm:$0xff]
    %v4332 = vld [vmem:[#allocation2 + $0x2ab] sm:$0xff]
    %v4333 = vld [vmem:[#allocation2 + $0x2b3] sm:$0xff]
    %v4334 = vld [vmem:[#allocation2 + $0x2bb] sm:$0xff]
    %v4335 = vld [vmem:[#allocation2 + $0x2c3] sm:$0xff]
    %v4336 = vld [vmem:[#allocation2 + $0x2cb] sm:$0xff]
    %v4337 = vld [vmem:[#allocation2 + $0x2d3] sm:$0xff]
    %v4338 = vld [vmem:[#allocation2 + $0x2db] sm:$0xff]
    %v4339 = vld [vmem:[#allocation2 + $0x2e3] sm:$0xff]
    %v4340 = vld [vmem:[#allocation2 + $0x2eb] sm:$0xff]
    %v4341 = vld [vmem:[#allocation2 + $0x2f3] sm:$0xff]
    %v4342 = vld [vmem:[#allocation2 + $0x2fb] sm:$0xff]
    %v4343 = vld [vmem:[#allocation2 + $0x303] sm:$0xff]
    %v4344 = vld [vmem:[#allocation2 + $0x30b] sm:$0xff]
    %v4345 = vld [vmem:[#allocation2 + $0x313] sm:$0xff]
    %v4346 = vld [vmem:[#allocation2 + $0x31b] sm:$0xff]
    %v4347 = vld [vmem:[#allocation2 + $0x323] sm:$0xff]
    %v4348 = vld [vmem:[#allocation2 + $0x32b] sm:$0xff]
    %v4349 = vld [vmem:[#allocation2 + $0x333] sm:$0xff]
    %v4350 = vld [vmem:[#allocation2 + $0x33b] sm:$0xff]
    %v4351 = vld [vmem:[#allocation2 + $0x343] sm:$0xff]
    %v4352 = vld [vmem:[#allocation2 + $0x34b] sm:$0xff]
    %v4353 = vld [vmem:[#allocation2 + $0x353] sm:$0xff]
    %v4354 = vld [vmem:[#allocation2 + $0x35b] sm:$0xff]
    %v4355 = vld [vmem:[#allocation2 + $0x363] sm:$0xff]
    %v4356 = vld [vmem:[#allocation2 + $0x36b] sm:$0xff]
    %v4357 = vld [vmem:[#allocation2 + $0x373] sm:$0xff]
    %v4358 = vld [vmem:[#allocation2 + $0x37b] sm:$0xff]
    %v4359 = vld [vmem:[#allocation2 + $0x383] sm:$0xff]
    %v4360 = vld [vmem:[#allocation2 + $0x38b] sm:$0xff]
    %v4361 = vld [vmem:[#allocation2 + $0x393] sm:$0xff]
    %v4362 = vld [vmem:[#allocation2 + $0x39b] sm:$0xff]
    %v4363 = vld [vmem:[#allocation2 + $0x3a3] sm:$0xff]
    %v4364 = vld [vmem:[#allocation2 + $0x3ab] sm:$0xff]
    %v4365 = vld [vmem:[#allocation2 + $0x3b3] sm:$0xff]
    %v4366 = vld [vmem:[#allocation2 + $0x3bb] sm:$0xff]
    %v4367 = vld [vmem:[#allocation2 + $0x3c3] sm:$0xff]
    %v4368 = vld [vmem:[#allocation2 + $0x3cb] sm:$0xff]
    %v4369 = vld [vmem:[#allocation2 + $0x3d3] sm:$0xff]
    %v4370 = vld [vmem:[#allocation2 + $0x3db] sm:$0xff]
    %v4371 = vld [vmem:[#allocation2 + $0x3e3] sm:$0xff]
    %v4372 = vld [vmem:[#allocation2 + $0x3eb] sm:$0xff]
    %v4373 = vld [vmem:[#allocation2 + $0x3f3] sm:$0xff]
    %v4374 = vld [vmem:[#allocation2 + $0x3fb] sm:$0xff]
    %v4375 = vld [vmem:[#allocation2 + $0x403] sm:$0xff]
    %v4376 = vld [vmem:[#allocation2 + $0x40b] sm:$0xff]
    %s4377 = scalar_lea.vmem %s2, 16
    %v4378 = vld [vmem:[%s4377] sm:$0xf]
    %v4380 = vsel %vm176, %v4249, 0
    %v4383 = vsel %vm176, %v4250, 0
    %v4386 = vsel %vm176, %v4251, 0
    %v4389 = vsel %vm176, %v4252, 0
    %v4392 = vsel %vm176, %v4253, 0
    %v4395 = vsel %vm176, %v4254, 0
    %v4398 = vsel %vm176, %v4255, 0
    %v4401 = vsel %vm176, %v4256, 0
    %v4404 = vsel %vm176, %v4257, 0
    %v4407 = vsel %vm176, %v4258, 0
    %v4410 = vsel %vm176, %v4259, 0
    %v4413 = vsel %vm176, %v4260, 0
    %v4416 = vsel %vm176, %v4261, 0
    %v4419 = vsel %vm176, %v4262, 0
    %v4422 = vsel %vm176, %v4263, 0
    %v4425 = vsel %vm176, %v4264, 0
    %v4428 = vsel %vm176, %v4265, 0
    %v4431 = vsel %vm176, %v4266, 0
    %v4434 = vsel %vm176, %v4267, 0
    %v4437 = vsel %vm176, %v4268, 0
    %v4440 = vsel %vm176, %v4269, 0
    %v4443 = vsel %vm176, %v4270, 0
    %v4446 = vsel %vm176, %v4271, 0
    %v4449 = vsel %vm176, %v4272, 0
    %v4452 = vsel %vm176, %v4273, 0
    %v4455 = vsel %vm176, %v4274, 0
    %v4458 = vsel %vm176, %v4275, 0
    %v4461 = vsel %vm176, %v4276, 0
    %v4464 = vsel %vm176, %v4277, 0
    %v4467 = vsel %vm176, %v4278, 0
    %v4470 = vsel %vm176, %v4279, 0
    %v4473 = vsel %vm176, %v4280, 0
    %v4476 = vsel %vm176, %v4281, 0
    %v4479 = vsel %vm176, %v4282, 0
    %v4482 = vsel %vm176, %v4283, 0
    %v4485 = vsel %vm176, %v4284, 0
    %v4488 = vsel %vm176, %v4285, 0
    %v4491 = vsel %vm176, %v4286, 0
    %v4494 = vsel %vm176, %v4287, 0
    %v4497 = vsel %vm176, %v4288, 0
    %v4500 = vsel %vm176, %v4289, 0
    %v4503 = vsel %vm176, %v4290, 0
    %v4506 = vsel %vm176, %v4291, 0
    %v4509 = vsel %vm176, %v4292, 0
    %v4512 = vsel %vm176, %v4293, 0
    %v4515 = vsel %vm176, %v4294, 0
    %v4518 = vsel %vm176, %v4295, 0
    %v4521 = vsel %vm176, %v4296, 0
    %v4524 = vsel %vm176, %v4297, 0
    %v4527 = vsel %vm176, %v4298, 0
    %v4530 = vsel %vm176, %v4299, 0
    %v4533 = vsel %vm176, %v4300, 0
    %v4536 = vsel %vm176, %v4301, 0
    %v4539 = vsel %vm176, %v4302, 0
    %v4542 = vsel %vm176, %v4303, 0
    %v4545 = vsel %vm176, %v4304, 0
    %v4548 = vsel %vm176, %v4305, 0
    %v4551 = vsel %vm176, %v4306, 0
    %v4554 = vsel %vm176, %v4307, 0
    %v4557 = vsel %vm176, %v4308, 0
    %v4560 = vsel %vm176, %v4309, 0
    %v4563 = vsel %vm176, %v4310, 0
    %v4566 = vsel %vm176, %v4311, 0
    %v4569 = vsel %vm176, %v4312, 0
    %v4572 = vsel %vm176, %v4313, 0
    %v4575 = vsel %vm176, %v4314, 0
    %v4578 = vsel %vm176, %v4315, 0
    %v4581 = vsel %vm176, %v4316, 0
    %v4584 = vsel %vm176, %v4317, 0
    %v4587 = vsel %vm176, %v4318, 0
    %v4590 = vsel %vm176, %v4319, 0
    %v4593 = vsel %vm176, %v4320, 0
    %v4596 = vsel %vm176, %v4321, 0
    %v4599 = vsel %vm176, %v4322, 0
    %v4602 = vsel %vm176, %v4323, 0
    %v4605 = vsel %vm176, %v4324, 0
    %v4608 = vsel %vm176, %v4325, 0
    %v4611 = vsel %vm176, %v4326, 0
    %v4614 = vsel %vm176, %v4327, 0
    %v4617 = vsel %vm176, %v4328, 0
    %v4620 = vsel %vm176, %v4329, 0
    %v4623 = vsel %vm176, %v4330, 0
    %v4626 = vsel %vm176, %v4331, 0
    %v4629 = vsel %vm176, %v4332, 0
    %v4632 = vsel %vm176, %v4333, 0
    %v4635 = vsel %vm176, %v4334, 0
    %v4638 = vsel %vm176, %v4335, 0
    %v4641 = vsel %vm176, %v4336, 0
    %v4644 = vsel %vm176, %v4337, 0
    %v4647 = vsel %vm176, %v4338, 0
    %v4650 = vsel %vm176, %v4339, 0
    %v4653 = vsel %vm176, %v4340, 0
    %v4656 = vsel %vm176, %v4341, 0
    %v4659 = vsel %vm176, %v4342, 0
    %v4662 = vsel %vm176, %v4343, 0
    %v4665 = vsel %vm176, %v4344, 0
    %v4668 = vsel %vm176, %v4345, 0
    %v4671 = vsel %vm176, %v4346, 0
    %v4674 = vsel %vm176, %v4347, 0
    %v4677 = vsel %vm176, %v4348, 0
    %v4680 = vsel %vm176, %v4349, 0
    %v4683 = vsel %vm176, %v4350, 0
    %v4686 = vsel %vm176, %v4351, 0
    %v4689 = vsel %vm176, %v4352, 0
    %v4692 = vsel %vm176, %v4353, 0
    %v4695 = vsel %vm176, %v4354, 0
    %v4698 = vsel %vm176, %v4355, 0
    %v4701 = vsel %vm176, %v4356, 0
    %v4704 = vsel %vm176, %v4357, 0
    %v4707 = vsel %vm176, %v4358, 0
    %v4710 = vsel %vm176, %v4359, 0
    %v4713 = vsel %vm176, %v4360, 0
    %v4716 = vsel %vm176, %v4361, 0
    %v4719 = vsel %vm176, %v4362, 0
    %v4722 = vsel %vm176, %v4363, 0
    %v4725 = vsel %vm176, %v4364, 0
    %v4728 = vsel %vm176, %v4365, 0
    %v4731 = vsel %vm176, %v4366, 0
    %v4734 = vsel %vm176, %v4367, 0
    %v4737 = vsel %vm176, %v4368, 0
    %v4740 = vsel %vm176, %v4369, 0
    %v4743 = vsel %vm176, %v4370, 0
    %v4746 = vsel %vm176, %v4371, 0
    %v4749 = vsel %vm176, %v4372, 0
    %v4752 = vsel %vm176, %v4373, 0
    %v4755 = vsel %vm176, %v4374, 0
    %v4758 = vsel %vm176, %v4375, 0
    %v4761 = vsel %vm176, %v4376, 0
    %v4764 = vsel %vm964, %v4378, 0
    %4766 = vmatpush.msra.mxu0 0.0
    %4767 = vmatpush.msra.mxu0 0.0
    %4768 = vmatpush.msra.mxu0 0.0
    %4769 = vmatpush.msra.mxu0 0.0
    %4770 = vmatpush.msra.mxu0 0.0
    %4771 = vmatpush.msra.mxu0 0.0
    %4772 = vmatpush.msra.mxu0 0.0
    %4773 = vmatpush.msra.mxu0 0.0
    %4774 = vmatpush.msra.mxu0 0.0
    %4775 = vmatpush.msra.mxu0 0.0
    %4776 = vmatpush.msra.mxu0 0.0
    %4777 = vmatpush.msra.mxu0 0.0
    %4778 = vmatpush.msra.mxu0 0.0
    %4779 = vmatpush.msra.mxu0 0.0
    %4780 = vmatpush.msra.mxu0 0.0
    %4781 = vmatpush.msra.mxu0 %v4764
    %4782 = vmatmul.f32.gmra.mxu0 %v4380
    %v4783 = vpop.f32.mrf.mxu0
    %v4784 = vadd.f32 0.0, %v4783
    %4785 = vmatmul.f32.gmra.mxu0 %v4383
    %v4786 = vpop.f32.mrf.mxu0
    %v4787 = vadd.f32 0.0, %v4786
    %4788 = vmatmul.f32.gmra.mxu0 %v4386
    %v4789 = vpop.f32.mrf.mxu0
    %v4790 = vadd.f32 0.0, %v4789
    %4791 = vmatmul.f32.gmra.mxu0 %v4389
    %v4792 = vpop.f32.mrf.mxu0
    %v4793 = vadd.f32 0.0, %v4792
    %4794 = vmatmul.f32.gmra.mxu0 %v4392
    %v4795 = vpop.f32.mrf.mxu0
    %v4796 = vadd.f32 0.0, %v4795
    %4797 = vmatmul.f32.gmra.mxu0 %v4395
    %v4798 = vpop.f32.mrf.mxu0
    %v4799 = vadd.f32 0.0, %v4798
    %4800 = vmatmul.f32.gmra.mxu0 %v4398
    %v4801 = vpop.f32.mrf.mxu0
    %v4802 = vadd.f32 0.0, %v4801
    %4803 = vmatmul.f32.gmra.mxu0 %v4401
    %v4804 = vpop.f32.mrf.mxu0
    %v4805 = vadd.f32 0.0, %v4804
    %4806 = vmatmul.f32.gmra.mxu0 %v4404
    %v4807 = vpop.f32.mrf.mxu0
    %v4808 = vadd.f32 0.0, %v4807
    %4809 = vmatmul.f32.gmra.mxu0 %v4407
    %v4810 = vpop.f32.mrf.mxu0
    %v4811 = vadd.f32 0.0, %v4810
    %4812 = vmatmul.f32.gmra.mxu0 %v4410
    %v4813 = vpop.f32.mrf.mxu0
    %v4814 = vadd.f32 0.0, %v4813
    %4815 = vmatmul.f32.gmra.mxu0 %v4413
    %v4816 = vpop.f32.mrf.mxu0
    %v4817 = vadd.f32 0.0, %v4816
    %4818 = vmatmul.f32.gmra.mxu0 %v4416
    %v4819 = vpop.f32.mrf.mxu0
    %v4820 = vadd.f32 0.0, %v4819
    %4821 = vmatmul.f32.gmra.mxu0 %v4419
    %v4822 = vpop.f32.mrf.mxu0
    %v4823 = vadd.f32 0.0, %v4822
    %4824 = vmatmul.f32.gmra.mxu0 %v4422
    %v4825 = vpop.f32.mrf.mxu0
    %v4826 = vadd.f32 0.0, %v4825
    %4827 = vmatmul.f32.gmra.mxu0 %v4425
    %v4828 = vpop.f32.mrf.mxu0
    %v4829 = vadd.f32 0.0, %v4828
    %4830 = vmatmul.f32.gmra.mxu0 %v4428
    %v4831 = vpop.f32.mrf.mxu0
    %v4832 = vadd.f32 0.0, %v4831
    %4833 = vmatmul.f32.gmra.mxu0 %v4431
    %v4834 = vpop.f32.mrf.mxu0
    %v4835 = vadd.f32 0.0, %v4834
    %4836 = vmatmul.f32.gmra.mxu0 %v4434
    %v4837 = vpop.f32.mrf.mxu0
    %v4838 = vadd.f32 0.0, %v4837
    %4839 = vmatmul.f32.gmra.mxu0 %v4437
    %v4840 = vpop.f32.mrf.mxu0
    %v4841 = vadd.f32 0.0, %v4840
    %4842 = vmatmul.f32.gmra.mxu0 %v4440
    %v4843 = vpop.f32.mrf.mxu0
    %v4844 = vadd.f32 0.0, %v4843
    %4845 = vmatmul.f32.gmra.mxu0 %v4443
    %v4846 = vpop.f32.mrf.mxu0
    %v4847 = vadd.f32 0.0, %v4846
    %4848 = vmatmul.f32.gmra.mxu0 %v4446
    %v4849 = vpop.f32.mrf.mxu0
    %v4850 = vadd.f32 0.0, %v4849
    %4851 = vmatmul.f32.gmra.mxu0 %v4449
    %v4852 = vpop.f32.mrf.mxu0
    %v4853 = vadd.f32 0.0, %v4852
    %4854 = vmatmul.f32.gmra.mxu0 %v4452
    %v4855 = vpop.f32.mrf.mxu0
    %v4856 = vadd.f32 0.0, %v4855
    %4857 = vmatmul.f32.gmra.mxu0 %v4455
    %v4858 = vpop.f32.mrf.mxu0
    %v4859 = vadd.f32 0.0, %v4858
    %4860 = vmatmul.f32.gmra.mxu0 %v4458
    %v4861 = vpop.f32.mrf.mxu0
    %v4862 = vadd.f32 0.0, %v4861
    %4863 = vmatmul.f32.gmra.mxu0 %v4461
    %v4864 = vpop.f32.mrf.mxu0
    %v4865 = vadd.f32 0.0, %v4864
    %4866 = vmatmul.f32.gmra.mxu0 %v4464
    %v4867 = vpop.f32.mrf.mxu0
    %v4868 = vadd.f32 0.0, %v4867
    %4869 = vmatmul.f32.gmra.mxu0 %v4467
    %v4870 = vpop.f32.mrf.mxu0
    %v4871 = vadd.f32 0.0, %v4870
    %4872 = vmatmul.f32.gmra.mxu0 %v4470
    %v4873 = vpop.f32.mrf.mxu0
    %v4874 = vadd.f32 0.0, %v4873
    %4875 = vmatmul.f32.gmra.mxu0 %v4473
    %v4876 = vpop.f32.mrf.mxu0
    %v4877 = vadd.f32 0.0, %v4876
    %4878 = vmatmul.f32.gmra.mxu0 %v4476
    %v4879 = vpop.f32.mrf.mxu0
    %v4880 = vadd.f32 0.0, %v4879
    %4881 = vmatmul.f32.gmra.mxu0 %v4479
    %v4882 = vpop.f32.mrf.mxu0
    %v4883 = vadd.f32 0.0, %v4882
    %4884 = vmatmul.f32.gmra.mxu0 %v4482
    %v4885 = vpop.f32.mrf.mxu0
    %v4886 = vadd.f32 0.0, %v4885
    %4887 = vmatmul.f32.gmra.mxu0 %v4485
    %v4888 = vpop.f32.mrf.mxu0
    %v4889 = vadd.f32 0.0, %v4888
    %4890 = vmatmul.f32.gmra.mxu0 %v4488
    %v4891 = vpop.f32.mrf.mxu0
    %v4892 = vadd.f32 0.0, %v4891
    %4893 = vmatmul.f32.gmra.mxu0 %v4491
    %v4894 = vpop.f32.mrf.mxu0
    %v4895 = vadd.f32 0.0, %v4894
    %4896 = vmatmul.f32.gmra.mxu0 %v4494
    %v4897 = vpop.f32.mrf.mxu0
    %v4898 = vadd.f32 0.0, %v4897
    %4899 = vmatmul.f32.gmra.mxu0 %v4497
    %v4900 = vpop.f32.mrf.mxu0
    %v4901 = vadd.f32 0.0, %v4900
    %4902 = vmatmul.f32.gmra.mxu0 %v4500
    %v4903 = vpop.f32.mrf.mxu0
    %v4904 = vadd.f32 0.0, %v4903
    %4905 = vmatmul.f32.gmra.mxu0 %v4503
    %v4906 = vpop.f32.mrf.mxu0
    %v4907 = vadd.f32 0.0, %v4906
    %4908 = vmatmul.f32.gmra.mxu0 %v4506
    %v4909 = vpop.f32.mrf.mxu0
    %v4910 = vadd.f32 0.0, %v4909
    %4911 = vmatmul.f32.gmra.mxu0 %v4509
    %v4912 = vpop.f32.mrf.mxu0
    %v4913 = vadd.f32 0.0, %v4912
    %4914 = vmatmul.f32.gmra.mxu0 %v4512
    %v4915 = vpop.f32.mrf.mxu0
    %v4916 = vadd.f32 0.0, %v4915
    %4917 = vmatmul.f32.gmra.mxu0 %v4515
    %v4918 = vpop.f32.mrf.mxu0
    %v4919 = vadd.f32 0.0, %v4918
    %4920 = vmatmul.f32.gmra.mxu0 %v4518
    %v4921 = vpop.f32.mrf.mxu0
    %v4922 = vadd.f32 0.0, %v4921
    %4923 = vmatmul.f32.gmra.mxu0 %v4521
    %v4924 = vpop.f32.mrf.mxu0
    %v4925 = vadd.f32 0.0, %v4924
    %4926 = vmatmul.f32.gmra.mxu0 %v4524
    %v4927 = vpop.f32.mrf.mxu0
    %v4928 = vadd.f32 0.0, %v4927
    %4929 = vmatmul.f32.gmra.mxu0 %v4527
    %v4930 = vpop.f32.mrf.mxu0
    %v4931 = vadd.f32 0.0, %v4930
    %4932 = vmatmul.f32.gmra.mxu0 %v4530
    %v4933 = vpop.f32.mrf.mxu0
    %v4934 = vadd.f32 0.0, %v4933
    %4935 = vmatmul.f32.gmra.mxu0 %v4533
    %v4936 = vpop.f32.mrf.mxu0
    %v4937 = vadd.f32 0.0, %v4936
    %4938 = vmatmul.f32.gmra.mxu0 %v4536
    %v4939 = vpop.f32.mrf.mxu0
    %v4940 = vadd.f32 0.0, %v4939
    %4941 = vmatmul.f32.gmra.mxu0 %v4539
    %v4942 = vpop.f32.mrf.mxu0
    %v4943 = vadd.f32 0.0, %v4942
    %4944 = vmatmul.f32.gmra.mxu0 %v4542
    %v4945 = vpop.f32.mrf.mxu0
    %v4946 = vadd.f32 0.0, %v4945
    %4947 = vmatmul.f32.gmra.mxu0 %v4545
    %v4948 = vpop.f32.mrf.mxu0
    %v4949 = vadd.f32 0.0, %v4948
    %4950 = vmatmul.f32.gmra.mxu0 %v4548
    %v4951 = vpop.f32.mrf.mxu0
    %v4952 = vadd.f32 0.0, %v4951
    %4953 = vmatmul.f32.gmra.mxu0 %v4551
    %v4954 = vpop.f32.mrf.mxu0
    %v4955 = vadd.f32 0.0, %v4954
    %4956 = vmatmul.f32.gmra.mxu0 %v4554
    %v4957 = vpop.f32.mrf.mxu0
    %v4958 = vadd.f32 0.0, %v4957
    %4959 = vmatmul.f32.gmra.mxu0 %v4557
    %v4960 = vpop.f32.mrf.mxu0
    %v4961 = vadd.f32 0.0, %v4960
    %4962 = vmatmul.f32.gmra.mxu0 %v4560
    %v4963 = vpop.f32.mrf.mxu0
    %v4964 = vadd.f32 0.0, %v4963
    %4965 = vmatmul.f32.gmra.mxu0 %v4563
    %v4966 = vpop.f32.mrf.mxu0
    %v4967 = vadd.f32 0.0, %v4966
    %4968 = vmatmul.f32.gmra.mxu0 %v4566
    %v4969 = vpop.f32.mrf.mxu0
    %v4970 = vadd.f32 0.0, %v4969
    %4971 = vmatmul.f32.gmra.mxu0 %v4569
    %v4972 = vpop.f32.mrf.mxu0
    %v4973 = vadd.f32 0.0, %v4972
    %4974 = vmatmul.f32.gmra.mxu0 %v4572
    %v4975 = vpop.f32.mrf.mxu0
    %v4976 = vadd.f32 0.0, %v4975
    %4977 = vmatmul.f32.gmra.mxu0 %v4575
    %v4978 = vpop.f32.mrf.mxu0
    %v4979 = vadd.f32 0.0, %v4978
    %4980 = vmatmul.f32.gmra.mxu0 %v4578
    %v4981 = vpop.f32.mrf.mxu0
    %v4982 = vadd.f32 0.0, %v4981
    %4983 = vmatmul.f32.gmra.mxu0 %v4581
    %v4984 = vpop.f32.mrf.mxu0
    %v4985 = vadd.f32 0.0, %v4984
    %4986 = vmatmul.f32.gmra.mxu0 %v4584
    %v4987 = vpop.f32.mrf.mxu0
    %v4988 = vadd.f32 0.0, %v4987
    %4989 = vmatmul.f32.gmra.mxu0 %v4587
    %v4990 = vpop.f32.mrf.mxu0
    %v4991 = vadd.f32 0.0, %v4990
    %4992 = vmatmul.f32.gmra.mxu0 %v4590
    %v4993 = vpop.f32.mrf.mxu0
    %v4994 = vadd.f32 0.0, %v4993
    %4995 = vmatmul.f32.gmra.mxu0 %v4593
    %v4996 = vpop.f32.mrf.mxu0
    %v4997 = vadd.f32 0.0, %v4996
    %4998 = vmatmul.f32.gmra.mxu0 %v4596
    %v4999 = vpop.f32.mrf.mxu0
    %v5000 = vadd.f32 0.0, %v4999
    %5001 = vmatmul.f32.gmra.mxu0 %v4599
    %v5002 = vpop.f32.mrf.mxu0
    %v5003 = vadd.f32 0.0, %v5002
    %5004 = vmatmul.f32.gmra.mxu0 %v4602
    %v5005 = vpop.f32.mrf.mxu0
    %v5006 = vadd.f32 0.0, %v5005
    %5007 = vmatmul.f32.gmra.mxu0 %v4605
    %v5008 = vpop.f32.mrf.mxu0
    %v5009 = vadd.f32 0.0, %v5008
    %5010 = vmatmul.f32.gmra.mxu0 %v4608
    %v5011 = vpop.f32.mrf.mxu0
    %v5012 = vadd.f32 0.0, %v5011
    %5013 = vmatmul.f32.gmra.mxu0 %v4611
    %v5014 = vpop.f32.mrf.mxu0
    %v5015 = vadd.f32 0.0, %v5014
    %5016 = vmatmul.f32.gmra.mxu0 %v4614
    %v5017 = vpop.f32.mrf.mxu0
    %v5018 = vadd.f32 0.0, %v5017
    %5019 = vmatmul.f32.gmra.mxu0 %v4617
    %v5020 = vpop.f32.mrf.mxu0
    %v5021 = vadd.f32 0.0, %v5020
    %5022 = vmatmul.f32.gmra.mxu0 %v4620
    %v5023 = vpop.f32.mrf.mxu0
    %v5024 = vadd.f32 0.0, %v5023
    %5025 = vmatmul.f32.gmra.mxu0 %v4623
    %v5026 = vpop.f32.mrf.mxu0
    %v5027 = vadd.f32 0.0, %v5026
    %5028 = vmatmul.f32.gmra.mxu0 %v4626
    %v5029 = vpop.f32.mrf.mxu0
    %v5030 = vadd.f32 0.0, %v5029
    %5031 = vmatmul.f32.gmra.mxu0 %v4629
    %v5032 = vpop.f32.mrf.mxu0
    %v5033 = vadd.f32 0.0, %v5032
    %5034 = vmatmul.f32.gmra.mxu0 %v4632
    %v5035 = vpop.f32.mrf.mxu0
    %v5036 = vadd.f32 0.0, %v5035
    %5037 = vmatmul.f32.gmra.mxu0 %v4635
    %v5038 = vpop.f32.mrf.mxu0
    %v5039 = vadd.f32 0.0, %v5038
    %5040 = vmatmul.f32.gmra.mxu0 %v4638
    %v5041 = vpop.f32.mrf.mxu0
    %v5042 = vadd.f32 0.0, %v5041
    %5043 = vmatmul.f32.gmra.mxu0 %v4641
    %v5044 = vpop.f32.mrf.mxu0
    %v5045 = vadd.f32 0.0, %v5044
    %5046 = vmatmul.f32.gmra.mxu0 %v4644
    %v5047 = vpop.f32.mrf.mxu0
    %v5048 = vadd.f32 0.0, %v5047
    %5049 = vmatmul.f32.gmra.mxu0 %v4647
    %v5050 = vpop.f32.mrf.mxu0
    %v5051 = vadd.f32 0.0, %v5050
    %5052 = vmatmul.f32.gmra.mxu0 %v4650
    %v5053 = vpop.f32.mrf.mxu0
    %v5054 = vadd.f32 0.0, %v5053
    %5055 = vmatmul.f32.gmra.mxu0 %v4653
    %v5056 = vpop.f32.mrf.mxu0
    %v5057 = vadd.f32 0.0, %v5056
    %5058 = vmatmul.f32.gmra.mxu0 %v4656
    %v5059 = vpop.f32.mrf.mxu0
    %v5060 = vadd.f32 0.0, %v5059
    %5061 = vmatmul.f32.gmra.mxu0 %v4659
    %v5062 = vpop.f32.mrf.mxu0
    %v5063 = vadd.f32 0.0, %v5062
    %5064 = vmatmul.f32.gmra.mxu0 %v4662
    %v5065 = vpop.f32.mrf.mxu0
    %v5066 = vadd.f32 0.0, %v5065
    %5067 = vmatmul.f32.gmra.mxu0 %v4665
    %v5068 = vpop.f32.mrf.mxu0
    %v5069 = vadd.f32 0.0, %v5068
    %5070 = vmatmul.f32.gmra.mxu0 %v4668
    %v5071 = vpop.f32.mrf.mxu0
    %v5072 = vadd.f32 0.0, %v5071
    %5073 = vmatmul.f32.gmra.mxu0 %v4671
    %v5074 = vpop.f32.mrf.mxu0
    %v5075 = vadd.f32 0.0, %v5074
    %5076 = vmatmul.f32.gmra.mxu0 %v4674
    %v5077 = vpop.f32.mrf.mxu0
    %v5078 = vadd.f32 0.0, %v5077
    %5079 = vmatmul.f32.gmra.mxu0 %v4677
    %v5080 = vpop.f32.mrf.mxu0
    %v5081 = vadd.f32 0.0, %v5080
    %5082 = vmatmul.f32.gmra.mxu0 %v4680
    %v5083 = vpop.f32.mrf.mxu0
    %v5084 = vadd.f32 0.0, %v5083
    %5085 = vmatmul.f32.gmra.mxu0 %v4683
    %v5086 = vpop.f32.mrf.mxu0
    %v5087 = vadd.f32 0.0, %v5086
    %5088 = vmatmul.f32.gmra.mxu0 %v4686
    %v5089 = vpop.f32.mrf.mxu0
    %v5090 = vadd.f32 0.0, %v5089
    %5091 = vmatmul.f32.gmra.mxu0 %v4689
    %v5092 = vpop.f32.mrf.mxu0
    %v5093 = vadd.f32 0.0, %v5092
    %5094 = vmatmul.f32.gmra.mxu0 %v4692
    %v5095 = vpop.f32.mrf.mxu0
    %v5096 = vadd.f32 0.0, %v5095
    %5097 = vmatmul.f32.gmra.mxu0 %v4695
    %v5098 = vpop.f32.mrf.mxu0
    %v5099 = vadd.f32 0.0, %v5098
    %5100 = vmatmul.f32.gmra.mxu0 %v4698
    %v5101 = vpop.f32.mrf.mxu0
    %v5102 = vadd.f32 0.0, %v5101
    %5103 = vmatmul.f32.gmra.mxu0 %v4701
    %v5104 = vpop.f32.mrf.mxu0
    %v5105 = vadd.f32 0.0, %v5104
    %5106 = vmatmul.f32.gmra.mxu0 %v4704
    %v5107 = vpop.f32.mrf.mxu0
    %v5108 = vadd.f32 0.0, %v5107
    %5109 = vmatmul.f32.gmra.mxu0 %v4707
    %v5110 = vpop.f32.mrf.mxu0
    %v5111 = vadd.f32 0.0, %v5110
    %5112 = vmatmul.f32.gmra.mxu0 %v4710
    %v5113 = vpop.f32.mrf.mxu0
    %v5114 = vadd.f32 0.0, %v5113
    %5115 = vmatmul.f32.gmra.mxu0 %v4713
    %v5116 = vpop.f32.mrf.mxu0
    %v5117 = vadd.f32 0.0, %v5116
    %5118 = vmatmul.f32.gmra.mxu0 %v4716
    %v5119 = vpop.f32.mrf.mxu0
    %v5120 = vadd.f32 0.0, %v5119
    %5121 = vmatmul.f32.gmra.mxu0 %v4719
    %v5122 = vpop.f32.mrf.mxu0
    %v5123 = vadd.f32 0.0, %v5122
    %5124 = vmatmul.f32.gmra.mxu0 %v4722
    %v5125 = vpop.f32.mrf.mxu0
    %v5126 = vadd.f32 0.0, %v5125
    %5127 = vmatmul.f32.gmra.mxu0 %v4725
    %v5128 = vpop.f32.mrf.mxu0
    %v5129 = vadd.f32 0.0, %v5128
    %5130 = vmatmul.f32.gmra.mxu0 %v4728
    %v5131 = vpop.f32.mrf.mxu0
    %v5132 = vadd.f32 0.0, %v5131
    %5133 = vmatmul.f32.gmra.mxu0 %v4731
    %v5134 = vpop.f32.mrf.mxu0
    %v5135 = vadd.f32 0.0, %v5134
    %5136 = vmatmul.f32.gmra.mxu0 %v4734
    %v5137 = vpop.f32.mrf.mxu0
    %v5138 = vadd.f32 0.0, %v5137
    %5139 = vmatmul.f32.gmra.mxu0 %v4737
    %v5140 = vpop.f32.mrf.mxu0
    %v5141 = vadd.f32 0.0, %v5140
    %5142 = vmatmul.f32.gmra.mxu0 %v4740
    %v5143 = vpop.f32.mrf.mxu0
    %v5144 = vadd.f32 0.0, %v5143
    %5145 = vmatmul.f32.gmra.mxu0 %v4743
    %v5146 = vpop.f32.mrf.mxu0
    %v5147 = vadd.f32 0.0, %v5146
    %5148 = vmatmul.f32.gmra.mxu0 %v4746
    %v5149 = vpop.f32.mrf.mxu0
    %v5150 = vadd.f32 0.0, %v5149
    %5151 = vmatmul.f32.gmra.mxu0 %v4749
    %v5152 = vpop.f32.mrf.mxu0
    %v5153 = vadd.f32 0.0, %v5152
    %5154 = vmatmul.f32.gmra.mxu0 %v4752
    %v5155 = vpop.f32.mrf.mxu0
    %v5156 = vadd.f32 0.0, %v5155
    %5157 = vmatmul.f32.gmra.mxu0 %v4755
    %v5158 = vpop.f32.mrf.mxu0
    %v5159 = vadd.f32 0.0, %v5158
    %5160 = vmatmul.f32.gmra.mxu0 %v4758
    %v5161 = vpop.f32.mrf.mxu0
    %v5162 = vadd.f32 0.0, %v5161
    %5163 = vmatmul.f32.gmra.mxu0 %v4761
    %v5164 = vpop.f32.mrf.mxu0
    %v5165 = vadd.f32 0.0, %v5164
    %5166 = vdwg.mxu0
    %v5167 = vadd.f32 %v4121, %v4784
    %v5168 = vadd.f32 %v4122, %v4787
    %v5169 = vadd.f32 %v4123, %v4790
    %v5170 = vadd.f32 %v4124, %v4793
    %v5171 = vadd.f32 %v4125, %v4796
    %v5172 = vadd.f32 %v4126, %v4799
    %v5173 = vadd.f32 %v4127, %v4802
    %v5174 = vadd.f32 %v4128, %v4805
    %v5175 = vadd.f32 %v4129, %v4808
    %v5176 = vadd.f32 %v4130, %v4811
    %v5177 = vadd.f32 %v4131, %v4814
    %v5178 = vadd.f32 %v4132, %v4817
    %v5179 = vadd.f32 %v4133, %v4820
    %v5180 = vadd.f32 %v4134, %v4823
    %v5181 = vadd.f32 %v4135, %v4826
    %v5182 = vadd.f32 %v4136, %v4829
    %v5183 = vadd.f32 %v4137, %v4832
    %v5184 = vadd.f32 %v4138, %v4835
    %v5185 = vadd.f32 %v4139, %v4838
    %v5186 = vadd.f32 %v4140, %v4841
    %v5187 = vadd.f32 %v4141, %v4844
    %v5188 = vadd.f32 %v4142, %v4847
    %v5189 = vadd.f32 %v4143, %v4850
    %v5190 = vadd.f32 %v4144, %v4853
    %v5191 = vadd.f32 %v4145, %v4856
    %v5192 = vadd.f32 %v4146, %v4859
    %v5193 = vadd.f32 %v4147, %v4862
    %v5194 = vadd.f32 %v4148, %v4865
    %v5195 = vadd.f32 %v4149, %v4868
    %v5196 = vadd.f32 %v4150, %v4871
    %v5197 = vadd.f32 %v4151, %v4874
    %v5198 = vadd.f32 %v4152, %v4877
    %v5199 = vadd.f32 %v4153, %v4880
    %v5200 = vadd.f32 %v4154, %v4883
    %v5201 = vadd.f32 %v4155, %v4886
    %v5202 = vadd.f32 %v4156, %v4889
    %v5203 = vadd.f32 %v4157, %v4892
    %v5204 = vadd.f32 %v4158, %v4895
    %v5205 = vadd.f32 %v4159, %v4898
    %v5206 = vadd.f32 %v4160, %v4901
    %v5207 = vadd.f32 %v4161, %v4904
    %v5208 = vadd.f32 %v4162, %v4907
    %v5209 = vadd.f32 %v4163, %v4910
    %v5210 = vadd.f32 %v4164, %v4913
    %v5211 = vadd.f32 %v4165, %v4916
    %v5212 = vadd.f32 %v4166, %v4919
    %v5213 = vadd.f32 %v4167, %v4922
    %v5214 = vadd.f32 %v4168, %v4925
    %v5215 = vadd.f32 %v4169, %v4928
    %v5216 = vadd.f32 %v4170, %v4931
    %v5217 = vadd.f32 %v4171, %v4934
    %v5218 = vadd.f32 %v4172, %v4937
    %v5219 = vadd.f32 %v4173, %v4940
    %v5220 = vadd.f32 %v4174, %v4943
    %v5221 = vadd.f32 %v4175, %v4946
    %v5222 = vadd.f32 %v4176, %v4949
    %v5223 = vadd.f32 %v4177, %v4952
    %v5224 = vadd.f32 %v4178, %v4955
    %v5225 = vadd.f32 %v4179, %v4958
    %v5226 = vadd.f32 %v4180, %v4961
    %v5227 = vadd.f32 %v4181, %v4964
    %v5228 = vadd.f32 %v4182, %v4967
    %v5229 = vadd.f32 %v4183, %v4970
    %v5230 = vadd.f32 %v4184, %v4973
    %v5231 = vadd.f32 %v4185, %v4976
    %v5232 = vadd.f32 %v4186, %v4979
    %v5233 = vadd.f32 %v4187, %v4982
    %v5234 = vadd.f32 %v4188, %v4985
    %v5235 = vadd.f32 %v4189, %v4988
    %v5236 = vadd.f32 %v4190, %v4991
    %v5237 = vadd.f32 %v4191, %v4994
    %v5238 = vadd.f32 %v4192, %v4997
    %v5239 = vadd.f32 %v4193, %v5000
    %v5240 = vadd.f32 %v4194, %v5003
    %v5241 = vadd.f32 %v4195, %v5006
    %v5242 = vadd.f32 %v4196, %v5009
    %v5243 = vadd.f32 %v4197, %v5012
    %v5244 = vadd.f32 %v4198, %v5015
    %v5245 = vadd.f32 %v4199, %v5018
    %v5246 = vadd.f32 %v4200, %v5021
    %v5247 = vadd.f32 %v4201, %v5024
    %v5248 = vadd.f32 %v4202, %v5027
    %v5249 = vadd.f32 %v4203, %v5030
    %v5250 = vadd.f32 %v4204, %v5033
    %v5251 = vadd.f32 %v4205, %v5036
    %v5252 = vadd.f32 %v4206, %v5039
    %v5253 = vadd.f32 %v4207, %v5042
    %v5254 = vadd.f32 %v4208, %v5045
    %v5255 = vadd.f32 %v4209, %v5048
    %v5256 = vadd.f32 %v4210, %v5051
    %v5257 = vadd.f32 %v4211, %v5054
    %v5258 = vadd.f32 %v4212, %v5057
    %v5259 = vadd.f32 %v4213, %v5060
    %v5260 = vadd.f32 %v4214, %v5063
    %v5261 = vadd.f32 %v4215, %v5066
    %v5262 = vadd.f32 %v4216, %v5069
    %v5263 = vadd.f32 %v4217, %v5072
    %v5264 = vadd.f32 %v4218, %v5075
    %v5265 = vadd.f32 %v4219, %v5078
    %v5266 = vadd.f32 %v4220, %v5081
    %v5267 = vadd.f32 %v4221, %v5084
    %v5268 = vadd.f32 %v4222, %v5087
    %v5269 = vadd.f32 %v4223, %v5090
    %v5270 = vadd.f32 %v4224, %v5093
    %v5271 = vadd.f32 %v4225, %v5096
    %v5272 = vadd.f32 %v4226, %v5099
    %v5273 = vadd.f32 %v4227, %v5102
    %v5274 = vadd.f32 %v4228, %v5105
    %v5275 = vadd.f32 %v4229, %v5108
    %v5276 = vadd.f32 %v4230, %v5111
    %v5277 = vadd.f32 %v4231, %v5114
    %v5278 = vadd.f32 %v4232, %v5117
    %v5279 = vadd.f32 %v4233, %v5120
    %v5280 = vadd.f32 %v4234, %v5123
    %v5281 = vadd.f32 %v4235, %v5126
    %v5282 = vadd.f32 %v4236, %v5129
    %v5283 = vadd.f32 %v4237, %v5132
    %v5284 = vadd.f32 %v4238, %v5135
    %v5285 = vadd.f32 %v4239, %v5138
    %v5286 = vadd.f32 %v4240, %v5141
    %v5287 = vadd.f32 %v4241, %v5144
    %v5288 = vadd.f32 %v4242, %v5147
    %v5289 = vadd.f32 %v4243, %v5150
    %v5290 = vadd.f32 %v4244, %v5153
    %v5291 = vadd.f32 %v4245, %v5156
    %v5292 = vadd.f32 %v4246, %v5159
    %v5293 = vadd.f32 %v4247, %v5162
    %v5294 = vadd.f32 %v4248, %v5165
    %v5295 = vld [vmem:[#allocation2 + $0x14] sm:$0xff]
    %v5296 = vld [vmem:[#allocation2 + $0x1c] sm:$0xff]
    %v5297 = vld [vmem:[#allocation2 + $0x24] sm:$0xff]
    %v5298 = vld [vmem:[#allocation2 + $0x2c] sm:$0xff]
    %v5299 = vld [vmem:[#allocation2 + $0x34] sm:$0xff]
    %v5300 = vld [vmem:[#allocation2 + $0x3c] sm:$0xff]
    %v5301 = vld [vmem:[#allocation2 + $0x44] sm:$0xff]
    %v5302 = vld [vmem:[#allocation2 + $0x4c] sm:$0xff]
    %v5303 = vld [vmem:[#allocation2 + $0x54] sm:$0xff]
    %v5304 = vld [vmem:[#allocation2 + $0x5c] sm:$0xff]
    %v5305 = vld [vmem:[#allocation2 + $0x64] sm:$0xff]
    %v5306 = vld [vmem:[#allocation2 + $0x6c] sm:$0xff]
    %v5307 = vld [vmem:[#allocation2 + $0x74] sm:$0xff]
    %v5308 = vld [vmem:[#allocation2 + $0x7c] sm:$0xff]
    %v5309 = vld [vmem:[#allocation2 + $0x84] sm:$0xff]
    %v5310 = vld [vmem:[#allocation2 + $0x8c] sm:$0xff]
    %v5311 = vld [vmem:[#allocation2 + $0x94] sm:$0xff]
    %v5312 = vld [vmem:[#allocation2 + $0x9c] sm:$0xff]
    %v5313 = vld [vmem:[#allocation2 + $0xa4] sm:$0xff]
    %v5314 = vld [vmem:[#allocation2 + $0xac] sm:$0xff]
    %v5315 = vld [vmem:[#allocation2 + $0xb4] sm:$0xff]
    %v5316 = vld [vmem:[#allocation2 + $0xbc] sm:$0xff]
    %v5317 = vld [vmem:[#allocation2 + $0xc4] sm:$0xff]
    %v5318 = vld [vmem:[#allocation2 + $0xcc] sm:$0xff]
    %v5319 = vld [vmem:[#allocation2 + $0xd4] sm:$0xff]
    %v5320 = vld [vmem:[#allocation2 + $0xdc] sm:$0xff]
    %v5321 = vld [vmem:[#allocation2 + $0xe4] sm:$0xff]
    %v5322 = vld [vmem:[#allocation2 + $0xec] sm:$0xff]
    %v5323 = vld [vmem:[#allocation2 + $0xf4] sm:$0xff]
    %v5324 = vld [vmem:[#allocation2 + $0xfc] sm:$0xff]
    %v5325 = vld [vmem:[#allocation2 + $0x104] sm:$0xff]
    %v5326 = vld [vmem:[#allocation2 + $0x10c] sm:$0xff]
    %v5327 = vld [vmem:[#allocation2 + $0x114] sm:$0xff]
    %v5328 = vld [vmem:[#allocation2 + $0x11c] sm:$0xff]
    %v5329 = vld [vmem:[#allocation2 + $0x124] sm:$0xff]
    %v5330 = vld [vmem:[#allocation2 + $0x12c] sm:$0xff]
    %v5331 = vld [vmem:[#allocation2 + $0x134] sm:$0xff]
    %v5332 = vld [vmem:[#allocation2 + $0x13c] sm:$0xff]
    %v5333 = vld [vmem:[#allocation2 + $0x144] sm:$0xff]
    %v5334 = vld [vmem:[#allocation2 + $0x14c] sm:$0xff]
    %v5335 = vld [vmem:[#allocation2 + $0x154] sm:$0xff]
    %v5336 = vld [vmem:[#allocation2 + $0x15c] sm:$0xff]
    %v5337 = vld [vmem:[#allocation2 + $0x164] sm:$0xff]
    %v5338 = vld [vmem:[#allocation2 + $0x16c] sm:$0xff]
    %v5339 = vld [vmem:[#allocation2 + $0x174] sm:$0xff]
    %v5340 = vld [vmem:[#allocation2 + $0x17c] sm:$0xff]
    %v5341 = vld [vmem:[#allocation2 + $0x184] sm:$0xff]
    %v5342 = vld [vmem:[#allocation2 + $0x18c] sm:$0xff]
    %v5343 = vld [vmem:[#allocation2 + $0x194] sm:$0xff]
    %v5344 = vld [vmem:[#allocation2 + $0x19c] sm:$0xff]
    %v5345 = vld [vmem:[#allocation2 + $0x1a4] sm:$0xff]
    %v5346 = vld [vmem:[#allocation2 + $0x1ac] sm:$0xff]
    %v5347 = vld [vmem:[#allocation2 + $0x1b4] sm:$0xff]
    %v5348 = vld [vmem:[#allocation2 + $0x1bc] sm:$0xff]
    %v5349 = vld [vmem:[#allocation2 + $0x1c4] sm:$0xff]
    %v5350 = vld [vmem:[#allocation2 + $0x1cc] sm:$0xff]
    %v5351 = vld [vmem:[#allocation2 + $0x1d4] sm:$0xff]
    %v5352 = vld [vmem:[#allocation2 + $0x1dc] sm:$0xff]
    %v5353 = vld [vmem:[#allocation2 + $0x1e4] sm:$0xff]
    %v5354 = vld [vmem:[#allocation2 + $0x1ec] sm:$0xff]
    %v5355 = vld [vmem:[#allocation2 + $0x1f4] sm:$0xff]
    %v5356 = vld [vmem:[#allocation2 + $0x1fc] sm:$0xff]
    %v5357 = vld [vmem:[#allocation2 + $0x204] sm:$0xff]
    %v5358 = vld [vmem:[#allocation2 + $0x20c] sm:$0xff]
    %v5359 = vld [vmem:[#allocation2 + $0x214] sm:$0xff]
    %v5360 = vld [vmem:[#allocation2 + $0x21c] sm:$0xff]
    %v5361 = vld [vmem:[#allocation2 + $0x224] sm:$0xff]
    %v5362 = vld [vmem:[#allocation2 + $0x22c] sm:$0xff]
    %v5363 = vld [vmem:[#allocation2 + $0x234] sm:$0xff]
    %v5364 = vld [vmem:[#allocation2 + $0x23c] sm:$0xff]
    %v5365 = vld [vmem:[#allocation2 + $0x244] sm:$0xff]
    %v5366 = vld [vmem:[#allocation2 + $0x24c] sm:$0xff]
    %v5367 = vld [vmem:[#allocation2 + $0x254] sm:$0xff]
    %v5368 = vld [vmem:[#allocation2 + $0x25c] sm:$0xff]
    %v5369 = vld [vmem:[#allocation2 + $0x264] sm:$0xff]
    %v5370 = vld [vmem:[#allocation2 + $0x26c] sm:$0xff]
    %v5371 = vld [vmem:[#allocation2 + $0x274] sm:$0xff]
    %v5372 = vld [vmem:[#allocation2 + $0x27c] sm:$0xff]
    %v5373 = vld [vmem:[#allocation2 + $0x284] sm:$0xff]
    %v5374 = vld [vmem:[#allocation2 + $0x28c] sm:$0xff]
    %v5375 = vld [vmem:[#allocation2 + $0x294] sm:$0xff]
    %v5376 = vld [vmem:[#allocation2 + $0x29c] sm:$0xff]
    %v5377 = vld [vmem:[#allocation2 + $0x2a4] sm:$0xff]
    %v5378 = vld [vmem:[#allocation2 + $0x2ac] sm:$0xff]
    %v5379 = vld [vmem:[#allocation2 + $0x2b4] sm:$0xff]
    %v5380 = vld [vmem:[#allocation2 + $0x2bc] sm:$0xff]
    %v5381 = vld [vmem:[#allocation2 + $0x2c4] sm:$0xff]
    %v5382 = vld [vmem:[#allocation2 + $0x2cc] sm:$0xff]
    %v5383 = vld [vmem:[#allocation2 + $0x2d4] sm:$0xff]
    %v5384 = vld [vmem:[#allocation2 + $0x2dc] sm:$0xff]
    %v5385 = vld [vmem:[#allocation2 + $0x2e4] sm:$0xff]
    %v5386 = vld [vmem:[#allocation2 + $0x2ec] sm:$0xff]
    %v5387 = vld [vmem:[#allocation2 + $0x2f4] sm:$0xff]
    %v5388 = vld [vmem:[#allocation2 + $0x2fc] sm:$0xff]
    %v5389 = vld [vmem:[#allocation2 + $0x304] sm:$0xff]
    %v5390 = vld [vmem:[#allocation2 + $0x30c] sm:$0xff]
    %v5391 = vld [vmem:[#allocation2 + $0x314] sm:$0xff]
    %v5392 = vld [vmem:[#allocation2 + $0x31c] sm:$0xff]
    %v5393 = vld [vmem:[#allocation2 + $0x324] sm:$0xff]
    %v5394 = vld [vmem:[#allocation2 + $0x32c] sm:$0xff]
    %v5395 = vld [vmem:[#allocation2 + $0x334] sm:$0xff]
    %v5396 = vld [vmem:[#allocation2 + $0x33c] sm:$0xff]
    %v5397 = vld [vmem:[#allocation2 + $0x344] sm:$0xff]
    %v5398 = vld [vmem:[#allocation2 + $0x34c] sm:$0xff]
    %v5399 = vld [vmem:[#allocation2 + $0x354] sm:$0xff]
    %v5400 = vld [vmem:[#allocation2 + $0x35c] sm:$0xff]
    %v5401 = vld [vmem:[#allocation2 + $0x364] sm:$0xff]
    %v5402 = vld [vmem:[#allocation2 + $0x36c] sm:$0xff]
    %v5403 = vld [vmem:[#allocation2 + $0x374] sm:$0xff]
    %v5404 = vld [vmem:[#allocation2 + $0x37c] sm:$0xff]
    %v5405 = vld [vmem:[#allocation2 + $0x384] sm:$0xff]
    %v5406 = vld [vmem:[#allocation2 + $0x38c] sm:$0xff]
    %v5407 = vld [vmem:[#allocation2 + $0x394] sm:$0xff]
    %v5408 = vld [vmem:[#allocation2 + $0x39c] sm:$0xff]
    %v5409 = vld [vmem:[#allocation2 + $0x3a4] sm:$0xff]
    %v5410 = vld [vmem:[#allocation2 + $0x3ac] sm:$0xff]
    %v5411 = vld [vmem:[#allocation2 + $0x3b4] sm:$0xff]
    %v5412 = vld [vmem:[#allocation2 + $0x3bc] sm:$0xff]
    %v5413 = vld [vmem:[#allocation2 + $0x3c4] sm:$0xff]
    %v5414 = vld [vmem:[#allocation2 + $0x3cc] sm:$0xff]
    %v5415 = vld [vmem:[#allocation2 + $0x3d4] sm:$0xff]
    %v5416 = vld [vmem:[#allocation2 + $0x3dc] sm:$0xff]
    %v5417 = vld [vmem:[#allocation2 + $0x3e4] sm:$0xff]
    %v5418 = vld [vmem:[#allocation2 + $0x3ec] sm:$0xff]
    %v5419 = vld [vmem:[#allocation2 + $0x3f4] sm:$0xff]
    %v5420 = vld [vmem:[#allocation2 + $0x3fc] sm:$0xff]
    %v5421 = vld [vmem:[#allocation2 + $0x404] sm:$0xff]
    %v5422 = vld [vmem:[#allocation2 + $0x40c] sm:$0xff]
    %s5423 = scalar_lea.vmem %s2, 20
    %v5424 = vld [vmem:[%s5423] sm:$0xf]
    %v5426 = vsel %vm176, %v5295, 0
    %v5429 = vsel %vm176, %v5296, 0
    %v5432 = vsel %vm176, %v5297, 0
    %v5435 = vsel %vm176, %v5298, 0
    %v5438 = vsel %vm176, %v5299, 0
    %v5441 = vsel %vm176, %v5300, 0
    %v5444 = vsel %vm176, %v5301, 0
    %v5447 = vsel %vm176, %v5302, 0
    %v5450 = vsel %vm176, %v5303, 0
    %v5453 = vsel %vm176, %v5304, 0
    %v5456 = vsel %vm176, %v5305, 0
    %v5459 = vsel %vm176, %v5306, 0
    %v5462 = vsel %vm176, %v5307, 0
    %v5465 = vsel %vm176, %v5308, 0
    %v5468 = vsel %vm176, %v5309, 0
    %v5471 = vsel %vm176, %v5310, 0
    %v5474 = vsel %vm176, %v5311, 0
    %v5477 = vsel %vm176, %v5312, 0
    %v5480 = vsel %vm176, %v5313, 0
    %v5483 = vsel %vm176, %v5314, 0
    %v5486 = vsel %vm176, %v5315, 0
    %v5489 = vsel %vm176, %v5316, 0
    %v5492 = vsel %vm176, %v5317, 0
    %v5495 = vsel %vm176, %v5318, 0
    %v5498 = vsel %vm176, %v5319, 0
    %v5501 = vsel %vm176, %v5320, 0
    %v5504 = vsel %vm176, %v5321, 0
    %v5507 = vsel %vm176, %v5322, 0
    %v5510 = vsel %vm176, %v5323, 0
    %v5513 = vsel %vm176, %v5324, 0
    %v5516 = vsel %vm176, %v5325, 0
    %v5519 = vsel %vm176, %v5326, 0
    %v5522 = vsel %vm176, %v5327, 0
    %v5525 = vsel %vm176, %v5328, 0
    %v5528 = vsel %vm176, %v5329, 0
    %v5531 = vsel %vm176, %v5330, 0
    %v5534 = vsel %vm176, %v5331, 0
    %v5537 = vsel %vm176, %v5332, 0
    %v5540 = vsel %vm176, %v5333, 0
    %v5543 = vsel %vm176, %v5334, 0
    %v5546 = vsel %vm176, %v5335, 0
    %v5549 = vsel %vm176, %v5336, 0
    %v5552 = vsel %vm176, %v5337, 0
    %v5555 = vsel %vm176, %v5338, 0
    %v5558 = vsel %vm176, %v5339, 0
    %v5561 = vsel %vm176, %v5340, 0
    %v5564 = vsel %vm176, %v5341, 0
    %v5567 = vsel %vm176, %v5342, 0
    %v5570 = vsel %vm176, %v5343, 0
    %v5573 = vsel %vm176, %v5344, 0
    %v5576 = vsel %vm176, %v5345, 0
    %v5579 = vsel %vm176, %v5346, 0
    %v5582 = vsel %vm176, %v5347, 0
    %v5585 = vsel %vm176, %v5348, 0
    %v5588 = vsel %vm176, %v5349, 0
    %v5591 = vsel %vm176, %v5350, 0
    %v5594 = vsel %vm176, %v5351, 0
    %v5597 = vsel %vm176, %v5352, 0
    %v5600 = vsel %vm176, %v5353, 0
    %v5603 = vsel %vm176, %v5354, 0
    %v5606 = vsel %vm176, %v5355, 0
    %v5609 = vsel %vm176, %v5356, 0
    %v5612 = vsel %vm176, %v5357, 0
    %v5615 = vsel %vm176, %v5358, 0
    %v5618 = vsel %vm176, %v5359, 0
    %v5621 = vsel %vm176, %v5360, 0
    %v5624 = vsel %vm176, %v5361, 0
    %v5627 = vsel %vm176, %v5362, 0
    %v5630 = vsel %vm176, %v5363, 0
    %v5633 = vsel %vm176, %v5364, 0
    %v5636 = vsel %vm176, %v5365, 0
    %v5639 = vsel %vm176, %v5366, 0
    %v5642 = vsel %vm176, %v5367, 0
    %v5645 = vsel %vm176, %v5368, 0
    %v5648 = vsel %vm176, %v5369, 0
    %v5651 = vsel %vm176, %v5370, 0
    %v5654 = vsel %vm176, %v5371, 0
    %v5657 = vsel %vm176, %v5372, 0
    %v5660 = vsel %vm176, %v5373, 0
    %v5663 = vsel %vm176, %v5374, 0
    %v5666 = vsel %vm176, %v5375, 0
    %v5669 = vsel %vm176, %v5376, 0
    %v5672 = vsel %vm176, %v5377, 0
    %v5675 = vsel %vm176, %v5378, 0
    %v5678 = vsel %vm176, %v5379, 0
    %v5681 = vsel %vm176, %v5380, 0
    %v5684 = vsel %vm176, %v5381, 0
    %v5687 = vsel %vm176, %v5382, 0
    %v5690 = vsel %vm176, %v5383, 0
    %v5693 = vsel %vm176, %v5384, 0
    %v5696 = vsel %vm176, %v5385, 0
    %v5699 = vsel %vm176, %v5386, 0
    %v5702 = vsel %vm176, %v5387, 0
    %v5705 = vsel %vm176, %v5388, 0
    %v5708 = vsel %vm176, %v5389, 0
    %v5711 = vsel %vm176, %v5390, 0
    %v5714 = vsel %vm176, %v5391, 0
    %v5717 = vsel %vm176, %v5392, 0
    %v5720 = vsel %vm176, %v5393, 0
    %v5723 = vsel %vm176, %v5394, 0
    %v5726 = vsel %vm176, %v5395, 0
    %v5729 = vsel %vm176, %v5396, 0
    %v5732 = vsel %vm176, %v5397, 0
    %v5735 = vsel %vm176, %v5398, 0
    %v5738 = vsel %vm176, %v5399, 0
    %v5741 = vsel %vm176, %v5400, 0
    %v5744 = vsel %vm176, %v5401, 0
    %v5747 = vsel %vm176, %v5402, 0
    %v5750 = vsel %vm176, %v5403, 0
    %v5753 = vsel %vm176, %v5404, 0
    %v5756 = vsel %vm176, %v5405, 0
    %v5759 = vsel %vm176, %v5406, 0
    %v5762 = vsel %vm176, %v5407, 0
    %v5765 = vsel %vm176, %v5408, 0
    %v5768 = vsel %vm176, %v5409, 0
    %v5771 = vsel %vm176, %v5410, 0
    %v5774 = vsel %vm176, %v5411, 0
    %v5777 = vsel %vm176, %v5412, 0
    %v5780 = vsel %vm176, %v5413, 0
    %v5783 = vsel %vm176, %v5414, 0
    %v5786 = vsel %vm176, %v5415, 0
    %v5789 = vsel %vm176, %v5416, 0
    %v5792 = vsel %vm176, %v5417, 0
    %v5795 = vsel %vm176, %v5418, 0
    %v5798 = vsel %vm176, %v5419, 0
    %v5801 = vsel %vm176, %v5420, 0
    %v5804 = vsel %vm176, %v5421, 0
    %v5807 = vsel %vm176, %v5422, 0
    %v5810 = vsel %vm964, %v5424, 0
    %5812 = vmatpush.msra.mxu0 0.0
    %5813 = vmatpush.msra.mxu0 0.0
    %5814 = vmatpush.msra.mxu0 0.0
    %5815 = vmatpush.msra.mxu0 0.0
    %5816 = vmatpush.msra.mxu0 0.0
    %5817 = vmatpush.msra.mxu0 0.0
    %5818 = vmatpush.msra.mxu0 0.0
    %5819 = vmatpush.msra.mxu0 0.0
    %5820 = vmatpush.msra.mxu0 0.0
    %5821 = vmatpush.msra.mxu0 0.0
    %5822 = vmatpush.msra.mxu0 0.0
    %5823 = vmatpush.msra.mxu0 0.0
    %5824 = vmatpush.msra.mxu0 0.0
    %5825 = vmatpush.msra.mxu0 0.0
    %5826 = vmatpush.msra.mxu0 0.0
    %5827 = vmatpush.msra.mxu0 %v5810
    %5828 = vmatmul.f32.gmra.mxu0 %v5426
    %v5829 = vpop.f32.mrf.mxu0
    %v5830 = vadd.f32 0.0, %v5829
    %5831 = vmatmul.f32.gmra.mxu0 %v5429
    %v5832 = vpop.f32.mrf.mxu0
    %v5833 = vadd.f32 0.0, %v5832
    %5834 = vmatmul.f32.gmra.mxu0 %v5432
    %v5835 = vpop.f32.mrf.mxu0
    %v5836 = vadd.f32 0.0, %v5835
    %5837 = vmatmul.f32.gmra.mxu0 %v5435
    %v5838 = vpop.f32.mrf.mxu0
    %v5839 = vadd.f32 0.0, %v5838
    %5840 = vmatmul.f32.gmra.mxu0 %v5438
    %v5841 = vpop.f32.mrf.mxu0
    %v5842 = vadd.f32 0.0, %v5841
    %5843 = vmatmul.f32.gmra.mxu0 %v5441
    %v5844 = vpop.f32.mrf.mxu0
    %v5845 = vadd.f32 0.0, %v5844
    %5846 = vmatmul.f32.gmra.mxu0 %v5444
    %v5847 = vpop.f32.mrf.mxu0
    %v5848 = vadd.f32 0.0, %v5847
    %5849 = vmatmul.f32.gmra.mxu0 %v5447
    %v5850 = vpop.f32.mrf.mxu0
    %v5851 = vadd.f32 0.0, %v5850
    %5852 = vmatmul.f32.gmra.mxu0 %v5450
    %v5853 = vpop.f32.mrf.mxu0
    %v5854 = vadd.f32 0.0, %v5853
    %5855 = vmatmul.f32.gmra.mxu0 %v5453
    %v5856 = vpop.f32.mrf.mxu0
    %v5857 = vadd.f32 0.0, %v5856
    %5858 = vmatmul.f32.gmra.mxu0 %v5456
    %v5859 = vpop.f32.mrf.mxu0
    %v5860 = vadd.f32 0.0, %v5859
    %5861 = vmatmul.f32.gmra.mxu0 %v5459
    %v5862 = vpop.f32.mrf.mxu0
    %v5863 = vadd.f32 0.0, %v5862
    %5864 = vmatmul.f32.gmra.mxu0 %v5462
    %v5865 = vpop.f32.mrf.mxu0
    %v5866 = vadd.f32 0.0, %v5865
    %5867 = vmatmul.f32.gmra.mxu0 %v5465
    %v5868 = vpop.f32.mrf.mxu0
    %v5869 = vadd.f32 0.0, %v5868
    %5870 = vmatmul.f32.gmra.mxu0 %v5468
    %v5871 = vpop.f32.mrf.mxu0
    %v5872 = vadd.f32 0.0, %v5871
    %5873 = vmatmul.f32.gmra.mxu0 %v5471
    %v5874 = vpop.f32.mrf.mxu0
    %v5875 = vadd.f32 0.0, %v5874
    %5876 = vmatmul.f32.gmra.mxu0 %v5474
    %v5877 = vpop.f32.mrf.mxu0
    %v5878 = vadd.f32 0.0, %v5877
    %5879 = vmatmul.f32.gmra.mxu0 %v5477
    %v5880 = vpop.f32.mrf.mxu0
    %v5881 = vadd.f32 0.0, %v5880
    %5882 = vmatmul.f32.gmra.mxu0 %v5480
    %v5883 = vpop.f32.mrf.mxu0
    %v5884 = vadd.f32 0.0, %v5883
    %5885 = vmatmul.f32.gmra.mxu0 %v5483
    %v5886 = vpop.f32.mrf.mxu0
    %v5887 = vadd.f32 0.0, %v5886
    %5888 = vmatmul.f32.gmra.mxu0 %v5486
    %v5889 = vpop.f32.mrf.mxu0
    %v5890 = vadd.f32 0.0, %v5889
    %5891 = vmatmul.f32.gmra.mxu0 %v5489
    %v5892 = vpop.f32.mrf.mxu0
    %v5893 = vadd.f32 0.0, %v5892
    %5894 = vmatmul.f32.gmra.mxu0 %v5492
    %v5895 = vpop.f32.mrf.mxu0
    %v5896 = vadd.f32 0.0, %v5895
    %5897 = vmatmul.f32.gmra.mxu0 %v5495
    %v5898 = vpop.f32.mrf.mxu0
    %v5899 = vadd.f32 0.0, %v5898
    %5900 = vmatmul.f32.gmra.mxu0 %v5498
    %v5901 = vpop.f32.mrf.mxu0
    %v5902 = vadd.f32 0.0, %v5901
    %5903 = vmatmul.f32.gmra.mxu0 %v5501
    %v5904 = vpop.f32.mrf.mxu0
    %v5905 = vadd.f32 0.0, %v5904
    %5906 = vmatmul.f32.gmra.mxu0 %v5504
    %v5907 = vpop.f32.mrf.mxu0
    %v5908 = vadd.f32 0.0, %v5907
    %5909 = vmatmul.f32.gmra.mxu0 %v5507
    %v5910 = vpop.f32.mrf.mxu0
    %v5911 = vadd.f32 0.0, %v5910
    %5912 = vmatmul.f32.gmra.mxu0 %v5510
    %v5913 = vpop.f32.mrf.mxu0
    %v5914 = vadd.f32 0.0, %v5913
    %5915 = vmatmul.f32.gmra.mxu0 %v5513
    %v5916 = vpop.f32.mrf.mxu0
    %v5917 = vadd.f32 0.0, %v5916
    %5918 = vmatmul.f32.gmra.mxu0 %v5516
    %v5919 = vpop.f32.mrf.mxu0
    %v5920 = vadd.f32 0.0, %v5919
    %5921 = vmatmul.f32.gmra.mxu0 %v5519
    %v5922 = vpop.f32.mrf.mxu0
    %v5923 = vadd.f32 0.0, %v5922
    %5924 = vmatmul.f32.gmra.mxu0 %v5522
    %v5925 = vpop.f32.mrf.mxu0
    %v5926 = vadd.f32 0.0, %v5925
    %5927 = vmatmul.f32.gmra.mxu0 %v5525
    %v5928 = vpop.f32.mrf.mxu0
    %v5929 = vadd.f32 0.0, %v5928
    %5930 = vmatmul.f32.gmra.mxu0 %v5528
    %v5931 = vpop.f32.mrf.mxu0
    %v5932 = vadd.f32 0.0, %v5931
    %5933 = vmatmul.f32.gmra.mxu0 %v5531
    %v5934 = vpop.f32.mrf.mxu0
    %v5935 = vadd.f32 0.0, %v5934
    %5936 = vmatmul.f32.gmra.mxu0 %v5534
    %v5937 = vpop.f32.mrf.mxu0
    %v5938 = vadd.f32 0.0, %v5937
    %5939 = vmatmul.f32.gmra.mxu0 %v5537
    %v5940 = vpop.f32.mrf.mxu0
    %v5941 = vadd.f32 0.0, %v5940
    %5942 = vmatmul.f32.gmra.mxu0 %v5540
    %v5943 = vpop.f32.mrf.mxu0
    %v5944 = vadd.f32 0.0, %v5943
    %5945 = vmatmul.f32.gmra.mxu0 %v5543
    %v5946 = vpop.f32.mrf.mxu0
    %v5947 = vadd.f32 0.0, %v5946
    %5948 = vmatmul.f32.gmra.mxu0 %v5546
    %v5949 = vpop.f32.mrf.mxu0
    %v5950 = vadd.f32 0.0, %v5949
    %5951 = vmatmul.f32.gmra.mxu0 %v5549
    %v5952 = vpop.f32.mrf.mxu0
    %v5953 = vadd.f32 0.0, %v5952
    %5954 = vmatmul.f32.gmra.mxu0 %v5552
    %v5955 = vpop.f32.mrf.mxu0
    %v5956 = vadd.f32 0.0, %v5955
    %5957 = vmatmul.f32.gmra.mxu0 %v5555
    %v5958 = vpop.f32.mrf.mxu0
    %v5959 = vadd.f32 0.0, %v5958
    %5960 = vmatmul.f32.gmra.mxu0 %v5558
    %v5961 = vpop.f32.mrf.mxu0
    %v5962 = vadd.f32 0.0, %v5961
    %5963 = vmatmul.f32.gmra.mxu0 %v5561
    %v5964 = vpop.f32.mrf.mxu0
    %v5965 = vadd.f32 0.0, %v5964
    %5966 = vmatmul.f32.gmra.mxu0 %v5564
    %v5967 = vpop.f32.mrf.mxu0
    %v5968 = vadd.f32 0.0, %v5967
    %5969 = vmatmul.f32.gmra.mxu0 %v5567
    %v5970 = vpop.f32.mrf.mxu0
    %v5971 = vadd.f32 0.0, %v5970
    %5972 = vmatmul.f32.gmra.mxu0 %v5570
    %v5973 = vpop.f32.mrf.mxu0
    %v5974 = vadd.f32 0.0, %v5973
    %5975 = vmatmul.f32.gmra.mxu0 %v5573
    %v5976 = vpop.f32.mrf.mxu0
    %v5977 = vadd.f32 0.0, %v5976
    %5978 = vmatmul.f32.gmra.mxu0 %v5576
    %v5979 = vpop.f32.mrf.mxu0
    %v5980 = vadd.f32 0.0, %v5979
    %5981 = vmatmul.f32.gmra.mxu0 %v5579
    %v5982 = vpop.f32.mrf.mxu0
    %v5983 = vadd.f32 0.0, %v5982
    %5984 = vmatmul.f32.gmra.mxu0 %v5582
    %v5985 = vpop.f32.mrf.mxu0
    %v5986 = vadd.f32 0.0, %v5985
    %5987 = vmatmul.f32.gmra.mxu0 %v5585
    %v5988 = vpop.f32.mrf.mxu0
    %v5989 = vadd.f32 0.0, %v5988
    %5990 = vmatmul.f32.gmra.mxu0 %v5588
    %v5991 = vpop.f32.mrf.mxu0
    %v5992 = vadd.f32 0.0, %v5991
    %5993 = vmatmul.f32.gmra.mxu0 %v5591
    %v5994 = vpop.f32.mrf.mxu0
    %v5995 = vadd.f32 0.0, %v5994
    %5996 = vmatmul.f32.gmra.mxu0 %v5594
    %v5997 = vpop.f32.mrf.mxu0
    %v5998 = vadd.f32 0.0, %v5997
    %5999 = vmatmul.f32.gmra.mxu0 %v5597
    %v6000 = vpop.f32.mrf.mxu0
    %v6001 = vadd.f32 0.0, %v6000
    %6002 = vmatmul.f32.gmra.mxu0 %v5600
    %v6003 = vpop.f32.mrf.mxu0
    %v6004 = vadd.f32 0.0, %v6003
    %6005 = vmatmul.f32.gmra.mxu0 %v5603
    %v6006 = vpop.f32.mrf.mxu0
    %v6007 = vadd.f32 0.0, %v6006
    %6008 = vmatmul.f32.gmra.mxu0 %v5606
    %v6009 = vpop.f32.mrf.mxu0
    %v6010 = vadd.f32 0.0, %v6009
    %6011 = vmatmul.f32.gmra.mxu0 %v5609
    %v6012 = vpop.f32.mrf.mxu0
    %v6013 = vadd.f32 0.0, %v6012
    %6014 = vmatmul.f32.gmra.mxu0 %v5612
    %v6015 = vpop.f32.mrf.mxu0
    %v6016 = vadd.f32 0.0, %v6015
    %6017 = vmatmul.f32.gmra.mxu0 %v5615
    %v6018 = vpop.f32.mrf.mxu0
    %v6019 = vadd.f32 0.0, %v6018
    %6020 = vmatmul.f32.gmra.mxu0 %v5618
    %v6021 = vpop.f32.mrf.mxu0
    %v6022 = vadd.f32 0.0, %v6021
    %6023 = vmatmul.f32.gmra.mxu0 %v5621
    %v6024 = vpop.f32.mrf.mxu0
    %v6025 = vadd.f32 0.0, %v6024
    %6026 = vmatmul.f32.gmra.mxu0 %v5624
    %v6027 = vpop.f32.mrf.mxu0
    %v6028 = vadd.f32 0.0, %v6027
    %6029 = vmatmul.f32.gmra.mxu0 %v5627
    %v6030 = vpop.f32.mrf.mxu0
    %v6031 = vadd.f32 0.0, %v6030
    %6032 = vmatmul.f32.gmra.mxu0 %v5630
    %v6033 = vpop.f32.mrf.mxu0
    %v6034 = vadd.f32 0.0, %v6033
    %6035 = vmatmul.f32.gmra.mxu0 %v5633
    %v6036 = vpop.f32.mrf.mxu0
    %v6037 = vadd.f32 0.0, %v6036
    %6038 = vmatmul.f32.gmra.mxu0 %v5636
    %v6039 = vpop.f32.mrf.mxu0
    %v6040 = vadd.f32 0.0, %v6039
    %6041 = vmatmul.f32.gmra.mxu0 %v5639
    %v6042 = vpop.f32.mrf.mxu0
    %v6043 = vadd.f32 0.0, %v6042
    %6044 = vmatmul.f32.gmra.mxu0 %v5642
    %v6045 = vpop.f32.mrf.mxu0
    %v6046 = vadd.f32 0.0, %v6045
    %6047 = vmatmul.f32.gmra.mxu0 %v5645
    %v6048 = vpop.f32.mrf.mxu0
    %v6049 = vadd.f32 0.0, %v6048
    %6050 = vmatmul.f32.gmra.mxu0 %v5648
    %v6051 = vpop.f32.mrf.mxu0
    %v6052 = vadd.f32 0.0, %v6051
    %6053 = vmatmul.f32.gmra.mxu0 %v5651
    %v6054 = vpop.f32.mrf.mxu0
    %v6055 = vadd.f32 0.0, %v6054
    %6056 = vmatmul.f32.gmra.mxu0 %v5654
    %v6057 = vpop.f32.mrf.mxu0
    %v6058 = vadd.f32 0.0, %v6057
    %6059 = vmatmul.f32.gmra.mxu0 %v5657
    %v6060 = vpop.f32.mrf.mxu0
    %v6061 = vadd.f32 0.0, %v6060
    %6062 = vmatmul.f32.gmra.mxu0 %v5660
    %v6063 = vpop.f32.mrf.mxu0
    %v6064 = vadd.f32 0.0, %v6063
    %6065 = vmatmul.f32.gmra.mxu0 %v5663
    %v6066 = vpop.f32.mrf.mxu0
    %v6067 = vadd.f32 0.0, %v6066
    %6068 = vmatmul.f32.gmra.mxu0 %v5666
    %v6069 = vpop.f32.mrf.mxu0
    %v6070 = vadd.f32 0.0, %v6069
    %6071 = vmatmul.f32.gmra.mxu0 %v5669
    %v6072 = vpop.f32.mrf.mxu0
    %v6073 = vadd.f32 0.0, %v6072
    %6074 = vmatmul.f32.gmra.mxu0 %v5672
    %v6075 = vpop.f32.mrf.mxu0
    %v6076 = vadd.f32 0.0, %v6075
    %6077 = vmatmul.f32.gmra.mxu0 %v5675
    %v6078 = vpop.f32.mrf.mxu0
    %v6079 = vadd.f32 0.0, %v6078
    %6080 = vmatmul.f32.gmra.mxu0 %v5678
    %v6081 = vpop.f32.mrf.mxu0
    %v6082 = vadd.f32 0.0, %v6081
    %6083 = vmatmul.f32.gmra.mxu0 %v5681
    %v6084 = vpop.f32.mrf.mxu0
    %v6085 = vadd.f32 0.0, %v6084
    %6086 = vmatmul.f32.gmra.mxu0 %v5684
    %v6087 = vpop.f32.mrf.mxu0
    %v6088 = vadd.f32 0.0, %v6087
    %6089 = vmatmul.f32.gmra.mxu0 %v5687
    %v6090 = vpop.f32.mrf.mxu0
    %v6091 = vadd.f32 0.0, %v6090
    %6092 = vmatmul.f32.gmra.mxu0 %v5690
    %v6093 = vpop.f32.mrf.mxu0
    %v6094 = vadd.f32 0.0, %v6093
    %6095 = vmatmul.f32.gmra.mxu0 %v5693
    %v6096 = vpop.f32.mrf.mxu0
    %v6097 = vadd.f32 0.0, %v6096
    %6098 = vmatmul.f32.gmra.mxu0 %v5696
    %v6099 = vpop.f32.mrf.mxu0
    %v6100 = vadd.f32 0.0, %v6099
    %6101 = vmatmul.f32.gmra.mxu0 %v5699
    %v6102 = vpop.f32.mrf.mxu0
    %v6103 = vadd.f32 0.0, %v6102
    %6104 = vmatmul.f32.gmra.mxu0 %v5702
    %v6105 = vpop.f32.mrf.mxu0
    %v6106 = vadd.f32 0.0, %v6105
    %6107 = vmatmul.f32.gmra.mxu0 %v5705
    %v6108 = vpop.f32.mrf.mxu0
    %v6109 = vadd.f32 0.0, %v6108
    %6110 = vmatmul.f32.gmra.mxu0 %v5708
    %v6111 = vpop.f32.mrf.mxu0
    %v6112 = vadd.f32 0.0, %v6111
    %6113 = vmatmul.f32.gmra.mxu0 %v5711
    %v6114 = vpop.f32.mrf.mxu0
    %v6115 = vadd.f32 0.0, %v6114
    %6116 = vmatmul.f32.gmra.mxu0 %v5714
    %v6117 = vpop.f32.mrf.mxu0
    %v6118 = vadd.f32 0.0, %v6117
    %6119 = vmatmul.f32.gmra.mxu0 %v5717
    %v6120 = vpop.f32.mrf.mxu0
    %v6121 = vadd.f32 0.0, %v6120
    %6122 = vmatmul.f32.gmra.mxu0 %v5720
    %v6123 = vpop.f32.mrf.mxu0
    %v6124 = vadd.f32 0.0, %v6123
    %6125 = vmatmul.f32.gmra.mxu0 %v5723
    %v6126 = vpop.f32.mrf.mxu0
    %v6127 = vadd.f32 0.0, %v6126
    %6128 = vmatmul.f32.gmra.mxu0 %v5726
    %v6129 = vpop.f32.mrf.mxu0
    %v6130 = vadd.f32 0.0, %v6129
    %6131 = vmatmul.f32.gmra.mxu0 %v5729
    %v6132 = vpop.f32.mrf.mxu0
    %v6133 = vadd.f32 0.0, %v6132
    %6134 = vmatmul.f32.gmra.mxu0 %v5732
    %v6135 = vpop.f32.mrf.mxu0
    %v6136 = vadd.f32 0.0, %v6135
    %6137 = vmatmul.f32.gmra.mxu0 %v5735
    %v6138 = vpop.f32.mrf.mxu0
    %v6139 = vadd.f32 0.0, %v6138
    %6140 = vmatmul.f32.gmra.mxu0 %v5738
    %v6141 = vpop.f32.mrf.mxu0
    %v6142 = vadd.f32 0.0, %v6141
    %6143 = vmatmul.f32.gmra.mxu0 %v5741
    %v6144 = vpop.f32.mrf.mxu0
    %v6145 = vadd.f32 0.0, %v6144
    %6146 = vmatmul.f32.gmra.mxu0 %v5744
    %v6147 = vpop.f32.mrf.mxu0
    %v6148 = vadd.f32 0.0, %v6147
    %6149 = vmatmul.f32.gmra.mxu0 %v5747
    %v6150 = vpop.f32.mrf.mxu0
    %v6151 = vadd.f32 0.0, %v6150
    %6152 = vmatmul.f32.gmra.mxu0 %v5750
    %v6153 = vpop.f32.mrf.mxu0
    %v6154 = vadd.f32 0.0, %v6153
    %6155 = vmatmul.f32.gmra.mxu0 %v5753
    %v6156 = vpop.f32.mrf.mxu0
    %v6157 = vadd.f32 0.0, %v6156
    %6158 = vmatmul.f32.gmra.mxu0 %v5756
    %v6159 = vpop.f32.mrf.mxu0
    %v6160 = vadd.f32 0.0, %v6159
    %6161 = vmatmul.f32.gmra.mxu0 %v5759
    %v6162 = vpop.f32.mrf.mxu0
    %v6163 = vadd.f32 0.0, %v6162
    %6164 = vmatmul.f32.gmra.mxu0 %v5762
    %v6165 = vpop.f32.mrf.mxu0
    %v6166 = vadd.f32 0.0, %v6165
    %6167 = vmatmul.f32.gmra.mxu0 %v5765
    %v6168 = vpop.f32.mrf.mxu0
    %v6169 = vadd.f32 0.0, %v6168
    %6170 = vmatmul.f32.gmra.mxu0 %v5768
    %v6171 = vpop.f32.mrf.mxu0
    %v6172 = vadd.f32 0.0, %v6171
    %6173 = vmatmul.f32.gmra.mxu0 %v5771
    %v6174 = vpop.f32.mrf.mxu0
    %v6175 = vadd.f32 0.0, %v6174
    %6176 = vmatmul.f32.gmra.mxu0 %v5774
    %v6177 = vpop.f32.mrf.mxu0
    %v6178 = vadd.f32 0.0, %v6177
    %6179 = vmatmul.f32.gmra.mxu0 %v5777
    %v6180 = vpop.f32.mrf.mxu0
    %v6181 = vadd.f32 0.0, %v6180
    %6182 = vmatmul.f32.gmra.mxu0 %v5780
    %v6183 = vpop.f32.mrf.mxu0
    %v6184 = vadd.f32 0.0, %v6183
    %6185 = vmatmul.f32.gmra.mxu0 %v5783
    %v6186 = vpop.f32.mrf.mxu0
    %v6187 = vadd.f32 0.0, %v6186
    %6188 = vmatmul.f32.gmra.mxu0 %v5786
    %v6189 = vpop.f32.mrf.mxu0
    %v6190 = vadd.f32 0.0, %v6189
    %6191 = vmatmul.f32.gmra.mxu0 %v5789
    %v6192 = vpop.f32.mrf.mxu0
    %v6193 = vadd.f32 0.0, %v6192
    %6194 = vmatmul.f32.gmra.mxu0 %v5792
    %v6195 = vpop.f32.mrf.mxu0
    %v6196 = vadd.f32 0.0, %v6195
    %6197 = vmatmul.f32.gmra.mxu0 %v5795
    %v6198 = vpop.f32.mrf.mxu0
    %v6199 = vadd.f32 0.0, %v6198
    %6200 = vmatmul.f32.gmra.mxu0 %v5798
    %v6201 = vpop.f32.mrf.mxu0
    %v6202 = vadd.f32 0.0, %v6201
    %6203 = vmatmul.f32.gmra.mxu0 %v5801
    %v6204 = vpop.f32.mrf.mxu0
    %v6205 = vadd.f32 0.0, %v6204
    %6206 = vmatmul.f32.gmra.mxu0 %v5804
    %v6207 = vpop.f32.mrf.mxu0
    %v6208 = vadd.f32 0.0, %v6207
    %6209 = vmatmul.f32.gmra.mxu0 %v5807
    %v6210 = vpop.f32.mrf.mxu0
    %v6211 = vadd.f32 0.0, %v6210
    %6212 = vdwg.mxu0
    %v6213 = vadd.f32 %v5167, %v5830
    %v6214 = vadd.f32 %v5168, %v5833
    %v6215 = vadd.f32 %v5169, %v5836
    %v6216 = vadd.f32 %v5170, %v5839
    %v6217 = vadd.f32 %v5171, %v5842
    %v6218 = vadd.f32 %v5172, %v5845
    %v6219 = vadd.f32 %v5173, %v5848
    %v6220 = vadd.f32 %v5174, %v5851
    %v6221 = vadd.f32 %v5175, %v5854
    %v6222 = vadd.f32 %v5176, %v5857
    %v6223 = vadd.f32 %v5177, %v5860
    %v6224 = vadd.f32 %v5178, %v5863
    %v6225 = vadd.f32 %v5179, %v5866
    %v6226 = vadd.f32 %v5180, %v5869
    %v6227 = vadd.f32 %v5181, %v5872
    %v6228 = vadd.f32 %v5182, %v5875
    %v6229 = vadd.f32 %v5183, %v5878
    %v6230 = vadd.f32 %v5184, %v5881
    %v6231 = vadd.f32 %v5185, %v5884
    %v6232 = vadd.f32 %v5186, %v5887
    %v6233 = vadd.f32 %v5187, %v5890
    %v6234 = vadd.f32 %v5188, %v5893
    %v6235 = vadd.f32 %v5189, %v5896
    %v6236 = vadd.f32 %v5190, %v5899
    %v6237 = vadd.f32 %v5191, %v5902
    %v6238 = vadd.f32 %v5192, %v5905
    %v6239 = vadd.f32 %v5193, %v5908
    %v6240 = vadd.f32 %v5194, %v5911
    %v6241 = vadd.f32 %v5195, %v5914
    %v6242 = vadd.f32 %v5196, %v5917
    %v6243 = vadd.f32 %v5197, %v5920
    %v6244 = vadd.f32 %v5198, %v5923
    %v6245 = vadd.f32 %v5199, %v5926
    %v6246 = vadd.f32 %v5200, %v5929
    %v6247 = vadd.f32 %v5201, %v5932
    %v6248 = vadd.f32 %v5202, %v5935
    %v6249 = vadd.f32 %v5203, %v5938
    %v6250 = vadd.f32 %v5204, %v5941
    %v6251 = vadd.f32 %v5205, %v5944
    %v6252 = vadd.f32 %v5206, %v5947
    %v6253 = vadd.f32 %v5207, %v5950
    %v6254 = vadd.f32 %v5208, %v5953
    %v6255 = vadd.f32 %v5209, %v5956
    %v6256 = vadd.f32 %v5210, %v5959
    %v6257 = vadd.f32 %v5211, %v5962
    %v6258 = vadd.f32 %v5212, %v5965
    %v6259 = vadd.f32 %v5213, %v5968
    %v6260 = vadd.f32 %v5214, %v5971
    %v6261 = vadd.f32 %v5215, %v5974
    %v6262 = vadd.f32 %v5216, %v5977
    %v6263 = vadd.f32 %v5217, %v5980
    %v6264 = vadd.f32 %v5218, %v5983
    %v6265 = vadd.f32 %v5219, %v5986
    %v6266 = vadd.f32 %v5220, %v5989
    %v6267 = vadd.f32 %v5221, %v5992
    %v6268 = vadd.f32 %v5222, %v5995
    %v6269 = vadd.f32 %v5223, %v5998
    %v6270 = vadd.f32 %v5224, %v6001
    %v6271 = vadd.f32 %v5225, %v6004
    %v6272 = vadd.f32 %v5226, %v6007
    %v6273 = vadd.f32 %v5227, %v6010
    %v6274 = vadd.f32 %v5228, %v6013
    %v6275 = vadd.f32 %v5229, %v6016
    %v6276 = vadd.f32 %v5230, %v6019
    %v6277 = vadd.f32 %v5231, %v6022
    %v6278 = vadd.f32 %v5232, %v6025
    %v6279 = vadd.f32 %v5233, %v6028
    %v6280 = vadd.f32 %v5234, %v6031
    %v6281 = vadd.f32 %v5235, %v6034
    %v6282 = vadd.f32 %v5236, %v6037
    %v6283 = vadd.f32 %v5237, %v6040
    %v6284 = vadd.f32 %v5238, %v6043
    %v6285 = vadd.f32 %v5239, %v6046
    %v6286 = vadd.f32 %v5240, %v6049
    %v6287 = vadd.f32 %v5241, %v6052
    %v6288 = vadd.f32 %v5242, %v6055
    %v6289 = vadd.f32 %v5243, %v6058
    %v6290 = vadd.f32 %v5244, %v6061
    %v6291 = vadd.f32 %v5245, %v6064
    %v6292 = vadd.f32 %v5246, %v6067
    %v6293 = vadd.f32 %v5247, %v6070
    %v6294 = vadd.f32 %v5248, %v6073
    %v6295 = vadd.f32 %v5249, %v6076
    %v6296 = vadd.f32 %v5250, %v6079
    %v6297 = vadd.f32 %v5251, %v6082
    %v6298 = vadd.f32 %v5252, %v6085
    %v6299 = vadd.f32 %v5253, %v6088
    %v6300 = vadd.f32 %v5254, %v6091
    %v6301 = vadd.f32 %v5255, %v6094
    %v6302 = vadd.f32 %v5256, %v6097
    %v6303 = vadd.f32 %v5257, %v6100
    %v6304 = vadd.f32 %v5258, %v6103
    %v6305 = vadd.f32 %v5259, %v6106
    %v6306 = vadd.f32 %v5260, %v6109
    %v6307 = vadd.f32 %v5261, %v6112
    %v6308 = vadd.f32 %v5262, %v6115
    %v6309 = vadd.f32 %v5263, %v6118
    %v6310 = vadd.f32 %v5264, %v6121
    %v6311 = vadd.f32 %v5265, %v6124
    %v6312 = vadd.f32 %v5266, %v6127
    %v6313 = vadd.f32 %v5267, %v6130
    %v6314 = vadd.f32 %v5268, %v6133
    %v6315 = vadd.f32 %v5269, %v6136
    %v6316 = vadd.f32 %v5270, %v6139
    %v6317 = vadd.f32 %v5271, %v6142
    %v6318 = vadd.f32 %v5272, %v6145
    %v6319 = vadd.f32 %v5273, %v6148
    %v6320 = vadd.f32 %v5274, %v6151
    %v6321 = vadd.f32 %v5275, %v6154
    %v6322 = vadd.f32 %v5276, %v6157
    %v6323 = vadd.f32 %v5277, %v6160
    %v6324 = vadd.f32 %v5278, %v6163
    %v6325 = vadd.f32 %v5279, %v6166
    %v6326 = vadd.f32 %v5280, %v6169
    %v6327 = vadd.f32 %v5281, %v6172
    %v6328 = vadd.f32 %v5282, %v6175
    %v6329 = vadd.f32 %v5283, %v6178
    %v6330 = vadd.f32 %v5284, %v6181
    %v6331 = vadd.f32 %v5285, %v6184
    %v6332 = vadd.f32 %v5286, %v6187
    %v6333 = vadd.f32 %v5287, %v6190
    %v6334 = vadd.f32 %v5288, %v6193
    %v6335 = vadd.f32 %v5289, %v6196
    %v6336 = vadd.f32 %v5290, %v6199
    %v6337 = vadd.f32 %v5291, %v6202
    %v6338 = vadd.f32 %v5292, %v6205
    %v6339 = vadd.f32 %v5293, %v6208
    %v6340 = vadd.f32 %v5294, %v6211
    %v6341 = vld [vmem:[#allocation2 + $0x24] sm:$0xff]
    %v6342 = vld [vmem:[#allocation2 + $0x2c] sm:$0xff]
    %v6343 = vld [vmem:[#allocation2 + $0x34] sm:$0xff]
    %v6344 = vld [vmem:[#allocation2 + $0x3c] sm:$0xff]
    %v6345 = vld [vmem:[#allocation2 + $0x44] sm:$0xff]
    %v6346 = vld [vmem:[#allocation2 + $0x4c] sm:$0xff]
    %v6347 = vld [vmem:[#allocation2 + $0x54] sm:$0xff]
    %v6348 = vld [vmem:[#allocation2 + $0x5c] sm:$0xff]
    %v6349 = vld [vmem:[#allocation2 + $0x64] sm:$0xff]
    %v6350 = vld [vmem:[#allocation2 + $0x6c] sm:$0xff]
    %v6351 = vld [vmem:[#allocation2 + $0x74] sm:$0xff]
    %v6352 = vld [vmem:[#allocation2 + $0x7c] sm:$0xff]
    %v6353 = vld [vmem:[#allocation2 + $0x84] sm:$0xff]
    %v6354 = vld [vmem:[#allocation2 + $0x8c] sm:$0xff]
    %v6355 = vld [vmem:[#allocation2 + $0x94] sm:$0xff]
    %v6356 = vld [vmem:[#allocation2 + $0x9c] sm:$0xff]
    %v6357 = vld [vmem:[#allocation2 + $0xa4] sm:$0xff]
    %v6358 = vld [vmem:[#allocation2 + $0xac] sm:$0xff]
    %v6359 = vld [vmem:[#allocation2 + $0xb4] sm:$0xff]
    %v6360 = vld [vmem:[#allocation2 + $0xbc] sm:$0xff]
    %v6361 = vld [vmem:[#allocation2 + $0xc4] sm:$0xff]
    %v6362 = vld [vmem:[#allocation2 + $0xcc] sm:$0xff]
    %v6363 = vld [vmem:[#allocation2 + $0xd4] sm:$0xff]
    %v6364 = vld [vmem:[#allocation2 + $0xdc] sm:$0xff]
    %v6365 = vld [vmem:[#allocation2 + $0xe4] sm:$0xff]
    %v6366 = vld [vmem:[#allocation2 + $0xec] sm:$0xff]
    %v6367 = vld [vmem:[#allocation2 + $0xf4] sm:$0xff]
    %v6368 = vld [vmem:[#allocation2 + $0xfc] sm:$0xff]
    %v6369 = vld [vmem:[#allocation2 + $0x104] sm:$0xff]
    %v6370 = vld [vmem:[#allocation2 + $0x10c] sm:$0xff]
    %v6371 = vld [vmem:[#allocation2 + $0x114] sm:$0xff]
    %v6372 = vld [vmem:[#allocation2 + $0x11c] sm:$0xff]
    %v6373 = vld [vmem:[#allocation2 + $0x124] sm:$0xff]
    %v6374 = vld [vmem:[#allocation2 + $0x12c] sm:$0xff]
    %v6375 = vld [vmem:[#allocation2 + $0x134] sm:$0xff]
    %v6376 = vld [vmem:[#allocation2 + $0x13c] sm:$0xff]
    %v6377 = vld [vmem:[#allocation2 + $0x144] sm:$0xff]
    %v6378 = vld [vmem:[#allocation2 + $0x14c] sm:$0xff]
    %v6379 = vld [vmem:[#allocation2 + $0x154] sm:$0xff]
    %v6380 = vld [vmem:[#allocation2 + $0x15c] sm:$0xff]
    %v6381 = vld [vmem:[#allocation2 + $0x164] sm:$0xff]
    %v6382 = vld [vmem:[#allocation2 + $0x16c] sm:$0xff]
    %v6383 = vld [vmem:[#allocation2 + $0x174] sm:$0xff]
    %v6384 = vld [vmem:[#allocation2 + $0x17c] sm:$0xff]
    %v6385 = vld [vmem:[#allocation2 + $0x184] sm:$0xff]
    %v6386 = vld [vmem:[#allocation2 + $0x18c] sm:$0xff]
    %v6387 = vld [vmem:[#allocation2 + $0x194] sm:$0xff]
    %v6388 = vld [vmem:[#allocation2 + $0x19c] sm:$0xff]
    %v6389 = vld [vmem:[#allocation2 + $0x1a4] sm:$0xff]
    %v6390 = vld [vmem:[#allocation2 + $0x1ac] sm:$0xff]
    %v6391 = vld [vmem:[#allocation2 + $0x1b4] sm:$0xff]
    %v6392 = vld [vmem:[#allocation2 + $0x1bc] sm:$0xff]
    %v6393 = vld [vmem:[#allocation2 + $0x1c4] sm:$0xff]
    %v6394 = vld [vmem:[#allocation2 + $0x1cc] sm:$0xff]
    %v6395 = vld [vmem:[#allocation2 + $0x1d4] sm:$0xff]
    %v6396 = vld [vmem:[#allocation2 + $0x1dc] sm:$0xff]
    %v6397 = vld [vmem:[#allocation2 + $0x1e4] sm:$0xff]
    %v6398 = vld [vmem:[#allocation2 + $0x1ec] sm:$0xff]
    %v6399 = vld [vmem:[#allocation2 + $0x1f4] sm:$0xff]
    %v6400 = vld [vmem:[#allocation2 + $0x1fc] sm:$0xff]
    %v6401 = vld [vmem:[#allocation2 + $0x204] sm:$0xff]
    %v6402 = vld [vmem:[#allocation2 + $0x20c] sm:$0xff]
    %v6403 = vld [vmem:[#allocation2 + $0x214] sm:$0xff]
    %v6404 = vld [vmem:[#allocation2 + $0x21c] sm:$0xff]
    %v6405 = vld [vmem:[#allocation2 + $0x224] sm:$0xff]
    %v6406 = vld [vmem:[#allocation2 + $0x22c] sm:$0xff]
    %v6407 = vld [vmem:[#allocation2 + $0x234] sm:$0xff]
    %v6408 = vld [vmem:[#allocation2 + $0x23c] sm:$0xff]
    %v6409 = vld [vmem:[#allocation2 + $0x244] sm:$0xff]
    %v6410 = vld [vmem:[#allocation2 + $0x24c] sm:$0xff]
    %v6411 = vld [vmem:[#allocation2 + $0x254] sm:$0xff]
    %v6412 = vld [vmem:[#allocation2 + $0x25c] sm:$0xff]
    %v6413 = vld [vmem:[#allocation2 + $0x264] sm:$0xff]
    %v6414 = vld [vmem:[#allocation2 + $0x26c] sm:$0xff]
    %v6415 = vld [vmem:[#allocation2 + $0x274] sm:$0xff]
    %v6416 = vld [vmem:[#allocation2 + $0x27c] sm:$0xff]
    %v6417 = vld [vmem:[#allocation2 + $0x284] sm:$0xff]
    %v6418 = vld [vmem:[#allocation2 + $0x28c] sm:$0xff]
    %v6419 = vld [vmem:[#allocation2 + $0x294] sm:$0xff]
    %v6420 = vld [vmem:[#allocation2 + $0x29c] sm:$0xff]
    %v6421 = vld [vmem:[#allocation2 + $0x2a4] sm:$0xff]
    %v6422 = vld [vmem:[#allocation2 + $0x2ac] sm:$0xff]
    %v6423 = vld [vmem:[#allocation2 + $0x2b4] sm:$0xff]
    %v6424 = vld [vmem:[#allocation2 + $0x2bc] sm:$0xff]
    %v6425 = vld [vmem:[#allocation2 + $0x2c4] sm:$0xff]
    %v6426 = vld [vmem:[#allocation2 + $0x2cc] sm:$0xff]
    %v6427 = vld [vmem:[#allocation2 + $0x2d4] sm:$0xff]
    %v6428 = vld [vmem:[#allocation2 + $0x2dc] sm:$0xff]
    %v6429 = vld [vmem:[#allocation2 + $0x2e4] sm:$0xff]
    %v6430 = vld [vmem:[#allocation2 + $0x2ec] sm:$0xff]
    %v6431 = vld [vmem:[#allocation2 + $0x2f4] sm:$0xff]
    %v6432 = vld [vmem:[#allocation2 + $0x2fc] sm:$0xff]
    %v6433 = vld [vmem:[#allocation2 + $0x304] sm:$0xff]
    %v6434 = vld [vmem:[#allocation2 + $0x30c] sm:$0xff]
    %v6435 = vld [vmem:[#allocation2 + $0x314] sm:$0xff]
    %v6436 = vld [vmem:[#allocation2 + $0x31c] sm:$0xff]
    %v6437 = vld [vmem:[#allocation2 + $0x324] sm:$0xff]
    %v6438 = vld [vmem:[#allocation2 + $0x32c] sm:$0xff]
    %v6439 = vld [vmem:[#allocation2 + $0x334] sm:$0xff]
    %v6440 = vld [vmem:[#allocation2 + $0x33c] sm:$0xff]
    %v6441 = vld [vmem:[#allocation2 + $0x344] sm:$0xff]
    %v6442 = vld [vmem:[#allocation2 + $0x34c] sm:$0xff]
    %v6443 = vld [vmem:[#allocation2 + $0x354] sm:$0xff]
    %v6444 = vld [vmem:[#allocation2 + $0x35c] sm:$0xff]
    %v6445 = vld [vmem:[#allocation2 + $0x364] sm:$0xff]
    %v6446 = vld [vmem:[#allocation2 + $0x36c] sm:$0xff]
    %v6447 = vld [vmem:[#allocation2 + $0x374] sm:$0xff]
    %v6448 = vld [vmem:[#allocation2 + $0x37c] sm:$0xff]
    %v6449 = vld [vmem:[#allocation2 + $0x384] sm:$0xff]
    %v6450 = vld [vmem:[#allocation2 + $0x38c] sm:$0xff]
    %v6451 = vld [vmem:[#allocation2 + $0x394] sm:$0xff]
    %v6452 = vld [vmem:[#allocation2 + $0x39c] sm:$0xff]
    %v6453 = vld [vmem:[#allocation2 + $0x3a4] sm:$0xff]
    %v6454 = vld [vmem:[#allocation2 + $0x3ac] sm:$0xff]
    %v6455 = vld [vmem:[#allocation2 + $0x3b4] sm:$0xff]
    %v6456 = vld [vmem:[#allocation2 + $0x3bc] sm:$0xff]
    %v6457 = vld [vmem:[#allocation2 + $0x3c4] sm:$0xff]
    %v6458 = vld [vmem:[#allocation2 + $0x3cc] sm:$0xff]
    %v6459 = vld [vmem:[#allocation2 + $0x3d4] sm:$0xff]
    %v6460 = vld [vmem:[#allocation2 + $0x3dc] sm:$0xff]
    %v6461 = vld [vmem:[#allocation2 + $0x3e4] sm:$0xff]
    %v6462 = vld [vmem:[#allocation2 + $0x3ec] sm:$0xff]
    %v6463 = vld [vmem:[#allocation2 + $0x3f4] sm:$0xff]
    %v6464 = vld [vmem:[#allocation2 + $0x3fc] sm:$0xff]
    %v6465 = vld [vmem:[#allocation2 + $0x404] sm:$0xff]
    %v6466 = vld [vmem:[#allocation2 + $0x40c] sm:$0xff]
    %v6467 = vld [vmem:[#allocation2 + $0x414] sm:$0xff]
    %v6468 = vld [vmem:[#allocation2 + $0x41c] sm:$0xff]
    %s6469 = scalar_lea.vmem %s2, 24
    %v6470 = vld [vmem:[%s6469] sm:$0xf]
    %v6472 = vsel %vm176, %v6341, 0
    %v6475 = vsel %vm176, %v6342, 0
    %v6478 = vsel %vm176, %v6343, 0
    %v6481 = vsel %vm176, %v6344, 0
    %v6484 = vsel %vm176, %v6345, 0
    %v6487 = vsel %vm176, %v6346, 0
    %v6490 = vsel %vm176, %v6347, 0
    %v6493 = vsel %vm176, %v6348, 0
    %v6496 = vsel %vm176, %v6349, 0
    %v6499 = vsel %vm176, %v6350, 0
    %v6502 = vsel %vm176, %v6351, 0
    %v6505 = vsel %vm176, %v6352, 0
    %v6508 = vsel %vm176, %v6353, 0
    %v6511 = vsel %vm176, %v6354, 0
    %v6514 = vsel %vm176, %v6355, 0
    %v6517 = vsel %vm176, %v6356, 0
    %v6520 = vsel %vm176, %v6357, 0
    %v6523 = vsel %vm176, %v6358, 0
    %v6526 = vsel %vm176, %v6359, 0
    %v6529 = vsel %vm176, %v6360, 0
    %v6532 = vsel %vm176, %v6361, 0
    %v6535 = vsel %vm176, %v6362, 0
    %v6538 = vsel %vm176, %v6363, 0
    %v6541 = vsel %vm176, %v6364, 0
    %v6544 = vsel %vm176, %v6365, 0
    %v6547 = vsel %vm176, %v6366, 0
    %v6550 = vsel %vm176, %v6367, 0
    %v6553 = vsel %vm176, %v6368, 0
    %v6556 = vsel %vm176, %v6369, 0
    %v6559 = vsel %vm176, %v6370, 0
    %v6562 = vsel %vm176, %v6371, 0
    %v6565 = vsel %vm176, %v6372, 0
    %v6568 = vsel %vm176, %v6373, 0
    %v6571 = vsel %vm176, %v6374, 0
    %v6574 = vsel %vm176, %v6375, 0
    %v6577 = vsel %vm176, %v6376, 0
    %v6580 = vsel %vm176, %v6377, 0
    %v6583 = vsel %vm176, %v6378, 0
    %v6586 = vsel %vm176, %v6379, 0
    %v6589 = vsel %vm176, %v6380, 0
    %v6592 = vsel %vm176, %v6381, 0
    %v6595 = vsel %vm176, %v6382, 0
    %v6598 = vsel %vm176, %v6383, 0
    %v6601 = vsel %vm176, %v6384, 0
    %v6604 = vsel %vm176, %v6385, 0
    %v6607 = vsel %vm176, %v6386, 0
    %v6610 = vsel %vm176, %v6387, 0
    %v6613 = vsel %vm176, %v6388, 0
    %v6616 = vsel %vm176, %v6389, 0
    %v6619 = vsel %vm176, %v6390, 0
    %v6622 = vsel %vm176, %v6391, 0
    %v6625 = vsel %vm176, %v6392, 0
    %v6628 = vsel %vm176, %v6393, 0
    %v6631 = vsel %vm176, %v6394, 0
    %v6634 = vsel %vm176, %v6395, 0
    %v6637 = vsel %vm176, %v6396, 0
    %v6640 = vsel %vm176, %v6397, 0
    %v6643 = vsel %vm176, %v6398, 0
    %v6646 = vsel %vm176, %v6399, 0
    %v6649 = vsel %vm176, %v6400, 0
    %v6652 = vsel %vm176, %v6401, 0
    %v6655 = vsel %vm176, %v6402, 0
    %v6658 = vsel %vm176, %v6403, 0
    %v6661 = vsel %vm176, %v6404, 0
    %v6664 = vsel %vm176, %v6405, 0
    %v6667 = vsel %vm176, %v6406, 0
    %v6670 = vsel %vm176, %v6407, 0
    %v6673 = vsel %vm176, %v6408, 0
    %v6676 = vsel %vm176, %v6409, 0
    %v6679 = vsel %vm176, %v6410, 0
    %v6682 = vsel %vm176, %v6411, 0
    %v6685 = vsel %vm176, %v6412, 0
    %v6688 = vsel %vm176, %v6413, 0
    %v6691 = vsel %vm176, %v6414, 0
    %v6694 = vsel %vm176, %v6415, 0
    %v6697 = vsel %vm176, %v6416, 0
    %v6700 = vsel %vm176, %v6417, 0
    %v6703 = vsel %vm176, %v6418, 0
    %v6706 = vsel %vm176, %v6419, 0
    %v6709 = vsel %vm176, %v6420, 0
    %v6712 = vsel %vm176, %v6421, 0
    %v6715 = vsel %vm176, %v6422, 0
    %v6718 = vsel %vm176, %v6423, 0
    %v6721 = vsel %vm176, %v6424, 0
    %v6724 = vsel %vm176, %v6425, 0
    %v6727 = vsel %vm176, %v6426, 0
    %v6730 = vsel %vm176, %v6427, 0
    %v6733 = vsel %vm176, %v6428, 0
    %v6736 = vsel %vm176, %v6429, 0
    %v6739 = vsel %vm176, %v6430, 0
    %v6742 = vsel %vm176, %v6431, 0
    %v6745 = vsel %vm176, %v6432, 0
    %v6748 = vsel %vm176, %v6433, 0
    %v6751 = vsel %vm176, %v6434, 0
    %v6754 = vsel %vm176, %v6435, 0
    %v6757 = vsel %vm176, %v6436, 0
    %v6760 = vsel %vm176, %v6437, 0
    %v6763 = vsel %vm176, %v6438, 0
    %v6766 = vsel %vm176, %v6439, 0
    %v6769 = vsel %vm176, %v6440, 0
    %v6772 = vsel %vm176, %v6441, 0
    %v6775 = vsel %vm176, %v6442, 0
    %v6778 = vsel %vm176, %v6443, 0
    %v6781 = vsel %vm176, %v6444, 0
    %v6784 = vsel %vm176, %v6445, 0
    %v6787 = vsel %vm176, %v6446, 0
    %v6790 = vsel %vm176, %v6447, 0
    %v6793 = vsel %vm176, %v6448, 0
    %v6796 = vsel %vm176, %v6449, 0
    %v6799 = vsel %vm176, %v6450, 0
    %v6802 = vsel %vm176, %v6451, 0
    %v6805 = vsel %vm176, %v6452, 0
    %v6808 = vsel %vm176, %v6453, 0
    %v6811 = vsel %vm176, %v6454, 0
    %v6814 = vsel %vm176, %v6455, 0
    %v6817 = vsel %vm176, %v6456, 0
    %v6820 = vsel %vm176, %v6457, 0
    %v6823 = vsel %vm176, %v6458, 0
    %v6826 = vsel %vm176, %v6459, 0
    %v6829 = vsel %vm176, %v6460, 0
    %v6832 = vsel %vm176, %v6461, 0
    %v6835 = vsel %vm176, %v6462, 0
    %v6838 = vsel %vm176, %v6463, 0
    %v6841 = vsel %vm176, %v6464, 0
    %v6844 = vsel %vm176, %v6465, 0
    %v6847 = vsel %vm176, %v6466, 0
    %v6850 = vsel %vm176, %v6467, 0
    %v6853 = vsel %vm176, %v6468, 0
    %v6856 = vsel %vm964, %v6470, 0
    %6858 = vmatpush.msra.mxu0 0.0
    %6859 = vmatpush.msra.mxu0 0.0
    %6860 = vmatpush.msra.mxu0 0.0
    %6861 = vmatpush.msra.mxu0 0.0
    %6862 = vmatpush.msra.mxu0 0.0
    %6863 = vmatpush.msra.mxu0 0.0
    %6864 = vmatpush.msra.mxu0 0.0
    %6865 = vmatpush.msra.mxu0 0.0
    %6866 = vmatpush.msra.mxu0 0.0
    %6867 = vmatpush.msra.mxu0 0.0
    %6868 = vmatpush.msra.mxu0 0.0
    %6869 = vmatpush.msra.mxu0 0.0
    %6870 = vmatpush.msra.mxu0 0.0
    %6871 = vmatpush.msra.mxu0 0.0
    %6872 = vmatpush.msra.mxu0 0.0
    %6873 = vmatpush.msra.mxu0 %v6856
    %6874 = vmatmul.f32.gmra.mxu0 %v6472
    %v6875 = vpop.f32.mrf.mxu0
    %v6876 = vadd.f32 0.0, %v6875
    %6877 = vmatmul.f32.gmra.mxu0 %v6475
    %v6878 = vpop.f32.mrf.mxu0
    %v6879 = vadd.f32 0.0, %v6878
    %6880 = vmatmul.f32.gmra.mxu0 %v6478
    %v6881 = vpop.f32.mrf.mxu0
    %v6882 = vadd.f32 0.0, %v6881
    %6883 = vmatmul.f32.gmra.mxu0 %v6481
    %v6884 = vpop.f32.mrf.mxu0
    %v6885 = vadd.f32 0.0, %v6884
    %6886 = vmatmul.f32.gmra.mxu0 %v6484
    %v6887 = vpop.f32.mrf.mxu0
    %v6888 = vadd.f32 0.0, %v6887
    %6889 = vmatmul.f32.gmra.mxu0 %v6487
    %v6890 = vpop.f32.mrf.mxu0
    %v6891 = vadd.f32 0.0, %v6890
    %6892 = vmatmul.f32.gmra.mxu0 %v6490
    %v6893 = vpop.f32.mrf.mxu0
    %v6894 = vadd.f32 0.0, %v6893
    %6895 = vmatmul.f32.gmra.mxu0 %v6493
    %v6896 = vpop.f32.mrf.mxu0
    %v6897 = vadd.f32 0.0, %v6896
    %6898 = vmatmul.f32.gmra.mxu0 %v6496
    %v6899 = vpop.f32.mrf.mxu0
    %v6900 = vadd.f32 0.0, %v6899
    %6901 = vmatmul.f32.gmra.mxu0 %v6499
    %v6902 = vpop.f32.mrf.mxu0
    %v6903 = vadd.f32 0.0, %v6902
    %6904 = vmatmul.f32.gmra.mxu0 %v6502
    %v6905 = vpop.f32.mrf.mxu0
    %v6906 = vadd.f32 0.0, %v6905
    %6907 = vmatmul.f32.gmra.mxu0 %v6505
    %v6908 = vpop.f32.mrf.mxu0
    %v6909 = vadd.f32 0.0, %v6908
    %6910 = vmatmul.f32.gmra.mxu0 %v6508
    %v6911 = vpop.f32.mrf.mxu0
    %v6912 = vadd.f32 0.0, %v6911
    %6913 = vmatmul.f32.gmra.mxu0 %v6511
    %v6914 = vpop.f32.mrf.mxu0
    %v6915 = vadd.f32 0.0, %v6914
    %6916 = vmatmul.f32.gmra.mxu0 %v6514
    %v6917 = vpop.f32.mrf.mxu0
    %v6918 = vadd.f32 0.0, %v6917
    %6919 = vmatmul.f32.gmra.mxu0 %v6517
    %v6920 = vpop.f32.mrf.mxu0
    %v6921 = vadd.f32 0.0, %v6920
    %6922 = vmatmul.f32.gmra.mxu0 %v6520
    %v6923 = vpop.f32.mrf.mxu0
    %v6924 = vadd.f32 0.0, %v6923
    %6925 = vmatmul.f32.gmra.mxu0 %v6523
    %v6926 = vpop.f32.mrf.mxu0
    %v6927 = vadd.f32 0.0, %v6926
    %6928 = vmatmul.f32.gmra.mxu0 %v6526
    %v6929 = vpop.f32.mrf.mxu0
    %v6930 = vadd.f32 0.0, %v6929
    %6931 = vmatmul.f32.gmra.mxu0 %v6529
    %v6932 = vpop.f32.mrf.mxu0
    %v6933 = vadd.f32 0.0, %v6932
    %6934 = vmatmul.f32.gmra.mxu0 %v6532
    %v6935 = vpop.f32.mrf.mxu0
    %v6936 = vadd.f32 0.0, %v6935
    %6937 = vmatmul.f32.gmra.mxu0 %v6535
    %v6938 = vpop.f32.mrf.mxu0
    %v6939 = vadd.f32 0.0, %v6938
    %6940 = vmatmul.f32.gmra.mxu0 %v6538
    %v6941 = vpop.f32.mrf.mxu0
    %v6942 = vadd.f32 0.0, %v6941
    %6943 = vmatmul.f32.gmra.mxu0 %v6541
    %v6944 = vpop.f32.mrf.mxu0
    %v6945 = vadd.f32 0.0, %v6944
    %6946 = vmatmul.f32.gmra.mxu0 %v6544
    %v6947 = vpop.f32.mrf.mxu0
    %v6948 = vadd.f32 0.0, %v6947
    %6949 = vmatmul.f32.gmra.mxu0 %v6547
    %v6950 = vpop.f32.mrf.mxu0
    %v6951 = vadd.f32 0.0, %v6950
    %6952 = vmatmul.f32.gmra.mxu0 %v6550
    %v6953 = vpop.f32.mrf.mxu0
    %v6954 = vadd.f32 0.0, %v6953
    %6955 = vmatmul.f32.gmra.mxu0 %v6553
    %v6956 = vpop.f32.mrf.mxu0
    %v6957 = vadd.f32 0.0, %v6956
    %6958 = vmatmul.f32.gmra.mxu0 %v6556
    %v6959 = vpop.f32.mrf.mxu0
    %v6960 = vadd.f32 0.0, %v6959
    %6961 = vmatmul.f32.gmra.mxu0 %v6559
    %v6962 = vpop.f32.mrf.mxu0
    %v6963 = vadd.f32 0.0, %v6962
    %6964 = vmatmul.f32.gmra.mxu0 %v6562
    %v6965 = vpop.f32.mrf.mxu0
    %v6966 = vadd.f32 0.0, %v6965
    %6967 = vmatmul.f32.gmra.mxu0 %v6565
    %v6968 = vpop.f32.mrf.mxu0
    %v6969 = vadd.f32 0.0, %v6968
    %6970 = vmatmul.f32.gmra.mxu0 %v6568
    %v6971 = vpop.f32.mrf.mxu0
    %v6972 = vadd.f32 0.0, %v6971
    %6973 = vmatmul.f32.gmra.mxu0 %v6571
    %v6974 = vpop.f32.mrf.mxu0
    %v6975 = vadd.f32 0.0, %v6974
    %6976 = vmatmul.f32.gmra.mxu0 %v6574
    %v6977 = vpop.f32.mrf.mxu0
    %v6978 = vadd.f32 0.0, %v6977
    %6979 = vmatmul.f32.gmra.mxu0 %v6577
    %v6980 = vpop.f32.mrf.mxu0
    %v6981 = vadd.f32 0.0, %v6980
    %6982 = vmatmul.f32.gmra.mxu0 %v6580
    %v6983 = vpop.f32.mrf.mxu0
    %v6984 = vadd.f32 0.0, %v6983
    %6985 = vmatmul.f32.gmra.mxu0 %v6583
    %v6986 = vpop.f32.mrf.mxu0
    %v6987 = vadd.f32 0.0, %v6986
    %6988 = vmatmul.f32.gmra.mxu0 %v6586
    %v6989 = vpop.f32.mrf.mxu0
    %v6990 = vadd.f32 0.0, %v6989
    %6991 = vmatmul.f32.gmra.mxu0 %v6589
    %v6992 = vpop.f32.mrf.mxu0
    %v6993 = vadd.f32 0.0, %v6992
    %6994 = vmatmul.f32.gmra.mxu0 %v6592
    %v6995 = vpop.f32.mrf.mxu0
    %v6996 = vadd.f32 0.0, %v6995
    %6997 = vmatmul.f32.gmra.mxu0 %v6595
    %v6998 = vpop.f32.mrf.mxu0
    %v6999 = vadd.f32 0.0, %v6998
    %7000 = vmatmul.f32.gmra.mxu0 %v6598
    %v7001 = vpop.f32.mrf.mxu0
    %v7002 = vadd.f32 0.0, %v7001
    %7003 = vmatmul.f32.gmra.mxu0 %v6601
    %v7004 = vpop.f32.mrf.mxu0
    %v7005 = vadd.f32 0.0, %v7004
    %7006 = vmatmul.f32.gmra.mxu0 %v6604
    %v7007 = vpop.f32.mrf.mxu0
    %v7008 = vadd.f32 0.0, %v7007
    %7009 = vmatmul.f32.gmra.mxu0 %v6607
    %v7010 = vpop.f32.mrf.mxu0
    %v7011 = vadd.f32 0.0, %v7010
    %7012 = vmatmul.f32.gmra.mxu0 %v6610
    %v7013 = vpop.f32.mrf.mxu0
    %v7014 = vadd.f32 0.0, %v7013
    %7015 = vmatmul.f32.gmra.mxu0 %v6613
    %v7016 = vpop.f32.mrf.mxu0
    %v7017 = vadd.f32 0.0, %v7016
    %7018 = vmatmul.f32.gmra.mxu0 %v6616
    %v7019 = vpop.f32.mrf.mxu0
    %v7020 = vadd.f32 0.0, %v7019
    %7021 = vmatmul.f32.gmra.mxu0 %v6619
    %v7022 = vpop.f32.mrf.mxu0
    %v7023 = vadd.f32 0.0, %v7022
    %7024 = vmatmul.f32.gmra.mxu0 %v6622
    %v7025 = vpop.f32.mrf.mxu0
    %v7026 = vadd.f32 0.0, %v7025
    %7027 = vmatmul.f32.gmra.mxu0 %v6625
    %v7028 = vpop.f32.mrf.mxu0
    %v7029 = vadd.f32 0.0, %v7028
    %7030 = vmatmul.f32.gmra.mxu0 %v6628
    %v7031 = vpop.f32.mrf.mxu0
    %v7032 = vadd.f32 0.0, %v7031
    %7033 = vmatmul.f32.gmra.mxu0 %v6631
    %v7034 = vpop.f32.mrf.mxu0
    %v7035 = vadd.f32 0.0, %v7034
    %7036 = vmatmul.f32.gmra.mxu0 %v6634
    %v7037 = vpop.f32.mrf.mxu0
    %v7038 = vadd.f32 0.0, %v7037
    %7039 = vmatmul.f32.gmra.mxu0 %v6637
    %v7040 = vpop.f32.mrf.mxu0
    %v7041 = vadd.f32 0.0, %v7040
    %7042 = vmatmul.f32.gmra.mxu0 %v6640
    %v7043 = vpop.f32.mrf.mxu0
    %v7044 = vadd.f32 0.0, %v7043
    %7045 = vmatmul.f32.gmra.mxu0 %v6643
    %v7046 = vpop.f32.mrf.mxu0
    %v7047 = vadd.f32 0.0, %v7046
    %7048 = vmatmul.f32.gmra.mxu0 %v6646
    %v7049 = vpop.f32.mrf.mxu0
    %v7050 = vadd.f32 0.0, %v7049
    %7051 = vmatmul.f32.gmra.mxu0 %v6649
    %v7052 = vpop.f32.mrf.mxu0
    %v7053 = vadd.f32 0.0, %v7052
    %7054 = vmatmul.f32.gmra.mxu0 %v6652
    %v7055 = vpop.f32.mrf.mxu0
    %v7056 = vadd.f32 0.0, %v7055
    %7057 = vmatmul.f32.gmra.mxu0 %v6655
    %v7058 = vpop.f32.mrf.mxu0
    %v7059 = vadd.f32 0.0, %v7058
    %7060 = vmatmul.f32.gmra.mxu0 %v6658
    %v7061 = vpop.f32.mrf.mxu0
    %v7062 = vadd.f32 0.0, %v7061
    %7063 = vmatmul.f32.gmra.mxu0 %v6661
    %v7064 = vpop.f32.mrf.mxu0
    %v7065 = vadd.f32 0.0, %v7064
    %7066 = vmatmul.f32.gmra.mxu0 %v6664
    %v7067 = vpop.f32.mrf.mxu0
    %v7068 = vadd.f32 0.0, %v7067
    %7069 = vmatmul.f32.gmra.mxu0 %v6667
    %v7070 = vpop.f32.mrf.mxu0
    %v7071 = vadd.f32 0.0, %v7070
    %7072 = vmatmul.f32.gmra.mxu0 %v6670
    %v7073 = vpop.f32.mrf.mxu0
    %v7074 = vadd.f32 0.0, %v7073
    %7075 = vmatmul.f32.gmra.mxu0 %v6673
    %v7076 = vpop.f32.mrf.mxu0
    %v7077 = vadd.f32 0.0, %v7076
    %7078 = vmatmul.f32.gmra.mxu0 %v6676
    %v7079 = vpop.f32.mrf.mxu0
    %v7080 = vadd.f32 0.0, %v7079
    %7081 = vmatmul.f32.gmra.mxu0 %v6679
    %v7082 = vpop.f32.mrf.mxu0
    %v7083 = vadd.f32 0.0, %v7082
    %7084 = vmatmul.f32.gmra.mxu0 %v6682
    %v7085 = vpop.f32.mrf.mxu0
    %v7086 = vadd.f32 0.0, %v7085
    %7087 = vmatmul.f32.gmra.mxu0 %v6685
    %v7088 = vpop.f32.mrf.mxu0
    %v7089 = vadd.f32 0.0, %v7088
    %7090 = vmatmul.f32.gmra.mxu0 %v6688
    %v7091 = vpop.f32.mrf.mxu0
    %v7092 = vadd.f32 0.0, %v7091
    %7093 = vmatmul.f32.gmra.mxu0 %v6691
    %v7094 = vpop.f32.mrf.mxu0
    %v7095 = vadd.f32 0.0, %v7094
    %7096 = vmatmul.f32.gmra.mxu0 %v6694
    %v7097 = vpop.f32.mrf.mxu0
    %v7098 = vadd.f32 0.0, %v7097
    %7099 = vmatmul.f32.gmra.mxu0 %v6697
    %v7100 = vpop.f32.mrf.mxu0
    %v7101 = vadd.f32 0.0, %v7100
    %7102 = vmatmul.f32.gmra.mxu0 %v6700
    %v7103 = vpop.f32.mrf.mxu0
    %v7104 = vadd.f32 0.0, %v7103
    %7105 = vmatmul.f32.gmra.mxu0 %v6703
    %v7106 = vpop.f32.mrf.mxu0
    %v7107 = vadd.f32 0.0, %v7106
    %7108 = vmatmul.f32.gmra.mxu0 %v6706
    %v7109 = vpop.f32.mrf.mxu0
    %v7110 = vadd.f32 0.0, %v7109
    %7111 = vmatmul.f32.gmra.mxu0 %v6709
    %v7112 = vpop.f32.mrf.mxu0
    %v7113 = vadd.f32 0.0, %v7112
    %7114 = vmatmul.f32.gmra.mxu0 %v6712
    %v7115 = vpop.f32.mrf.mxu0
    %v7116 = vadd.f32 0.0, %v7115
    %7117 = vmatmul.f32.gmra.mxu0 %v6715
    %v7118 = vpop.f32.mrf.mxu0
    %v7119 = vadd.f32 0.0, %v7118
    %7120 = vmatmul.f32.gmra.mxu0 %v6718
    %v7121 = vpop.f32.mrf.mxu0
    %v7122 = vadd.f32 0.0, %v7121
    %7123 = vmatmul.f32.gmra.mxu0 %v6721
    %v7124 = vpop.f32.mrf.mxu0
    %v7125 = vadd.f32 0.0, %v7124
    %7126 = vmatmul.f32.gmra.mxu0 %v6724
    %v7127 = vpop.f32.mrf.mxu0
    %v7128 = vadd.f32 0.0, %v7127
    %7129 = vmatmul.f32.gmra.mxu0 %v6727
    %v7130 = vpop.f32.mrf.mxu0
    %v7131 = vadd.f32 0.0, %v7130
    %7132 = vmatmul.f32.gmra.mxu0 %v6730
    %v7133 = vpop.f32.mrf.mxu0
    %v7134 = vadd.f32 0.0, %v7133
    %7135 = vmatmul.f32.gmra.mxu0 %v6733
    %v7136 = vpop.f32.mrf.mxu0
    %v7137 = vadd.f32 0.0, %v7136
    %7138 = vmatmul.f32.gmra.mxu0 %v6736
    %v7139 = vpop.f32.mrf.mxu0
    %v7140 = vadd.f32 0.0, %v7139
    %7141 = vmatmul.f32.gmra.mxu0 %v6739
    %v7142 = vpop.f32.mrf.mxu0
    %v7143 = vadd.f32 0.0, %v7142
    %7144 = vmatmul.f32.gmra.mxu0 %v6742
    %v7145 = vpop.f32.mrf.mxu0
    %v7146 = vadd.f32 0.0, %v7145
    %7147 = vmatmul.f32.gmra.mxu0 %v6745
    %v7148 = vpop.f32.mrf.mxu0
    %v7149 = vadd.f32 0.0, %v7148
    %7150 = vmatmul.f32.gmra.mxu0 %v6748
    %v7151 = vpop.f32.mrf.mxu0
    %v7152 = vadd.f32 0.0, %v7151
    %7153 = vmatmul.f32.gmra.mxu0 %v6751
    %v7154 = vpop.f32.mrf.mxu0
    %v7155 = vadd.f32 0.0, %v7154
    %7156 = vmatmul.f32.gmra.mxu0 %v6754
    %v7157 = vpop.f32.mrf.mxu0
    %v7158 = vadd.f32 0.0, %v7157
    %7159 = vmatmul.f32.gmra.mxu0 %v6757
    %v7160 = vpop.f32.mrf.mxu0
    %v7161 = vadd.f32 0.0, %v7160
    %7162 = vmatmul.f32.gmra.mxu0 %v6760
    %v7163 = vpop.f32.mrf.mxu0
    %v7164 = vadd.f32 0.0, %v7163
    %7165 = vmatmul.f32.gmra.mxu0 %v6763
    %v7166 = vpop.f32.mrf.mxu0
    %v7167 = vadd.f32 0.0, %v7166
    %7168 = vmatmul.f32.gmra.mxu0 %v6766
    %v7169 = vpop.f32.mrf.mxu0
    %v7170 = vadd.f32 0.0, %v7169
    %7171 = vmatmul.f32.gmra.mxu0 %v6769
    %v7172 = vpop.f32.mrf.mxu0
    %v7173 = vadd.f32 0.0, %v7172
    %7174 = vmatmul.f32.gmra.mxu0 %v6772
    %v7175 = vpop.f32.mrf.mxu0
    %v7176 = vadd.f32 0.0, %v7175
    %7177 = vmatmul.f32.gmra.mxu0 %v6775
    %v7178 = vpop.f32.mrf.mxu0
    %v7179 = vadd.f32 0.0, %v7178
    %7180 = vmatmul.f32.gmra.mxu0 %v6778
    %v7181 = vpop.f32.mrf.mxu0
    %v7182 = vadd.f32 0.0, %v7181
    %7183 = vmatmul.f32.gmra.mxu0 %v6781
    %v7184 = vpop.f32.mrf.mxu0
    %v7185 = vadd.f32 0.0, %v7184
    %7186 = vmatmul.f32.gmra.mxu0 %v6784
    %v7187 = vpop.f32.mrf.mxu0
    %v7188 = vadd.f32 0.0, %v7187
    %7189 = vmatmul.f32.gmra.mxu0 %v6787
    %v7190 = vpop.f32.mrf.mxu0
    %v7191 = vadd.f32 0.0, %v7190
    %7192 = vmatmul.f32.gmra.mxu0 %v6790
    %v7193 = vpop.f32.mrf.mxu0
    %v7194 = vadd.f32 0.0, %v7193
    %7195 = vmatmul.f32.gmra.mxu0 %v6793
    %v7196 = vpop.f32.mrf.mxu0
    %v7197 = vadd.f32 0.0, %v7196
    %7198 = vmatmul.f32.gmra.mxu0 %v6796
    %v7199 = vpop.f32.mrf.mxu0
    %v7200 = vadd.f32 0.0, %v7199
    %7201 = vmatmul.f32.gmra.mxu0 %v6799
    %v7202 = vpop.f32.mrf.mxu0
    %v7203 = vadd.f32 0.0, %v7202
    %7204 = vmatmul.f32.gmra.mxu0 %v6802
    %v7205 = vpop.f32.mrf.mxu0
    %v7206 = vadd.f32 0.0, %v7205
    %7207 = vmatmul.f32.gmra.mxu0 %v6805
    %v7208 = vpop.f32.mrf.mxu0
    %v7209 = vadd.f32 0.0, %v7208
    %7210 = vmatmul.f32.gmra.mxu0 %v6808
    %v7211 = vpop.f32.mrf.mxu0
    %v7212 = vadd.f32 0.0, %v7211
    %7213 = vmatmul.f32.gmra.mxu0 %v6811
    %v7214 = vpop.f32.mrf.mxu0
    %v7215 = vadd.f32 0.0, %v7214
    %7216 = vmatmul.f32.gmra.mxu0 %v6814
    %v7217 = vpop.f32.mrf.mxu0
    %v7218 = vadd.f32 0.0, %v7217
    %7219 = vmatmul.f32.gmra.mxu0 %v6817
    %v7220 = vpop.f32.mrf.mxu0
    %v7221 = vadd.f32 0.0, %v7220
    %7222 = vmatmul.f32.gmra.mxu0 %v6820
    %v7223 = vpop.f32.mrf.mxu0
    %v7224 = vadd.f32 0.0, %v7223
    %7225 = vmatmul.f32.gmra.mxu0 %v6823
    %v7226 = vpop.f32.mrf.mxu0
    %v7227 = vadd.f32 0.0, %v7226
    %7228 = vmatmul.f32.gmra.mxu0 %v6826
    %v7229 = vpop.f32.mrf.mxu0
    %v7230 = vadd.f32 0.0, %v7229
    %7231 = vmatmul.f32.gmra.mxu0 %v6829
    %v7232 = vpop.f32.mrf.mxu0
    %v7233 = vadd.f32 0.0, %v7232
    %7234 = vmatmul.f32.gmra.mxu0 %v6832
    %v7235 = vpop.f32.mrf.mxu0
    %v7236 = vadd.f32 0.0, %v7235
    %7237 = vmatmul.f32.gmra.mxu0 %v6835
    %v7238 = vpop.f32.mrf.mxu0
    %v7239 = vadd.f32 0.0, %v7238
    %7240 = vmatmul.f32.gmra.mxu0 %v6838
    %v7241 = vpop.f32.mrf.mxu0
    %v7242 = vadd.f32 0.0, %v7241
    %7243 = vmatmul.f32.gmra.mxu0 %v6841
    %v7244 = vpop.f32.mrf.mxu0
    %v7245 = vadd.f32 0.0, %v7244
    %7246 = vmatmul.f32.gmra.mxu0 %v6844
    %v7247 = vpop.f32.mrf.mxu0
    %v7248 = vadd.f32 0.0, %v7247
    %7249 = vmatmul.f32.gmra.mxu0 %v6847
    %v7250 = vpop.f32.mrf.mxu0
    %v7251 = vadd.f32 0.0, %v7250
    %7252 = vmatmul.f32.gmra.mxu0 %v6850
    %v7253 = vpop.f32.mrf.mxu0
    %v7254 = vadd.f32 0.0, %v7253
    %7255 = vmatmul.f32.gmra.mxu0 %v6853
    %v7256 = vpop.f32.mrf.mxu0
    %v7257 = vadd.f32 0.0, %v7256
    %7258 = vdwg.mxu0
    %v7259 = vadd.f32 %v6213, %v6876
    %v7260 = vadd.f32 %v6214, %v6879
    %v7261 = vadd.f32 %v6215, %v6882
    %v7262 = vadd.f32 %v6216, %v6885
    %v7263 = vadd.f32 %v6217, %v6888
    %v7264 = vadd.f32 %v6218, %v6891
    %v7265 = vadd.f32 %v6219, %v6894
    %v7266 = vadd.f32 %v6220, %v6897
    %v7267 = vadd.f32 %v6221, %v6900
    %v7268 = vadd.f32 %v6222, %v6903
    %v7269 = vadd.f32 %v6223, %v6906
    %v7270 = vadd.f32 %v6224, %v6909
    %v7271 = vadd.f32 %v6225, %v6912
    %v7272 = vadd.f32 %v6226, %v6915
    %v7273 = vadd.f32 %v6227, %v6918
    %v7274 = vadd.f32 %v6228, %v6921
    %v7275 = vadd.f32 %v6229, %v6924
    %v7276 = vadd.f32 %v6230, %v6927
    %v7277 = vadd.f32 %v6231, %v6930
    %v7278 = vadd.f32 %v6232, %v6933
    %v7279 = vadd.f32 %v6233, %v6936
    %v7280 = vadd.f32 %v6234, %v6939
    %v7281 = vadd.f32 %v6235, %v6942
    %v7282 = vadd.f32 %v6236, %v6945
    %v7283 = vadd.f32 %v6237, %v6948
    %v7284 = vadd.f32 %v6238, %v6951
    %v7285 = vadd.f32 %v6239, %v6954
    %v7286 = vadd.f32 %v6240, %v6957
    %v7287 = vadd.f32 %v6241, %v6960
    %v7288 = vadd.f32 %v6242, %v6963
    %v7289 = vadd.f32 %v6243, %v6966
    %v7290 = vadd.f32 %v6244, %v6969
    %v7291 = vadd.f32 %v6245, %v6972
    %v7292 = vadd.f32 %v6246, %v6975
    %v7293 = vadd.f32 %v6247, %v6978
    %v7294 = vadd.f32 %v6248, %v6981
    %v7295 = vadd.f32 %v6249, %v6984
    %v7296 = vadd.f32 %v6250, %v6987
    %v7297 = vadd.f32 %v6251, %v6990
    %v7298 = vadd.f32 %v6252, %v6993
    %v7299 = vadd.f32 %v6253, %v6996
    %v7300 = vadd.f32 %v6254, %v6999
    %v7301 = vadd.f32 %v6255, %v7002
    %v7302 = vadd.f32 %v6256, %v7005
    %v7303 = vadd.f32 %v6257, %v7008
    %v7304 = vadd.f32 %v6258, %v7011
    %v7305 = vadd.f32 %v6259, %v7014
    %v7306 = vadd.f32 %v6260, %v7017
    %v7307 = vadd.f32 %v6261, %v7020
    %v7308 = vadd.f32 %v6262, %v7023
    %v7309 = vadd.f32 %v6263, %v7026
    %v7310 = vadd.f32 %v6264, %v7029
    %v7311 = vadd.f32 %v6265, %v7032
    %v7312 = vadd.f32 %v6266, %v7035
    %v7313 = vadd.f32 %v6267, %v7038
    %v7314 = vadd.f32 %v6268, %v7041
    %v7315 = vadd.f32 %v6269, %v7044
    %v7316 = vadd.f32 %v6270, %v7047
    %v7317 = vadd.f32 %v6271, %v7050
    %v7318 = vadd.f32 %v6272, %v7053
    %v7319 = vadd.f32 %v6273, %v7056
    %v7320 = vadd.f32 %v6274, %v7059
    %v7321 = vadd.f32 %v6275, %v7062
    %v7322 = vadd.f32 %v6276, %v7065
    %v7323 = vadd.f32 %v6277, %v7068
    %v7324 = vadd.f32 %v6278, %v7071
    %v7325 = vadd.f32 %v6279, %v7074
    %v7326 = vadd.f32 %v6280, %v7077
    %v7327 = vadd.f32 %v6281, %v7080
    %v7328 = vadd.f32 %v6282, %v7083
    %v7329 = vadd.f32 %v6283, %v7086
    %v7330 = vadd.f32 %v6284, %v7089
    %v7331 = vadd.f32 %v6285, %v7092
    %v7332 = vadd.f32 %v6286, %v7095
    %v7333 = vadd.f32 %v6287, %v7098
    %v7334 = vadd.f32 %v6288, %v7101
    %v7335 = vadd.f32 %v6289, %v7104
    %v7336 = vadd.f32 %v6290, %v7107
    %v7337 = vadd.f32 %v6291, %v7110
    %v7338 = vadd.f32 %v6292, %v7113
    %v7339 = vadd.f32 %v6293, %v7116
    %v7340 = vadd.f32 %v6294, %v7119
    %v7341 = vadd.f32 %v6295, %v7122
    %v7342 = vadd.f32 %v6296, %v7125
    %v7343 = vadd.f32 %v6297, %v7128
    %v7344 = vadd.f32 %v6298, %v7131
    %v7345 = vadd.f32 %v6299, %v7134
    %v7346 = vadd.f32 %v6300, %v7137
    %v7347 = vadd.f32 %v6301, %v7140
    %v7348 = vadd.f32 %v6302, %v7143
    %v7349 = vadd.f32 %v6303, %v7146
    %v7350 = vadd.f32 %v6304, %v7149
    %v7351 = vadd.f32 %v6305, %v7152
    %v7352 = vadd.f32 %v6306, %v7155
    %v7353 = vadd.f32 %v6307, %v7158
    %v7354 = vadd.f32 %v6308, %v7161
    %v7355 = vadd.f32 %v6309, %v7164
    %v7356 = vadd.f32 %v6310, %v7167
    %v7357 = vadd.f32 %v6311, %v7170
    %v7358 = vadd.f32 %v6312, %v7173
    %v7359 = vadd.f32 %v6313, %v7176
    %v7360 = vadd.f32 %v6314, %v7179
    %v7361 = vadd.f32 %v6315, %v7182
    %v7362 = vadd.f32 %v6316, %v7185
    %v7363 = vadd.f32 %v6317, %v7188
    %v7364 = vadd.f32 %v6318, %v7191
    %v7365 = vadd.f32 %v6319, %v7194
    %v7366 = vadd.f32 %v6320, %v7197
    %v7367 = vadd.f32 %v6321, %v7200
    %v7368 = vadd.f32 %v6322, %v7203
    %v7369 = vadd.f32 %v6323, %v7206
    %v7370 = vadd.f32 %v6324, %v7209
    %v7371 = vadd.f32 %v6325, %v7212
    %v7372 = vadd.f32 %v6326, %v7215
    %v7373 = vadd.f32 %v6327, %v7218
    %v7374 = vadd.f32 %v6328, %v7221
    %v7375 = vadd.f32 %v6329, %v7224
    %v7376 = vadd.f32 %v6330, %v7227
    %v7377 = vadd.f32 %v6331, %v7230
    %v7378 = vadd.f32 %v6332, %v7233
    %v7379 = vadd.f32 %v6333, %v7236
    %v7380 = vadd.f32 %v6334, %v7239
    %v7381 = vadd.f32 %v6335, %v7242
    %v7382 = vadd.f32 %v6336, %v7245
    %v7383 = vadd.f32 %v6337, %v7248
    %v7384 = vadd.f32 %v6338, %v7251
    %v7385 = vadd.f32 %v6339, %v7254
    %v7386 = vadd.f32 %v6340, %v7257
    %v7387 = vld [vmem:[#allocation2 + $0x25] sm:$0xff]
    %v7388 = vld [vmem:[#allocation2 + $0x2d] sm:$0xff]
    %v7389 = vld [vmem:[#allocation2 + $0x35] sm:$0xff]
    %v7390 = vld [vmem:[#allocation2 + $0x3d] sm:$0xff]
    %v7391 = vld [vmem:[#allocation2 + $0x45] sm:$0xff]
    %v7392 = vld [vmem:[#allocation2 + $0x4d] sm:$0xff]
    %v7393 = vld [vmem:[#allocation2 + $0x55] sm:$0xff]
    %v7394 = vld [vmem:[#allocation2 + $0x5d] sm:$0xff]
    %v7395 = vld [vmem:[#allocation2 + $0x65] sm:$0xff]
    %v7396 = vld [vmem:[#allocation2 + $0x6d] sm:$0xff]
    %v7397 = vld [vmem:[#allocation2 + $0x75] sm:$0xff]
    %v7398 = vld [vmem:[#allocation2 + $0x7d] sm:$0xff]
    %v7399 = vld [vmem:[#allocation2 + $0x85] sm:$0xff]
    %v7400 = vld [vmem:[#allocation2 + $0x8d] sm:$0xff]
    %v7401 = vld [vmem:[#allocation2 + $0x95] sm:$0xff]
    %v7402 = vld [vmem:[#allocation2 + $0x9d] sm:$0xff]
    %v7403 = vld [vmem:[#allocation2 + $0xa5] sm:$0xff]
    %v7404 = vld [vmem:[#allocation2 + $0xad] sm:$0xff]
    %v7405 = vld [vmem:[#allocation2 + $0xb5] sm:$0xff]
    %v7406 = vld [vmem:[#allocation2 + $0xbd] sm:$0xff]
    %v7407 = vld [vmem:[#allocation2 + $0xc5] sm:$0xff]
    %v7408 = vld [vmem:[#allocation2 + $0xcd] sm:$0xff]
    %v7409 = vld [vmem:[#allocation2 + $0xd5] sm:$0xff]
    %v7410 = vld [vmem:[#allocation2 + $0xdd] sm:$0xff]
    %v7411 = vld [vmem:[#allocation2 + $0xe5] sm:$0xff]
    %v7412 = vld [vmem:[#allocation2 + $0xed] sm:$0xff]
    %v7413 = vld [vmem:[#allocation2 + $0xf5] sm:$0xff]
    %v7414 = vld [vmem:[#allocation2 + $0xfd] sm:$0xff]
    %v7415 = vld [vmem:[#allocation2 + $0x105] sm:$0xff]
    %v7416 = vld [vmem:[#allocation2 + $0x10d] sm:$0xff]
    %v7417 = vld [vmem:[#allocation2 + $0x115] sm:$0xff]
    %v7418 = vld [vmem:[#allocation2 + $0x11d] sm:$0xff]
    %v7419 = vld [vmem:[#allocation2 + $0x125] sm:$0xff]
    %v7420 = vld [vmem:[#allocation2 + $0x12d] sm:$0xff]
    %v7421 = vld [vmem:[#allocation2 + $0x135] sm:$0xff]
    %v7422 = vld [vmem:[#allocation2 + $0x13d] sm:$0xff]
    %v7423 = vld [vmem:[#allocation2 + $0x145] sm:$0xff]
    %v7424 = vld [vmem:[#allocation2 + $0x14d] sm:$0xff]
    %v7425 = vld [vmem:[#allocation2 + $0x155] sm:$0xff]
    %v7426 = vld [vmem:[#allocation2 + $0x15d] sm:$0xff]
    %v7427 = vld [vmem:[#allocation2 + $0x165] sm:$0xff]
    %v7428 = vld [vmem:[#allocation2 + $0x16d] sm:$0xff]
    %v7429 = vld [vmem:[#allocation2 + $0x175] sm:$0xff]
    %v7430 = vld [vmem:[#allocation2 + $0x17d] sm:$0xff]
    %v7431 = vld [vmem:[#allocation2 + $0x185] sm:$0xff]
    %v7432 = vld [vmem:[#allocation2 + $0x18d] sm:$0xff]
    %v7433 = vld [vmem:[#allocation2 + $0x195] sm:$0xff]
    %v7434 = vld [vmem:[#allocation2 + $0x19d] sm:$0xff]
    %v7435 = vld [vmem:[#allocation2 + $0x1a5] sm:$0xff]
    %v7436 = vld [vmem:[#allocation2 + $0x1ad] sm:$0xff]
    %v7437 = vld [vmem:[#allocation2 + $0x1b5] sm:$0xff]
    %v7438 = vld [vmem:[#allocation2 + $0x1bd] sm:$0xff]
    %v7439 = vld [vmem:[#allocation2 + $0x1c5] sm:$0xff]
    %v7440 = vld [vmem:[#allocation2 + $0x1cd] sm:$0xff]
    %v7441 = vld [vmem:[#allocation2 + $0x1d5] sm:$0xff]
    %v7442 = vld [vmem:[#allocation2 + $0x1dd] sm:$0xff]
    %v7443 = vld [vmem:[#allocation2 + $0x1e5] sm:$0xff]
    %v7444 = vld [vmem:[#allocation2 + $0x1ed] sm:$0xff]
    %v7445 = vld [vmem:[#allocation2 + $0x1f5] sm:$0xff]
    %v7446 = vld [vmem:[#allocation2 + $0x1fd] sm:$0xff]
    %v7447 = vld [vmem:[#allocation2 + $0x205] sm:$0xff]
    %v7448 = vld [vmem:[#allocation2 + $0x20d] sm:$0xff]
    %v7449 = vld [vmem:[#allocation2 + $0x215] sm:$0xff]
    %v7450 = vld [vmem:[#allocation2 + $0x21d] sm:$0xff]
    %v7451 = vld [vmem:[#allocation2 + $0x225] sm:$0xff]
    %v7452 = vld [vmem:[#allocation2 + $0x22d] sm:$0xff]
    %v7453 = vld [vmem:[#allocation2 + $0x235] sm:$0xff]
    %v7454 = vld [vmem:[#allocation2 + $0x23d] sm:$0xff]
    %v7455 = vld [vmem:[#allocation2 + $0x245] sm:$0xff]
    %v7456 = vld [vmem:[#allocation2 + $0x24d] sm:$0xff]
    %v7457 = vld [vmem:[#allocation2 + $0x255] sm:$0xff]
    %v7458 = vld [vmem:[#allocation2 + $0x25d] sm:$0xff]
    %v7459 = vld [vmem:[#allocation2 + $0x265] sm:$0xff]
    %v7460 = vld [vmem:[#allocation2 + $0x26d] sm:$0xff]
    %v7461 = vld [vmem:[#allocation2 + $0x275] sm:$0xff]
    %v7462 = vld [vmem:[#allocation2 + $0x27d] sm:$0xff]
    %v7463 = vld [vmem:[#allocation2 + $0x285] sm:$0xff]
    %v7464 = vld [vmem:[#allocation2 + $0x28d] sm:$0xff]
    %v7465 = vld [vmem:[#allocation2 + $0x295] sm:$0xff]
    %v7466 = vld [vmem:[#allocation2 + $0x29d] sm:$0xff]
    %v7467 = vld [vmem:[#allocation2 + $0x2a5] sm:$0xff]
    %v7468 = vld [vmem:[#allocation2 + $0x2ad] sm:$0xff]
    %v7469 = vld [vmem:[#allocation2 + $0x2b5] sm:$0xff]
    %v7470 = vld [vmem:[#allocation2 + $0x2bd] sm:$0xff]
    %v7471 = vld [vmem:[#allocation2 + $0x2c5] sm:$0xff]
    %v7472 = vld [vmem:[#allocation2 + $0x2cd] sm:$0xff]
    %v7473 = vld [vmem:[#allocation2 + $0x2d5] sm:$0xff]
    %v7474 = vld [vmem:[#allocation2 + $0x2dd] sm:$0xff]
    %v7475 = vld [vmem:[#allocation2 + $0x2e5] sm:$0xff]
    %v7476 = vld [vmem:[#allocation2 + $0x2ed] sm:$0xff]
    %v7477 = vld [vmem:[#allocation2 + $0x2f5] sm:$0xff]
    %v7478 = vld [vmem:[#allocation2 + $0x2fd] sm:$0xff]
    %v7479 = vld [vmem:[#allocation2 + $0x305] sm:$0xff]
    %v7480 = vld [vmem:[#allocation2 + $0x30d] sm:$0xff]
    %v7481 = vld [vmem:[#allocation2 + $0x315] sm:$0xff]
    %v7482 = vld [vmem:[#allocation2 + $0x31d] sm:$0xff]
    %v7483 = vld [vmem:[#allocation2 + $0x325] sm:$0xff]
    %v7484 = vld [vmem:[#allocation2 + $0x32d] sm:$0xff]
    %v7485 = vld [vmem:[#allocation2 + $0x335] sm:$0xff]
    %v7486 = vld [vmem:[#allocation2 + $0x33d] sm:$0xff]
    %v7487 = vld [vmem:[#allocation2 + $0x345] sm:$0xff]
    %v7488 = vld [vmem:[#allocation2 + $0x34d] sm:$0xff]
    %v7489 = vld [vmem:[#allocation2 + $0x355] sm:$0xff]
    %v7490 = vld [vmem:[#allocation2 + $0x35d] sm:$0xff]
    %v7491 = vld [vmem:[#allocation2 + $0x365] sm:$0xff]
    %v7492 = vld [vmem:[#allocation2 + $0x36d] sm:$0xff]
    %v7493 = vld [vmem:[#allocation2 + $0x375] sm:$0xff]
    %v7494 = vld [vmem:[#allocation2 + $0x37d] sm:$0xff]
    %v7495 = vld [vmem:[#allocation2 + $0x385] sm:$0xff]
    %v7496 = vld [vmem:[#allocation2 + $0x38d] sm:$0xff]
    %v7497 = vld [vmem:[#allocation2 + $0x395] sm:$0xff]
    %v7498 = vld [vmem:[#allocation2 + $0x39d] sm:$0xff]
    %v7499 = vld [vmem:[#allocation2 + $0x3a5] sm:$0xff]
    %v7500 = vld [vmem:[#allocation2 + $0x3ad] sm:$0xff]
    %v7501 = vld [vmem:[#allocation2 + $0x3b5] sm:$0xff]
    %v7502 = vld [vmem:[#allocation2 + $0x3bd] sm:$0xff]
    %v7503 = vld [vmem:[#allocation2 + $0x3c5] sm:$0xff]
    %v7504 = vld [vmem:[#allocation2 + $0x3cd] sm:$0xff]
    %v7505 = vld [vmem:[#allocation2 + $0x3d5] sm:$0xff]
    %v7506 = vld [vmem:[#allocation2 + $0x3dd] sm:$0xff]
    %v7507 = vld [vmem:[#allocation2 + $0x3e5] sm:$0xff]
    %v7508 = vld [vmem:[#allocation2 + $0x3ed] sm:$0xff]
    %v7509 = vld [vmem:[#allocation2 + $0x3f5] sm:$0xff]
    %v7510 = vld [vmem:[#allocation2 + $0x3fd] sm:$0xff]
    %v7511 = vld [vmem:[#allocation2 + $0x405] sm:$0xff]
    %v7512 = vld [vmem:[#allocation2 + $0x40d] sm:$0xff]
    %v7513 = vld [vmem:[#allocation2 + $0x415] sm:$0xff]
    %v7514 = vld [vmem:[#allocation2 + $0x41d] sm:$0xff]
    %s7515 = scalar_lea.vmem %s2, 28
    %v7516 = vld [vmem:[%s7515] sm:$0xf]
    %v7518 = vsel %vm176, %v7387, 0
    %v7521 = vsel %vm176, %v7388, 0
    %v7524 = vsel %vm176, %v7389, 0
    %v7527 = vsel %vm176, %v7390, 0
    %v7530 = vsel %vm176, %v7391, 0
    %v7533 = vsel %vm176, %v7392, 0
    %v7536 = vsel %vm176, %v7393, 0
    %v7539 = vsel %vm176, %v7394, 0
    %v7542 = vsel %vm176, %v7395, 0
    %v7545 = vsel %vm176, %v7396, 0
    %v7548 = vsel %vm176, %v7397, 0
    %v7551 = vsel %vm176, %v7398, 0
    %v7554 = vsel %vm176, %v7399, 0
    %v7557 = vsel %vm176, %v7400, 0
    %v7560 = vsel %vm176, %v7401, 0
    %v7563 = vsel %vm176, %v7402, 0
    %v7566 = vsel %vm176, %v7403, 0
    %v7569 = vsel %vm176, %v7404, 0
    %v7572 = vsel %vm176, %v7405, 0
    %v7575 = vsel %vm176, %v7406, 0
    %v7578 = vsel %vm176, %v7407, 0
    %v7581 = vsel %vm176, %v7408, 0
    %v7584 = vsel %vm176, %v7409, 0
    %v7587 = vsel %vm176, %v7410, 0
    %v7590 = vsel %vm176, %v7411, 0
    %v7593 = vsel %vm176, %v7412, 0
    %v7596 = vsel %vm176, %v7413, 0
    %v7599 = vsel %vm176, %v7414, 0
    %v7602 = vsel %vm176, %v7415, 0
    %v7605 = vsel %vm176, %v7416, 0
    %v7608 = vsel %vm176, %v7417, 0
    %v7611 = vsel %vm176, %v7418, 0
    %v7614 = vsel %vm176, %v7419, 0
    %v7617 = vsel %vm176, %v7420, 0
    %v7620 = vsel %vm176, %v7421, 0
    %v7623 = vsel %vm176, %v7422, 0
    %v7626 = vsel %vm176, %v7423, 0
    %v7629 = vsel %vm176, %v7424, 0
    %v7632 = vsel %vm176, %v7425, 0
    %v7635 = vsel %vm176, %v7426, 0
    %v7638 = vsel %vm176, %v7427, 0
    %v7641 = vsel %vm176, %v7428, 0
    %v7644 = vsel %vm176, %v7429, 0
    %v7647 = vsel %vm176, %v7430, 0
    %v7650 = vsel %vm176, %v7431, 0
    %v7653 = vsel %vm176, %v7432, 0
    %v7656 = vsel %vm176, %v7433, 0
    %v7659 = vsel %vm176, %v7434, 0
    %v7662 = vsel %vm176, %v7435, 0
    %v7665 = vsel %vm176, %v7436, 0
    %v7668 = vsel %vm176, %v7437, 0
    %v7671 = vsel %vm176, %v7438, 0
    %v7674 = vsel %vm176, %v7439, 0
    %v7677 = vsel %vm176, %v7440, 0
    %v7680 = vsel %vm176, %v7441, 0
    %v7683 = vsel %vm176, %v7442, 0
    %v7686 = vsel %vm176, %v7443, 0
    %v7689 = vsel %vm176, %v7444, 0
    %v7692 = vsel %vm176, %v7445, 0
    %v7695 = vsel %vm176, %v7446, 0
    %v7698 = vsel %vm176, %v7447, 0
    %v7701 = vsel %vm176, %v7448, 0
    %v7704 = vsel %vm176, %v7449, 0
    %v7707 = vsel %vm176, %v7450, 0
    %v7710 = vsel %vm176, %v7451, 0
    %v7713 = vsel %vm176, %v7452, 0
    %v7716 = vsel %vm176, %v7453, 0
    %v7719 = vsel %vm176, %v7454, 0
    %v7722 = vsel %vm176, %v7455, 0
    %v7725 = vsel %vm176, %v7456, 0
    %v7728 = vsel %vm176, %v7457, 0
    %v7731 = vsel %vm176, %v7458, 0
    %v7734 = vsel %vm176, %v7459, 0
    %v7737 = vsel %vm176, %v7460, 0
    %v7740 = vsel %vm176, %v7461, 0
    %v7743 = vsel %vm176, %v7462, 0
    %v7746 = vsel %vm176, %v7463, 0
    %v7749 = vsel %vm176, %v7464, 0
    %v7752 = vsel %vm176, %v7465, 0
    %v7755 = vsel %vm176, %v7466, 0
    %v7758 = vsel %vm176, %v7467, 0
    %v7761 = vsel %vm176, %v7468, 0
    %v7764 = vsel %vm176, %v7469, 0
    %v7767 = vsel %vm176, %v7470, 0
    %v7770 = vsel %vm176, %v7471, 0
    %v7773 = vsel %vm176, %v7472, 0
    %v7776 = vsel %vm176, %v7473, 0
    %v7779 = vsel %vm176, %v7474, 0
    %v7782 = vsel %vm176, %v7475, 0
    %v7785 = vsel %vm176, %v7476, 0
    %v7788 = vsel %vm176, %v7477, 0
    %v7791 = vsel %vm176, %v7478, 0
    %v7794 = vsel %vm176, %v7479, 0
    %v7797 = vsel %vm176, %v7480, 0
    %v7800 = vsel %vm176, %v7481, 0
    %v7803 = vsel %vm176, %v7482, 0
    %v7806 = vsel %vm176, %v7483, 0
    %v7809 = vsel %vm176, %v7484, 0
    %v7812 = vsel %vm176, %v7485, 0
    %v7815 = vsel %vm176, %v7486, 0
    %v7818 = vsel %vm176, %v7487, 0
    %v7821 = vsel %vm176, %v7488, 0
    %v7824 = vsel %vm176, %v7489, 0
    %v7827 = vsel %vm176, %v7490, 0
    %v7830 = vsel %vm176, %v7491, 0
    %v7833 = vsel %vm176, %v7492, 0
    %v7836 = vsel %vm176, %v7493, 0
    %v7839 = vsel %vm176, %v7494, 0
    %v7842 = vsel %vm176, %v7495, 0
    %v7845 = vsel %vm176, %v7496, 0
    %v7848 = vsel %vm176, %v7497, 0
    %v7851 = vsel %vm176, %v7498, 0
    %v7854 = vsel %vm176, %v7499, 0
    %v7857 = vsel %vm176, %v7500, 0
    %v7860 = vsel %vm176, %v7501, 0
    %v7863 = vsel %vm176, %v7502, 0
    %v7866 = vsel %vm176, %v7503, 0
    %v7869 = vsel %vm176, %v7504, 0
    %v7872 = vsel %vm176, %v7505, 0
    %v7875 = vsel %vm176, %v7506, 0
    %v7878 = vsel %vm176, %v7507, 0
    %v7881 = vsel %vm176, %v7508, 0
    %v7884 = vsel %vm176, %v7509, 0
    %v7887 = vsel %vm176, %v7510, 0
    %v7890 = vsel %vm176, %v7511, 0
    %v7893 = vsel %vm176, %v7512, 0
    %v7896 = vsel %vm176, %v7513, 0
    %v7899 = vsel %vm176, %v7514, 0
    %v7902 = vsel %vm964, %v7516, 0
    %7904 = vmatpush.msra.mxu0 0.0
    %7905 = vmatpush.msra.mxu0 0.0
    %7906 = vmatpush.msra.mxu0 0.0
    %7907 = vmatpush.msra.mxu0 0.0
    %7908 = vmatpush.msra.mxu0 0.0
    %7909 = vmatpush.msra.mxu0 0.0
    %7910 = vmatpush.msra.mxu0 0.0
    %7911 = vmatpush.msra.mxu0 0.0
    %7912 = vmatpush.msra.mxu0 0.0
    %7913 = vmatpush.msra.mxu0 0.0
    %7914 = vmatpush.msra.mxu0 0.0
    %7915 = vmatpush.msra.mxu0 0.0
    %7916 = vmatpush.msra.mxu0 0.0
    %7917 = vmatpush.msra.mxu0 0.0
    %7918 = vmatpush.msra.mxu0 0.0
    %7919 = vmatpush.msra.mxu0 %v7902
    %7920 = vmatmul.f32.gmra.mxu0 %v7518
    %v7921 = vpop.f32.mrf.mxu0
    %v7922 = vadd.f32 0.0, %v7921
    %7923 = vmatmul.f32.gmra.mxu0 %v7521
    %v7924 = vpop.f32.mrf.mxu0
    %v7925 = vadd.f32 0.0, %v7924
    %7926 = vmatmul.f32.gmra.mxu0 %v7524
    %v7927 = vpop.f32.mrf.mxu0
    %v7928 = vadd.f32 0.0, %v7927
    %7929 = vmatmul.f32.gmra.mxu0 %v7527
    %v7930 = vpop.f32.mrf.mxu0
    %v7931 = vadd.f32 0.0, %v7930
    %7932 = vmatmul.f32.gmra.mxu0 %v7530
    %v7933 = vpop.f32.mrf.mxu0
    %v7934 = vadd.f32 0.0, %v7933
    %7935 = vmatmul.f32.gmra.mxu0 %v7533
    %v7936 = vpop.f32.mrf.mxu0
    %v7937 = vadd.f32 0.0, %v7936
    %7938 = vmatmul.f32.gmra.mxu0 %v7536
    %v7939 = vpop.f32.mrf.mxu0
    %v7940 = vadd.f32 0.0, %v7939
    %7941 = vmatmul.f32.gmra.mxu0 %v7539
    %v7942 = vpop.f32.mrf.mxu0
    %v7943 = vadd.f32 0.0, %v7942
    %7944 = vmatmul.f32.gmra.mxu0 %v7542
    %v7945 = vpop.f32.mrf.mxu0
    %v7946 = vadd.f32 0.0, %v7945
    %7947 = vmatmul.f32.gmra.mxu0 %v7545
    %v7948 = vpop.f32.mrf.mxu0
    %v7949 = vadd.f32 0.0, %v7948
    %7950 = vmatmul.f32.gmra.mxu0 %v7548
    %v7951 = vpop.f32.mrf.mxu0
    %v7952 = vadd.f32 0.0, %v7951
    %7953 = vmatmul.f32.gmra.mxu0 %v7551
    %v7954 = vpop.f32.mrf.mxu0
    %v7955 = vadd.f32 0.0, %v7954
    %7956 = vmatmul.f32.gmra.mxu0 %v7554
    %v7957 = vpop.f32.mrf.mxu0
    %v7958 = vadd.f32 0.0, %v7957
    %7959 = vmatmul.f32.gmra.mxu0 %v7557
    %v7960 = vpop.f32.mrf.mxu0
    %v7961 = vadd.f32 0.0, %v7960
    %7962 = vmatmul.f32.gmra.mxu0 %v7560
    %v7963 = vpop.f32.mrf.mxu0
    %v7964 = vadd.f32 0.0, %v7963
    %7965 = vmatmul.f32.gmra.mxu0 %v7563
    %v7966 = vpop.f32.mrf.mxu0
    %v7967 = vadd.f32 0.0, %v7966
    %7968 = vmatmul.f32.gmra.mxu0 %v7566
    %v7969 = vpop.f32.mrf.mxu0
    %v7970 = vadd.f32 0.0, %v7969
    %7971 = vmatmul.f32.gmra.mxu0 %v7569
    %v7972 = vpop.f32.mrf.mxu0
    %v7973 = vadd.f32 0.0, %v7972
    %7974 = vmatmul.f32.gmra.mxu0 %v7572
    %v7975 = vpop.f32.mrf.mxu0
    %v7976 = vadd.f32 0.0, %v7975
    %7977 = vmatmul.f32.gmra.mxu0 %v7575
    %v7978 = vpop.f32.mrf.mxu0
    %v7979 = vadd.f32 0.0, %v7978
    %7980 = vmatmul.f32.gmra.mxu0 %v7578
    %v7981 = vpop.f32.mrf.mxu0
    %v7982 = vadd.f32 0.0, %v7981
    %7983 = vmatmul.f32.gmra.mxu0 %v7581
    %v7984 = vpop.f32.mrf.mxu0
    %v7985 = vadd.f32 0.0, %v7984
    %7986 = vmatmul.f32.gmra.mxu0 %v7584
    %v7987 = vpop.f32.mrf.mxu0
    %v7988 = vadd.f32 0.0, %v7987
    %7989 = vmatmul.f32.gmra.mxu0 %v7587
    %v7990 = vpop.f32.mrf.mxu0
    %v7991 = vadd.f32 0.0, %v7990
    %7992 = vmatmul.f32.gmra.mxu0 %v7590
    %v7993 = vpop.f32.mrf.mxu0
    %v7994 = vadd.f32 0.0, %v7993
    %7995 = vmatmul.f32.gmra.mxu0 %v7593
    %v7996 = vpop.f32.mrf.mxu0
    %v7997 = vadd.f32 0.0, %v7996
    %7998 = vmatmul.f32.gmra.mxu0 %v7596
    %v7999 = vpop.f32.mrf.mxu0
    %v8000 = vadd.f32 0.0, %v7999
    %8001 = vmatmul.f32.gmra.mxu0 %v7599
    %v8002 = vpop.f32.mrf.mxu0
    %v8003 = vadd.f32 0.0, %v8002
    %8004 = vmatmul.f32.gmra.mxu0 %v7602
    %v8005 = vpop.f32.mrf.mxu0
    %v8006 = vadd.f32 0.0, %v8005
    %8007 = vmatmul.f32.gmra.mxu0 %v7605
    %v8008 = vpop.f32.mrf.mxu0
    %v8009 = vadd.f32 0.0, %v8008
    %8010 = vmatmul.f32.gmra.mxu0 %v7608
    %v8011 = vpop.f32.mrf.mxu0
    %v8012 = vadd.f32 0.0, %v8011
    %8013 = vmatmul.f32.gmra.mxu0 %v7611
    %v8014 = vpop.f32.mrf.mxu0
    %v8015 = vadd.f32 0.0, %v8014
    %8016 = vmatmul.f32.gmra.mxu0 %v7614
    %v8017 = vpop.f32.mrf.mxu0
    %v8018 = vadd.f32 0.0, %v8017
    %8019 = vmatmul.f32.gmra.mxu0 %v7617
    %v8020 = vpop.f32.mrf.mxu0
    %v8021 = vadd.f32 0.0, %v8020
    %8022 = vmatmul.f32.gmra.mxu0 %v7620
    %v8023 = vpop.f32.mrf.mxu0
    %v8024 = vadd.f32 0.0, %v8023
    %8025 = vmatmul.f32.gmra.mxu0 %v7623
    %v8026 = vpop.f32.mrf.mxu0
    %v8027 = vadd.f32 0.0, %v8026
    %8028 = vmatmul.f32.gmra.mxu0 %v7626
    %v8029 = vpop.f32.mrf.mxu0
    %v8030 = vadd.f32 0.0, %v8029
    %8031 = vmatmul.f32.gmra.mxu0 %v7629
    %v8032 = vpop.f32.mrf.mxu0
    %v8033 = vadd.f32 0.0, %v8032
    %8034 = vmatmul.f32.gmra.mxu0 %v7632
    %v8035 = vpop.f32.mrf.mxu0
    %v8036 = vadd.f32 0.0, %v8035
    %8037 = vmatmul.f32.gmra.mxu0 %v7635
    %v8038 = vpop.f32.mrf.mxu0
    %v8039 = vadd.f32 0.0, %v8038
    %8040 = vmatmul.f32.gmra.mxu0 %v7638
    %v8041 = vpop.f32.mrf.mxu0
    %v8042 = vadd.f32 0.0, %v8041
    %8043 = vmatmul.f32.gmra.mxu0 %v7641
    %v8044 = vpop.f32.mrf.mxu0
    %v8045 = vadd.f32 0.0, %v8044
    %8046 = vmatmul.f32.gmra.mxu0 %v7644
    %v8047 = vpop.f32.mrf.mxu0
    %v8048 = vadd.f32 0.0, %v8047
    %8049 = vmatmul.f32.gmra.mxu0 %v7647
    %v8050 = vpop.f32.mrf.mxu0
    %v8051 = vadd.f32 0.0, %v8050
    %8052 = vmatmul.f32.gmra.mxu0 %v7650
    %v8053 = vpop.f32.mrf.mxu0
    %v8054 = vadd.f32 0.0, %v8053
    %8055 = vmatmul.f32.gmra.mxu0 %v7653
    %v8056 = vpop.f32.mrf.mxu0
    %v8057 = vadd.f32 0.0, %v8056
    %8058 = vmatmul.f32.gmra.mxu0 %v7656
    %v8059 = vpop.f32.mrf.mxu0
    %v8060 = vadd.f32 0.0, %v8059
    %8061 = vmatmul.f32.gmra.mxu0 %v7659
    %v8062 = vpop.f32.mrf.mxu0
    %v8063 = vadd.f32 0.0, %v8062
    %8064 = vmatmul.f32.gmra.mxu0 %v7662
    %v8065 = vpop.f32.mrf.mxu0
    %v8066 = vadd.f32 0.0, %v8065
    %8067 = vmatmul.f32.gmra.mxu0 %v7665
    %v8068 = vpop.f32.mrf.mxu0
    %v8069 = vadd.f32 0.0, %v8068
    %8070 = vmatmul.f32.gmra.mxu0 %v7668
    %v8071 = vpop.f32.mrf.mxu0
    %v8072 = vadd.f32 0.0, %v8071
    %8073 = vmatmul.f32.gmra.mxu0 %v7671
    %v8074 = vpop.f32.mrf.mxu0
    %v8075 = vadd.f32 0.0, %v8074
    %8076 = vmatmul.f32.gmra.mxu0 %v7674
    %v8077 = vpop.f32.mrf.mxu0
    %v8078 = vadd.f32 0.0, %v8077
    %8079 = vmatmul.f32.gmra.mxu0 %v7677
    %v8080 = vpop.f32.mrf.mxu0
    %v8081 = vadd.f32 0.0, %v8080
    %8082 = vmatmul.f32.gmra.mxu0 %v7680
    %v8083 = vpop.f32.mrf.mxu0
    %v8084 = vadd.f32 0.0, %v8083
    %8085 = vmatmul.f32.gmra.mxu0 %v7683
    %v8086 = vpop.f32.mrf.mxu0
    %v8087 = vadd.f32 0.0, %v8086
    %8088 = vmatmul.f32.gmra.mxu0 %v7686
    %v8089 = vpop.f32.mrf.mxu0
    %v8090 = vadd.f32 0.0, %v8089
    %8091 = vmatmul.f32.gmra.mxu0 %v7689
    %v8092 = vpop.f32.mrf.mxu0
    %v8093 = vadd.f32 0.0, %v8092
    %8094 = vmatmul.f32.gmra.mxu0 %v7692
    %v8095 = vpop.f32.mrf.mxu0
    %v8096 = vadd.f32 0.0, %v8095
    %8097 = vmatmul.f32.gmra.mxu0 %v7695
    %v8098 = vpop.f32.mrf.mxu0
    %v8099 = vadd.f32 0.0, %v8098
    %8100 = vmatmul.f32.gmra.mxu0 %v7698
    %v8101 = vpop.f32.mrf.mxu0
    %v8102 = vadd.f32 0.0, %v8101
    %8103 = vmatmul.f32.gmra.mxu0 %v7701
    %v8104 = vpop.f32.mrf.mxu0
    %v8105 = vadd.f32 0.0, %v8104
    %8106 = vmatmul.f32.gmra.mxu0 %v7704
    %v8107 = vpop.f32.mrf.mxu0
    %v8108 = vadd.f32 0.0, %v8107
    %8109 = vmatmul.f32.gmra.mxu0 %v7707
    %v8110 = vpop.f32.mrf.mxu0
    %v8111 = vadd.f32 0.0, %v8110
    %8112 = vmatmul.f32.gmra.mxu0 %v7710
    %v8113 = vpop.f32.mrf.mxu0
    %v8114 = vadd.f32 0.0, %v8113
    %8115 = vmatmul.f32.gmra.mxu0 %v7713
    %v8116 = vpop.f32.mrf.mxu0
    %v8117 = vadd.f32 0.0, %v8116
    %8118 = vmatmul.f32.gmra.mxu0 %v7716
    %v8119 = vpop.f32.mrf.mxu0
    %v8120 = vadd.f32 0.0, %v8119
    %8121 = vmatmul.f32.gmra.mxu0 %v7719
    %v8122 = vpop.f32.mrf.mxu0
    %v8123 = vadd.f32 0.0, %v8122
    %8124 = vmatmul.f32.gmra.mxu0 %v7722
    %v8125 = vpop.f32.mrf.mxu0
    %v8126 = vadd.f32 0.0, %v8125
    %8127 = vmatmul.f32.gmra.mxu0 %v7725
    %v8128 = vpop.f32.mrf.mxu0
    %v8129 = vadd.f32 0.0, %v8128
    %8130 = vmatmul.f32.gmra.mxu0 %v7728
    %v8131 = vpop.f32.mrf.mxu0
    %v8132 = vadd.f32 0.0, %v8131
    %8133 = vmatmul.f32.gmra.mxu0 %v7731
    %v8134 = vpop.f32.mrf.mxu0
    %v8135 = vadd.f32 0.0, %v8134
    %8136 = vmatmul.f32.gmra.mxu0 %v7734
    %v8137 = vpop.f32.mrf.mxu0
    %v8138 = vadd.f32 0.0, %v8137
    %8139 = vmatmul.f32.gmra.mxu0 %v7737
    %v8140 = vpop.f32.mrf.mxu0
    %v8141 = vadd.f32 0.0, %v8140
    %8142 = vmatmul.f32.gmra.mxu0 %v7740
    %v8143 = vpop.f32.mrf.mxu0
    %v8144 = vadd.f32 0.0, %v8143
    %8145 = vmatmul.f32.gmra.mxu0 %v7743
    %v8146 = vpop.f32.mrf.mxu0
    %v8147 = vadd.f32 0.0, %v8146
    %8148 = vmatmul.f32.gmra.mxu0 %v7746
    %v8149 = vpop.f32.mrf.mxu0
    %v8150 = vadd.f32 0.0, %v8149
    %8151 = vmatmul.f32.gmra.mxu0 %v7749
    %v8152 = vpop.f32.mrf.mxu0
    %v8153 = vadd.f32 0.0, %v8152
    %8154 = vmatmul.f32.gmra.mxu0 %v7752
    %v8155 = vpop.f32.mrf.mxu0
    %v8156 = vadd.f32 0.0, %v8155
    %8157 = vmatmul.f32.gmra.mxu0 %v7755
    %v8158 = vpop.f32.mrf.mxu0
    %v8159 = vadd.f32 0.0, %v8158
    %8160 = vmatmul.f32.gmra.mxu0 %v7758
    %v8161 = vpop.f32.mrf.mxu0
    %v8162 = vadd.f32 0.0, %v8161
    %8163 = vmatmul.f32.gmra.mxu0 %v7761
    %v8164 = vpop.f32.mrf.mxu0
    %v8165 = vadd.f32 0.0, %v8164
    %8166 = vmatmul.f32.gmra.mxu0 %v7764
    %v8167 = vpop.f32.mrf.mxu0
    %v8168 = vadd.f32 0.0, %v8167
    %8169 = vmatmul.f32.gmra.mxu0 %v7767
    %v8170 = vpop.f32.mrf.mxu0
    %v8171 = vadd.f32 0.0, %v8170
    %8172 = vmatmul.f32.gmra.mxu0 %v7770
    %v8173 = vpop.f32.mrf.mxu0
    %v8174 = vadd.f32 0.0, %v8173
    %8175 = vmatmul.f32.gmra.mxu0 %v7773
    %v8176 = vpop.f32.mrf.mxu0
    %v8177 = vadd.f32 0.0, %v8176
    %8178 = vmatmul.f32.gmra.mxu0 %v7776
    %v8179 = vpop.f32.mrf.mxu0
    %v8180 = vadd.f32 0.0, %v8179
    %8181 = vmatmul.f32.gmra.mxu0 %v7779
    %v8182 = vpop.f32.mrf.mxu0
    %v8183 = vadd.f32 0.0, %v8182
    %8184 = vmatmul.f32.gmra.mxu0 %v7782
    %v8185 = vpop.f32.mrf.mxu0
    %v8186 = vadd.f32 0.0, %v8185
    %8187 = vmatmul.f32.gmra.mxu0 %v7785
    %v8188 = vpop.f32.mrf.mxu0
    %v8189 = vadd.f32 0.0, %v8188
    %8190 = vmatmul.f32.gmra.mxu0 %v7788
    %v8191 = vpop.f32.mrf.mxu0
    %v8192 = vadd.f32 0.0, %v8191
    %8193 = vmatmul.f32.gmra.mxu0 %v7791
    %v8194 = vpop.f32.mrf.mxu0
    %v8195 = vadd.f32 0.0, %v8194
    %8196 = vmatmul.f32.gmra.mxu0 %v7794
    %v8197 = vpop.f32.mrf.mxu0
    %v8198 = vadd.f32 0.0, %v8197
    %8199 = vmatmul.f32.gmra.mxu0 %v7797
    %v8200 = vpop.f32.mrf.mxu0
    %v8201 = vadd.f32 0.0, %v8200
    %8202 = vmatmul.f32.gmra.mxu0 %v7800
    %v8203 = vpop.f32.mrf.mxu0
    %v8204 = vadd.f32 0.0, %v8203
    %8205 = vmatmul.f32.gmra.mxu0 %v7803
    %v8206 = vpop.f32.mrf.mxu0
    %v8207 = vadd.f32 0.0, %v8206
    %8208 = vmatmul.f32.gmra.mxu0 %v7806
    %v8209 = vpop.f32.mrf.mxu0
    %v8210 = vadd.f32 0.0, %v8209
    %8211 = vmatmul.f32.gmra.mxu0 %v7809
    %v8212 = vpop.f32.mrf.mxu0
    %v8213 = vadd.f32 0.0, %v8212
    %8214 = vmatmul.f32.gmra.mxu0 %v7812
    %v8215 = vpop.f32.mrf.mxu0
    %v8216 = vadd.f32 0.0, %v8215
    %8217 = vmatmul.f32.gmra.mxu0 %v7815
    %v8218 = vpop.f32.mrf.mxu0
    %v8219 = vadd.f32 0.0, %v8218
    %8220 = vmatmul.f32.gmra.mxu0 %v7818
    %v8221 = vpop.f32.mrf.mxu0
    %v8222 = vadd.f32 0.0, %v8221
    %8223 = vmatmul.f32.gmra.mxu0 %v7821
    %v8224 = vpop.f32.mrf.mxu0
    %v8225 = vadd.f32 0.0, %v8224
    %8226 = vmatmul.f32.gmra.mxu0 %v7824
    %v8227 = vpop.f32.mrf.mxu0
    %v8228 = vadd.f32 0.0, %v8227
    %8229 = vmatmul.f32.gmra.mxu0 %v7827
    %v8230 = vpop.f32.mrf.mxu0
    %v8231 = vadd.f32 0.0, %v8230
    %8232 = vmatmul.f32.gmra.mxu0 %v7830
    %v8233 = vpop.f32.mrf.mxu0
    %v8234 = vadd.f32 0.0, %v8233
    %8235 = vmatmul.f32.gmra.mxu0 %v7833
    %v8236 = vpop.f32.mrf.mxu0
    %v8237 = vadd.f32 0.0, %v8236
    %8238 = vmatmul.f32.gmra.mxu0 %v7836
    %v8239 = vpop.f32.mrf.mxu0
    %v8240 = vadd.f32 0.0, %v8239
    %8241 = vmatmul.f32.gmra.mxu0 %v7839
    %v8242 = vpop.f32.mrf.mxu0
    %v8243 = vadd.f32 0.0, %v8242
    %8244 = vmatmul.f32.gmra.mxu0 %v7842
    %v8245 = vpop.f32.mrf.mxu0
    %v8246 = vadd.f32 0.0, %v8245
    %8247 = vmatmul.f32.gmra.mxu0 %v7845
    %v8248 = vpop.f32.mrf.mxu0
    %v8249 = vadd.f32 0.0, %v8248
    %8250 = vmatmul.f32.gmra.mxu0 %v7848
    %v8251 = vpop.f32.mrf.mxu0
    %v8252 = vadd.f32 0.0, %v8251
    %8253 = vmatmul.f32.gmra.mxu0 %v7851
    %v8254 = vpop.f32.mrf.mxu0
    %v8255 = vadd.f32 0.0, %v8254
    %8256 = vmatmul.f32.gmra.mxu0 %v7854
    %v8257 = vpop.f32.mrf.mxu0
    %v8258 = vadd.f32 0.0, %v8257
    %8259 = vmatmul.f32.gmra.mxu0 %v7857
    %v8260 = vpop.f32.mrf.mxu0
    %v8261 = vadd.f32 0.0, %v8260
    %8262 = vmatmul.f32.gmra.mxu0 %v7860
    %v8263 = vpop.f32.mrf.mxu0
    %v8264 = vadd.f32 0.0, %v8263
    %8265 = vmatmul.f32.gmra.mxu0 %v7863
    %v8266 = vpop.f32.mrf.mxu0
    %v8267 = vadd.f32 0.0, %v8266
    %8268 = vmatmul.f32.gmra.mxu0 %v7866
    %v8269 = vpop.f32.mrf.mxu0
    %v8270 = vadd.f32 0.0, %v8269
    %8271 = vmatmul.f32.gmra.mxu0 %v7869
    %v8272 = vpop.f32.mrf.mxu0
    %v8273 = vadd.f32 0.0, %v8272
    %8274 = vmatmul.f32.gmra.mxu0 %v7872
    %v8275 = vpop.f32.mrf.mxu0
    %v8276 = vadd.f32 0.0, %v8275
    %8277 = vmatmul.f32.gmra.mxu0 %v7875
    %v8278 = vpop.f32.mrf.mxu0
    %v8279 = vadd.f32 0.0, %v8278
    %8280 = vmatmul.f32.gmra.mxu0 %v7878
    %v8281 = vpop.f32.mrf.mxu0
    %v8282 = vadd.f32 0.0, %v8281
    %8283 = vmatmul.f32.gmra.mxu0 %v7881
    %v8284 = vpop.f32.mrf.mxu0
    %v8285 = vadd.f32 0.0, %v8284
    %8286 = vmatmul.f32.gmra.mxu0 %v7884
    %v8287 = vpop.f32.mrf.mxu0
    %v8288 = vadd.f32 0.0, %v8287
    %8289 = vmatmul.f32.gmra.mxu0 %v7887
    %v8290 = vpop.f32.mrf.mxu0
    %v8291 = vadd.f32 0.0, %v8290
    %8292 = vmatmul.f32.gmra.mxu0 %v7890
    %v8293 = vpop.f32.mrf.mxu0
    %v8294 = vadd.f32 0.0, %v8293
    %8295 = vmatmul.f32.gmra.mxu0 %v7893
    %v8296 = vpop.f32.mrf.mxu0
    %v8297 = vadd.f32 0.0, %v8296
    %8298 = vmatmul.f32.gmra.mxu0 %v7896
    %v8299 = vpop.f32.mrf.mxu0
    %v8300 = vadd.f32 0.0, %v8299
    %8301 = vmatmul.f32.gmra.mxu0 %v7899
    %v8302 = vpop.f32.mrf.mxu0
    %v8303 = vadd.f32 0.0, %v8302
    %8304 = vdwg.mxu0
    %v8305 = vadd.f32 %v7259, %v7922
    %v8306 = vadd.f32 %v7260, %v7925
    %v8307 = vadd.f32 %v7261, %v7928
    %v8308 = vadd.f32 %v7262, %v7931
    %v8309 = vadd.f32 %v7263, %v7934
    %v8310 = vadd.f32 %v7264, %v7937
    %v8311 = vadd.f32 %v7265, %v7940
    %v8312 = vadd.f32 %v7266, %v7943
    %v8313 = vadd.f32 %v7267, %v7946
    %v8314 = vadd.f32 %v7268, %v7949
    %v8315 = vadd.f32 %v7269, %v7952
    %v8316 = vadd.f32 %v7270, %v7955
    %v8317 = vadd.f32 %v7271, %v7958
    %v8318 = vadd.f32 %v7272, %v7961
    %v8319 = vadd.f32 %v7273, %v7964
    %v8320 = vadd.f32 %v7274, %v7967
    %v8321 = vadd.f32 %v7275, %v7970
    %v8322 = vadd.f32 %v7276, %v7973
    %v8323 = vadd.f32 %v7277, %v7976
    %v8324 = vadd.f32 %v7278, %v7979
    %v8325 = vadd.f32 %v7279, %v7982
    %v8326 = vadd.f32 %v7280, %v7985
    %v8327 = vadd.f32 %v7281, %v7988
    %v8328 = vadd.f32 %v7282, %v7991
    %v8329 = vadd.f32 %v7283, %v7994
    %v8330 = vadd.f32 %v7284, %v7997
    %v8331 = vadd.f32 %v7285, %v8000
    %v8332 = vadd.f32 %v7286, %v8003
    %v8333 = vadd.f32 %v7287, %v8006
    %v8334 = vadd.f32 %v7288, %v8009
    %v8335 = vadd.f32 %v7289, %v8012
    %v8336 = vadd.f32 %v7290, %v8015
    %v8337 = vadd.f32 %v7291, %v8018
    %v8338 = vadd.f32 %v7292, %v8021
    %v8339 = vadd.f32 %v7293, %v8024
    %v8340 = vadd.f32 %v7294, %v8027
    %v8341 = vadd.f32 %v7295, %v8030
    %v8342 = vadd.f32 %v7296, %v8033
    %v8343 = vadd.f32 %v7297, %v8036
    %v8344 = vadd.f32 %v7298, %v8039
    %v8345 = vadd.f32 %v7299, %v8042
    %v8346 = vadd.f32 %v7300, %v8045
    %v8347 = vadd.f32 %v7301, %v8048
    %v8348 = vadd.f32 %v7302, %v8051
    %v8349 = vadd.f32 %v7303, %v8054
    %v8350 = vadd.f32 %v7304, %v8057
    %v8351 = vadd.f32 %v7305, %v8060
    %v8352 = vadd.f32 %v7306, %v8063
    %v8353 = vadd.f32 %v7307, %v8066
    %v8354 = vadd.f32 %v7308, %v8069
    %v8355 = vadd.f32 %v7309, %v8072
    %v8356 = vadd.f32 %v7310, %v8075
    %v8357 = vadd.f32 %v7311, %v8078
    %v8358 = vadd.f32 %v7312, %v8081
    %v8359 = vadd.f32 %v7313, %v8084
    %v8360 = vadd.f32 %v7314, %v8087
    %v8361 = vadd.f32 %v7315, %v8090
    %v8362 = vadd.f32 %v7316, %v8093
    %v8363 = vadd.f32 %v7317, %v8096
    %v8364 = vadd.f32 %v7318, %v8099
    %v8365 = vadd.f32 %v7319, %v8102
    %v8366 = vadd.f32 %v7320, %v8105
    %v8367 = vadd.f32 %v7321, %v8108
    %v8368 = vadd.f32 %v7322, %v8111
    %v8369 = vadd.f32 %v7323, %v8114
    %v8370 = vadd.f32 %v7324, %v8117
    %v8371 = vadd.f32 %v7325, %v8120
    %v8372 = vadd.f32 %v7326, %v8123
    %v8373 = vadd.f32 %v7327, %v8126
    %v8374 = vadd.f32 %v7328, %v8129
    %v8375 = vadd.f32 %v7329, %v8132
    %v8376 = vadd.f32 %v7330, %v8135
    %v8377 = vadd.f32 %v7331, %v8138
    %v8378 = vadd.f32 %v7332, %v8141
    %v8379 = vadd.f32 %v7333, %v8144
    %v8380 = vadd.f32 %v7334, %v8147
    %v8381 = vadd.f32 %v7335, %v8150
    %v8382 = vadd.f32 %v7336, %v8153
    %v8383 = vadd.f32 %v7337, %v8156
    %v8384 = vadd.f32 %v7338, %v8159
    %v8385 = vadd.f32 %v7339, %v8162
    %v8386 = vadd.f32 %v7340, %v8165
    %v8387 = vadd.f32 %v7341, %v8168
    %v8388 = vadd.f32 %v7342, %v8171
    %v8389 = vadd.f32 %v7343, %v8174
    %v8390 = vadd.f32 %v7344, %v8177
    %v8391 = vadd.f32 %v7345, %v8180
    %v8392 = vadd.f32 %v7346, %v8183
    %v8393 = vadd.f32 %v7347, %v8186
    %v8394 = vadd.f32 %v7348, %v8189
    %v8395 = vadd.f32 %v7349, %v8192
    %v8396 = vadd.f32 %v7350, %v8195
    %v8397 = vadd.f32 %v7351, %v8198
    %v8398 = vadd.f32 %v7352, %v8201
    %v8399 = vadd.f32 %v7353, %v8204
    %v8400 = vadd.f32 %v7354, %v8207
    %v8401 = vadd.f32 %v7355, %v8210
    %v8402 = vadd.f32 %v7356, %v8213
    %v8403 = vadd.f32 %v7357, %v8216
    %v8404 = vadd.f32 %v7358, %v8219
    %v8405 = vadd.f32 %v7359, %v8222
    %v8406 = vadd.f32 %v7360, %v8225
    %v8407 = vadd.f32 %v7361, %v8228
    %v8408 = vadd.f32 %v7362, %v8231
    %v8409 = vadd.f32 %v7363, %v8234
    %v8410 = vadd.f32 %v7364, %v8237
    %v8411 = vadd.f32 %v7365, %v8240
    %v8412 = vadd.f32 %v7366, %v8243
    %v8413 = vadd.f32 %v7367, %v8246
    %v8414 = vadd.f32 %v7368, %v8249
    %v8415 = vadd.f32 %v7369, %v8252
    %v8416 = vadd.f32 %v7370, %v8255
    %v8417 = vadd.f32 %v7371, %v8258
    %v8418 = vadd.f32 %v7372, %v8261
    %v8419 = vadd.f32 %v7373, %v8264
    %v8420 = vadd.f32 %v7374, %v8267
    %v8421 = vadd.f32 %v7375, %v8270
    %v8422 = vadd.f32 %v7376, %v8273
    %v8423 = vadd.f32 %v7377, %v8276
    %v8424 = vadd.f32 %v7378, %v8279
    %v8425 = vadd.f32 %v7379, %v8282
    %v8426 = vadd.f32 %v7380, %v8285
    %v8427 = vadd.f32 %v7381, %v8288
    %v8428 = vadd.f32 %v7382, %v8291
    %v8429 = vadd.f32 %v7383, %v8294
    %v8430 = vadd.f32 %v7384, %v8297
    %v8431 = vadd.f32 %v7385, %v8300
    %v8432 = vadd.f32 %v7386, %v8303
    %v8433 = vld [vmem:[#allocation2 + $0x26] sm:$0xff]
    %v8434 = vld [vmem:[#allocation2 + $0x2e] sm:$0xff]
    %v8435 = vld [vmem:[#allocation2 + $0x36] sm:$0xff]
    %v8436 = vld [vmem:[#allocation2 + $0x3e] sm:$0xff]
    %v8437 = vld [vmem:[#allocation2 + $0x46] sm:$0xff]
    %v8438 = vld [vmem:[#allocation2 + $0x4e] sm:$0xff]
    %v8439 = vld [vmem:[#allocation2 + $0x56] sm:$0xff]
    %v8440 = vld [vmem:[#allocation2 + $0x5e] sm:$0xff]
    %v8441 = vld [vmem:[#allocation2 + $0x66] sm:$0xff]
    %v8442 = vld [vmem:[#allocation2 + $0x6e] sm:$0xff]
    %v8443 = vld [vmem:[#allocation2 + $0x76] sm:$0xff]
    %v8444 = vld [vmem:[#allocation2 + $0x7e] sm:$0xff]
    %v8445 = vld [vmem:[#allocation2 + $0x86] sm:$0xff]
    %v8446 = vld [vmem:[#allocation2 + $0x8e] sm:$0xff]
    %v8447 = vld [vmem:[#allocation2 + $0x96] sm:$0xff]
    %v8448 = vld [vmem:[#allocation2 + $0x9e] sm:$0xff]
    %v8449 = vld [vmem:[#allocation2 + $0xa6] sm:$0xff]
    %v8450 = vld [vmem:[#allocation2 + $0xae] sm:$0xff]
    %v8451 = vld [vmem:[#allocation2 + $0xb6] sm:$0xff]
    %v8452 = vld [vmem:[#allocation2 + $0xbe] sm:$0xff]
    %v8453 = vld [vmem:[#allocation2 + $0xc6] sm:$0xff]
    %v8454 = vld [vmem:[#allocation2 + $0xce] sm:$0xff]
    %v8455 = vld [vmem:[#allocation2 + $0xd6] sm:$0xff]
    %v8456 = vld [vmem:[#allocation2 + $0xde] sm:$0xff]
    %v8457 = vld [vmem:[#allocation2 + $0xe6] sm:$0xff]
    %v8458 = vld [vmem:[#allocation2 + $0xee] sm:$0xff]
    %v8459 = vld [vmem:[#allocation2 + $0xf6] sm:$0xff]
    %v8460 = vld [vmem:[#allocation2 + $0xfe] sm:$0xff]
    %v8461 = vld [vmem:[#allocation2 + $0x106] sm:$0xff]
    %v8462 = vld [vmem:[#allocation2 + $0x10e] sm:$0xff]
    %v8463 = vld [vmem:[#allocation2 + $0x116] sm:$0xff]
    %v8464 = vld [vmem:[#allocation2 + $0x11e] sm:$0xff]
    %v8465 = vld [vmem:[#allocation2 + $0x126] sm:$0xff]
    %v8466 = vld [vmem:[#allocation2 + $0x12e] sm:$0xff]
    %v8467 = vld [vmem:[#allocation2 + $0x136] sm:$0xff]
    %v8468 = vld [vmem:[#allocation2 + $0x13e] sm:$0xff]
    %v8469 = vld [vmem:[#allocation2 + $0x146] sm:$0xff]
    %v8470 = vld [vmem:[#allocation2 + $0x14e] sm:$0xff]
    %v8471 = vld [vmem:[#allocation2 + $0x156] sm:$0xff]
    %v8472 = vld [vmem:[#allocation2 + $0x15e] sm:$0xff]
    %v8473 = vld [vmem:[#allocation2 + $0x166] sm:$0xff]
    %v8474 = vld [vmem:[#allocation2 + $0x16e] sm:$0xff]
    %v8475 = vld [vmem:[#allocation2 + $0x176] sm:$0xff]
    %v8476 = vld [vmem:[#allocation2 + $0x17e] sm:$0xff]
    %v8477 = vld [vmem:[#allocation2 + $0x186] sm:$0xff]
    %v8478 = vld [vmem:[#allocation2 + $0x18e] sm:$0xff]
    %v8479 = vld [vmem:[#allocation2 + $0x196] sm:$0xff]
    %v8480 = vld [vmem:[#allocation2 + $0x19e] sm:$0xff]
    %v8481 = vld [vmem:[#allocation2 + $0x1a6] sm:$0xff]
    %v8482 = vld [vmem:[#allocation2 + $0x1ae] sm:$0xff]
    %v8483 = vld [vmem:[#allocation2 + $0x1b6] sm:$0xff]
    %v8484 = vld [vmem:[#allocation2 + $0x1be] sm:$0xff]
    %v8485 = vld [vmem:[#allocation2 + $0x1c6] sm:$0xff]
    %v8486 = vld [vmem:[#allocation2 + $0x1ce] sm:$0xff]
    %v8487 = vld [vmem:[#allocation2 + $0x1d6] sm:$0xff]
    %v8488 = vld [vmem:[#allocation2 + $0x1de] sm:$0xff]
    %v8489 = vld [vmem:[#allocation2 + $0x1e6] sm:$0xff]
    %v8490 = vld [vmem:[#allocation2 + $0x1ee] sm:$0xff]
    %v8491 = vld [vmem:[#allocation2 + $0x1f6] sm:$0xff]
    %v8492 = vld [vmem:[#allocation2 + $0x1fe] sm:$0xff]
    %v8493 = vld [vmem:[#allocation2 + $0x206] sm:$0xff]
    %v8494 = vld [vmem:[#allocation2 + $0x20e] sm:$0xff]
    %v8495 = vld [vmem:[#allocation2 + $0x216] sm:$0xff]
    %v8496 = vld [vmem:[#allocation2 + $0x21e] sm:$0xff]
    %v8497 = vld [vmem:[#allocation2 + $0x226] sm:$0xff]
    %v8498 = vld [vmem:[#allocation2 + $0x22e] sm:$0xff]
    %v8499 = vld [vmem:[#allocation2 + $0x236] sm:$0xff]
    %v8500 = vld [vmem:[#allocation2 + $0x23e] sm:$0xff]
    %v8501 = vld [vmem:[#allocation2 + $0x246] sm:$0xff]
    %v8502 = vld [vmem:[#allocation2 + $0x24e] sm:$0xff]
    %v8503 = vld [vmem:[#allocation2 + $0x256] sm:$0xff]
    %v8504 = vld [vmem:[#allocation2 + $0x25e] sm:$0xff]
    %v8505 = vld [vmem:[#allocation2 + $0x266] sm:$0xff]
    %v8506 = vld [vmem:[#allocation2 + $0x26e] sm:$0xff]
    %v8507 = vld [vmem:[#allocation2 + $0x276] sm:$0xff]
    %v8508 = vld [vmem:[#allocation2 + $0x27e] sm:$0xff]
    %v8509 = vld [vmem:[#allocation2 + $0x286] sm:$0xff]
    %v8510 = vld [vmem:[#allocation2 + $0x28e] sm:$0xff]
    %v8511 = vld [vmem:[#allocation2 + $0x296] sm:$0xff]
    %v8512 = vld [vmem:[#allocation2 + $0x29e] sm:$0xff]
    %v8513 = vld [vmem:[#allocation2 + $0x2a6] sm:$0xff]
    %v8514 = vld [vmem:[#allocation2 + $0x2ae] sm:$0xff]
    %v8515 = vld [vmem:[#allocation2 + $0x2b6] sm:$0xff]
    %v8516 = vld [vmem:[#allocation2 + $0x2be] sm:$0xff]
    %v8517 = vld [vmem:[#allocation2 + $0x2c6] sm:$0xff]
    %v8518 = vld [vmem:[#allocation2 + $0x2ce] sm:$0xff]
    %v8519 = vld [vmem:[#allocation2 + $0x2d6] sm:$0xff]
    %v8520 = vld [vmem:[#allocation2 + $0x2de] sm:$0xff]
    %v8521 = vld [vmem:[#allocation2 + $0x2e6] sm:$0xff]
    %v8522 = vld [vmem:[#allocation2 + $0x2ee] sm:$0xff]
    %v8523 = vld [vmem:[#allocation2 + $0x2f6] sm:$0xff]
    %v8524 = vld [vmem:[#allocation2 + $0x2fe] sm:$0xff]
    %v8525 = vld [vmem:[#allocation2 + $0x306] sm:$0xff]
    %v8526 = vld [vmem:[#allocation2 + $0x30e] sm:$0xff]
    %v8527 = vld [vmem:[#allocation2 + $0x316] sm:$0xff]
    %v8528 = vld [vmem:[#allocation2 + $0x31e] sm:$0xff]
    %v8529 = vld [vmem:[#allocation2 + $0x326] sm:$0xff]
    %v8530 = vld [vmem:[#allocation2 + $0x32e] sm:$0xff]
    %v8531 = vld [vmem:[#allocation2 + $0x336] sm:$0xff]
    %v8532 = vld [vmem:[#allocation2 + $0x33e] sm:$0xff]
    %v8533 = vld [vmem:[#allocation2 + $0x346] sm:$0xff]
    %v8534 = vld [vmem:[#allocation2 + $0x34e] sm:$0xff]
    %v8535 = vld [vmem:[#allocation2 + $0x356] sm:$0xff]
    %v8536 = vld [vmem:[#allocation2 + $0x35e] sm:$0xff]
    %v8537 = vld [vmem:[#allocation2 + $0x366] sm:$0xff]
    %v8538 = vld [vmem:[#allocation2 + $0x36e] sm:$0xff]
    %v8539 = vld [vmem:[#allocation2 + $0x376] sm:$0xff]
    %v8540 = vld [vmem:[#allocation2 + $0x37e] sm:$0xff]
    %v8541 = vld [vmem:[#allocation2 + $0x386] sm:$0xff]
    %v8542 = vld [vmem:[#allocation2 + $0x38e] sm:$0xff]
    %v8543 = vld [vmem:[#allocation2 + $0x396] sm:$0xff]
    %v8544 = vld [vmem:[#allocation2 + $0x39e] sm:$0xff]
    %v8545 = vld [vmem:[#allocation2 + $0x3a6] sm:$0xff]
    %v8546 = vld [vmem:[#allocation2 + $0x3ae] sm:$0xff]
    %v8547 = vld [vmem:[#allocation2 + $0x3b6] sm:$0xff]
    %v8548 = vld [vmem:[#allocation2 + $0x3be] sm:$0xff]
    %v8549 = vld [vmem:[#allocation2 + $0x3c6] sm:$0xff]
    %v8550 = vld [vmem:[#allocation2 + $0x3ce] sm:$0xff]
    %v8551 = vld [vmem:[#allocation2 + $0x3d6] sm:$0xff]
    %v8552 = vld [vmem:[#allocation2 + $0x3de] sm:$0xff]
    %v8553 = vld [vmem:[#allocation2 + $0x3e6] sm:$0xff]
    %v8554 = vld [vmem:[#allocation2 + $0x3ee] sm:$0xff]
    %v8555 = vld [vmem:[#allocation2 + $0x3f6] sm:$0xff]
    %v8556 = vld [vmem:[#allocation2 + $0x3fe] sm:$0xff]
    %v8557 = vld [vmem:[#allocation2 + $0x406] sm:$0xff]
    %v8558 = vld [vmem:[#allocation2 + $0x40e] sm:$0xff]
    %v8559 = vld [vmem:[#allocation2 + $0x416] sm:$0xff]
    %v8560 = vld [vmem:[#allocation2 + $0x41e] sm:$0xff]
    %s8561 = scalar_lea.vmem %s2, 32
    %v8562 = vld [vmem:[%s8561] sm:$0xf]
    %v8564 = vsel %vm176, %v8433, 0
    %v8567 = vsel %vm176, %v8434, 0
    %v8570 = vsel %vm176, %v8435, 0
    %v8573 = vsel %vm176, %v8436, 0
    %v8576 = vsel %vm176, %v8437, 0
    %v8579 = vsel %vm176, %v8438, 0
    %v8582 = vsel %vm176, %v8439, 0
    %v8585 = vsel %vm176, %v8440, 0
    %v8588 = vsel %vm176, %v8441, 0
    %v8591 = vsel %vm176, %v8442, 0
    %v8594 = vsel %vm176, %v8443, 0
    %v8597 = vsel %vm176, %v8444, 0
    %v8600 = vsel %vm176, %v8445, 0
    %v8603 = vsel %vm176, %v8446, 0
    %v8606 = vsel %vm176, %v8447, 0
    %v8609 = vsel %vm176, %v8448, 0
    %v8612 = vsel %vm176, %v8449, 0
    %v8615 = vsel %vm176, %v8450, 0
    %v8618 = vsel %vm176, %v8451, 0
    %v8621 = vsel %vm176, %v8452, 0
    %v8624 = vsel %vm176, %v8453, 0
    %v8627 = vsel %vm176, %v8454, 0
    %v8630 = vsel %vm176, %v8455, 0
    %v8633 = vsel %vm176, %v8456, 0
    %v8636 = vsel %vm176, %v8457, 0
    %v8639 = vsel %vm176, %v8458, 0
    %v8642 = vsel %vm176, %v8459, 0
    %v8645 = vsel %vm176, %v8460, 0
    %v8648 = vsel %vm176, %v8461, 0
    %v8651 = vsel %vm176, %v8462, 0
    %v8654 = vsel %vm176, %v8463, 0
    %v8657 = vsel %vm176, %v8464, 0
    %v8660 = vsel %vm176, %v8465, 0
    %v8663 = vsel %vm176, %v8466, 0
    %v8666 = vsel %vm176, %v8467, 0
    %v8669 = vsel %vm176, %v8468, 0
    %v8672 = vsel %vm176, %v8469, 0
    %v8675 = vsel %vm176, %v8470, 0
    %v8678 = vsel %vm176, %v8471, 0
    %v8681 = vsel %vm176, %v8472, 0
    %v8684 = vsel %vm176, %v8473, 0
    %v8687 = vsel %vm176, %v8474, 0
    %v8690 = vsel %vm176, %v8475, 0
    %v8693 = vsel %vm176, %v8476, 0
    %v8696 = vsel %vm176, %v8477, 0
    %v8699 = vsel %vm176, %v8478, 0
    %v8702 = vsel %vm176, %v8479, 0
    %v8705 = vsel %vm176, %v8480, 0
    %v8708 = vsel %vm176, %v8481, 0
    %v8711 = vsel %vm176, %v8482, 0
    %v8714 = vsel %vm176, %v8483, 0
    %v8717 = vsel %vm176, %v8484, 0
    %v8720 = vsel %vm176, %v8485, 0
    %v8723 = vsel %vm176, %v8486, 0
    %v8726 = vsel %vm176, %v8487, 0
    %v8729 = vsel %vm176, %v8488, 0
    %v8732 = vsel %vm176, %v8489, 0
    %v8735 = vsel %vm176, %v8490, 0
    %v8738 = vsel %vm176, %v8491, 0
    %v8741 = vsel %vm176, %v8492, 0
    %v8744 = vsel %vm176, %v8493, 0
    %v8747 = vsel %vm176, %v8494, 0
    %v8750 = vsel %vm176, %v8495, 0
    %v8753 = vsel %vm176, %v8496, 0
    %v8756 = vsel %vm176, %v8497, 0
    %v8759 = vsel %vm176, %v8498, 0
    %v8762 = vsel %vm176, %v8499, 0
    %v8765 = vsel %vm176, %v8500, 0
    %v8768 = vsel %vm176, %v8501, 0
    %v8771 = vsel %vm176, %v8502, 0
    %v8774 = vsel %vm176, %v8503, 0
    %v8777 = vsel %vm176, %v8504, 0
    %v8780 = vsel %vm176, %v8505, 0
    %v8783 = vsel %vm176, %v8506, 0
    %v8786 = vsel %vm176, %v8507, 0
    %v8789 = vsel %vm176, %v8508, 0
    %v8792 = vsel %vm176, %v8509, 0
    %v8795 = vsel %vm176, %v8510, 0
    %v8798 = vsel %vm176, %v8511, 0
    %v8801 = vsel %vm176, %v8512, 0
    %v8804 = vsel %vm176, %v8513, 0
    %v8807 = vsel %vm176, %v8514, 0
    %v8810 = vsel %vm176, %v8515, 0
    %v8813 = vsel %vm176, %v8516, 0
    %v8816 = vsel %vm176, %v8517, 0
    %v8819 = vsel %vm176, %v8518, 0
    %v8822 = vsel %vm176, %v8519, 0
    %v8825 = vsel %vm176, %v8520, 0
    %v8828 = vsel %vm176, %v8521, 0
    %v8831 = vsel %vm176, %v8522, 0
    %v8834 = vsel %vm176, %v8523, 0
    %v8837 = vsel %vm176, %v8524, 0
    %v8840 = vsel %vm176, %v8525, 0
    %v8843 = vsel %vm176, %v8526, 0
    %v8846 = vsel %vm176, %v8527, 0
    %v8849 = vsel %vm176, %v8528, 0
    %v8852 = vsel %vm176, %v8529, 0
    %v8855 = vsel %vm176, %v8530, 0
    %v8858 = vsel %vm176, %v8531, 0
    %v8861 = vsel %vm176, %v8532, 0
    %v8864 = vsel %vm176, %v8533, 0
    %v8867 = vsel %vm176, %v8534, 0
    %v8870 = vsel %vm176, %v8535, 0
    %v8873 = vsel %vm176, %v8536, 0
    %v8876 = vsel %vm176, %v8537, 0
    %v8879 = vsel %vm176, %v8538, 0
    %v8882 = vsel %vm176, %v8539, 0
    %v8885 = vsel %vm176, %v8540, 0
    %v8888 = vsel %vm176, %v8541, 0
    %v8891 = vsel %vm176, %v8542, 0
    %v8894 = vsel %vm176, %v8543, 0
    %v8897 = vsel %vm176, %v8544, 0
    %v8900 = vsel %vm176, %v8545, 0
    %v8903 = vsel %vm176, %v8546, 0
    %v8906 = vsel %vm176, %v8547, 0
    %v8909 = vsel %vm176, %v8548, 0
    %v8912 = vsel %vm176, %v8549, 0
    %v8915 = vsel %vm176, %v8550, 0
    %v8918 = vsel %vm176, %v8551, 0
    %v8921 = vsel %vm176, %v8552, 0
    %v8924 = vsel %vm176, %v8553, 0
    %v8927 = vsel %vm176, %v8554, 0
    %v8930 = vsel %vm176, %v8555, 0
    %v8933 = vsel %vm176, %v8556, 0
    %v8936 = vsel %vm176, %v8557, 0
    %v8939 = vsel %vm176, %v8558, 0
    %v8942 = vsel %vm176, %v8559, 0
    %v8945 = vsel %vm176, %v8560, 0
    %v8948 = vsel %vm964, %v8562, 0
    %8950 = vmatpush.msra.mxu0 0.0
    %8951 = vmatpush.msra.mxu0 0.0
    %8952 = vmatpush.msra.mxu0 0.0
    %8953 = vmatpush.msra.mxu0 0.0
    %8954 = vmatpush.msra.mxu0 0.0
    %8955 = vmatpush.msra.mxu0 0.0
    %8956 = vmatpush.msra.mxu0 0.0
    %8957 = vmatpush.msra.mxu0 0.0
    %8958 = vmatpush.msra.mxu0 0.0
    %8959 = vmatpush.msra.mxu0 0.0
    %8960 = vmatpush.msra.mxu0 0.0
    %8961 = vmatpush.msra.mxu0 0.0
    %8962 = vmatpush.msra.mxu0 0.0
    %8963 = vmatpush.msra.mxu0 0.0
    %8964 = vmatpush.msra.mxu0 0.0
    %8965 = vmatpush.msra.mxu0 %v8948
    %8966 = vmatmul.f32.gmra.mxu0 %v8564
    %v8967 = vpop.f32.mrf.mxu0
    %v8968 = vadd.f32 0.0, %v8967
    %8969 = vmatmul.f32.gmra.mxu0 %v8567
    %v8970 = vpop.f32.mrf.mxu0
    %v8971 = vadd.f32 0.0, %v8970
    %8972 = vmatmul.f32.gmra.mxu0 %v8570
    %v8973 = vpop.f32.mrf.mxu0
    %v8974 = vadd.f32 0.0, %v8973
    %8975 = vmatmul.f32.gmra.mxu0 %v8573
    %v8976 = vpop.f32.mrf.mxu0
    %v8977 = vadd.f32 0.0, %v8976
    %8978 = vmatmul.f32.gmra.mxu0 %v8576
    %v8979 = vpop.f32.mrf.mxu0
    %v8980 = vadd.f32 0.0, %v8979
    %8981 = vmatmul.f32.gmra.mxu0 %v8579
    %v8982 = vpop.f32.mrf.mxu0
    %v8983 = vadd.f32 0.0, %v8982
    %8984 = vmatmul.f32.gmra.mxu0 %v8582
    %v8985 = vpop.f32.mrf.mxu0
    %v8986 = vadd.f32 0.0, %v8985
    %8987 = vmatmul.f32.gmra.mxu0 %v8585
    %v8988 = vpop.f32.mrf.mxu0
    %v8989 = vadd.f32 0.0, %v8988
    %8990 = vmatmul.f32.gmra.mxu0 %v8588
    %v8991 = vpop.f32.mrf.mxu0
    %v8992 = vadd.f32 0.0, %v8991
    %8993 = vmatmul.f32.gmra.mxu0 %v8591
    %v8994 = vpop.f32.mrf.mxu0
    %v8995 = vadd.f32 0.0, %v8994
    %8996 = vmatmul.f32.gmra.mxu0 %v8594
    %v8997 = vpop.f32.mrf.mxu0
    %v8998 = vadd.f32 0.0, %v8997
    %8999 = vmatmul.f32.gmra.mxu0 %v8597
    %v9000 = vpop.f32.mrf.mxu0
    %v9001 = vadd.f32 0.0, %v9000
    %9002 = vmatmul.f32.gmra.mxu0 %v8600
    %v9003 = vpop.f32.mrf.mxu0
    %v9004 = vadd.f32 0.0, %v9003
    %9005 = vmatmul.f32.gmra.mxu0 %v8603
    %v9006 = vpop.f32.mrf.mxu0
    %v9007 = vadd.f32 0.0, %v9006
    %9008 = vmatmul.f32.gmra.mxu0 %v8606
    %v9009 = vpop.f32.mrf.mxu0
    %v9010 = vadd.f32 0.0, %v9009
    %9011 = vmatmul.f32.gmra.mxu0 %v8609
    %v9012 = vpop.f32.mrf.mxu0
    %v9013 = vadd.f32 0.0, %v9012
    %9014 = vmatmul.f32.gmra.mxu0 %v8612
    %v9015 = vpop.f32.mrf.mxu0
    %v9016 = vadd.f32 0.0, %v9015
    %9017 = vmatmul.f32.gmra.mxu0 %v8615
    %v9018 = vpop.f32.mrf.mxu0
    %v9019 = vadd.f32 0.0, %v9018
    %9020 = vmatmul.f32.gmra.mxu0 %v8618
    %v9021 = vpop.f32.mrf.mxu0
    %v9022 = vadd.f32 0.0, %v9021
    %9023 = vmatmul.f32.gmra.mxu0 %v8621
    %v9024 = vpop.f32.mrf.mxu0
    %v9025 = vadd.f32 0.0, %v9024
    %9026 = vmatmul.f32.gmra.mxu0 %v8624
    %v9027 = vpop.f32.mrf.mxu0
    %v9028 = vadd.f32 0.0, %v9027
    %9029 = vmatmul.f32.gmra.mxu0 %v8627
    %v9030 = vpop.f32.mrf.mxu0
    %v9031 = vadd.f32 0.0, %v9030
    %9032 = vmatmul.f32.gmra.mxu0 %v8630
    %v9033 = vpop.f32.mrf.mxu0
    %v9034 = vadd.f32 0.0, %v9033
    %9035 = vmatmul.f32.gmra.mxu0 %v8633
    %v9036 = vpop.f32.mrf.mxu0
    %v9037 = vadd.f32 0.0, %v9036
    %9038 = vmatmul.f32.gmra.mxu0 %v8636
    %v9039 = vpop.f32.mrf.mxu0
    %v9040 = vadd.f32 0.0, %v9039
    %9041 = vmatmul.f32.gmra.mxu0 %v8639
    %v9042 = vpop.f32.mrf.mxu0
    %v9043 = vadd.f32 0.0, %v9042
    %9044 = vmatmul.f32.gmra.mxu0 %v8642
    %v9045 = vpop.f32.mrf.mxu0
    %v9046 = vadd.f32 0.0, %v9045
    %9047 = vmatmul.f32.gmra.mxu0 %v8645
    %v9048 = vpop.f32.mrf.mxu0
    %v9049 = vadd.f32 0.0, %v9048
    %9050 = vmatmul.f32.gmra.mxu0 %v8648
    %v9051 = vpop.f32.mrf.mxu0
    %v9052 = vadd.f32 0.0, %v9051
    %9053 = vmatmul.f32.gmra.mxu0 %v8651
    %v9054 = vpop.f32.mrf.mxu0
    %v9055 = vadd.f32 0.0, %v9054
    %9056 = vmatmul.f32.gmra.mxu0 %v8654
    %v9057 = vpop.f32.mrf.mxu0
    %v9058 = vadd.f32 0.0, %v9057
    %9059 = vmatmul.f32.gmra.mxu0 %v8657
    %v9060 = vpop.f32.mrf.mxu0
    %v9061 = vadd.f32 0.0, %v9060
    %9062 = vmatmul.f32.gmra.mxu0 %v8660
    %v9063 = vpop.f32.mrf.mxu0
    %v9064 = vadd.f32 0.0, %v9063
    %9065 = vmatmul.f32.gmra.mxu0 %v8663
    %v9066 = vpop.f32.mrf.mxu0
    %v9067 = vadd.f32 0.0, %v9066
    %9068 = vmatmul.f32.gmra.mxu0 %v8666
    %v9069 = vpop.f32.mrf.mxu0
    %v9070 = vadd.f32 0.0, %v9069
    %9071 = vmatmul.f32.gmra.mxu0 %v8669
    %v9072 = vpop.f32.mrf.mxu0
    %v9073 = vadd.f32 0.0, %v9072
    %9074 = vmatmul.f32.gmra.mxu0 %v8672
    %v9075 = vpop.f32.mrf.mxu0
    %v9076 = vadd.f32 0.0, %v9075
    %9077 = vmatmul.f32.gmra.mxu0 %v8675
    %v9078 = vpop.f32.mrf.mxu0
    %v9079 = vadd.f32 0.0, %v9078
    %9080 = vmatmul.f32.gmra.mxu0 %v8678
    %v9081 = vpop.f32.mrf.mxu0
    %v9082 = vadd.f32 0.0, %v9081
    %9083 = vmatmul.f32.gmra.mxu0 %v8681
    %v9084 = vpop.f32.mrf.mxu0
    %v9085 = vadd.f32 0.0, %v9084
    %9086 = vmatmul.f32.gmra.mxu0 %v8684
    %v9087 = vpop.f32.mrf.mxu0
    %v9088 = vadd.f32 0.0, %v9087
    %9089 = vmatmul.f32.gmra.mxu0 %v8687
    %v9090 = vpop.f32.mrf.mxu0
    %v9091 = vadd.f32 0.0, %v9090
    %9092 = vmatmul.f32.gmra.mxu0 %v8690
    %v9093 = vpop.f32.mrf.mxu0
    %v9094 = vadd.f32 0.0, %v9093
    %9095 = vmatmul.f32.gmra.mxu0 %v8693
    %v9096 = vpop.f32.mrf.mxu0
    %v9097 = vadd.f32 0.0, %v9096
    %9098 = vmatmul.f32.gmra.mxu0 %v8696
    %v9099 = vpop.f32.mrf.mxu0
    %v9100 = vadd.f32 0.0, %v9099
    %9101 = vmatmul.f32.gmra.mxu0 %v8699
    %v9102 = vpop.f32.mrf.mxu0
    %v9103 = vadd.f32 0.0, %v9102
    %9104 = vmatmul.f32.gmra.mxu0 %v8702
    %v9105 = vpop.f32.mrf.mxu0
    %v9106 = vadd.f32 0.0, %v9105
    %9107 = vmatmul.f32.gmra.mxu0 %v8705
    %v9108 = vpop.f32.mrf.mxu0
    %v9109 = vadd.f32 0.0, %v9108
    %9110 = vmatmul.f32.gmra.mxu0 %v8708
    %v9111 = vpop.f32.mrf.mxu0
    %v9112 = vadd.f32 0.0, %v9111
    %9113 = vmatmul.f32.gmra.mxu0 %v8711
    %v9114 = vpop.f32.mrf.mxu0
    %v9115 = vadd.f32 0.0, %v9114
    %9116 = vmatmul.f32.gmra.mxu0 %v8714
    %v9117 = vpop.f32.mrf.mxu0
    %v9118 = vadd.f32 0.0, %v9117
    %9119 = vmatmul.f32.gmra.mxu0 %v8717
    %v9120 = vpop.f32.mrf.mxu0
    %v9121 = vadd.f32 0.0, %v9120
    %9122 = vmatmul.f32.gmra.mxu0 %v8720
    %v9123 = vpop.f32.mrf.mxu0
    %v9124 = vadd.f32 0.0, %v9123
    %9125 = vmatmul.f32.gmra.mxu0 %v8723
    %v9126 = vpop.f32.mrf.mxu0
    %v9127 = vadd.f32 0.0, %v9126
    %9128 = vmatmul.f32.gmra.mxu0 %v8726
    %v9129 = vpop.f32.mrf.mxu0
    %v9130 = vadd.f32 0.0, %v9129
    %9131 = vmatmul.f32.gmra.mxu0 %v8729
    %v9132 = vpop.f32.mrf.mxu0
    %v9133 = vadd.f32 0.0, %v9132
    %9134 = vmatmul.f32.gmra.mxu0 %v8732
    %v9135 = vpop.f32.mrf.mxu0
    %v9136 = vadd.f32 0.0, %v9135
    %9137 = vmatmul.f32.gmra.mxu0 %v8735
    %v9138 = vpop.f32.mrf.mxu0
    %v9139 = vadd.f32 0.0, %v9138
    %9140 = vmatmul.f32.gmra.mxu0 %v8738
    %v9141 = vpop.f32.mrf.mxu0
    %v9142 = vadd.f32 0.0, %v9141
    %9143 = vmatmul.f32.gmra.mxu0 %v8741
    %v9144 = vpop.f32.mrf.mxu0
    %v9145 = vadd.f32 0.0, %v9144
    %9146 = vmatmul.f32.gmra.mxu0 %v8744
    %v9147 = vpop.f32.mrf.mxu0
    %v9148 = vadd.f32 0.0, %v9147
    %9149 = vmatmul.f32.gmra.mxu0 %v8747
    %v9150 = vpop.f32.mrf.mxu0
    %v9151 = vadd.f32 0.0, %v9150
    %9152 = vmatmul.f32.gmra.mxu0 %v8750
    %v9153 = vpop.f32.mrf.mxu0
    %v9154 = vadd.f32 0.0, %v9153
    %9155 = vmatmul.f32.gmra.mxu0 %v8753
    %v9156 = vpop.f32.mrf.mxu0
    %v9157 = vadd.f32 0.0, %v9156
    %9158 = vmatmul.f32.gmra.mxu0 %v8756
    %v9159 = vpop.f32.mrf.mxu0
    %v9160 = vadd.f32 0.0, %v9159
    %9161 = vmatmul.f32.gmra.mxu0 %v8759
    %v9162 = vpop.f32.mrf.mxu0
    %v9163 = vadd.f32 0.0, %v9162
    %9164 = vmatmul.f32.gmra.mxu0 %v8762
    %v9165 = vpop.f32.mrf.mxu0
    %v9166 = vadd.f32 0.0, %v9165
    %9167 = vmatmul.f32.gmra.mxu0 %v8765
    %v9168 = vpop.f32.mrf.mxu0
    %v9169 = vadd.f32 0.0, %v9168
    %9170 = vmatmul.f32.gmra.mxu0 %v8768
    %v9171 = vpop.f32.mrf.mxu0
    %v9172 = vadd.f32 0.0, %v9171
    %9173 = vmatmul.f32.gmra.mxu0 %v8771
    %v9174 = vpop.f32.mrf.mxu0
    %v9175 = vadd.f32 0.0, %v9174
    %9176 = vmatmul.f32.gmra.mxu0 %v8774
    %v9177 = vpop.f32.mrf.mxu0
    %v9178 = vadd.f32 0.0, %v9177
    %9179 = vmatmul.f32.gmra.mxu0 %v8777
    %v9180 = vpop.f32.mrf.mxu0
    %v9181 = vadd.f32 0.0, %v9180
    %9182 = vmatmul.f32.gmra.mxu0 %v8780
    %v9183 = vpop.f32.mrf.mxu0
    %v9184 = vadd.f32 0.0, %v9183
    %9185 = vmatmul.f32.gmra.mxu0 %v8783
    %v9186 = vpop.f32.mrf.mxu0
    %v9187 = vadd.f32 0.0, %v9186
    %9188 = vmatmul.f32.gmra.mxu0 %v8786
    %v9189 = vpop.f32.mrf.mxu0
    %v9190 = vadd.f32 0.0, %v9189
    %9191 = vmatmul.f32.gmra.mxu0 %v8789
    %v9192 = vpop.f32.mrf.mxu0
    %v9193 = vadd.f32 0.0, %v9192
    %9194 = vmatmul.f32.gmra.mxu0 %v8792
    %v9195 = vpop.f32.mrf.mxu0
    %v9196 = vadd.f32 0.0, %v9195
    %9197 = vmatmul.f32.gmra.mxu0 %v8795
    %v9198 = vpop.f32.mrf.mxu0
    %v9199 = vadd.f32 0.0, %v9198
    %9200 = vmatmul.f32.gmra.mxu0 %v8798
    %v9201 = vpop.f32.mrf.mxu0
    %v9202 = vadd.f32 0.0, %v9201
    %9203 = vmatmul.f32.gmra.mxu0 %v8801
    %v9204 = vpop.f32.mrf.mxu0
    %v9205 = vadd.f32 0.0, %v9204
    %9206 = vmatmul.f32.gmra.mxu0 %v8804
    %v9207 = vpop.f32.mrf.mxu0
    %v9208 = vadd.f32 0.0, %v9207
    %9209 = vmatmul.f32.gmra.mxu0 %v8807
    %v9210 = vpop.f32.mrf.mxu0
    %v9211 = vadd.f32 0.0, %v9210
    %9212 = vmatmul.f32.gmra.mxu0 %v8810
    %v9213 = vpop.f32.mrf.mxu0
    %v9214 = vadd.f32 0.0, %v9213
    %9215 = vmatmul.f32.gmra.mxu0 %v8813
    %v9216 = vpop.f32.mrf.mxu0
    %v9217 = vadd.f32 0.0, %v9216
    %9218 = vmatmul.f32.gmra.mxu0 %v8816
    %v9219 = vpop.f32.mrf.mxu0
    %v9220 = vadd.f32 0.0, %v9219
    %9221 = vmatmul.f32.gmra.mxu0 %v8819
    %v9222 = vpop.f32.mrf.mxu0
    %v9223 = vadd.f32 0.0, %v9222
    %9224 = vmatmul.f32.gmra.mxu0 %v8822
    %v9225 = vpop.f32.mrf.mxu0
    %v9226 = vadd.f32 0.0, %v9225
    %9227 = vmatmul.f32.gmra.mxu0 %v8825
    %v9228 = vpop.f32.mrf.mxu0
    %v9229 = vadd.f32 0.0, %v9228
    %9230 = vmatmul.f32.gmra.mxu0 %v8828
    %v9231 = vpop.f32.mrf.mxu0
    %v9232 = vadd.f32 0.0, %v9231
    %9233 = vmatmul.f32.gmra.mxu0 %v8831
    %v9234 = vpop.f32.mrf.mxu0
    %v9235 = vadd.f32 0.0, %v9234
    %9236 = vmatmul.f32.gmra.mxu0 %v8834
    %v9237 = vpop.f32.mrf.mxu0
    %v9238 = vadd.f32 0.0, %v9237
    %9239 = vmatmul.f32.gmra.mxu0 %v8837
    %v9240 = vpop.f32.mrf.mxu0
    %v9241 = vadd.f32 0.0, %v9240
    %9242 = vmatmul.f32.gmra.mxu0 %v8840
    %v9243 = vpop.f32.mrf.mxu0
    %v9244 = vadd.f32 0.0, %v9243
    %9245 = vmatmul.f32.gmra.mxu0 %v8843
    %v9246 = vpop.f32.mrf.mxu0
    %v9247 = vadd.f32 0.0, %v9246
    %9248 = vmatmul.f32.gmra.mxu0 %v8846
    %v9249 = vpop.f32.mrf.mxu0
    %v9250 = vadd.f32 0.0, %v9249
    %9251 = vmatmul.f32.gmra.mxu0 %v8849
    %v9252 = vpop.f32.mrf.mxu0
    %v9253 = vadd.f32 0.0, %v9252
    %9254 = vmatmul.f32.gmra.mxu0 %v8852
    %v9255 = vpop.f32.mrf.mxu0
    %v9256 = vadd.f32 0.0, %v9255
    %9257 = vmatmul.f32.gmra.mxu0 %v8855
    %v9258 = vpop.f32.mrf.mxu0
    %v9259 = vadd.f32 0.0, %v9258
    %9260 = vmatmul.f32.gmra.mxu0 %v8858
    %v9261 = vpop.f32.mrf.mxu0
    %v9262 = vadd.f32 0.0, %v9261
    %9263 = vmatmul.f32.gmra.mxu0 %v8861
    %v9264 = vpop.f32.mrf.mxu0
    %v9265 = vadd.f32 0.0, %v9264
    %9266 = vmatmul.f32.gmra.mxu0 %v8864
    %v9267 = vpop.f32.mrf.mxu0
    %v9268 = vadd.f32 0.0, %v9267
    %9269 = vmatmul.f32.gmra.mxu0 %v8867
    %v9270 = vpop.f32.mrf.mxu0
    %v9271 = vadd.f32 0.0, %v9270
    %9272 = vmatmul.f32.gmra.mxu0 %v8870
    %v9273 = vpop.f32.mrf.mxu0
    %v9274 = vadd.f32 0.0, %v9273
    %9275 = vmatmul.f32.gmra.mxu0 %v8873
    %v9276 = vpop.f32.mrf.mxu0
    %v9277 = vadd.f32 0.0, %v9276
    %9278 = vmatmul.f32.gmra.mxu0 %v8876
    %v9279 = vpop.f32.mrf.mxu0
    %v9280 = vadd.f32 0.0, %v9279
    %9281 = vmatmul.f32.gmra.mxu0 %v8879
    %v9282 = vpop.f32.mrf.mxu0
    %v9283 = vadd.f32 0.0, %v9282
    %9284 = vmatmul.f32.gmra.mxu0 %v8882
    %v9285 = vpop.f32.mrf.mxu0
    %v9286 = vadd.f32 0.0, %v9285
    %9287 = vmatmul.f32.gmra.mxu0 %v8885
    %v9288 = vpop.f32.mrf.mxu0
    %v9289 = vadd.f32 0.0, %v9288
    %9290 = vmatmul.f32.gmra.mxu0 %v8888
    %v9291 = vpop.f32.mrf.mxu0
    %v9292 = vadd.f32 0.0, %v9291
    %9293 = vmatmul.f32.gmra.mxu0 %v8891
    %v9294 = vpop.f32.mrf.mxu0
    %v9295 = vadd.f32 0.0, %v9294
    %9296 = vmatmul.f32.gmra.mxu0 %v8894
    %v9297 = vpop.f32.mrf.mxu0
    %v9298 = vadd.f32 0.0, %v9297
    %9299 = vmatmul.f32.gmra.mxu0 %v8897
    %v9300 = vpop.f32.mrf.mxu0
    %v9301 = vadd.f32 0.0, %v9300
    %9302 = vmatmul.f32.gmra.mxu0 %v8900
    %v9303 = vpop.f32.mrf.mxu0
    %v9304 = vadd.f32 0.0, %v9303
    %9305 = vmatmul.f32.gmra.mxu0 %v8903
    %v9306 = vpop.f32.mrf.mxu0
    %v9307 = vadd.f32 0.0, %v9306
    %9308 = vmatmul.f32.gmra.mxu0 %v8906
    %v9309 = vpop.f32.mrf.mxu0
    %v9310 = vadd.f32 0.0, %v9309
    %9311 = vmatmul.f32.gmra.mxu0 %v8909
    %v9312 = vpop.f32.mrf.mxu0
    %v9313 = vadd.f32 0.0, %v9312
    %9314 = vmatmul.f32.gmra.mxu0 %v8912
    %v9315 = vpop.f32.mrf.mxu0
    %v9316 = vadd.f32 0.0, %v9315
    %9317 = vmatmul.f32.gmra.mxu0 %v8915
    %v9318 = vpop.f32.mrf.mxu0
    %v9319 = vadd.f32 0.0, %v9318
    %9320 = vmatmul.f32.gmra.mxu0 %v8918
    %v9321 = vpop.f32.mrf.mxu0
    %v9322 = vadd.f32 0.0, %v9321
    %9323 = vmatmul.f32.gmra.mxu0 %v8921
    %v9324 = vpop.f32.mrf.mxu0
    %v9325 = vadd.f32 0.0, %v9324
    %9326 = vmatmul.f32.gmra.mxu0 %v8924
    %v9327 = vpop.f32.mrf.mxu0
    %v9328 = vadd.f32 0.0, %v9327
    %9329 = vmatmul.f32.gmra.mxu0 %v8927
    %v9330 = vpop.f32.mrf.mxu0
    %v9331 = vadd.f32 0.0, %v9330
    %9332 = vmatmul.f32.gmra.mxu0 %v8930
    %v9333 = vpop.f32.mrf.mxu0
    %v9334 = vadd.f32 0.0, %v9333
    %9335 = vmatmul.f32.gmra.mxu0 %v8933
    %v9336 = vpop.f32.mrf.mxu0
    %v9337 = vadd.f32 0.0, %v9336
    %9338 = vmatmul.f32.gmra.mxu0 %v8936
    %v9339 = vpop.f32.mrf.mxu0
    %v9340 = vadd.f32 0.0, %v9339
    %9341 = vmatmul.f32.gmra.mxu0 %v8939
    %v9342 = vpop.f32.mrf.mxu0
    %v9343 = vadd.f32 0.0, %v9342
    %9344 = vmatmul.f32.gmra.mxu0 %v8942
    %v9345 = vpop.f32.mrf.mxu0
    %v9346 = vadd.f32 0.0, %v9345
    %9347 = vmatmul.f32.gmra.mxu0 %v8945
    %v9348 = vpop.f32.mrf.mxu0
    %v9349 = vadd.f32 0.0, %v9348
    %9350 = vdwg.mxu0
    %v9351 = vadd.f32 %v8305, %v8968
    %v9352 = vadd.f32 %v8306, %v8971
    %v9353 = vadd.f32 %v8307, %v8974
    %v9354 = vadd.f32 %v8308, %v8977
    %v9355 = vadd.f32 %v8309, %v8980
    %v9356 = vadd.f32 %v8310, %v8983
    %v9357 = vadd.f32 %v8311, %v8986
    %v9358 = vadd.f32 %v8312, %v8989
    %v9359 = vadd.f32 %v8313, %v8992
    %v9360 = vadd.f32 %v8314, %v8995
    %v9361 = vadd.f32 %v8315, %v8998
    %v9362 = vadd.f32 %v8316, %v9001
    %v9363 = vadd.f32 %v8317, %v9004
    %v9364 = vadd.f32 %v8318, %v9007
    %v9365 = vadd.f32 %v8319, %v9010
    %v9366 = vadd.f32 %v8320, %v9013
    %v9367 = vadd.f32 %v8321, %v9016
    %v9368 = vadd.f32 %v8322, %v9019
    %v9369 = vadd.f32 %v8323, %v9022
    %v9370 = vadd.f32 %v8324, %v9025
    %v9371 = vadd.f32 %v8325, %v9028
    %v9372 = vadd.f32 %v8326, %v9031
    %v9373 = vadd.f32 %v8327, %v9034
    %v9374 = vadd.f32 %v8328, %v9037
    %v9375 = vadd.f32 %v8329, %v9040
    %v9376 = vadd.f32 %v8330, %v9043
    %v9377 = vadd.f32 %v8331, %v9046
    %v9378 = vadd.f32 %v8332, %v9049
    %v9379 = vadd.f32 %v8333, %v9052
    %v9380 = vadd.f32 %v8334, %v9055
    %v9381 = vadd.f32 %v8335, %v9058
    %v9382 = vadd.f32 %v8336, %v9061
    %v9383 = vadd.f32 %v8337, %v9064
    %v9384 = vadd.f32 %v8338, %v9067
    %v9385 = vadd.f32 %v8339, %v9070
    %v9386 = vadd.f32 %v8340, %v9073
    %v9387 = vadd.f32 %v8341, %v9076
    %v9388 = vadd.f32 %v8342, %v9079
    %v9389 = vadd.f32 %v8343, %v9082
    %v9390 = vadd.f32 %v8344, %v9085
    %v9391 = vadd.f32 %v8345, %v9088
    %v9392 = vadd.f32 %v8346, %v9091
    %v9393 = vadd.f32 %v8347, %v9094
    %v9394 = vadd.f32 %v8348, %v9097
    %v9395 = vadd.f32 %v8349, %v9100
    %v9396 = vadd.f32 %v8350, %v9103
    %v9397 = vadd.f32 %v8351, %v9106
    %v9398 = vadd.f32 %v8352, %v9109
    %v9399 = vadd.f32 %v8353, %v9112
    %v9400 = vadd.f32 %v8354, %v9115
    %v9401 = vadd.f32 %v8355, %v9118
    %v9402 = vadd.f32 %v8356, %v9121
    %v9403 = vadd.f32 %v8357, %v9124
    %v9404 = vadd.f32 %v8358, %v9127
    %v9405 = vadd.f32 %v8359, %v9130
    %v9406 = vadd.f32 %v8360, %v9133
    %v9407 = vadd.f32 %v8361, %v9136
    %v9408 = vadd.f32 %v8362, %v9139
    %v9409 = vadd.f32 %v8363, %v9142
    %v9410 = vadd.f32 %v8364, %v9145
    %v9411 = vadd.f32 %v8365, %v9148
    %v9412 = vadd.f32 %v8366, %v9151
    %v9413 = vadd.f32 %v8367, %v9154
    %v9414 = vadd.f32 %v8368, %v9157
    %v9415 = vadd.f32 %v8369, %v9160
    %v9416 = vadd.f32 %v8370, %v9163
    %v9417 = vadd.f32 %v8371, %v9166
    %v9418 = vadd.f32 %v8372, %v9169
    %v9419 = vadd.f32 %v8373, %v9172
    %v9420 = vadd.f32 %v8374, %v9175
    %v9421 = vadd.f32 %v8375, %v9178
    %v9422 = vadd.f32 %v8376, %v9181
    %v9423 = vadd.f32 %v8377, %v9184
    %v9424 = vadd.f32 %v8378, %v9187
    %v9425 = vadd.f32 %v8379, %v9190
    %v9426 = vadd.f32 %v8380, %v9193
    %v9427 = vadd.f32 %v8381, %v9196
    %v9428 = vadd.f32 %v8382, %v9199
    %v9429 = vadd.f32 %v8383, %v9202
    %v9430 = vadd.f32 %v8384, %v9205
    %v9431 = vadd.f32 %v8385, %v9208
    %v9432 = vadd.f32 %v8386, %v9211
    %v9433 = vadd.f32 %v8387, %v9214
    %v9434 = vadd.f32 %v8388, %v9217
    %v9435 = vadd.f32 %v8389, %v9220
    %v9436 = vadd.f32 %v8390, %v9223
    %v9437 = vadd.f32 %v8391, %v9226
    %v9438 = vadd.f32 %v8392, %v9229
    %v9439 = vadd.f32 %v8393, %v9232
    %v9440 = vadd.f32 %v8394, %v9235
    %v9441 = vadd.f32 %v8395, %v9238
    %v9442 = vadd.f32 %v8396, %v9241
    %v9443 = vadd.f32 %v8397, %v9244
    %v9444 = vadd.f32 %v8398, %v9247
    %v9445 = vadd.f32 %v8399, %v9250
    %v9446 = vadd.f32 %v8400, %v9253
    %v9447 = vadd.f32 %v8401, %v9256
    %v9448 = vadd.f32 %v8402, %v9259
    %v9449 = vadd.f32 %v8403, %v9262
    %v9450 = vadd.f32 %v8404, %v9265
    %v9451 = vadd.f32 %v8405, %v9268
    %v9452 = vadd.f32 %v8406, %v9271
    %v9453 = vadd.f32 %v8407, %v9274
    %v9454 = vadd.f32 %v8408, %v9277
    %v9455 = vadd.f32 %v8409, %v9280
    %v9456 = vadd.f32 %v8410, %v9283
    %v9457 = vadd.f32 %v8411, %v9286
    %v9458 = vadd.f32 %v8412, %v9289
    %v9459 = vadd.f32 %v8413, %v9292
    %v9460 = vadd.f32 %v8414, %v9295
    %v9461 = vadd.f32 %v8415, %v9298
    %v9462 = vadd.f32 %v8416, %v9301
    %v9463 = vadd.f32 %v8417, %v9304
    %v9464 = vadd.f32 %v8418, %v9307
    %v9465 = vadd.f32 %v8419, %v9310
    %v9466 = vadd.f32 %v8420, %v9313
    %v9467 = vadd.f32 %v8421, %v9316
    %v9468 = vadd.f32 %v8422, %v9319
    %v9469 = vadd.f32 %v8423, %v9322
    %v9470 = vadd.f32 %v8424, %v9325
    %v9471 = vadd.f32 %v8425, %v9328
    %v9472 = vadd.f32 %v8426, %v9331
    %v9473 = vadd.f32 %v8427, %v9334
    %v9474 = vadd.f32 %v8428, %v9337
    %v9475 = vadd.f32 %v8429, %v9340
    %v9476 = vadd.f32 %v8430, %v9343
    %v9477 = vadd.f32 %v8431, %v9346
    %v9478 = vadd.f32 %v8432, %v9349
    %9479 = vst [vmem:[#allocation3] sm:$0xff] %v9351
    %9480 = vst [vmem:[#allocation3 + $0x8] sm:$0xff] %v9352
    %9481 = vst [vmem:[#allocation3 + $0x10] sm:$0xff] %v9353
    %9482 = vst [vmem:[#allocation3 + $0x18] sm:$0xff] %v9354
    %9483 = vst [vmem:[#allocation3 + $0x20] sm:$0xff] %v9355
    %9484 = vst [vmem:[#allocation3 + $0x28] sm:$0xff] %v9356
    %9485 = vst [vmem:[#allocation3 + $0x30] sm:$0xff] %v9357
    %9486 = vst [vmem:[#allocation3 + $0x38] sm:$0xff] %v9358
    %9487 = vst [vmem:[#allocation3 + $0x40] sm:$0xff] %v9359
    %9488 = vst [vmem:[#allocation3 + $0x48] sm:$0xff] %v9360
    %9489 = vst [vmem:[#allocation3 + $0x50] sm:$0xff] %v9361
    %9490 = vst [vmem:[#allocation3 + $0x58] sm:$0xff] %v9362
    %9491 = vst [vmem:[#allocation3 + $0x60] sm:$0xff] %v9363
    %9492 = vst [vmem:[#allocation3 + $0x68] sm:$0xff] %v9364
    %9493 = vst [vmem:[#allocation3 + $0x70] sm:$0xff] %v9365
    %9494 = vst [vmem:[#allocation3 + $0x78] sm:$0xff] %v9366
    %9495 = vst [vmem:[#allocation3 + $0x80] sm:$0xff] %v9367
    %9496 = vst [vmem:[#allocation3 + $0x88] sm:$0xff] %v9368
    %9497 = vst [vmem:[#allocation3 + $0x90] sm:$0xff] %v9369
    %9498 = vst [vmem:[#allocation3 + $0x98] sm:$0xff] %v9370
    %9499 = vst [vmem:[#allocation3 + $0xa0] sm:$0xff] %v9371
    %9500 = vst [vmem:[#allocation3 + $0xa8] sm:$0xff] %v9372
    %9501 = vst [vmem:[#allocation3 + $0xb0] sm:$0xff] %v9373
    %9502 = vst [vmem:[#allocation3 + $0xb8] sm:$0xff] %v9374
    %9503 = vst [vmem:[#allocation3 + $0xc0] sm:$0xff] %v9375
    %9504 = vst [vmem:[#allocation3 + $0xc8] sm:$0xff] %v9376
    %9505 = vst [vmem:[#allocation3 + $0xd0] sm:$0xff] %v9377
    %9506 = vst [vmem:[#allocation3 + $0xd8] sm:$0xff] %v9378
    %9507 = vst [vmem:[#allocation3 + $0xe0] sm:$0xff] %v9379
    %9508 = vst [vmem:[#allocation3 + $0xe8] sm:$0xff] %v9380
    %9509 = vst [vmem:[#allocation3 + $0xf0] sm:$0xff] %v9381
    %9510 = vst [vmem:[#allocation3 + $0xf8] sm:$0xff] %v9382
    %9511 = vst [vmem:[#allocation3 + $0x100] sm:$0xff] %v9383
    %9512 = vst [vmem:[#allocation3 + $0x108] sm:$0xff] %v9384
    %9513 = vst [vmem:[#allocation3 + $0x110] sm:$0xff] %v9385
    %9514 = vst [vmem:[#allocation3 + $0x118] sm:$0xff] %v9386
    %9515 = vst [vmem:[#allocation3 + $0x120] sm:$0xff] %v9387
    %9516 = vst [vmem:[#allocation3 + $0x128] sm:$0xff] %v9388
    %9517 = vst [vmem:[#allocation3 + $0x130] sm:$0xff] %v9389
    %9518 = vst [vmem:[#allocation3 + $0x138] sm:$0xff] %v9390
    %9519 = vst [vmem:[#allocation3 + $0x140] sm:$0xff] %v9391
    %9520 = vst [vmem:[#allocation3 + $0x148] sm:$0xff] %v9392
    %9521 = vst [vmem:[#allocation3 + $0x150] sm:$0xff] %v9393
    %9522 = vst [vmem:[#allocation3 + $0x158] sm:$0xff] %v9394
    %9523 = vst [vmem:[#allocation3 + $0x160] sm:$0xff] %v9395
    %9524 = vst [vmem:[#allocation3 + $0x168] sm:$0xff] %v9396
    %9525 = vst [vmem:[#allocation3 + $0x170] sm:$0xff] %v9397
    %9526 = vst [vmem:[#allocation3 + $0x178] sm:$0xff] %v9398
    %9527 = vst [vmem:[#allocation3 + $0x180] sm:$0xff] %v9399
    %9528 = vst [vmem:[#allocation3 + $0x188] sm:$0xff] %v9400
    %9529 = vst [vmem:[#allocation3 + $0x190] sm:$0xff] %v9401
    %9530 = vst [vmem:[#allocation3 + $0x198] sm:$0xff] %v9402
    %9531 = vst [vmem:[#allocation3 + $0x1a0] sm:$0xff] %v9403
    %9532 = vst [vmem:[#allocation3 + $0x1a8] sm:$0xff] %v9404
    %9533 = vst [vmem:[#allocation3 + $0x1b0] sm:$0xff] %v9405
    %9534 = vst [vmem:[#allocation3 + $0x1b8] sm:$0xff] %v9406
    %9535 = vst [vmem:[#allocation3 + $0x1c0] sm:$0xff] %v9407
    %9536 = vst [vmem:[#allocation3 + $0x1c8] sm:$0xff] %v9408
    %9537 = vst [vmem:[#allocation3 + $0x1d0] sm:$0xff] %v9409
    %9538 = vst [vmem:[#allocation3 + $0x1d8] sm:$0xff] %v9410
    %9539 = vst [vmem:[#allocation3 + $0x1e0] sm:$0xff] %v9411
    %9540 = vst [vmem:[#allocation3 + $0x1e8] sm:$0xff] %v9412
    %9541 = vst [vmem:[#allocation3 + $0x1f0] sm:$0xff] %v9413
    %9542 = vst [vmem:[#allocation3 + $0x1f8] sm:$0xff] %v9414
    %9543 = vst [vmem:[#allocation3 + $0x200] sm:$0xff] %v9415
    %9544 = vst [vmem:[#allocation3 + $0x208] sm:$0xff] %v9416
    %9545 = vst [vmem:[#allocation3 + $0x210] sm:$0xff] %v9417
    %9546 = vst [vmem:[#allocation3 + $0x218] sm:$0xff] %v9418
    %9547 = vst [vmem:[#allocation3 + $0x220] sm:$0xff] %v9419
    %9548 = vst [vmem:[#allocation3 + $0x228] sm:$0xff] %v9420
    %9549 = vst [vmem:[#allocation3 + $0x230] sm:$0xff] %v9421
    %9550 = vst [vmem:[#allocation3 + $0x238] sm:$0xff] %v9422
    %9551 = vst [vmem:[#allocation3 + $0x240] sm:$0xff] %v9423
    %9552 = vst [vmem:[#allocation3 + $0x248] sm:$0xff] %v9424
    %9553 = vst [vmem:[#allocation3 + $0x250] sm:$0xff] %v9425
    %9554 = vst [vmem:[#allocation3 + $0x258] sm:$0xff] %v9426
    %9555 = vst [vmem:[#allocation3 + $0x260] sm:$0xff] %v9427
    %9556 = vst [vmem:[#allocation3 + $0x268] sm:$0xff] %v9428
    %9557 = vst [vmem:[#allocation3 + $0x270] sm:$0xff] %v9429
    %9558 = vst [vmem:[#allocation3 + $0x278] sm:$0xff] %v9430
    %9559 = vst [vmem:[#allocation3 + $0x280] sm:$0xff] %v9431
    %9560 = vst [vmem:[#allocation3 + $0x288] sm:$0xff] %v9432
    %9561 = vst [vmem:[#allocation3 + $0x290] sm:$0xff] %v9433
    %9562 = vst [vmem:[#allocation3 + $0x298] sm:$0xff] %v9434
    %9563 = vst [vmem:[#allocation3 + $0x2a0] sm:$0xff] %v9435
    %9564 = vst [vmem:[#allocation3 + $0x2a8] sm:$0xff] %v9436
    %9565 = vst [vmem:[#allocation3 + $0x2b0] sm:$0xff] %v9437
    %9566 = vst [vmem:[#allocation3 + $0x2b8] sm:$0xff] %v9438
    %9567 = vst [vmem:[#allocation3 + $0x2c0] sm:$0xff] %v9439
    %9568 = vst [vmem:[#allocation3 + $0x2c8] sm:$0xff] %v9440
    %9569 = vst [vmem:[#allocation3 + $0x2d0] sm:$0xff] %v9441
    %9570 = vst [vmem:[#allocation3 + $0x2d8] sm:$0xff] %v9442
    %9571 = vst [vmem:[#allocation3 + $0x2e0] sm:$0xff] %v9443
    %9572 = vst [vmem:[#allocation3 + $0x2e8] sm:$0xff] %v9444
    %9573 = vst [vmem:[#allocation3 + $0x2f0] sm:$0xff] %v9445
    %9574 = vst [vmem:[#allocation3 + $0x2f8] sm:$0xff] %v9446
    %9575 = vst [vmem:[#allocation3 + $0x300] sm:$0xff] %v9447
    %9576 = vst [vmem:[#allocation3 + $0x308] sm:$0xff] %v9448
    %9577 = vst [vmem:[#allocation3 + $0x310] sm:$0xff] %v9449
    %9578 = vst [vmem:[#allocation3 + $0x318] sm:$0xff] %v9450
    %9579 = vst [vmem:[#allocation3 + $0x320] sm:$0xff] %v9451
    %9580 = vst [vmem:[#allocation3 + $0x328] sm:$0xff] %v9452
    %9581 = vst [vmem:[#allocation3 + $0x330] sm:$0xff] %v9453
    %9582 = vst [vmem:[#allocation3 + $0x338] sm:$0xff] %v9454
    %9583 = vst [vmem:[#allocation3 + $0x340] sm:$0xff] %v9455
    %9584 = vst [vmem:[#allocation3 + $0x348] sm:$0xff] %v9456
    %9585 = vst [vmem:[#allocation3 + $0x350] sm:$0xff] %v9457
    %9586 = vst [vmem:[#allocation3 + $0x358] sm:$0xff] %v9458
    %9587 = vst [vmem:[#allocation3 + $0x360] sm:$0xff] %v9459
    %9588 = vst [vmem:[#allocation3 + $0x368] sm:$0xff] %v9460
    %9589 = vst [vmem:[#allocation3 + $0x370] sm:$0xff] %v9461
    %9590 = vst [vmem:[#allocation3 + $0x378] sm:$0xff] %v9462
    %9591 = vst [vmem:[#allocation3 + $0x380] sm:$0xff] %v9463
    %9592 = vst [vmem:[#allocation3 + $0x388] sm:$0xff] %v9464
    %9593 = vst [vmem:[#allocation3 + $0x390] sm:$0xff] %v9465
    %9594 = vst [vmem:[#allocation3 + $0x398] sm:$0xff] %v9466
    %9595 = vst [vmem:[#allocation3 + $0x3a0] sm:$0xff] %v9467
    %9596 = vst [vmem:[#allocation3 + $0x3a8] sm:$0xff] %v9468
    %9597 = vst [vmem:[#allocation3 + $0x3b0] sm:$0xff] %v9469
    %9598 = vst [vmem:[#allocation3 + $0x3b8] sm:$0xff] %v9470
    %9599 = vst [vmem:[#allocation3 + $0x3c0] sm:$0xff] %v9471
    %9600 = vst [vmem:[#allocation3 + $0x3c8] sm:$0xff] %v9472
    %9601 = vst [vmem:[#allocation3 + $0x3d0] sm:$0xff] %v9473
    %9602 = vst [vmem:[#allocation3 + $0x3d8] sm:$0xff] %v9474
    %9603 = vst [vmem:[#allocation3 + $0x3e0] sm:$0xff] %v9475
    %9604 = vst [vmem:[#allocation3 + $0x3e8] sm:$0xff] %v9476
    %9605 = vst [vmem:[#allocation3 + $0x3f0] sm:$0xff] %v9477
    %9606 = vst [vmem:[#allocation3 + $0x3f8] sm:$0xff] %v9478
    %v9607 = vld [vmem:[%s3] sm:$0xff]
    %v9608 = vld [vmem:[%s3 + $0x8] sm:$0xff]
    %v9609 = vld [vmem:[%s3 + $0x10] sm:$0xff]
    %v9610 = vld [vmem:[%s3 + $0x18] sm:$0xff]
    %v9611 = vld [vmem:[%s3 + $0x20] sm:$0xff]
    %v9612 = vld [vmem:[%s3 + $0x28] sm:$0xff]
    %v9613 = vld [vmem:[%s3 + $0x30] sm:$0xff]
    %v9614 = vld [vmem:[%s3 + $0x38] sm:$0xff]
    %v9615 = vld [vmem:[%s3 + $0x40] sm:$0xff]
    %v9616 = vld [vmem:[%s3 + $0x48] sm:$0xff]
    %v9617 = vld [vmem:[%s3 + $0x50] sm:$0xff]
    %v9618 = vld [vmem:[%s3 + $0x58] sm:$0xff]
    %v9619 = vld [vmem:[%s3 + $0x60] sm:$0xff]
    %v9620 = vld [vmem:[%s3 + $0x68] sm:$0xff]
    %v9621 = vld [vmem:[%s3 + $0x70] sm:$0xff]
    %v9622 = vld [vmem:[%s3 + $0x78] sm:$0xff]
    %v9623 = vld [vmem:[%s3 + $0x80] sm:$0xff]
    %v9624 = vld [vmem:[%s3 + $0x88] sm:$0xff]
    %v9625 = vld [vmem:[%s3 + $0x90] sm:$0xff]
    %v9626 = vld [vmem:[%s3 + $0x98] sm:$0xff]
    %v9627 = vld [vmem:[%s3 + $0xa0] sm:$0xff]
    %v9628 = vld [vmem:[%s3 + $0xa8] sm:$0xff]
    %v9629 = vld [vmem:[%s3 + $0xb0] sm:$0xff]
    %v9630 = vld [vmem:[%s3 + $0xb8] sm:$0xff]
    %v9631 = vld [vmem:[%s3 + $0xc0] sm:$0xff]
    %v9632 = vld [vmem:[%s3 + $0xc8] sm:$0xff]
    %v9633 = vld [vmem:[%s3 + $0xd0] sm:$0xff]
    %v9634 = vld [vmem:[%s3 + $0xd8] sm:$0xff]
    %v9635 = vld [vmem:[%s3 + $0xe0] sm:$0xff]
    %v9636 = vld [vmem:[%s3 + $0xe8] sm:$0xff]
    %v9637 = vld [vmem:[%s3 + $0xf0] sm:$0xff]
    %v9638 = vld [vmem:[%s3 + $0xf8] sm:$0xff]
    %v9639 = vld [vmem:[%s3 + $0x100] sm:$0xff]
    %v9640 = vld [vmem:[%s3 + $0x108] sm:$0xff]
    %v9641 = vld [vmem:[%s3 + $0x110] sm:$0xff]
    %v9642 = vld [vmem:[%s3 + $0x118] sm:$0xff]
    %v9643 = vld [vmem:[%s3 + $0x120] sm:$0xff]
    %v9644 = vld [vmem:[%s3 + $0x128] sm:$0xff]
    %v9645 = vld [vmem:[%s3 + $0x130] sm:$0xff]
    %v9646 = vld [vmem:[%s3 + $0x138] sm:$0xff]
    %v9647 = vld [vmem:[%s3 + $0x140] sm:$0xff]
    %v9648 = vld [vmem:[%s3 + $0x148] sm:$0xff]
    %v9649 = vld [vmem:[%s3 + $0x150] sm:$0xff]
    %v9650 = vld [vmem:[%s3 + $0x158] sm:$0xff]
    %v9651 = vld [vmem:[%s3 + $0x160] sm:$0xff]
    %v9652 = vld [vmem:[%s3 + $0x168] sm:$0xff]
    %v9653 = vld [vmem:[%s3 + $0x170] sm:$0xff]
    %v9654 = vld [vmem:[%s3 + $0x178] sm:$0xff]
    %v9655 = vld [vmem:[%s3 + $0x180] sm:$0xff]
    %v9656 = vld [vmem:[%s3 + $0x188] sm:$0xff]
    %v9657 = vld [vmem:[%s3 + $0x190] sm:$0xff]
    %v9658 = vld [vmem:[%s3 + $0x198] sm:$0xff]
    %v9659 = vld [vmem:[%s3 + $0x1a0] sm:$0xff]
    %v9660 = vld [vmem:[%s3 + $0x1a8] sm:$0xff]
    %v9661 = vld [vmem:[%s3 + $0x1b0] sm:$0xff]
    %v9662 = vld [vmem:[%s3 + $0x1b8] sm:$0xff]
    %v9663 = vld [vmem:[%s3 + $0x1c0] sm:$0xff]
    %v9664 = vld [vmem:[%s3 + $0x1c8] sm:$0xff]
    %v9665 = vld [vmem:[%s3 + $0x1d0] sm:$0xff]
    %v9666 = vld [vmem:[%s3 + $0x1d8] sm:$0xff]
    %v9667 = vld [vmem:[%s3 + $0x1e0] sm:$0xff]
    %v9668 = vld [vmem:[%s3 + $0x1e8] sm:$0xff]
    %v9669 = vld [vmem:[%s3 + $0x1f0] sm:$0xff]
    %v9670 = vld [vmem:[%s3 + $0x1f8] sm:$0xff]
    %v9671 = vld [vmem:[%s3 + $0x200] sm:$0xff]
    %v9672 = vld [vmem:[%s3 + $0x208] sm:$0xff]
    %v9673 = vld [vmem:[%s3 + $0x210] sm:$0xff]
    %v9674 = vld [vmem:[%s3 + $0x218] sm:$0xff]
    %v9675 = vld [vmem:[%s3 + $0x220] sm:$0xff]
    %v9676 = vld [vmem:[%s3 + $0x228] sm:$0xff]
    %v9677 = vld [vmem:[%s3 + $0x230] sm:$0xff]
    %v9678 = vld [vmem:[%s3 + $0x238] sm:$0xff]
    %v9679 = vld [vmem:[%s3 + $0x240] sm:$0xff]
    %v9680 = vld [vmem:[%s3 + $0x248] sm:$0xff]
    %v9681 = vld [vmem:[%s3 + $0x250] sm:$0xff]
    %v9682 = vld [vmem:[%s3 + $0x258] sm:$0xff]
    %v9683 = vld [vmem:[%s3 + $0x260] sm:$0xff]
    %v9684 = vld [vmem:[%s3 + $0x268] sm:$0xff]
    %v9685 = vld [vmem:[%s3 + $0x270] sm:$0xff]
    %v9686 = vld [vmem:[%s3 + $0x278] sm:$0xff]
    %v9687 = vld [vmem:[%s3 + $0x280] sm:$0xff]
    %v9688 = vld [vmem:[%s3 + $0x288] sm:$0xff]
    %v9689 = vld [vmem:[%s3 + $0x290] sm:$0xff]
    %v9690 = vld [vmem:[%s3 + $0x298] sm:$0xff]
    %v9691 = vld [vmem:[%s3 + $0x2a0] sm:$0xff]
    %v9692 = vld [vmem:[%s3 + $0x2a8] sm:$0xff]
    %v9693 = vld [vmem:[%s3 + $0x2b0] sm:$0xff]
    %v9694 = vld [vmem:[%s3 + $0x2b8] sm:$0xff]
    %v9695 = vld [vmem:[%s3 + $0x2c0] sm:$0xff]
    %v9696 = vld [vmem:[%s3 + $0x2c8] sm:$0xff]
    %v9697 = vld [vmem:[%s3 + $0x2d0] sm:$0xff]
    %v9698 = vld [vmem:[%s3 + $0x2d8] sm:$0xff]
    %v9699 = vld [vmem:[%s3 + $0x2e0] sm:$0xff]
    %v9700 = vld [vmem:[%s3 + $0x2e8] sm:$0xff]
    %v9701 = vld [vmem:[%s3 + $0x2f0] sm:$0xff]
    %v9702 = vld [vmem:[%s3 + $0x2f8] sm:$0xff]
    %v9703 = vld [vmem:[%s3 + $0x300] sm:$0xff]
    %v9704 = vld [vmem:[%s3 + $0x308] sm:$0xff]
    %v9705 = vld [vmem:[%s3 + $0x310] sm:$0xff]
    %v9706 = vld [vmem:[%s3 + $0x318] sm:$0xff]
    %v9707 = vld [vmem:[%s3 + $0x320] sm:$0xff]
    %v9708 = vld [vmem:[%s3 + $0x328] sm:$0xff]
    %v9709 = vld [vmem:[%s3 + $0x330] sm:$0xff]
    %v9710 = vld [vmem:[%s3 + $0x338] sm:$0xff]
    %v9711 = vld [vmem:[%s3 + $0x340] sm:$0xff]
    %v9712 = vld [vmem:[%s3 + $0x348] sm:$0xff]
    %v9713 = vld [vmem:[%s3 + $0x350] sm:$0xff]
    %v9714 = vld [vmem:[%s3 + $0x358] sm:$0xff]
    %v9715 = vld [vmem:[%s3 + $0x360] sm:$0xff]
    %v9716 = vld [vmem:[%s3 + $0x368] sm:$0xff]
    %v9717 = vld [vmem:[%s3 + $0x370] sm:$0xff]
    %v9718 = vld [vmem:[%s3 + $0x378] sm:$0xff]
    %v9719 = vld [vmem:[%s3 + $0x380] sm:$0xff]
    %v9720 = vld [vmem:[%s3 + $0x388] sm:$0xff]
    %v9721 = vld [vmem:[%s3 + $0x390] sm:$0xff]
    %v9722 = vld [vmem:[%s3 + $0x398] sm:$0xff]
    %v9723 = vld [vmem:[%s3 + $0x3a0] sm:$0xff]
    %v9724 = vld [vmem:[%s3 + $0x3a8] sm:$0xff]
    %v9725 = vld [vmem:[%s3 + $0x3b0] sm:$0xff]
    %v9726 = vld [vmem:[%s3 + $0x3b8] sm:$0xff]
    %v9727 = vld [vmem:[%s3 + $0x3c0] sm:$0xff]
    %v9728 = vld [vmem:[%s3 + $0x3c8] sm:$0xff]
    %v9729 = vld [vmem:[%s3 + $0x3d0] sm:$0xff]
    %v9730 = vld [vmem:[%s3 + $0x3d8] sm:$0xff]
    %v9731 = vld [vmem:[%s3 + $0x3e0] sm:$0xff]
    %v9732 = vld [vmem:[%s3 + $0x3e8] sm:$0xff]
    %v9733 = vld [vmem:[%s3 + $0x3f0] sm:$0xff]
    %v9734 = vld [vmem:[%s3 + $0x3f8] sm:$0xff]
    %9736 = vset.pattern.permute.xlu0 0
    %9737 = vperm.xlu0 %9736, %v9607
    %v9738 = vpop.permute.xlu0 %9737
    %9741 = vset.pattern.permute.xlu0 0
    %9742 = vperm.xlu0 %9741, %v9608
    %v9743 = vpop.permute.xlu0 %9742
    %9746 = vset.pattern.permute.xlu0 0
    %9747 = vperm.xlu0 %9746, %v9609
    %v9748 = vpop.permute.xlu0 %9747
    %9751 = vset.pattern.permute.xlu0 0
    %9752 = vperm.xlu0 %9751, %v9610
    %v9753 = vpop.permute.xlu0 %9752
    %9756 = vset.pattern.permute.xlu0 0
    %9757 = vperm.xlu0 %9756, %v9611
    %v9758 = vpop.permute.xlu0 %9757
    %9761 = vset.pattern.permute.xlu0 0
    %9762 = vperm.xlu0 %9761, %v9612
    %v9763 = vpop.permute.xlu0 %9762
    %9766 = vset.pattern.permute.xlu0 0
    %9767 = vperm.xlu0 %9766, %v9613
    %v9768 = vpop.permute.xlu0 %9767
    %9771 = vset.pattern.permute.xlu0 0
    %9772 = vperm.xlu0 %9771, %v9614
    %v9773 = vpop.permute.xlu0 %9772
    %9776 = vset.pattern.permute.xlu0 0
    %9777 = vperm.xlu0 %9776, %v9615
    %v9778 = vpop.permute.xlu0 %9777
    %9781 = vset.pattern.permute.xlu0 0
    %9782 = vperm.xlu0 %9781, %v9616
    %v9783 = vpop.permute.xlu0 %9782
    %9786 = vset.pattern.permute.xlu0 0
    %9787 = vperm.xlu0 %9786, %v9617
    %v9788 = vpop.permute.xlu0 %9787
    %9791 = vset.pattern.permute.xlu0 0
    %9792 = vperm.xlu0 %9791, %v9618
    %v9793 = vpop.permute.xlu0 %9792
    %9796 = vset.pattern.permute.xlu0 0
    %9797 = vperm.xlu0 %9796, %v9619
    %v9798 = vpop.permute.xlu0 %9797
    %9801 = vset.pattern.permute.xlu0 0
    %9802 = vperm.xlu0 %9801, %v9620
    %v9803 = vpop.permute.xlu0 %9802
    %9806 = vset.pattern.permute.xlu0 0
    %9807 = vperm.xlu0 %9806, %v9621
    %v9808 = vpop.permute.xlu0 %9807
    %9811 = vset.pattern.permute.xlu0 0
    %9812 = vperm.xlu0 %9811, %v9622
    %v9813 = vpop.permute.xlu0 %9812
    %9816 = vset.pattern.permute.xlu0 0
    %9817 = vperm.xlu0 %9816, %v9623
    %v9818 = vpop.permute.xlu0 %9817
    %9821 = vset.pattern.permute.xlu0 0
    %9822 = vperm.xlu0 %9821, %v9624
    %v9823 = vpop.permute.xlu0 %9822
    %9826 = vset.pattern.permute.xlu0 0
    %9827 = vperm.xlu0 %9826, %v9625
    %v9828 = vpop.permute.xlu0 %9827
    %9831 = vset.pattern.permute.xlu0 0
    %9832 = vperm.xlu0 %9831, %v9626
    %v9833 = vpop.permute.xlu0 %9832
    %9836 = vset.pattern.permute.xlu0 0
    %9837 = vperm.xlu0 %9836, %v9627
    %v9838 = vpop.permute.xlu0 %9837
    %9841 = vset.pattern.permute.xlu0 0
    %9842 = vperm.xlu0 %9841, %v9628
    %v9843 = vpop.permute.xlu0 %9842
    %9846 = vset.pattern.permute.xlu0 0
    %9847 = vperm.xlu0 %9846, %v9629
    %v9848 = vpop.permute.xlu0 %9847
    %9851 = vset.pattern.permute.xlu0 0
    %9852 = vperm.xlu0 %9851, %v9630
    %v9853 = vpop.permute.xlu0 %9852
    %9856 = vset.pattern.permute.xlu0 0
    %9857 = vperm.xlu0 %9856, %v9631
    %v9858 = vpop.permute.xlu0 %9857
    %9861 = vset.pattern.permute.xlu0 0
    %9862 = vperm.xlu0 %9861, %v9632
    %v9863 = vpop.permute.xlu0 %9862
    %9866 = vset.pattern.permute.xlu0 0
    %9867 = vperm.xlu0 %9866, %v9633
    %v9868 = vpop.permute.xlu0 %9867
    %9871 = vset.pattern.permute.xlu0 0
    %9872 = vperm.xlu0 %9871, %v9634
    %v9873 = vpop.permute.xlu0 %9872
    %9876 = vset.pattern.permute.xlu0 0
    %9877 = vperm.xlu0 %9876, %v9635
    %v9878 = vpop.permute.xlu0 %9877
    %9881 = vset.pattern.permute.xlu0 0
    %9882 = vperm.xlu0 %9881, %v9636
    %v9883 = vpop.permute.xlu0 %9882
    %9886 = vset.pattern.permute.xlu0 0
    %9887 = vperm.xlu0 %9886, %v9637
    %v9888 = vpop.permute.xlu0 %9887
    %9891 = vset.pattern.permute.xlu0 0
    %9892 = vperm.xlu0 %9891, %v9638
    %v9893 = vpop.permute.xlu0 %9892
    %9896 = vset.pattern.permute.xlu0 0
    %9897 = vperm.xlu0 %9896, %v9639
    %v9898 = vpop.permute.xlu0 %9897
    %9901 = vset.pattern.permute.xlu0 0
    %9902 = vperm.xlu0 %9901, %v9640
    %v9903 = vpop.permute.xlu0 %9902
    %9906 = vset.pattern.permute.xlu0 0
    %9907 = vperm.xlu0 %9906, %v9641
    %v9908 = vpop.permute.xlu0 %9907
    %9911 = vset.pattern.permute.xlu0 0
    %9912 = vperm.xlu0 %9911, %v9642
    %v9913 = vpop.permute.xlu0 %9912
    %9916 = vset.pattern.permute.xlu0 0
    %9917 = vperm.xlu0 %9916, %v9643
    %v9918 = vpop.permute.xlu0 %9917
    %9921 = vset.pattern.permute.xlu0 0
    %9922 = vperm.xlu0 %9921, %v9644
    %v9923 = vpop.permute.xlu0 %9922
    %9926 = vset.pattern.permute.xlu0 0
    %9927 = vperm.xlu0 %9926, %v9645
    %v9928 = vpop.permute.xlu0 %9927
    %9931 = vset.pattern.permute.xlu0 0
    %9932 = vperm.xlu0 %9931, %v9646
    %v9933 = vpop.permute.xlu0 %9932
    %9936 = vset.pattern.permute.xlu0 0
    %9937 = vperm.xlu0 %9936, %v9647
    %v9938 = vpop.permute.xlu0 %9937
    %9941 = vset.pattern.permute.xlu0 0
    %9942 = vperm.xlu0 %9941, %v9648
    %v9943 = vpop.permute.xlu0 %9942
    %9946 = vset.pattern.permute.xlu0 0
    %9947 = vperm.xlu0 %9946, %v9649
    %v9948 = vpop.permute.xlu0 %9947
    %9951 = vset.pattern.permute.xlu0 0
    %9952 = vperm.xlu0 %9951, %v9650
    %v9953 = vpop.permute.xlu0 %9952
    %9956 = vset.pattern.permute.xlu0 0
    %9957 = vperm.xlu0 %9956, %v9651
    %v9958 = vpop.permute.xlu0 %9957
    %9961 = vset.pattern.permute.xlu0 0
    %9962 = vperm.xlu0 %9961, %v9652
    %v9963 = vpop.permute.xlu0 %9962
    %9966 = vset.pattern.permute.xlu0 0
    %9967 = vperm.xlu0 %9966, %v9653
    %v9968 = vpop.permute.xlu0 %9967
    %9971 = vset.pattern.permute.xlu0 0
    %9972 = vperm.xlu0 %9971, %v9654
    %v9973 = vpop.permute.xlu0 %9972
    %9976 = vset.pattern.permute.xlu0 0
    %9977 = vperm.xlu0 %9976, %v9655
    %v9978 = vpop.permute.xlu0 %9977
    %9981 = vset.pattern.permute.xlu0 0
    %9982 = vperm.xlu0 %9981, %v9656
    %v9983 = vpop.permute.xlu0 %9982
    %9986 = vset.pattern.permute.xlu0 0
    %9987 = vperm.xlu0 %9986, %v9657
    %v9988 = vpop.permute.xlu0 %9987
    %9991 = vset.pattern.permute.xlu0 0
    %9992 = vperm.xlu0 %9991, %v9658
    %v9993 = vpop.permute.xlu0 %9992
    %9996 = vset.pattern.permute.xlu0 0
    %9997 = vperm.xlu0 %9996, %v9659
    %v9998 = vpop.permute.xlu0 %9997
    %10001 = vset.pattern.permute.xlu0 0
    %10002 = vperm.xlu0 %10001, %v9660
    %v10003 = vpop.permute.xlu0 %10002
    %10006 = vset.pattern.permute.xlu0 0
    %10007 = vperm.xlu0 %10006, %v9661
    %v10008 = vpop.permute.xlu0 %10007
    %10011 = vset.pattern.permute.xlu0 0
    %10012 = vperm.xlu0 %10011, %v9662
    %v10013 = vpop.permute.xlu0 %10012
    %10016 = vset.pattern.permute.xlu0 0
    %10017 = vperm.xlu0 %10016, %v9663
    %v10018 = vpop.permute.xlu0 %10017
    %10021 = vset.pattern.permute.xlu0 0
    %10022 = vperm.xlu0 %10021, %v9664
    %v10023 = vpop.permute.xlu0 %10022
    %10026 = vset.pattern.permute.xlu0 0
    %10027 = vperm.xlu0 %10026, %v9665
    %v10028 = vpop.permute.xlu0 %10027
    %10031 = vset.pattern.permute.xlu0 0
    %10032 = vperm.xlu0 %10031, %v9666
    %v10033 = vpop.permute.xlu0 %10032
    %10036 = vset.pattern.permute.xlu0 0
    %10037 = vperm.xlu0 %10036, %v9667
    %v10038 = vpop.permute.xlu0 %10037
    %10041 = vset.pattern.permute.xlu0 0
    %10042 = vperm.xlu0 %10041, %v9668
    %v10043 = vpop.permute.xlu0 %10042
    %10046 = vset.pattern.permute.xlu0 0
    %10047 = vperm.xlu0 %10046, %v9669
    %v10048 = vpop.permute.xlu0 %10047
    %10051 = vset.pattern.permute.xlu0 0
    %10052 = vperm.xlu0 %10051, %v9670
    %v10053 = vpop.permute.xlu0 %10052
    %10056 = vset.pattern.permute.xlu0 0
    %10057 = vperm.xlu0 %10056, %v9671
    %v10058 = vpop.permute.xlu0 %10057
    %10061 = vset.pattern.permute.xlu0 0
    %10062 = vperm.xlu0 %10061, %v9672
    %v10063 = vpop.permute.xlu0 %10062
    %10066 = vset.pattern.permute.xlu0 0
    %10067 = vperm.xlu0 %10066, %v9673
    %v10068 = vpop.permute.xlu0 %10067
    %10071 = vset.pattern.permute.xlu0 0
    %10072 = vperm.xlu0 %10071, %v9674
    %v10073 = vpop.permute.xlu0 %10072
    %10076 = vset.pattern.permute.xlu0 0
    %10077 = vperm.xlu0 %10076, %v9675
    %v10078 = vpop.permute.xlu0 %10077
    %10081 = vset.pattern.permute.xlu0 0
    %10082 = vperm.xlu0 %10081, %v9676
    %v10083 = vpop.permute.xlu0 %10082
    %10086 = vset.pattern.permute.xlu0 0
    %10087 = vperm.xlu0 %10086, %v9677
    %v10088 = vpop.permute.xlu0 %10087
    %10091 = vset.pattern.permute.xlu0 0
    %10092 = vperm.xlu0 %10091, %v9678
    %v10093 = vpop.permute.xlu0 %10092
    %10096 = vset.pattern.permute.xlu0 0
    %10097 = vperm.xlu0 %10096, %v9679
    %v10098 = vpop.permute.xlu0 %10097
    %10101 = vset.pattern.permute.xlu0 0
    %10102 = vperm.xlu0 %10101, %v9680
    %v10103 = vpop.permute.xlu0 %10102
    %10106 = vset.pattern.permute.xlu0 0
    %10107 = vperm.xlu0 %10106, %v9681
    %v10108 = vpop.permute.xlu0 %10107
    %10111 = vset.pattern.permute.xlu0 0
    %10112 = vperm.xlu0 %10111, %v9682
    %v10113 = vpop.permute.xlu0 %10112
    %10116 = vset.pattern.permute.xlu0 0
    %10117 = vperm.xlu0 %10116, %v9683
    %v10118 = vpop.permute.xlu0 %10117
    %10121 = vset.pattern.permute.xlu0 0
    %10122 = vperm.xlu0 %10121, %v9684
    %v10123 = vpop.permute.xlu0 %10122
    %10126 = vset.pattern.permute.xlu0 0
    %10127 = vperm.xlu0 %10126, %v9685
    %v10128 = vpop.permute.xlu0 %10127
    %10131 = vset.pattern.permute.xlu0 0
    %10132 = vperm.xlu0 %10131, %v9686
    %v10133 = vpop.permute.xlu0 %10132
    %10136 = vset.pattern.permute.xlu0 0
    %10137 = vperm.xlu0 %10136, %v9687
    %v10138 = vpop.permute.xlu0 %10137
    %10141 = vset.pattern.permute.xlu0 0
    %10142 = vperm.xlu0 %10141, %v9688
    %v10143 = vpop.permute.xlu0 %10142
    %10146 = vset.pattern.permute.xlu0 0
    %10147 = vperm.xlu0 %10146, %v9689
    %v10148 = vpop.permute.xlu0 %10147
    %10151 = vset.pattern.permute.xlu0 0
    %10152 = vperm.xlu0 %10151, %v9690
    %v10153 = vpop.permute.xlu0 %10152
    %10156 = vset.pattern.permute.xlu0 0
    %10157 = vperm.xlu0 %10156, %v9691
    %v10158 = vpop.permute.xlu0 %10157
    %10161 = vset.pattern.permute.xlu0 0
    %10162 = vperm.xlu0 %10161, %v9692
    %v10163 = vpop.permute.xlu0 %10162
    %10166 = vset.pattern.permute.xlu0 0
    %10167 = vperm.xlu0 %10166, %v9693
    %v10168 = vpop.permute.xlu0 %10167
    %10171 = vset.pattern.permute.xlu0 0
    %10172 = vperm.xlu0 %10171, %v9694
    %v10173 = vpop.permute.xlu0 %10172
    %10176 = vset.pattern.permute.xlu0 0
    %10177 = vperm.xlu0 %10176, %v9695
    %v10178 = vpop.permute.xlu0 %10177
    %10181 = vset.pattern.permute.xlu0 0
    %10182 = vperm.xlu0 %10181, %v9696
    %v10183 = vpop.permute.xlu0 %10182
    %10186 = vset.pattern.permute.xlu0 0
    %10187 = vperm.xlu0 %10186, %v9697
    %v10188 = vpop.permute.xlu0 %10187
    %10191 = vset.pattern.permute.xlu0 0
    %10192 = vperm.xlu0 %10191, %v9698
    %v10193 = vpop.permute.xlu0 %10192
    %10196 = vset.pattern.permute.xlu0 0
    %10197 = vperm.xlu0 %10196, %v9699
    %v10198 = vpop.permute.xlu0 %10197
    %10201 = vset.pattern.permute.xlu0 0
    %10202 = vperm.xlu0 %10201, %v9700
    %v10203 = vpop.permute.xlu0 %10202
    %10206 = vset.pattern.permute.xlu0 0
    %10207 = vperm.xlu0 %10206, %v9701
    %v10208 = vpop.permute.xlu0 %10207
    %10211 = vset.pattern.permute.xlu0 0
    %10212 = vperm.xlu0 %10211, %v9702
    %v10213 = vpop.permute.xlu0 %10212
    %10216 = vset.pattern.permute.xlu0 0
    %10217 = vperm.xlu0 %10216, %v9703
    %v10218 = vpop.permute.xlu0 %10217
    %10221 = vset.pattern.permute.xlu0 0
    %10222 = vperm.xlu0 %10221, %v9704
    %v10223 = vpop.permute.xlu0 %10222
    %10226 = vset.pattern.permute.xlu0 0
    %10227 = vperm.xlu0 %10226, %v9705
    %v10228 = vpop.permute.xlu0 %10227
    %10231 = vset.pattern.permute.xlu0 0
    %10232 = vperm.xlu0 %10231, %v9706
    %v10233 = vpop.permute.xlu0 %10232
    %10236 = vset.pattern.permute.xlu0 0
    %10237 = vperm.xlu0 %10236, %v9707
    %v10238 = vpop.permute.xlu0 %10237
    %10241 = vset.pattern.permute.xlu0 0
    %10242 = vperm.xlu0 %10241, %v9708
    %v10243 = vpop.permute.xlu0 %10242
    %10246 = vset.pattern.permute.xlu0 0
    %10247 = vperm.xlu0 %10246, %v9709
    %v10248 = vpop.permute.xlu0 %10247
    %10251 = vset.pattern.permute.xlu0 0
    %10252 = vperm.xlu0 %10251, %v9710
    %v10253 = vpop.permute.xlu0 %10252
    %10256 = vset.pattern.permute.xlu0 0
    %10257 = vperm.xlu0 %10256, %v9711
    %v10258 = vpop.permute.xlu0 %10257
    %10261 = vset.pattern.permute.xlu0 0
    %10262 = vperm.xlu0 %10261, %v9712
    %v10263 = vpop.permute.xlu0 %10262
    %10266 = vset.pattern.permute.xlu0 0
    %10267 = vperm.xlu0 %10266, %v9713
    %v10268 = vpop.permute.xlu0 %10267
    %10271 = vset.pattern.permute.xlu0 0
    %10272 = vperm.xlu0 %10271, %v9714
    %v10273 = vpop.permute.xlu0 %10272
    %10276 = vset.pattern.permute.xlu0 0
    %10277 = vperm.xlu0 %10276, %v9715
    %v10278 = vpop.permute.xlu0 %10277
    %10281 = vset.pattern.permute.xlu0 0
    %10282 = vperm.xlu0 %10281, %v9716
    %v10283 = vpop.permute.xlu0 %10282
    %10286 = vset.pattern.permute.xlu0 0
    %10287 = vperm.xlu0 %10286, %v9717
    %v10288 = vpop.permute.xlu0 %10287
    %10291 = vset.pattern.permute.xlu0 0
    %10292 = vperm.xlu0 %10291, %v9718
    %v10293 = vpop.permute.xlu0 %10292
    %10296 = vset.pattern.permute.xlu0 0
    %10297 = vperm.xlu0 %10296, %v9719
    %v10298 = vpop.permute.xlu0 %10297
    %10301 = vset.pattern.permute.xlu0 0
    %10302 = vperm.xlu0 %10301, %v9720
    %v10303 = vpop.permute.xlu0 %10302
    %10306 = vset.pattern.permute.xlu0 0
    %10307 = vperm.xlu0 %10306, %v9721
    %v10308 = vpop.permute.xlu0 %10307
    %10311 = vset.pattern.permute.xlu0 0
    %10312 = vperm.xlu0 %10311, %v9722
    %v10313 = vpop.permute.xlu0 %10312
    %10316 = vset.pattern.permute.xlu0 0
    %10317 = vperm.xlu0 %10316, %v9723
    %v10318 = vpop.permute.xlu0 %10317
    %10321 = vset.pattern.permute.xlu0 0
    %10322 = vperm.xlu0 %10321, %v9724
    %v10323 = vpop.permute.xlu0 %10322
    %10326 = vset.pattern.permute.xlu0 0
    %10327 = vperm.xlu0 %10326, %v9725
    %v10328 = vpop.permute.xlu0 %10327
    %10331 = vset.pattern.permute.xlu0 0
    %10332 = vperm.xlu0 %10331, %v9726
    %v10333 = vpop.permute.xlu0 %10332
    %10336 = vset.pattern.permute.xlu0 0
    %10337 = vperm.xlu0 %10336, %v9727
    %v10338 = vpop.permute.xlu0 %10337
    %10341 = vset.pattern.permute.xlu0 0
    %10342 = vperm.xlu0 %10341, %v9728
    %v10343 = vpop.permute.xlu0 %10342
    %10346 = vset.pattern.permute.xlu0 0
    %10347 = vperm.xlu0 %10346, %v9729
    %v10348 = vpop.permute.xlu0 %10347
    %10351 = vset.pattern.permute.xlu0 0
    %10352 = vperm.xlu0 %10351, %v9730
    %v10353 = vpop.permute.xlu0 %10352
    %10356 = vset.pattern.permute.xlu0 0
    %10357 = vperm.xlu0 %10356, %v9731
    %v10358 = vpop.permute.xlu0 %10357
    %10361 = vset.pattern.permute.xlu0 0
    %10362 = vperm.xlu0 %10361, %v9732
    %v10363 = vpop.permute.xlu0 %10362
    %10366 = vset.pattern.permute.xlu0 0
    %10367 = vperm.xlu0 %10366, %v9733
    %v10368 = vpop.permute.xlu0 %10367
    %10371 = vset.pattern.permute.xlu0 0
    %10372 = vperm.xlu0 %10371, %v9734
    %v10373 = vpop.permute.xlu0 %10372
    %v10375 = vmul.f32 %v9351, %v9738
    %v10376 = vmul.f32 %v9352, %v9743
    %v10377 = vmul.f32 %v9353, %v9748
    %v10378 = vmul.f32 %v9354, %v9753
    %v10379 = vmul.f32 %v9355, %v9758
    %v10380 = vmul.f32 %v9356, %v9763
    %v10381 = vmul.f32 %v9357, %v9768
    %v10382 = vmul.f32 %v9358, %v9773
    %v10383 = vmul.f32 %v9359, %v9778
    %v10384 = vmul.f32 %v9360, %v9783
    %v10385 = vmul.f32 %v9361, %v9788
    %v10386 = vmul.f32 %v9362, %v9793
    %v10387 = vmul.f32 %v9363, %v9798
    %v10388 = vmul.f32 %v9364, %v9803
    %v10389 = vmul.f32 %v9365, %v9808
    %v10390 = vmul.f32 %v9366, %v9813
    %v10391 = vmul.f32 %v9367, %v9818
    %v10392 = vmul.f32 %v9368, %v9823
    %v10393 = vmul.f32 %v9369, %v9828
    %v10394 = vmul.f32 %v9370, %v9833
    %v10395 = vmul.f32 %v9371, %v9838
    %v10396 = vmul.f32 %v9372, %v9843
    %v10397 = vmul.f32 %v9373, %v9848
    %v10398 = vmul.f32 %v9374, %v9853
    %v10399 = vmul.f32 %v9375, %v9858
    %v10400 = vmul.f32 %v9376, %v9863
    %v10401 = vmul.f32 %v9377, %v9868
    %v10402 = vmul.f32 %v9378, %v9873
    %v10403 = vmul.f32 %v9379, %v9878
    %v10404 = vmul.f32 %v9380, %v9883
    %v10405 = vmul.f32 %v9381, %v9888
    %v10406 = vmul.f32 %v9382, %v9893
    %v10407 = vmul.f32 %v9383, %v9898
    %v10408 = vmul.f32 %v9384, %v9903
    %v10409 = vmul.f32 %v9385, %v9908
    %v10410 = vmul.f32 %v9386, %v9913
    %v10411 = vmul.f32 %v9387, %v9918
    %v10412 = vmul.f32 %v9388, %v9923
    %v10413 = vmul.f32 %v9389, %v9928
    %v10414 = vmul.f32 %v9390, %v9933
    %v10415 = vmul.f32 %v9391, %v9938
    %v10416 = vmul.f32 %v9392, %v9943
    %v10417 = vmul.f32 %v9393, %v9948
    %v10418 = vmul.f32 %v9394, %v9953
    %v10419 = vmul.f32 %v9395, %v9958
    %v10420 = vmul.f32 %v9396, %v9963
    %v10421 = vmul.f32 %v9397, %v9968
    %v10422 = vmul.f32 %v9398, %v9973
    %v10423 = vmul.f32 %v9399, %v9978
    %v10424 = vmul.f32 %v9400, %v9983
    %v10425 = vmul.f32 %v9401, %v9988
    %v10426 = vmul.f32 %v9402, %v9993
    %v10427 = vmul.f32 %v9403, %v9998
    %v10428 = vmul.f32 %v9404, %v10003
    %v10429 = vmul.f32 %v9405, %v10008
    %v10430 = vmul.f32 %v9406, %v10013
    %v10431 = vmul.f32 %v9407, %v10018
    %v10432 = vmul.f32 %v9408, %v10023
    %v10433 = vmul.f32 %v9409, %v10028
    %v10434 = vmul.f32 %v9410, %v10033
    %v10435 = vmul.f32 %v9411, %v10038
    %v10436 = vmul.f32 %v9412, %v10043
    %v10437 = vmul.f32 %v9413, %v10048
    %v10438 = vmul.f32 %v9414, %v10053
    %v10439 = vmul.f32 %v9415, %v10058
    %v10440 = vmul.f32 %v9416, %v10063
    %v10441 = vmul.f32 %v9417, %v10068
    %v10442 = vmul.f32 %v9418, %v10073
    %v10443 = vmul.f32 %v9419, %v10078
    %v10444 = vmul.f32 %v9420, %v10083
    %v10445 = vmul.f32 %v9421, %v10088
    %v10446 = vmul.f32 %v9422, %v10093
    %v10447 = vmul.f32 %v9423, %v10098
    %v10448 = vmul.f32 %v9424, %v10103
    %v10449 = vmul.f32 %v9425, %v10108
    %v10450 = vmul.f32 %v9426, %v10113
    %v10451 = vmul.f32 %v9427, %v10118
    %v10452 = vmul.f32 %v9428, %v10123
    %v10453 = vmul.f32 %v9429, %v10128
    %v10454 = vmul.f32 %v9430, %v10133
    %v10455 = vmul.f32 %v9431, %v10138
    %v10456 = vmul.f32 %v9432, %v10143
    %v10457 = vmul.f32 %v9433, %v10148
    %v10458 = vmul.f32 %v9434, %v10153
    %v10459 = vmul.f32 %v9435, %v10158
    %v10460 = vmul.f32 %v9436, %v10163
    %v10461 = vmul.f32 %v9437, %v10168
    %v10462 = vmul.f32 %v9438, %v10173
    %v10463 = vmul.f32 %v9439, %v10178
    %v10464 = vmul.f32 %v9440, %v10183
    %v10465 = vmul.f32 %v9441, %v10188
    %v10466 = vmul.f32 %v9442, %v10193
    %v10467 = vmul.f32 %v9443, %v10198
    %v10468 = vmul.f32 %v9444, %v10203
    %v10469 = vmul.f32 %v9445, %v10208
    %v10470 = vmul.f32 %v9446, %v10213
    %v10471 = vmul.f32 %v9447, %v10218
    %v10472 = vmul.f32 %v9448, %v10223
    %v10473 = vmul.f32 %v9449, %v10228
    %v10474 = vmul.f32 %v9450, %v10233
    %v10475 = vmul.f32 %v9451, %v10238
    %v10476 = vmul.f32 %v9452, %v10243
    %v10477 = vmul.f32 %v9453, %v10248
    %v10478 = vmul.f32 %v9454, %v10253
    %v10479 = vmul.f32 %v9455, %v10258
    %v10480 = vmul.f32 %v9456, %v10263
    %v10481 = vmul.f32 %v9457, %v10268
    %v10482 = vmul.f32 %v9458, %v10273
    %v10483 = vmul.f32 %v9459, %v10278
    %v10484 = vmul.f32 %v9460, %v10283
    %v10485 = vmul.f32 %v9461, %v10288
    %v10486 = vmul.f32 %v9462, %v10293
    %v10487 = vmul.f32 %v9463, %v10298
    %v10488 = vmul.f32 %v9464, %v10303
    %v10489 = vmul.f32 %v9465, %v10308
    %v10490 = vmul.f32 %v9466, %v10313
    %v10491 = vmul.f32 %v9467, %v10318
    %v10492 = vmul.f32 %v9468, %v10323
    %v10493 = vmul.f32 %v9469, %v10328
    %v10494 = vmul.f32 %v9470, %v10333
    %v10495 = vmul.f32 %v9471, %v10338
    %v10496 = vmul.f32 %v9472, %v10343
    %v10497 = vmul.f32 %v9473, %v10348
    %v10498 = vmul.f32 %v9474, %v10353
    %v10499 = vmul.f32 %v9475, %v10358
    %v10500 = vmul.f32 %v9476, %v10363
    %v10501 = vmul.f32 %v9477, %v10368
    %v10502 = vmul.f32 %v9478, %v10373
    %v10503 = vadd.f32 %v10375, %v10376
    %v10504 = vadd.f32 %v10503, %v10377
    %v10505 = vadd.f32 %v10504, %v10378
    %v10506 = vadd.f32 %v10505, %v10379
    %v10507 = vadd.f32 %v10506, %v10380
    %v10508 = vadd.f32 %v10507, %v10381
    %v10509 = vadd.f32 %v10508, %v10382
    %v10510 = vadd.f32 %v10509, %v10383
    %v10511 = vadd.f32 %v10510, %v10384
    %v10512 = vadd.f32 %v10511, %v10385
    %v10513 = vadd.f32 %v10512, %v10386
    %v10514 = vadd.f32 %v10513, %v10387
    %v10515 = vadd.f32 %v10514, %v10388
    %v10516 = vadd.f32 %v10515, %v10389
    %v10517 = vadd.f32 %v10516, %v10390
    %v10518 = vadd.f32 %v10517, %v10391
    %v10519 = vadd.f32 %v10518, %v10392
    %v10520 = vadd.f32 %v10519, %v10393
    %v10521 = vadd.f32 %v10520, %v10394
    %v10522 = vadd.f32 %v10521, %v10395
    %v10523 = vadd.f32 %v10522, %v10396
    %v10524 = vadd.f32 %v10523, %v10397
    %v10525 = vadd.f32 %v10524, %v10398
    %v10526 = vadd.f32 %v10525, %v10399
    %v10527 = vadd.f32 %v10526, %v10400
    %v10528 = vadd.f32 %v10527, %v10401
    %v10529 = vadd.f32 %v10528, %v10402
    %v10530 = vadd.f32 %v10529, %v10403
    %v10531 = vadd.f32 %v10530, %v10404
    %v10532 = vadd.f32 %v10531, %v10405
    %v10533 = vadd.f32 %v10532, %v10406
    %v10534 = vadd.f32 %v10533, %v10407
    %v10535 = vadd.f32 %v10534, %v10408
    %v10536 = vadd.f32 %v10535, %v10409
    %v10537 = vadd.f32 %v10536, %v10410
    %v10538 = vadd.f32 %v10537, %v10411
    %v10539 = vadd.f32 %v10538, %v10412
    %v10540 = vadd.f32 %v10539, %v10413
    %v10541 = vadd.f32 %v10540, %v10414
    %v10542 = vadd.f32 %v10541, %v10415
    %v10543 = vadd.f32 %v10542, %v10416
    %v10544 = vadd.f32 %v10543, %v10417
    %v10545 = vadd.f32 %v10544, %v10418
    %v10546 = vadd.f32 %v10545, %v10419
    %v10547 = vadd.f32 %v10546, %v10420
    %v10548 = vadd.f32 %v10547, %v10421
    %v10549 = vadd.f32 %v10548, %v10422
    %v10550 = vadd.f32 %v10549, %v10423
    %v10551 = vadd.f32 %v10550, %v10424
    %v10552 = vadd.f32 %v10551, %v10425
    %v10553 = vadd.f32 %v10552, %v10426
    %v10554 = vadd.f32 %v10553, %v10427
    %v10555 = vadd.f32 %v10554, %v10428
    %v10556 = vadd.f32 %v10555, %v10429
    %v10557 = vadd.f32 %v10556, %v10430
    %v10558 = vadd.f32 %v10557, %v10431
    %v10559 = vadd.f32 %v10558, %v10432
    %v10560 = vadd.f32 %v10559, %v10433
    %v10561 = vadd.f32 %v10560, %v10434
    %v10562 = vadd.f32 %v10561, %v10435
    %v10563 = vadd.f32 %v10562, %v10436
    %v10564 = vadd.f32 %v10563, %v10437
    %v10565 = vadd.f32 %v10564, %v10438
    %v10566 = vadd.f32 %v10565, %v10439
    %v10567 = vadd.f32 %v10566, %v10440
    %v10568 = vadd.f32 %v10567, %v10441
    %v10569 = vadd.f32 %v10568, %v10442
    %v10570 = vadd.f32 %v10569, %v10443
    %v10571 = vadd.f32 %v10570, %v10444
    %v10572 = vadd.f32 %v10571, %v10445
    %v10573 = vadd.f32 %v10572, %v10446
    %v10574 = vadd.f32 %v10573, %v10447
    %v10575 = vadd.f32 %v10574, %v10448
    %v10576 = vadd.f32 %v10575, %v10449
    %v10577 = vadd.f32 %v10576, %v10450
    %v10578 = vadd.f32 %v10577, %v10451
    %v10579 = vadd.f32 %v10578, %v10452
    %v10580 = vadd.f32 %v10579, %v10453
    %v10581 = vadd.f32 %v10580, %v10454
    %v10582 = vadd.f32 %v10581, %v10455
    %v10583 = vadd.f32 %v10582, %v10456
    %v10584 = vadd.f32 %v10583, %v10457
    %v10585 = vadd.f32 %v10584, %v10458
    %v10586 = vadd.f32 %v10585, %v10459
    %v10587 = vadd.f32 %v10586, %v10460
    %v10588 = vadd.f32 %v10587, %v10461
    %v10589 = vadd.f32 %v10588, %v10462
    %v10590 = vadd.f32 %v10589, %v10463
    %v10591 = vadd.f32 %v10590, %v10464
    %v10592 = vadd.f32 %v10591, %v10465
    %v10593 = vadd.f32 %v10592, %v10466
    %v10594 = vadd.f32 %v10593, %v10467
    %v10595 = vadd.f32 %v10594, %v10468
    %v10596 = vadd.f32 %v10595, %v10469
    %v10597 = vadd.f32 %v10596, %v10470
    %v10598 = vadd.f32 %v10597, %v10471
    %v10599 = vadd.f32 %v10598, %v10472
    %v10600 = vadd.f32 %v10599, %v10473
    %v10601 = vadd.f32 %v10600, %v10474
    %v10602 = vadd.f32 %v10601, %v10475
    %v10603 = vadd.f32 %v10602, %v10476
    %v10604 = vadd.f32 %v10603, %v10477
    %v10605 = vadd.f32 %v10604, %v10478
    %v10606 = vadd.f32 %v10605, %v10479
    %v10607 = vadd.f32 %v10606, %v10480
    %v10608 = vadd.f32 %v10607, %v10481
    %v10609 = vadd.f32 %v10608, %v10482
    %v10610 = vadd.f32 %v10609, %v10483
    %v10611 = vadd.f32 %v10610, %v10484
    %v10612 = vadd.f32 %v10611, %v10485
    %v10613 = vadd.f32 %v10612, %v10486
    %v10614 = vadd.f32 %v10613, %v10487
    %v10615 = vadd.f32 %v10614, %v10488
    %v10616 = vadd.f32 %v10615, %v10489
    %v10617 = vadd.f32 %v10616, %v10490
    %v10618 = vadd.f32 %v10617, %v10491
    %v10619 = vadd.f32 %v10618, %v10492
    %v10620 = vadd.f32 %v10619, %v10493
    %v10621 = vadd.f32 %v10620, %v10494
    %v10622 = vadd.f32 %v10621, %v10495
    %v10623 = vadd.f32 %v10622, %v10496
    %v10624 = vadd.f32 %v10623, %v10497
    %v10625 = vadd.f32 %v10624, %v10498
    %v10626 = vadd.f32 %v10625, %v10499
    %v10627 = vadd.f32 %v10626, %v10500
    %v10628 = vadd.f32 %v10627, %v10501
    %v10629 = vadd.f32 %v10628, %v10502
    %v10630 = vrot.slane %v10629, 4
    %v10631 = vadd.f32 %v10629, %v10630
    %v10632 = vrot.slane %v10631, 2
    %v10633 = vadd.f32 %v10631, %v10632
    %v10634 = vrot.slane %v10633, 1
    %v10635 = vadd.f32 %v10633, %v10634
    %v10636 = vmul.f32 %v9351, %v10375
    %v10637 = vmul.f32 %v9352, %v10376
    %v10638 = vmul.f32 %v9353, %v10377
    %v10639 = vmul.f32 %v9354, %v10378
    %v10640 = vmul.f32 %v9355, %v10379
    %v10641 = vmul.f32 %v9356, %v10380
    %v10642 = vmul.f32 %v9357, %v10381
    %v10643 = vmul.f32 %v9358, %v10382
    %v10644 = vmul.f32 %v9359, %v10383
    %v10645 = vmul.f32 %v9360, %v10384
    %v10646 = vmul.f32 %v9361, %v10385
    %v10647 = vmul.f32 %v9362, %v10386
    %v10648 = vmul.f32 %v9363, %v10387
    %v10649 = vmul.f32 %v9364, %v10388
    %v10650 = vmul.f32 %v9365, %v10389
    %v10651 = vmul.f32 %v9366, %v10390
    %v10652 = vmul.f32 %v9367, %v10391
    %v10653 = vmul.f32 %v9368, %v10392
    %v10654 = vmul.f32 %v9369, %v10393
    %v10655 = vmul.f32 %v9370, %v10394
    %v10656 = vmul.f32 %v9371, %v10395
    %v10657 = vmul.f32 %v9372, %v10396
    %v10658 = vmul.f32 %v9373, %v10397
    %v10659 = vmul.f32 %v9374, %v10398
    %v10660 = vmul.f32 %v9375, %v10399
    %v10661 = vmul.f32 %v9376, %v10400
    %v10662 = vmul.f32 %v9377, %v10401
    %v10663 = vmul.f32 %v9378, %v10402
    %v10664 = vmul.f32 %v9379, %v10403
    %v10665 = vmul.f32 %v9380, %v10404
    %v10666 = vmul.f32 %v9381, %v10405
    %v10667 = vmul.f32 %v9382, %v10406
    %v10668 = vmul.f32 %v9383, %v10407
    %v10669 = vmul.f32 %v9384, %v10408
    %v10670 = vmul.f32 %v9385, %v10409
    %v10671 = vmul.f32 %v9386, %v10410
    %v10672 = vmul.f32 %v9387, %v10411
    %v10673 = vmul.f32 %v9388, %v10412
    %v10674 = vmul.f32 %v9389, %v10413
    %v10675 = vmul.f32 %v9390, %v10414
    %v10676 = vmul.f32 %v9391, %v10415
    %v10677 = vmul.f32 %v9392, %v10416
    %v10678 = vmul.f32 %v9393, %v10417
    %v10679 = vmul.f32 %v9394, %v10418
    %v10680 = vmul.f32 %v9395, %v10419
    %v10681 = vmul.f32 %v9396, %v10420
    %v10682 = vmul.f32 %v9397, %v10421
    %v10683 = vmul.f32 %v9398, %v10422
    %v10684 = vmul.f32 %v9399, %v10423
    %v10685 = vmul.f32 %v9400, %v10424
    %v10686 = vmul.f32 %v9401, %v10425
    %v10687 = vmul.f32 %v9402, %v10426
    %v10688 = vmul.f32 %v9403, %v10427
    %v10689 = vmul.f32 %v9404, %v10428
    %v10690 = vmul.f32 %v9405, %v10429
    %v10691 = vmul.f32 %v9406, %v10430
    %v10692 = vmul.f32 %v9407, %v10431
    %v10693 = vmul.f32 %v9408, %v10432
    %v10694 = vmul.f32 %v9409, %v10433
    %v10695 = vmul.f32 %v9410, %v10434
    %v10696 = vmul.f32 %v9411, %v10435
    %v10697 = vmul.f32 %v9412, %v10436
    %v10698 = vmul.f32 %v9413, %v10437
    %v10699 = vmul.f32 %v9414, %v10438
    %v10700 = vmul.f32 %v9415, %v10439
    %v10701 = vmul.f32 %v9416, %v10440
    %v10702 = vmul.f32 %v9417, %v10441
    %v10703 = vmul.f32 %v9418, %v10442
    %v10704 = vmul.f32 %v9419, %v10443
    %v10705 = vmul.f32 %v9420, %v10444
    %v10706 = vmul.f32 %v9421, %v10445
    %v10707 = vmul.f32 %v9422, %v10446
    %v10708 = vmul.f32 %v9423, %v10447
    %v10709 = vmul.f32 %v9424, %v10448
    %v10710 = vmul.f32 %v9425, %v10449
    %v10711 = vmul.f32 %v9426, %v10450
    %v10712 = vmul.f32 %v9427, %v10451
    %v10713 = vmul.f32 %v9428, %v10452
    %v10714 = vmul.f32 %v9429, %v10453
    %v10715 = vmul.f32 %v9430, %v10454
    %v10716 = vmul.f32 %v9431, %v10455
    %v10717 = vmul.f32 %v9432, %v10456
    %v10718 = vmul.f32 %v9433, %v10457
    %v10719 = vmul.f32 %v9434, %v10458
    %v10720 = vmul.f32 %v9435, %v10459
    %v10721 = vmul.f32 %v9436, %v10460
    %v10722 = vmul.f32 %v9437, %v10461
    %v10723 = vmul.f32 %v9438, %v10462
    %v10724 = vmul.f32 %v9439, %v10463
    %v10725 = vmul.f32 %v9440, %v10464
    %v10726 = vmul.f32 %v9441, %v10465
    %v10727 = vmul.f32 %v9442, %v10466
    %v10728 = vmul.f32 %v9443, %v10467
    %v10729 = vmul.f32 %v9444, %v10468
    %v10730 = vmul.f32 %v9445, %v10469
    %v10731 = vmul.f32 %v9446, %v10470
    %v10732 = vmul.f32 %v9447, %v10471
    %v10733 = vmul.f32 %v9448, %v10472
    %v10734 = vmul.f32 %v9449, %v10473
    %v10735 = vmul.f32 %v9450, %v10474
    %v10736 = vmul.f32 %v9451, %v10475
    %v10737 = vmul.f32 %v9452, %v10476
    %v10738 = vmul.f32 %v9453, %v10477
    %v10739 = vmul.f32 %v9454, %v10478
    %v10740 = vmul.f32 %v9455, %v10479
    %v10741 = vmul.f32 %v9456, %v10480
    %v10742 = vmul.f32 %v9457, %v10481
    %v10743 = vmul.f32 %v9458, %v10482
    %v10744 = vmul.f32 %v9459, %v10483
    %v10745 = vmul.f32 %v9460, %v10484
    %v10746 = vmul.f32 %v9461, %v10485
    %v10747 = vmul.f32 %v9462, %v10486
    %v10748 = vmul.f32 %v9463, %v10487
    %v10749 = vmul.f32 %v9464, %v10488
    %v10750 = vmul.f32 %v9465, %v10489
    %v10751 = vmul.f32 %v9466, %v10490
    %v10752 = vmul.f32 %v9467, %v10491
    %v10753 = vmul.f32 %v9468, %v10492
    %v10754 = vmul.f32 %v9469, %v10493
    %v10755 = vmul.f32 %v9470, %v10494
    %v10756 = vmul.f32 %v9471, %v10495
    %v10757 = vmul.f32 %v9472, %v10496
    %v10758 = vmul.f32 %v9473, %v10497
    %v10759 = vmul.f32 %v9474, %v10498
    %v10760 = vmul.f32 %v9475, %v10499
    %v10761 = vmul.f32 %v9476, %v10500
    %v10762 = vmul.f32 %v9477, %v10501
    %v10763 = vmul.f32 %v9478, %v10502
    %v10764 = vadd.f32 %v10636, %v10637
    %v10765 = vadd.f32 %v10764, %v10638
    %v10766 = vadd.f32 %v10765, %v10639
    %v10767 = vadd.f32 %v10766, %v10640
    %v10768 = vadd.f32 %v10767, %v10641
    %v10769 = vadd.f32 %v10768, %v10642
    %v10770 = vadd.f32 %v10769, %v10643
    %v10771 = vadd.f32 %v10770, %v10644
    %v10772 = vadd.f32 %v10771, %v10645
    %v10773 = vadd.f32 %v10772, %v10646
    %v10774 = vadd.f32 %v10773, %v10647
    %v10775 = vadd.f32 %v10774, %v10648
    %v10776 = vadd.f32 %v10775, %v10649
    %v10777 = vadd.f32 %v10776, %v10650
    %v10778 = vadd.f32 %v10777, %v10651
    %v10779 = vadd.f32 %v10778, %v10652
    %v10780 = vadd.f32 %v10779, %v10653
    %v10781 = vadd.f32 %v10780, %v10654
    %v10782 = vadd.f32 %v10781, %v10655
    %v10783 = vadd.f32 %v10782, %v10656
    %v10784 = vadd.f32 %v10783, %v10657
    %v10785 = vadd.f32 %v10784, %v10658
    %v10786 = vadd.f32 %v10785, %v10659
    %v10787 = vadd.f32 %v10786, %v10660
    %v10788 = vadd.f32 %v10787, %v10661
    %v10789 = vadd.f32 %v10788, %v10662
    %v10790 = vadd.f32 %v10789, %v10663
    %v10791 = vadd.f32 %v10790, %v10664
    %v10792 = vadd.f32 %v10791, %v10665
    %v10793 = vadd.f32 %v10792, %v10666
    %v10794 = vadd.f32 %v10793, %v10667
    %v10795 = vadd.f32 %v10794, %v10668
    %v10796 = vadd.f32 %v10795, %v10669
    %v10797 = vadd.f32 %v10796, %v10670
    %v10798 = vadd.f32 %v10797, %v10671
    %v10799 = vadd.f32 %v10798, %v10672
    %v10800 = vadd.f32 %v10799, %v10673
    %v10801 = vadd.f32 %v10800, %v10674
    %v10802 = vadd.f32 %v10801, %v10675
    %v10803 = vadd.f32 %v10802, %v10676
    %v10804 = vadd.f32 %v10803, %v10677
    %v10805 = vadd.f32 %v10804, %v10678
    %v10806 = vadd.f32 %v10805, %v10679
    %v10807 = vadd.f32 %v10806, %v10680
    %v10808 = vadd.f32 %v10807, %v10681
    %v10809 = vadd.f32 %v10808, %v10682
    %v10810 = vadd.f32 %v10809, %v10683
    %v10811 = vadd.f32 %v10810, %v10684
    %v10812 = vadd.f32 %v10811, %v10685
    %v10813 = vadd.f32 %v10812, %v10686
    %v10814 = vadd.f32 %v10813, %v10687
    %v10815 = vadd.f32 %v10814, %v10688
    %v10816 = vadd.f32 %v10815, %v10689
    %v10817 = vadd.f32 %v10816, %v10690
    %v10818 = vadd.f32 %v10817, %v10691
    %v10819 = vadd.f32 %v10818, %v10692
    %v10820 = vadd.f32 %v10819, %v10693
    %v10821 = vadd.f32 %v10820, %v10694
    %v10822 = vadd.f32 %v10821, %v10695
    %v10823 = vadd.f32 %v10822, %v10696
    %v10824 = vadd.f32 %v10823, %v10697
    %v10825 = vadd.f32 %v10824, %v10698
    %v10826 = vadd.f32 %v10825, %v10699
    %v10827 = vadd.f32 %v10826, %v10700
    %v10828 = vadd.f32 %v10827, %v10701
    %v10829 = vadd.f32 %v10828, %v10702
    %v10830 = vadd.f32 %v10829, %v10703
    %v10831 = vadd.f32 %v10830, %v10704
    %v10832 = vadd.f32 %v10831, %v10705
    %v10833 = vadd.f32 %v10832, %v10706
    %v10834 = vadd.f32 %v10833, %v10707
    %v10835 = vadd.f32 %v10834, %v10708
    %v10836 = vadd.f32 %v10835, %v10709
    %v10837 = vadd.f32 %v10836, %v10710
    %v10838 = vadd.f32 %v10837, %v10711
    %v10839 = vadd.f32 %v10838, %v10712
    %v10840 = vadd.f32 %v10839, %v10713
    %v10841 = vadd.f32 %v10840, %v10714
    %v10842 = vadd.f32 %v10841, %v10715
    %v10843 = vadd.f32 %v10842, %v10716
    %v10844 = vadd.f32 %v10843, %v10717
    %v10845 = vadd.f32 %v10844, %v10718
    %v10846 = vadd.f32 %v10845, %v10719
    %v10847 = vadd.f32 %v10846, %v10720
    %v10848 = vadd.f32 %v10847, %v10721
    %v10849 = vadd.f32 %v10848, %v10722
    %v10850 = vadd.f32 %v10849, %v10723
    %v10851 = vadd.f32 %v10850, %v10724
    %v10852 = vadd.f32 %v10851, %v10725
    %v10853 = vadd.f32 %v10852, %v10726
    %v10854 = vadd.f32 %v10853, %v10727
    %v10855 = vadd.f32 %v10854, %v10728
    %v10856 = vadd.f32 %v10855, %v10729
    %v10857 = vadd.f32 %v10856, %v10730
    %v10858 = vadd.f32 %v10857, %v10731
    %v10859 = vadd.f32 %v10858, %v10732
    %v10860 = vadd.f32 %v10859, %v10733
    %v10861 = vadd.f32 %v10860, %v10734
    %v10862 = vadd.f32 %v10861, %v10735
    %v10863 = vadd.f32 %v10862, %v10736
    %v10864 = vadd.f32 %v10863, %v10737
    %v10865 = vadd.f32 %v10864, %v10738
    %v10866 = vadd.f32 %v10865, %v10739
    %v10867 = vadd.f32 %v10866, %v10740
    %v10868 = vadd.f32 %v10867, %v10741
    %v10869 = vadd.f32 %v10868, %v10742
    %v10870 = vadd.f32 %v10869, %v10743
    %v10871 = vadd.f32 %v10870, %v10744
    %v10872 = vadd.f32 %v10871, %v10745
    %v10873 = vadd.f32 %v10872, %v10746
    %v10874 = vadd.f32 %v10873, %v10747
    %v10875 = vadd.f32 %v10874, %v10748
    %v10876 = vadd.f32 %v10875, %v10749
    %v10877 = vadd.f32 %v10876, %v10750
    %v10878 = vadd.f32 %v10877, %v10751
    %v10879 = vadd.f32 %v10878, %v10752
    %v10880 = vadd.f32 %v10879, %v10753
    %v10881 = vadd.f32 %v10880, %v10754
    %v10882 = vadd.f32 %v10881, %v10755
    %v10883 = vadd.f32 %v10882, %v10756
    %v10884 = vadd.f32 %v10883, %v10757
    %v10885 = vadd.f32 %v10884, %v10758
    %v10886 = vadd.f32 %v10885, %v10759
    %v10887 = vadd.f32 %v10886, %v10760
    %v10888 = vadd.f32 %v10887, %v10761
    %v10889 = vadd.f32 %v10888, %v10762
    %v10890 = vadd.f32 %v10889, %v10763
    %v10891 = vrot.slane %v10890, 4
    %v10892 = vadd.f32 %v10890, %v10891
    %v10893 = vrot.slane %v10892, 2
    %v10894 = vadd.f32 %v10892, %v10893
    %v10895 = vrot.slane %v10894, 1
    %v10896 = vadd.f32 %v10894, %v10895
    %vm10897 = vcmask 1040384
    %v10898 = vsel %vm10897, %v10635, %v10896
    %10899 = vst [vmem:[#allocation5] sm:$0x3] %v10898
    // Predicated region
    $region18: #{tpu_custom_call.1} parent=1 // pred_check
      _
    $region19: #{tpu_custom_call.1} parent=1 // pred_check_branch
      %10901 = sbr.rel (0) target = $region21
    $region20: #{tpu_custom_call.1} parent=1 // pred_region
      %10903 = vsyncadd [#allocation4], 0
      %s10904 = sshll.u32 [#allocation3], 4
      %s10905 = int_to_ptr.vmem [resolvable:$true] %s10904
      %s10906 = sshll.u32 %s4, 4
      %s10907 = int_to_ptr.hbm [resolvable:$true] %s10906
      %10912 = dma.vmem_to_hbm [thread:$0]  %s10905, 16384, %s10907, [#allocation4], 128, 128, 8
    $region21: #{tpu_custom_call.1} parent=1 // pred_fallthru
      _
    // Predicated region
    $region22: #{tpu_custom_call.1} parent=1 // pred_check
      _
    $region23: #{tpu_custom_call.1} parent=1 // pred_check_branch
      %10914 = sbr.rel (0) target = $region25
    $region24: #{tpu_custom_call.1} parent=1 // pred_region
      %10916 = vsyncadd [#allocation6], 0
      %s10918 = sshll.u32 [#allocation5], 4
      %s10919 = int_to_ptr.vmem [resolvable:$true] %s10918
      %s10920 = sshll.u32 %s5, 4
      %s10921 = int_to_ptr.hbm [resolvable:$true] %s10920
      %10923 = dma.vmem_to_hbm [thread:$0]  %s10919, 32, %s10921, [#allocation6]
    $region25: #{tpu_custom_call.1} parent=1 // pred_fallthru
      _
    // Predicated region
    $region26: #{tpu_custom_call.1} parent=1 // pred_check
      _
    $region27: #{tpu_custom_call.1} parent=1 // pred_check_branch
      %10925 = sbr.rel (0) target = $region29
    $region28: #{tpu_custom_call.1} parent=1 // pred_region
      %10927 = dma.done [#allocation4], 16384
    $region29: #{tpu_custom_call.1} parent=1 // pred_fallthru
      _
    // Predicated region
    $region30: #{tpu_custom_call.1} parent=1 // pred_check
      _
    $region31: #{tpu_custom_call.1} parent=1 // pred_check_branch
      %10929 = sbr.rel (0) target = $region33
    $region32: #{tpu_custom_call.1} parent=1 // pred_region
      %10931 = dma.done [#allocation6], 32
    $region33: #{tpu_custom_call.1} parent=1 // pred_fallthru
      _
    %10932 = vsyncpa [#allocation4], 1
    %10933 = vsyncpa [#allocation6], 1

</llo_original>
